<compile_context>
chip_gen: v6e
topology: v6e:2x2x1
jax: 0.10.0
libtpu: 0.0.40
codegen_flags: <defaults>
</compile_context>

<pallas_src>
import numpy as np
import jax
import jax.numpy as jnp
from jax import lax
from jax.experimental import pallas as pl
from jax.experimental.pallas import tpu as pltpu

NU = 0.01 / np.pi
H = 10            # true hidden width of the MLP (nn.Linear(..., 10))
FPAD = 16         # feature padding for sublane/elementwise work
HPAD = 128        # feature padding for the MXU contraction dim
MXU_DTYPE = jnp.bfloat16   # MXU operand dtype (weights + stored activations)


def _make_kernel(nf, n0, nb):
    nall = nf + n0 + 2 * nb          # value-stream columns (all point sets)
    ntot = nall + 3 * nf             # + u_x / u_t / u_xx streams (collocation only)

    def kernel(x_ref, u0_ref, w1_ref, ws_ref, bs_ref, wout_ref, bout_ref,
               uout_ref, loss_ref, A_ref):
        # A_ref: (HPAD, ntot) activation scratch.  Only rows 0:FPAD are ever written;
        # rows FPAD:HPAD are zeroed once and stay zero (zero-padded weight columns make
        # them irrelevant to every matmul / reduction -> padding is exact).
        A_ref[FPAD:HPAD, :] = jnp.zeros((HPAD - FPAD, ntot), A_ref.dtype)

        xr = x_ref[0:1, :]           # (1, nall) x-coordinates
        tr = x_ref[1:2, :]           # (1, nall) t-coordinates
        w1x = w1_ref[:, 0:1]         # (FPAD, 1) layer-1 weights for x
        w1t = w1_ref[:, 1:2]         # (FPAD, 1) layer-1 weights for t
        b1 = bs_ref[0]               # (FPAD, 1)

        # ---- layer 1 (fc1): contraction dim is 2 -> VPU broadcast-multiply, no MXU ----
        z = w1x * xr + w1t * tr + b1                    # (FPAD, nall)
        a = jnp.tanh(z)
        a_f = a[:, 0:nf]                                # collocation columns only
        s = 1.0 - a_f * a_f                             # tanh'(z)
        szx = s * w1x                                   # reused subexpression
        ax = szx
        at = s * w1t
        axx = -2.0 * (a_f * w1x) * szx                  # d2z/dx2 == 0 at layer 1

        A_ref[0:FPAD, 0:nall] = a.astype(A_ref.dtype)
        A_ref[0:FPAD, nall:nall + nf] = ax.astype(A_ref.dtype)
        A_ref[0:FPAD, nall + nf:nall + 2 * nf] = at.astype(A_ref.dtype)
        A_ref[0:FPAD, nall + 2 * nf:ntot] = axx.astype(A_ref.dtype)

        # ---- 7 hidden layers (fc2..fc8): ONE matmul per layer for all streams ----
        def layer(l, carry):
            W = ws_ref[l]                                # (FPAD, HPAD), pre-cast bf16
            Y = jnp.dot(W, A_ref[...],                   # (FPAD, ntot), f32 accumulate
                        preferred_element_type=jnp.float32)
            a = jnp.tanh(Y[:, 0:nall] + bs_ref[l + 1])   # tanh on value columns only
            a_f = a[:, 0:nf]
            s = 1.0 - a_f * a_f
            zx = Y[:, nall:nall + nf]
            zt = Y[:, nall + nf:nall + 2 * nf]
            zxx = Y[:, nall + 2 * nf:ntot]
            szx = s * zx
            ax = szx
            at = s * zt
            axx = s * zxx - 2.0 * (a_f * zx) * szx
            A_ref[0:FPAD, 0:nall] = a.astype(A_ref.dtype)
            A_ref[0:FPAD, nall:nall + nf] = ax.astype(A_ref.dtype)
            A_ref[0:FPAD, nall + nf:nall + 2 * nf] = at.astype(A_ref.dtype)
            A_ref[0:FPAD, nall + 2 * nf:ntot] = axx.astype(A_ref.dtype)
            return carry

        lax.fori_loop(0, 7, layer, 0, unroll=True)

        # ---- output layer (fc_out, 10 -> 1): sublane reduction over FPAD features ----
        Af = A_ref[0:FPAD, :].astype(jnp.float32)        # (FPAD, ntot)
        V = jnp.sum(Af * wout_ref[...], axis=0, keepdims=True)   # (1, ntot), lane-dense
        bout = bout_ref[...]                             # (1, 1)

        u_all = V[:, 0:nall] + bout                      # module forward for all points
        uout_ref[...] = u_all

        ux = V[:, nall:nall + nf]                        # derivatives: no output bias
        ut = V[:, nall + nf:nall + 2 * nf]
        uxx = V[:, nall + 2 * nf:ntot]

        # PDE residual + IC + BC mean-squared losses (all lane-dense (1, N) rows)
        u_fc = u_all[:, 0:nf]
        f = ut + u_fc * ux - NU * uxx
        loss_f = jnp.sum(f * f, keepdims=True) / nf
        d0 = u_all[:, nf:nf + n0] - u0_ref[...]
        loss_0 = jnp.sum(d0 * d0, keepdims=True) / n0
        ubl = u_all[:, nf + n0:nf + n0 + nb]
        ubr = u_all[:, nf + n0 + nb:nall]
        loss_b = (jnp.sum(ubl * ubl, keepdims=True) / nb
                  + jnp.sum(ubr * ubr, keepdims=True) / nb)

        loss_ref[...] = loss_f + loss_0 + loss_b

    return kernel, nall, ntot


def burgers_forward_and_loss(X_f, x0_t0, xb_left_tb, xb_right_tb, u0, padded_params):
    nf, n0, nb = X_f.shape[0], x0_t0.shape[0], xb_left_tb.shape[0]
    # Multiples of 8 required for clean sublane/lane tiling; multiples of 128 (as used
    # in the demo) make every stream boundary lane-aligned (unmasked stores/slices).
    assert nf % 8 == 0 and n0 % 8 == 0 and nb % 8 == 0

    kernel, nall, ntot = _make_kernel(nf, n0, nb)
    # Points on the 128-lane axis: transpose to (2, nall); order = [X_f; x0_t0; xbl; xbr]
    x_all_t = jnp.concatenate([X_f, x0_t0, xb_left_tb, xb_right_tb], axis=0).T
    u0_t = u0.reshape(1, n0)
    w1p, wsp, bsp, woutp, boutp = padded_params

    vspec = pl.BlockSpec(memory_space=pltpu.MemorySpace.VMEM)
    u_all, loss = pl.pallas_call(
        kernel,
        out_shape=(jax.ShapeDtypeStruct((1, nall), jnp.float32),   # module forward u
                   jax.ShapeDtypeStruct((1, 1), jnp.float32)),     # PINN loss
        in_specs=[vspec] * 7,
        out_specs=(vspec, vspec),
        scratch_shapes=[pltpu.VMEM((HPAD, ntot), MXU_DTYPE)],
        # Sized to actual need (~3 MiB), NOT to physical VMEM (never 64 MiB on v7x).
        compiler_params=pltpu.CompilerParams(vmem_limit_bytes=16 * 1024 * 1024),
    )(x_all_t, u0_t, w1p, wsp, bsp, woutp, boutp)
    # TODO(synk): for production Nf (>~2-8k), grid-tile the collocation axis
    # ("parallel", per-tile partial losses, resident weights) to use both v7x cores.
    return u_all[0], loss[0, 0]


# ----------------------------- parameter setup (deterministic) -----------------------------
def init_params(key):
    """PyTorch-nn.Linear-style deterministic init; returns list of (W[out,in], b[out])."""
    dims = [2] + [H] * 8 + [1]
    keys = jax.random.split(key, 2 * (len(dims) - 1))
    layers = []
    for i in range(len(dims) - 1):
        in_d, out_d = dims[i], dims[i + 1]
        bound = 1.0 / np.sqrt(in_d)
        W = jax.random.uniform(keys[2 * i], (out_d, in_d), jnp.float32, -bound, bound)
        b = jax.random.uniform(keys[2 * i + 1], (out_d,), jnp.float32, -bound, bound)
        layers.append((W, b))
    return layers


def pad_params(layers):
    """Feature-on-sublane padded parameters.  Hidden weights are (out=FPAD, in=HPAD)
    blocks pre-cast to MXU_DTYPE (no per-layer cast inside the kernel)."""
    W1 = layers[0][0]                                            # (10, 2)  [out, in]
    ws = jnp.stack([layers[i][0] for i in range(1, 8)])          # (7, 10, 10)
    bs = jnp.stack([layers[i][1] for i in range(0, 8)])          # (8, 10)
    Wout, bout = layers[8]                                       # (1, 10), (1,)

    w1p = jnp.zeros((FPAD, 2), jnp.float32).at[:H, :].set(W1)
    wsp = (jnp.zeros((7, FPAD, HPAD), jnp.float32)
           .at[:, :H, :H].set(ws).astype(MXU_DTYPE))
    bsp = jnp.zeros((8, FPAD, 1), jnp.float32).at[:, :H, 0].set(bs)
    woutp = jnp.zeros((FPAD, 1), jnp.float32).at[:H, 0].set(Wout[0])
    boutp = bout.reshape(1, 1)
    return (w1p, wsp, bsp, woutp, boutp)


# ----------------------------- pure-JAX references (f32, autodiff) -----------------------------
def ref_forward(pts, layers):
    """Exact forward pass of the PyTorch module for a (N, 2) batch -> (N, 1)."""
    h = jnp.tanh(pts @ layers[0][0].T + layers[0][1])
    for i in range(1, 8):
        h = jnp.tanh(h @ layers[i][0].T + layers[i][1])
    return h @ layers[8][0].T + layers[8][1]


def reference_loss(X_f, x0_t0, xbl, xbr, u0, layers):
    w1t = layers[0][0].T
    ws = [layers[i][0].T for i in range(1, 8)]
    bs = [layers[i][1] for i in range(0, 8)]
    Wout, bout = layers[8]

    def u_fn(xy):  # xy: (2,) -> scalar
        h = jnp.tanh(xy @ w1t + bs[0])
        for l in range(7):
            h = jnp.tanh(h @ ws[l] + bs[l + 1])
        return (h @ Wout.T + bout)[0]

    u = jax.vmap(u_fn)(X_f)
    g = jax.vmap(jax.grad(u_fn))(X_f)
    u_x, u_t = g[:, 0], g[:, 1]
    u_xx = jax.vmap(lambda p: jax.grad(lambda q: jax.grad(u_fn)(q)[0])(p)[0])(X_f)
    f = u_t + u * u_x - NU * u_xx
    loss_f = jnp.mean(f ** 2)
    loss_0 = jnp.mean((jax.vmap(u_fn)(x0_t0) - u0[:, 0]) ** 2)
    loss_b = jnp.mean(jax.vmap(u_fn)(xbl) ** 2) + jnp.mean(jax.vmap(u_fn)(xbr) ** 2)
    return loss_f + loss_0 + loss_b


if __name__ == "__main__":
    key = jax.random.PRNGKey(0)
    k1, k2, k3, k4, kp = jax.random.split(key, 5)

    # Multiples of 128 -> every stream boundary in the kernel is lane-aligned.
    Nf, N0, Nb = 256, 128, 128
    xs = jax.random.uniform(k1, (Nf, 1), jnp.float32, -1.0, 1.0)
    ts = jax.random.uniform(k2, (Nf, 1), jnp.float32, 0.0, 1.0)
    X_f = jnp.concatenate([xs, ts], axis=1)                       # collocation points
    x0 = jax.random.uniform(k3, (N0, 1), jnp.float32, -1.0, 1.0)
    x0_t0 = jnp.concatenate([x0, jnp.zeros((N0, 1), jnp.float32)], axis=1)
    tb = jax.random.uniform(k4, (Nb, 1), jnp.float32, 0.0, 1.0)
    xb_left_tb = jnp.concatenate([-jnp.ones((Nb, 1), jnp.float32), tb], axis=1)
    xb_right_tb = jnp.concatenate([jnp.ones((Nb, 1), jnp.float32), tb], axis=1)
    u0 = -jnp.sin(np.pi * x0)                                     # (N0, 1)

    layers = init_params(kp)
    padded = pad_params(layers)

    u_kernel, loss_kernel = burgers_forward_and_loss(
        X_f, x0_t0, xb_left_tb, xb_right_tb, u0, padded)
    u_kernel, loss_kernel = jax.block_until_ready((u_kernel, loss_kernel))

    pts = jnp.concatenate([X_f, x0_t0, xb_left_tb, xb_right_tb], axis=0)
    with jax.default_matmul_precision("highest"):
        u_ref = ref_forward(pts, layers)[:, 0]
        loss_ref = reference_loss(X_f, x0_t0, xb_left_tb, xb_right_tb, u0, layers)
        u_ref, loss_ref = jax.block_until_ready((u_ref, loss_ref))

    # Tolerances account for bf16 MXU operands vs the f32 autodiff reference
    # (derivative-chain error amplification); MXU_DTYPE=float32 recovers <=2e-2.
    np.testing.assert_allclose(np.asarray(u_kernel), np.asarray(u_ref),
                               rtol=5e-2, atol=3e-2)
    np.testing.assert_allclose(np.asarray(loss_kernel), np.asarray(loss_ref),
                               rtol=1e-1, atol=1e-3)

    print("KERNEL_OK")
</pallas_src>

<mosaic_0001>
module attributes {stable_mosaic.version = 11 : i64} {
  func.func @kernel(%arg0: memref<2x640xf32, #tpu.memory_space<vmem>>, %arg1: memref<1x128xf32, #tpu.memory_space<vmem>>, %arg2: memref<16x2xf32, #tpu.memory_space<vmem>>, %arg3: memref<7x16x128xbf16, #tpu.memory_space<vmem>>, %arg4: memref<8x16x1xf32, #tpu.memory_space<vmem>>, %arg5: memref<16x1xf32, #tpu.memory_space<vmem>>, %arg6: memref<1x1xf32, #tpu.memory_space<vmem>>, %arg7: memref<1x640xf32, #tpu.memory_space<vmem>>, %arg8: memref<1x1xf32, #tpu.memory_space<vmem>>, %arg9: memref<128x1408xbf16, #tpu.memory_space<vmem>>) attributes {dimension_semantics = [], scalar_prefetch = 0 : i64, scratch_operands = 1 : i64, tpu.core_type = #tpu.core_type<tc>} {
    %cst = arith.constant 0.000000e+00 : bf16
    %0 = vector.broadcast %cst : bf16 to vector<112x1408xbf16>
    %c16 = arith.constant 16 : index
    %c0 = arith.constant 0 : index
    %1 = vector.load %arg9[%c16, %c0] : memref<128x1408xbf16, #tpu.memory_space<vmem>>, vector<112x1408xbf16>
    tpu.vector_store %arg9[%c16, %c0], %0 {strides = array<i32>} : memref<128x1408xbf16, #tpu.memory_space<vmem>>, vector<112x1408xbf16>,
    %c0_0 = arith.constant 0 : index
    %c0_1 = arith.constant 0 : index
    %2 = vector.load %arg0[%c0_0, %c0_1] : memref<2x640xf32, #tpu.memory_space<vmem>>, vector<1x640xf32>
    %c1 = arith.constant 1 : index
    %c0_2 = arith.constant 0 : index
    %3 = vector.load %arg0[%c1, %c0_2] : memref<2x640xf32, #tpu.memory_space<vmem>>, vector<1x640xf32>
    %c0_3 = arith.constant 0 : index
    %c0_4 = arith.constant 0 : index
    %4 = vector.load %arg2[%c0_3, %c0_4] : memref<16x2xf32, #tpu.memory_space<vmem>>, vector<16x1xf32>
    %c0_5 = arith.constant 0 : index
    %c1_6 = arith.constant 1 : index
    %5 = vector.load %arg2[%c0_5, %c1_6] : memref<16x2xf32, #tpu.memory_space<vmem>>, vector<16x1xf32>
    %c0_7 = arith.constant 0 : index
    %c0_8 = arith.constant 0 : index
    %c0_9 = arith.constant 0 : index
    %6 = vector.load %arg4[%c0_7, %c0_8, %c0_9] : memref<8x16x1xf32, #tpu.memory_space<vmem>>, vector<1x16x1xf32>
    %7 = vector.shape_cast %6 : vector<1x16x1xf32> to vector<16x1xf32>
    %8 = vector.broadcast %4 : vector<16x1xf32> to vector<16x640xf32>
    %9 = vector.broadcast %2 : vector<1x640xf32> to vector<16x640xf32>
    %10 = arith.mulf %8, %9 : vector<16x640xf32>
    %11 = vector.broadcast %5 : vector<16x1xf32> to vector<16x640xf32>
    %12 = vector.broadcast %3 : vector<1x640xf32> to vector<16x640xf32>
    %13 = arith.mulf %11, %12 : vector<16x640xf32>
    %14 = arith.addf %10, %13 : vector<16x640xf32>
    %15 = vector.broadcast %7 : vector<16x1xf32> to vector<16x640xf32>
    %16 = arith.addf %14, %15 : vector<16x640xf32>
    %17 = math.tanh %16 : vector<16x640xf32>
    %18 = vector.extract_strided_slice %17 {offsets = [0, 0], sizes = [16, 256], strides = [1, 1]} : vector<16x640xf32> to vector<16x256xf32>
    %19 = arith.mulf %18, %18 : vector<16x256xf32>
    %cst_10 = arith.constant 1.000000e+00 : f32
    %20 = vector.broadcast %cst_10 : f32 to vector<16x256xf32>
    %21 = arith.subf %20, %19 : vector<16x256xf32>
    %22 = vector.broadcast %4 : vector<16x1xf32> to vector<16x256xf32>
    %23 = arith.mulf %21, %22 : vector<16x256xf32>
    %24 = vector.broadcast %5 : vector<16x1xf32> to vector<16x256xf32>
    %25 = arith.mulf %21, %24 : vector<16x256xf32>
    %26 = vector.broadcast %4 : vector<16x1xf32> to vector<16x256xf32>
    %27 = arith.mulf %18, %26 : vector<16x256xf32>
    %cst_11 = arith.constant -2.000000e+00 : f32
    %28 = vector.broadcast %cst_11 : f32 to vector<16x256xf32>
    %29 = arith.mulf %28, %27 : vector<16x256xf32>
    %30 = arith.mulf %29, %23 : vector<16x256xf32>
    %31 = arith.truncf %17 : vector<16x640xf32> to vector<16x640xbf16>
    %c0_12 = arith.constant 0 : index
    %c0_13 = arith.constant 0 : index
    %32 = vector.load %arg9[%c0_12, %c0_13] : memref<128x1408xbf16, #tpu.memory_space<vmem>>, vector<16x640xbf16>
    tpu.vector_store %arg9[%c0_12, %c0_13], %31 {strides = array<i32>} : memref<128x1408xbf16, #tpu.memory_space<vmem>>, vector<16x640xbf16>,
    %33 = arith.truncf %23 : vector<16x256xf32> to vector<16x256xbf16>
    %c0_14 = arith.constant 0 : index
    %c640 = arith.constant 640 : index
    %34 = vector.load %arg9[%c0_14, %c640] : memref<128x1408xbf16, #tpu.memory_space<vmem>>, vector<16x256xbf16>
    tpu.vector_store %arg9[%c0_14, %c640], %33 {strides = array<i32>} : memref<128x1408xbf16, #tpu.memory_space<vmem>>, vector<16x256xbf16>,
    %35 = arith.truncf %25 : vector<16x256xf32> to vector<16x256xbf16>
    %c0_15 = arith.constant 0 : index
    %c896 = arith.constant 896 : index
    %36 = vector.load %arg9[%c0_15, %c896] : memref<128x1408xbf16, #tpu.memory_space<vmem>>, vector<16x256xbf16>
    tpu.vector_store %arg9[%c0_15, %c896], %35 {strides = array<i32>} : memref<128x1408xbf16, #tpu.memory_space<vmem>>, vector<16x256xbf16>,
    %37 = arith.truncf %30 : vector<16x256xf32> to vector<16x256xbf16>
    %c0_16 = arith.constant 0 : index
    %c1152 = arith.constant 1152 : index
    %38 = vector.load %arg9[%c0_16, %c1152] : memref<128x1408xbf16, #tpu.memory_space<vmem>>, vector<16x256xbf16>
    tpu.vector_store %arg9[%c0_16, %c1152], %37 {strides = array<i32>} : memref<128x1408xbf16, #tpu.memory_space<vmem>>, vector<16x256xbf16>,
    %c0_i32 = arith.constant 0 : i32
    %39 = arith.index_cast %c0_i32 : i32 to index
    %c0_17 = arith.constant 0 : index
    %c0_18 = arith.constant 0 : index
    %40 = vector.load %arg3[%39, %c0_17, %c0_18] : memref<7x16x128xbf16, #tpu.memory_space<vmem>>, vector<1x16x128xbf16>
    %41 = vector.shape_cast %40 : vector<1x16x128xbf16> to vector<16x128xbf16>
    %c0_19 = arith.constant 0 : index
    %c0_20 = arith.constant 0 : index
    %42 = vector.load %arg9[%c0_19, %c0_20] : memref<128x1408xbf16, #tpu.memory_space<vmem>>, vector<128x1408xbf16>
    %cst_21 = arith.constant dense<0.000000e+00> : vector<16x1408xf32>
    %43 = tpu.matmul %41, %42, %cst_21 {dimension_numbers = #tpu.dot_dimension_numbers<[1], [0], [0], [1], [0, 0, 1, 1], [], []>} : vector<16x128xbf16>, vector<128x1408xbf16>, vector<16x1408xf32> -> vector<16x1408xf32>
    %44 = vector.extract_strided_slice %43 {offsets = [0, 0], sizes = [16, 640], strides = [1, 1]} : vector<16x1408xf32> to vector<16x640xf32>
    %c1_i32 = arith.constant 1 : i32
    %45 = arith.addi %c0_i32, %c1_i32 : i32
    %46 = arith.index_cast %45 : i32 to index
    %c0_22 = arith.constant 0 : index
    %c0_23 = arith.constant 0 : index
    %47 = vector.load %arg4[%46, %c0_22, %c0_23] : memref<8x16x1xf32, #tpu.memory_space<vmem>>, vector<1x16x1xf32>
    %48 = vector.shape_cast %47 : vector<1x16x1xf32> to vector<16x1xf32>
    %49 = vector.broadcast %48 : vector<16x1xf32> to vector<16x640xf32>
    %50 = arith.addf %44, %49 : vector<16x640xf32>
    %51 = math.tanh %50 : vector<16x640xf32>
    %52 = vector.extract_strided_slice %51 {offsets = [0, 0], sizes = [16, 256], strides = [1, 1]} : vector<16x640xf32> to vector<16x256xf32>
    %53 = arith.mulf %52, %52 : vector<16x256xf32>
    %cst_24 = arith.constant 1.000000e+00 : f32
    %54 = vector.broadcast %cst_24 : f32 to vector<16x256xf32>
    %55 = arith.subf %54, %53 : vector<16x256xf32>
    %56 = vector.extract_strided_slice %43 {offsets = [0, 640], sizes = [16, 256], strides = [1, 1]} : vector<16x1408xf32> to vector<16x256xf32>
    %57 = vector.extract_strided_slice %43 {offsets = [0, 896], sizes = [16, 256], strides = [1, 1]} : vector<16x1408xf32> to vector<16x256xf32>
    %58 = vector.extract_strided_slice %43 {offsets = [0, 1152], sizes = [16, 256], strides = [1, 1]} : vector<16x1408xf32> to vector<16x256xf32>
    %59 = arith.mulf %55, %56 : vector<16x256xf32>
    %60 = arith.mulf %55, %57 : vector<16x256xf32>
    %61 = arith.mulf %55, %58 : vector<16x256xf32>
    %62 = arith.mulf %52, %56 : vector<16x256xf32>
    %cst_25 = arith.constant 2.000000e+00 : f32
    %63 = vector.broadcast %cst_25 : f32 to vector<16x256xf32>
    %64 = arith.mulf %63, %62 : vector<16x256xf32>
    %65 = arith.mulf %64, %59 : vector<16x256xf32>
    %66 = arith.subf %61, %65 : vector<16x256xf32>
    %67 = arith.truncf %51 : vector<16x640xf32> to vector<16x640xbf16>
    %c0_26 = arith.constant 0 : index
    %c0_27 = arith.constant 0 : index
    %68 = vector.load %arg9[%c0_26, %c0_27] : memref<128x1408xbf16, #tpu.memory_space<vmem>>, vector<16x640xbf16>
    tpu.vector_store %arg9[%c0_26, %c0_27], %67 {strides = array<i32>} : memref<128x1408xbf16, #tpu.memory_space<vmem>>, vector<16x640xbf16>,
    %69 = arith.truncf %59 : vector<16x256xf32> to vector<16x256xbf16>
    %c0_28 = arith.constant 0 : index
    %c640_29 = arith.constant 640 : index
    %70 = vector.load %arg9[%c0_28, %c640_29] : memref<128x1408xbf16, #tpu.memory_space<vmem>>, vector<16x256xbf16>
    tpu.vector_store %arg9[%c0_28, %c640_29], %69 {strides = array<i32>} : memref<128x1408xbf16, #tpu.memory_space<vmem>>, vector<16x256xbf16>,
    %71 = arith.truncf %60 : vector<16x256xf32> to vector<16x256xbf16>
    %c0_30 = arith.constant 0 : index
    %c896_31 = arith.constant 896 : index
    %72 = vector.load %arg9[%c0_30, %c896_31] : memref<128x1408xbf16, #tpu.memory_space<vmem>>, vector<16x256xbf16>
    tpu.vector_store %arg9[%c0_30, %c896_31], %71 {strides = array<i32>} : memref<128x1408xbf16, #tpu.memory_space<vmem>>, vector<16x256xbf16>,
    %73 = arith.truncf %66 : vector<16x256xf32> to vector<16x256xbf16>
    %c0_32 = arith.constant 0 : index
    %c1152_33 = arith.constant 1152 : index
    %74 = vector.load %arg9[%c0_32, %c1152_33] : memref<128x1408xbf16, #tpu.memory_space<vmem>>, vector<16x256xbf16>
    tpu.vector_store %arg9[%c0_32, %c1152_33], %73 {strides = array<i32>} : memref<128x1408xbf16, #tpu.memory_space<vmem>>, vector<16x256xbf16>,
    %c1_i32_34 = arith.constant 1 : i32
    %75 = arith.index_cast %c1_i32_34 : i32 to index
    %c0_35 = arith.constant 0 : index
    %c0_36 = arith.constant 0 : index
    %76 = vector.load %arg3[%75, %c0_35, %c0_36] : memref<7x16x128xbf16, #tpu.memory_space<vmem>>, vector<1x16x128xbf16>
    %77 = vector.shape_cast %76 : vector<1x16x128xbf16> to vector<16x128xbf16>
    %c0_37 = arith.constant 0 : index
    %c0_38 = arith.constant 0 : index
    %78 = vector.load %arg9[%c0_37, %c0_38] : memref<128x1408xbf16, #tpu.memory_space<vmem>>, vector<128x1408xbf16>
    %cst_39 = arith.constant dense<0.000000e+00> : vector<16x1408xf32>
    %79 = tpu.matmul %77, %78, %cst_39 {dimension_numbers = #tpu.dot_dimension_numbers<[1], [0], [0], [1], [0, 0, 1, 1], [], []>} : vector<16x128xbf16>, vector<128x1408xbf16>, vector<16x1408xf32> -> vector<16x1408xf32>
    %80 = vector.extract_strided_slice %79 {offsets = [0, 0], sizes = [16, 640], strides = [1, 1]} : vector<16x1408xf32> to vector<16x640xf32>
    %c1_i32_40 = arith.constant 1 : i32
    %81 = arith.addi %c1_i32_34, %c1_i32_40 : i32
    %82 = arith.index_cast %81 : i32 to index
    %c0_41 = arith.constant 0 : index
    %c0_42 = arith.constant 0 : index
    %83 = vector.load %arg4[%82, %c0_41, %c0_42] : memref<8x16x1xf32, #tpu.memory_space<vmem>>, vector<1x16x1xf32>
    %84 = vector.shape_cast %83 : vector<1x16x1xf32> to vector<16x1xf32>
    %85 = vector.broadcast %84 : vector<16x1xf32> to vector<16x640xf32>
    %86 = arith.addf %80, %85 : vector<16x640xf32>
    %87 = math.tanh %86 : vector<16x640xf32>
    %88 = vector.extract_strided_slice %87 {offsets = [0, 0], sizes = [16, 256], strides = [1, 1]} : vector<16x640xf32> to vector<16x256xf32>
    %89 = arith.mulf %88, %88 : vector<16x256xf32>
    %cst_43 = arith.constant 1.000000e+00 : f32
    %90 = vector.broadcast %cst_43 : f32 to vector<16x256xf32>
    %91 = arith.subf %90, %89 : vector<16x256xf32>
    %92 = vector.extract_strided_slice %79 {offsets = [0, 640], sizes = [16, 256], strides = [1, 1]} : vector<16x1408xf32> to vector<16x256xf32>
    %93 = vector.extract_strided_slice %79 {offsets = [0, 896], sizes = [16, 256], strides = [1, 1]} : vector<16x1408xf32> to vector<16x256xf32>
    %94 = vector.extract_strided_slice %79 {offsets = [0, 1152], sizes = [16, 256], strides = [1, 1]} : vector<16x1408xf32> to vector<16x256xf32>
    %95 = arith.mulf %91, %92 : vector<16x256xf32>
    %96 = arith.mulf %91, %93 : vector<16x256xf32>
    %97 = arith.mulf %91, %94 : vector<16x256xf32>
    %98 = arith.mulf %88, %92 : vector<16x256xf32>
    %cst_44 = arith.constant 2.000000e+00 : f32
    %99 = vector.broadcast %cst_44 : f32 to vector<16x256xf32>
    %100 = arith.mulf %99, %98 : vector<16x256xf32>
    %101 = arith.mulf %100, %95 : vector<16x256xf32>
    %102 = arith.subf %97, %101 : vector<16x256xf32>
    %103 = arith.truncf %87 : vector<16x640xf32> to vector<16x640xbf16>
    %c0_45 = arith.constant 0 : index
    %c0_46 = arith.constant 0 : index
    %104 = vector.load %arg9[%c0_45, %c0_46] : memref<128x1408xbf16, #tpu.memory_space<vmem>>, vector<16x640xbf16>
    tpu.vector_store %arg9[%c0_45, %c0_46], %103 {strides = array<i32>} : memref<128x1408xbf16, #tpu.memory_space<vmem>>, vector<16x640xbf16>,
    %105 = arith.truncf %95 : vector<16x256xf32> to vector<16x256xbf16>
    %c0_47 = arith.constant 0 : index
    %c640_48 = arith.constant 640 : index
    %106 = vector.load %arg9[%c0_47, %c640_48] : memref<128x1408xbf16, #tpu.memory_space<vmem>>, vector<16x256xbf16>
    tpu.vector_store %arg9[%c0_47, %c640_48], %105 {strides = array<i32>} : memref<128x1408xbf16, #tpu.memory_space<vmem>>, vector<16x256xbf16>,
    %107 = arith.truncf %96 : vector<16x256xf32> to vector<16x256xbf16>
    %c0_49 = arith.constant 0 : index
    %c896_50 = arith.constant 896 : index
    %108 = vector.load %arg9[%c0_49, %c896_50] : memref<128x1408xbf16, #tpu.memory_space<vmem>>, vector<16x256xbf16>
    tpu.vector_store %arg9[%c0_49, %c896_50], %107 {strides = array<i32>} : memref<128x1408xbf16, #tpu.memory_space<vmem>>, vector<16x256xbf16>,
    %109 = arith.truncf %102 : vector<16x256xf32> to vector<16x256xbf16>
    %c0_51 = arith.constant 0 : index
    %c1152_52 = arith.constant 1152 : index
    %110 = vector.load %arg9[%c0_51, %c1152_52] : memref<128x1408xbf16, #tpu.memory_space<vmem>>, vector<16x256xbf16>
    tpu.vector_store %arg9[%c0_51, %c1152_52], %109 {strides = array<i32>} : memref<128x1408xbf16, #tpu.memory_space<vmem>>, vector<16x256xbf16>,
    %c2_i32 = arith.constant 2 : i32
    %111 = arith.index_cast %c2_i32 : i32 to index
    %c0_53 = arith.constant 0 : index
    %c0_54 = arith.constant 0 : index
    %112 = vector.load %arg3[%111, %c0_53, %c0_54] : memref<7x16x128xbf16, #tpu.memory_space<vmem>>, vector<1x16x128xbf16>
    %113 = vector.shape_cast %112 : vector<1x16x128xbf16> to vector<16x128xbf16>
    %c0_55 = arith.constant 0 : index
    %c0_56 = arith.constant 0 : index
    %114 = vector.load %arg9[%c0_55, %c0_56] : memref<128x1408xbf16, #tpu.memory_space<vmem>>, vector<128x1408xbf16>
    %cst_57 = arith.constant dense<0.000000e+00> : vector<16x1408xf32>
    %115 = tpu.matmul %113, %114, %cst_57 {dimension_numbers = #tpu.dot_dimension_numbers<[1], [0], [0], [1], [0, 0, 1, 1], [], []>} : vector<16x128xbf16>, vector<128x1408xbf16>, vector<16x1408xf32> -> vector<16x1408xf32>
    %116 = vector.extract_strided_slice %115 {offsets = [0, 0], sizes = [16, 640], strides = [1, 1]} : vector<16x1408xf32> to vector<16x640xf32>
    %c1_i32_58 = arith.constant 1 : i32
    %117 = arith.addi %c2_i32, %c1_i32_58 : i32
    %118 = arith.index_cast %117 : i32 to index
    %c0_59 = arith.constant 0 : index
    %c0_60 = arith.constant 0 : index
    %119 = vector.load %arg4[%118, %c0_59, %c0_60] : memref<8x16x1xf32, #tpu.memory_space<vmem>>, vector<1x16x1xf32>
    %120 = vector.shape_cast %119 : vector<1x16x1xf32> to vector<16x1xf32>
    %121 = vector.broadcast %120 : vector<16x1xf32> to vector<16x640xf32>
    %122 = arith.addf %116, %121 : vector<16x640xf32>
    %123 = math.tanh %122 : vector<16x640xf32>
    %124 = vector.extract_strided_slice %123 {offsets = [0, 0], sizes = [16, 256], strides = [1, 1]} : vector<16x640xf32> to vector<16x256xf32>
    %125 = arith.mulf %124, %124 : vector<16x256xf32>
    %cst_61 = arith.constant 1.000000e+00 : f32
    %126 = vector.broadcast %cst_61 : f32 to vector<16x256xf32>
    %127 = arith.subf %126, %125 : vector<16x256xf32>
    %128 = vector.extract_strided_slice %115 {offsets = [0, 640], sizes = [16, 256], strides = [1, 1]} : vector<16x1408xf32> to vector<16x256xf32>
    %129 = vector.extract_strided_slice %115 {offsets = [0, 896], sizes = [16, 256], strides = [1, 1]} : vector<16x1408xf32> to vector<16x256xf32>
    %130 = vector.extract_strided_slice %115 {offsets = [0, 1152], sizes = [16, 256], strides = [1, 1]} : vector<16x1408xf32> to vector<16x256xf32>
    %131 = arith.mulf %127, %128 : vector<16x256xf32>
    %132 = arith.mulf %127, %129 : vector<16x256xf32>
    %133 = arith.mulf %127, %130 : vector<16x256xf32>
    %134 = arith.mulf %124, %128 : vector<16x256xf32>
    %cst_62 = arith.constant 2.000000e+00 : f32
    %135 = vector.broadcast %cst_62 : f32 to vector<16x256xf32>
    %136 = arith.mulf %135, %134 : vector<16x256xf32>
    %137 = arith.mulf %136, %131 : vector<16x256xf32>
    %138 = arith.subf %133, %137 : vector<16x256xf32>
    %139 = arith.truncf %123 : vector<16x640xf32> to vector<16x640xbf16>
    %c0_63 = arith.constant 0 : index
    %c0_64 = arith.constant 0 : index
    %140 = vector.load %arg9[%c0_63, %c0_64] : memref<128x1408xbf16, #tpu.memory_space<vmem>>, vector<16x640xbf16>
    tpu.vector_store %arg9[%c0_63, %c0_64], %139 {strides = array<i32>} : memref<128x1408xbf16, #tpu.memory_space<vmem>>, vector<16x640xbf16>,
    %141 = arith.truncf %131 : vector<16x256xf32> to vector<16x256xbf16>
    %c0_65 = arith.constant 0 : index
    %c640_66 = arith.constant 640 : index
    %142 = vector.load %arg9[%c0_65, %c640_66] : memref<128x1408xbf16, #tpu.memory_space<vmem>>, vector<16x256xbf16>
    tpu.vector_store %arg9[%c0_65, %c640_66], %141 {strides = array<i32>} : memref<128x1408xbf16, #tpu.memory_space<vmem>>, vector<16x256xbf16>,
    %143 = arith.truncf %132 : vector<16x256xf32> to vector<16x256xbf16>
    %c0_67 = arith.constant 0 : index
    %c896_68 = arith.constant 896 : index
    %144 = vector.load %arg9[%c0_67, %c896_68] : memref<128x1408xbf16, #tpu.memory_space<vmem>>, vector<16x256xbf16>
    tpu.vector_store %arg9[%c0_67, %c896_68], %143 {strides = array<i32>} : memref<128x1408xbf16, #tpu.memory_space<vmem>>, vector<16x256xbf16>,
    %145 = arith.truncf %138 : vector<16x256xf32> to vector<16x256xbf16>
    %c0_69 = arith.constant 0 : index
    %c1152_70 = arith.constant 1152 : index
    %146 = vector.load %arg9[%c0_69, %c1152_70] : memref<128x1408xbf16, #tpu.memory_space<vmem>>, vector<16x256xbf16>
    tpu.vector_store %arg9[%c0_69, %c1152_70], %145 {strides = array<i32>} : memref<128x1408xbf16, #tpu.memory_space<vmem>>, vector<16x256xbf16>,
    %c3_i32 = arith.constant 3 : i32
    %147 = arith.index_cast %c3_i32 : i32 to index
    %c0_71 = arith.constant 0 : index
    %c0_72 = arith.constant 0 : index
    %148 = vector.load %arg3[%147, %c0_71, %c0_72] : memref<7x16x128xbf16, #tpu.memory_space<vmem>>, vector<1x16x128xbf16>
    %149 = vector.shape_cast %148 : vector<1x16x128xbf16> to vector<16x128xbf16>
    %c0_73 = arith.constant 0 : index
    %c0_74 = arith.constant 0 : index
    %150 = vector.load %arg9[%c0_73, %c0_74] : memref<128x1408xbf16, #tpu.memory_space<vmem>>, vector<128x1408xbf16>
    %cst_75 = arith.constant dense<0.000000e+00> : vector<16x1408xf32>
    %151 = tpu.matmul %149, %150, %cst_75 {dimension_numbers = #tpu.dot_dimension_numbers<[1], [0], [0], [1], [0, 0, 1, 1], [], []>} : vector<16x128xbf16>, vector<128x1408xbf16>, vector<16x1408xf32> -> vector<16x1408xf32>
    %152 = vector.extract_strided_slice %151 {offsets = [0, 0], sizes = [16, 640], strides = [1, 1]} : vector<16x1408xf32> to vector<16x640xf32>
    %c1_i32_76 = arith.constant 1 : i32
    %153 = arith.addi %c3_i32, %c1_i32_76 : i32
    %154 = arith.index_cast %153 : i32 to index
    %c0_77 = arith.constant 0 : index
    %c0_78 = arith.constant 0 : index
    %155 = vector.load %arg4[%154, %c0_77, %c0_78] : memref<8x16x1xf32, #tpu.memory_space<vmem>>, vector<1x16x1xf32>
    %156 = vector.shape_cast %155 : vector<1x16x1xf32> to vector<16x1xf32>
    %157 = vector.broadcast %156 : vector<16x1xf32> to vector<16x640xf32>
    %158 = arith.addf %152, %157 : vector<16x640xf32>
    %159 = math.tanh %158 : vector<16x640xf32>
    %160 = vector.extract_strided_slice %159 {offsets = [0, 0], sizes = [16, 256], strides = [1, 1]} : vector<16x640xf32> to vector<16x256xf32>
    %161 = arith.mulf %160, %160 : vector<16x256xf32>
    %cst_79 = arith.constant 1.000000e+00 : f32
    %162 = vector.broadcast %cst_79 : f32 to vector<16x256xf32>
    %163 = arith.subf %162, %161 : vector<16x256xf32>
    %164 = vector.extract_strided_slice %151 {offsets = [0, 640], sizes = [16, 256], strides = [1, 1]} : vector<16x1408xf32> to vector<16x256xf32>
    %165 = vector.extract_strided_slice %151 {offsets = [0, 896], sizes = [16, 256], strides = [1, 1]} : vector<16x1408xf32> to vector<16x256xf32>
    %166 = vector.extract_strided_slice %151 {offsets = [0, 1152], sizes = [16, 256], strides = [1, 1]} : vector<16x1408xf32> to vector<16x256xf32>
    %167 = arith.mulf %163, %164 : vector<16x256xf32>
    %168 = arith.mulf %163, %165 : vector<16x256xf32>
    %169 = arith.mulf %163, %166 : vector<16x256xf32>
    %170 = arith.mulf %160, %164 : vector<16x256xf32>
    %cst_80 = arith.constant 2.000000e+00 : f32
    %171 = vector.broadcast %cst_80 : f32 to vector<16x256xf32>
    %172 = arith.mulf %171, %170 : vector<16x256xf32>
    %173 = arith.mulf %172, %167 : vector<16x256xf32>
    %174 = arith.subf %169, %173 : vector<16x256xf32>
    %175 = arith.truncf %159 : vector<16x640xf32> to vector<16x640xbf16>
    %c0_81 = arith.constant 0 : index
    %c0_82 = arith.constant 0 : index
    %176 = vector.load %arg9[%c0_81, %c0_82] : memref<128x1408xbf16, #tpu.memory_space<vmem>>, vector<16x640xbf16>
    tpu.vector_store %arg9[%c0_81, %c0_82], %175 {strides = array<i32>} : memref<128x1408xbf16, #tpu.memory_space<vmem>>, vector<16x640xbf16>,
    %177 = arith.truncf %167 : vector<16x256xf32> to vector<16x256xbf16>
    %c0_83 = arith.constant 0 : index
    %c640_84 = arith.constant 640 : index
    %178 = vector.load %arg9[%c0_83, %c640_84] : memref<128x1408xbf16, #tpu.memory_space<vmem>>, vector<16x256xbf16>
    tpu.vector_store %arg9[%c0_83, %c640_84], %177 {strides = array<i32>} : memref<128x1408xbf16, #tpu.memory_space<vmem>>, vector<16x256xbf16>,
    %179 = arith.truncf %168 : vector<16x256xf32> to vector<16x256xbf16>
    %c0_85 = arith.constant 0 : index
    %c896_86 = arith.constant 896 : index
    %180 = vector.load %arg9[%c0_85, %c896_86] : memref<128x1408xbf16, #tpu.memory_space<vmem>>, vector<16x256xbf16>
    tpu.vector_store %arg9[%c0_85, %c896_86], %179 {strides = array<i32>} : memref<128x1408xbf16, #tpu.memory_space<vmem>>, vector<16x256xbf16>,
    %181 = arith.truncf %174 : vector<16x256xf32> to vector<16x256xbf16>
    %c0_87 = arith.constant 0 : index
    %c1152_88 = arith.constant 1152 : index
    %182 = vector.load %arg9[%c0_87, %c1152_88] : memref<128x1408xbf16, #tpu.memory_space<vmem>>, vector<16x256xbf16>
    tpu.vector_store %arg9[%c0_87, %c1152_88], %181 {strides = array<i32>} : memref<128x1408xbf16, #tpu.memory_space<vmem>>, vector<16x256xbf16>,
    %c4_i32 = arith.constant 4 : i32
    %183 = arith.index_cast %c4_i32 : i32 to index
    %c0_89 = arith.constant 0 : index
    %c0_90 = arith.constant 0 : index
    %184 = vector.load %arg3[%183, %c0_89, %c0_90] : memref<7x16x128xbf16, #tpu.memory_space<vmem>>, vector<1x16x128xbf16>
    %185 = vector.shape_cast %184 : vector<1x16x128xbf16> to vector<16x128xbf16>
    %c0_91 = arith.constant 0 : index
    %c0_92 = arith.constant 0 : index
    %186 = vector.load %arg9[%c0_91, %c0_92] : memref<128x1408xbf16, #tpu.memory_space<vmem>>, vector<128x1408xbf16>
    %cst_93 = arith.constant dense<0.000000e+00> : vector<16x1408xf32>
    %187 = tpu.matmul %185, %186, %cst_93 {dimension_numbers = #tpu.dot_dimension_numbers<[1], [0], [0], [1], [0, 0, 1, 1], [], []>} : vector<16x128xbf16>, vector<128x1408xbf16>, vector<16x1408xf32> -> vector<16x1408xf32>
    %188 = vector.extract_strided_slice %187 {offsets = [0, 0], sizes = [16, 640], strides = [1, 1]} : vector<16x1408xf32> to vector<16x640xf32>
    %c1_i32_94 = arith.constant 1 : i32
    %189 = arith.addi %c4_i32, %c1_i32_94 : i32
    %190 = arith.index_cast %189 : i32 to index
    %c0_95 = arith.constant 0 : index
    %c0_96 = arith.constant 0 : index
    %191 = vector.load %arg4[%190, %c0_95, %c0_96] : memref<8x16x1xf32, #tpu.memory_space<vmem>>, vector<1x16x1xf32>
    %192 = vector.shape_cast %191 : vector<1x16x1xf32> to vector<16x1xf32>
    %193 = vector.broadcast %192 : vector<16x1xf32> to vector<16x640xf32>
    %194 = arith.addf %188, %193 : vector<16x640xf32>
    %195 = math.tanh %194 : vector<16x640xf32>
    %196 = vector.extract_strided_slice %195 {offsets = [0, 0], sizes = [16, 256], strides = [1, 1]} : vector<16x640xf32> to vector<16x256xf32>
    %197 = arith.mulf %196, %196 : vector<16x256xf32>
    %cst_97 = arith.constant 1.000000e+00 : f32
    %198 = vector.broadcast %cst_97 : f32 to vector<16x256xf32>
    %199 = arith.subf %198, %197 : vector<16x256xf32>
    %200 = vector.extract_strided_slice %187 {offsets = [0, 640], sizes = [16, 256], strides = [1, 1]} : vector<16x1408xf32> to vector<16x256xf32>
    %201 = vector.extract_strided_slice %187 {offsets = [0, 896], sizes = [16, 256], strides = [1, 1]} : vector<16x1408xf32> to vector<16x256xf32>
    %202 = vector.extract_strided_slice %187 {offsets = [0, 1152], sizes = [16, 256], strides = [1, 1]} : vector<16x1408xf32> to vector<16x256xf32>
    %203 = arith.mulf %199, %200 : vector<16x256xf32>
    %204 = arith.mulf %199, %201 : vector<16x256xf32>
    %205 = arith.mulf %199, %202 : vector<16x256xf32>
    %206 = arith.mulf %196, %200 : vector<16x256xf32>
    %cst_98 = arith.constant 2.000000e+00 : f32
    %207 = vector.broadcast %cst_98 : f32 to vector<16x256xf32>
    %208 = arith.mulf %207, %206 : vector<16x256xf32>
    %209 = arith.mulf %208, %203 : vector<16x256xf32>
    %210 = arith.subf %205, %209 : vector<16x256xf32>
    %211 = arith.truncf %195 : vector<16x640xf32> to vector<16x640xbf16>
    %c0_99 = arith.constant 0 : index
    %c0_100 = arith.constant 0 : index
    %212 = vector.load %arg9[%c0_99, %c0_100] : memref<128x1408xbf16, #tpu.memory_space<vmem>>, vector<16x640xbf16>
    tpu.vector_store %arg9[%c0_99, %c0_100], %211 {strides = array<i32>} : memref<128x1408xbf16, #tpu.memory_space<vmem>>, vector<16x640xbf16>,
    %213 = arith.truncf %203 : vector<16x256xf32> to vector<16x256xbf16>
    %c0_101 = arith.constant 0 : index
    %c640_102 = arith.constant 640 : index
    %214 = vector.load %arg9[%c0_101, %c640_102] : memref<128x1408xbf16, #tpu.memory_space<vmem>>, vector<16x256xbf16>
    tpu.vector_store %arg9[%c0_101, %c640_102], %213 {strides = array<i32>} : memref<128x1408xbf16, #tpu.memory_space<vmem>>, vector<16x256xbf16>,
    %215 = arith.truncf %204 : vector<16x256xf32> to vector<16x256xbf16>
    %c0_103 = arith.constant 0 : index
    %c896_104 = arith.constant 896 : index
    %216 = vector.load %arg9[%c0_103, %c896_104] : memref<128x1408xbf16, #tpu.memory_space<vmem>>, vector<16x256xbf16>
    tpu.vector_store %arg9[%c0_103, %c896_104], %215 {strides = array<i32>} : memref<128x1408xbf16, #tpu.memory_space<vmem>>, vector<16x256xbf16>,
    %217 = arith.truncf %210 : vector<16x256xf32> to vector<16x256xbf16>
    %c0_105 = arith.constant 0 : index
    %c1152_106 = arith.constant 1152 : index
    %218 = vector.load %arg9[%c0_105, %c1152_106] : memref<128x1408xbf16, #tpu.memory_space<vmem>>, vector<16x256xbf16>
    tpu.vector_store %arg9[%c0_105, %c1152_106], %217 {strides = array<i32>} : memref<128x1408xbf16, #tpu.memory_space<vmem>>, vector<16x256xbf16>,
    %c5_i32 = arith.constant 5 : i32
    %219 = arith.index_cast %c5_i32 : i32 to index
    %c0_107 = arith.constant 0 : index
    %c0_108 = arith.constant 0 : index
    %220 = vector.load %arg3[%219, %c0_107, %c0_108] : memref<7x16x128xbf16, #tpu.memory_space<vmem>>, vector<1x16x128xbf16>
    %221 = vector.shape_cast %220 : vector<1x16x128xbf16> to vector<16x128xbf16>
    %c0_109 = arith.constant 0 : index
    %c0_110 = arith.constant 0 : index
    %222 = vector.load %arg9[%c0_109, %c0_110] : memref<128x1408xbf16, #tpu.memory_space<vmem>>, vector<128x1408xbf16>
    %cst_111 = arith.constant dense<0.000000e+00> : vector<16x1408xf32>
    %223 = tpu.matmul %221, %222, %cst_111 {dimension_numbers = #tpu.dot_dimension_numbers<[1], [0], [0], [1], [0, 0, 1, 1], [], []>} : vector<16x128xbf16>, vector<128x1408xbf16>, vector<16x1408xf32> -> vector<16x1408xf32>
    %224 = vector.extract_strided_slice %223 {offsets = [0, 0], sizes = [16, 640], strides = [1, 1]} : vector<16x1408xf32> to vector<16x640xf32>
    %c1_i32_112 = arith.constant 1 : i32
    %225 = arith.addi %c5_i32, %c1_i32_112 : i32
    %226 = arith.index_cast %225 : i32 to index
    %c0_113 = arith.constant 0 : index
    %c0_114 = arith.constant 0 : index
    %227 = vector.load %arg4[%226, %c0_113, %c0_114] : memref<8x16x1xf32, #tpu.memory_space<vmem>>, vector<1x16x1xf32>
    %228 = vector.shape_cast %227 : vector<1x16x1xf32> to vector<16x1xf32>
    %229 = vector.broadcast %228 : vector<16x1xf32> to vector<16x640xf32>
    %230 = arith.addf %224, %229 : vector<16x640xf32>
    %231 = math.tanh %230 : vector<16x640xf32>
    %232 = vector.extract_strided_slice %231 {offsets = [0, 0], sizes = [16, 256], strides = [1, 1]} : vector<16x640xf32> to vector<16x256xf32>
    %233 = arith.mulf %232, %232 : vector<16x256xf32>
    %cst_115 = arith.constant 1.000000e+00 : f32
    %234 = vector.broadcast %cst_115 : f32 to vector<16x256xf32>
    %235 = arith.subf %234, %233 : vector<16x256xf32>
    %236 = vector.extract_strided_slice %223 {offsets = [0, 640], sizes = [16, 256], strides = [1, 1]} : vector<16x1408xf32> to vector<16x256xf32>
    %237 = vector.extract_strided_slice %223 {offsets = [0, 896], sizes = [16, 256], strides = [1, 1]} : vector<16x1408xf32> to vector<16x256xf32>
    %238 = vector.extract_strided_slice %223 {offsets = [0, 1152], sizes = [16, 256], strides = [1, 1]} : vector<16x1408xf32> to vector<16x256xf32>
    %239 = arith.mulf %235, %236 : vector<16x256xf32>
    %240 = arith.mulf %235, %237 : vector<16x256xf32>
    %241 = arith.mulf %235, %238 : vector<16x256xf32>
    %242 = arith.mulf %232, %236 : vector<16x256xf32>
    %cst_116 = arith.constant 2.000000e+00 : f32
    %243 = vector.broadcast %cst_116 : f32 to vector<16x256xf32>
    %244 = arith.mulf %243, %242 : vector<16x256xf32>
    %245 = arith.mulf %244, %239 : vector<16x256xf32>
    %246 = arith.subf %241, %245 : vector<16x256xf32>
    %247 = arith.truncf %231 : vector<16x640xf32> to vector<16x640xbf16>
    %c0_117 = arith.constant 0 : index
    %c0_118 = arith.constant 0 : index
    %248 = vector.load %arg9[%c0_117, %c0_118] : memref<128x1408xbf16, #tpu.memory_space<vmem>>, vector<16x640xbf16>
    tpu.vector_store %arg9[%c0_117, %c0_118], %247 {strides = array<i32>} : memref<128x1408xbf16, #tpu.memory_space<vmem>>, vector<16x640xbf16>,
    %249 = arith.truncf %239 : vector<16x256xf32> to vector<16x256xbf16>
    %c0_119 = arith.constant 0 : index
    %c640_120 = arith.constant 640 : index
    %250 = vector.load %arg9[%c0_119, %c640_120] : memref<128x1408xbf16, #tpu.memory_space<vmem>>, vector<16x256xbf16>
    tpu.vector_store %arg9[%c0_119, %c640_120], %249 {strides = array<i32>} : memref<128x1408xbf16, #tpu.memory_space<vmem>>, vector<16x256xbf16>,
    %251 = arith.truncf %240 : vector<16x256xf32> to vector<16x256xbf16>
    %c0_121 = arith.constant 0 : index
    %c896_122 = arith.constant 896 : index
    %252 = vector.load %arg9[%c0_121, %c896_122] : memref<128x1408xbf16, #tpu.memory_space<vmem>>, vector<16x256xbf16>
    tpu.vector_store %arg9[%c0_121, %c896_122], %251 {strides = array<i32>} : memref<128x1408xbf16, #tpu.memory_space<vmem>>, vector<16x256xbf16>,
    %253 = arith.truncf %246 : vector<16x256xf32> to vector<16x256xbf16>
    %c0_123 = arith.constant 0 : index
    %c1152_124 = arith.constant 1152 : index
    %254 = vector.load %arg9[%c0_123, %c1152_124] : memref<128x1408xbf16, #tpu.memory_space<vmem>>, vector<16x256xbf16>
    tpu.vector_store %arg9[%c0_123, %c1152_124], %253 {strides = array<i32>} : memref<128x1408xbf16, #tpu.memory_space<vmem>>, vector<16x256xbf16>,
    %c6_i32 = arith.constant 6 : i32
    %255 = arith.index_cast %c6_i32 : i32 to index
    %c0_125 = arith.constant 0 : index
    %c0_126 = arith.constant 0 : index
    %256 = vector.load %arg3[%255, %c0_125, %c0_126] : memref<7x16x128xbf16, #tpu.memory_space<vmem>>, vector<1x16x128xbf16>
    %257 = vector.shape_cast %256 : vector<1x16x128xbf16> to vector<16x128xbf16>
    %c0_127 = arith.constant 0 : index
    %c0_128 = arith.constant 0 : index
    %258 = vector.load %arg9[%c0_127, %c0_128] : memref<128x1408xbf16, #tpu.memory_space<vmem>>, vector<128x1408xbf16>
    %cst_129 = arith.constant dense<0.000000e+00> : vector<16x1408xf32>
    %259 = tpu.matmul %257, %258, %cst_129 {dimension_numbers = #tpu.dot_dimension_numbers<[1], [0], [0], [1], [0, 0, 1, 1], [], []>} : vector<16x128xbf16>, vector<128x1408xbf16>, vector<16x1408xf32> -> vector<16x1408xf32>
    %260 = vector.extract_strided_slice %259 {offsets = [0, 0], sizes = [16, 640], strides = [1, 1]} : vector<16x1408xf32> to vector<16x640xf32>
    %c1_i32_130 = arith.constant 1 : i32
    %261 = arith.addi %c6_i32, %c1_i32_130 : i32
    %262 = arith.index_cast %261 : i32 to index
    %c0_131 = arith.constant 0 : index
    %c0_132 = arith.constant 0 : index
    %263 = vector.load %arg4[%262, %c0_131, %c0_132] : memref<8x16x1xf32, #tpu.memory_space<vmem>>, vector<1x16x1xf32>
    %264 = vector.shape_cast %263 : vector<1x16x1xf32> to vector<16x1xf32>
    %265 = vector.broadcast %264 : vector<16x1xf32> to vector<16x640xf32>
    %266 = arith.addf %260, %265 : vector<16x640xf32>
    %267 = math.tanh %266 : vector<16x640xf32>
    %268 = vector.extract_strided_slice %267 {offsets = [0, 0], sizes = [16, 256], strides = [1, 1]} : vector<16x640xf32> to vector<16x256xf32>
    %269 = arith.mulf %268, %268 : vector<16x256xf32>
    %cst_133 = arith.constant 1.000000e+00 : f32
    %270 = vector.broadcast %cst_133 : f32 to vector<16x256xf32>
    %271 = arith.subf %270, %269 : vector<16x256xf32>
    %272 = vector.extract_strided_slice %259 {offsets = [0, 640], sizes = [16, 256], strides = [1, 1]} : vector<16x1408xf32> to vector<16x256xf32>
    %273 = vector.extract_strided_slice %259 {offsets = [0, 896], sizes = [16, 256], strides = [1, 1]} : vector<16x1408xf32> to vector<16x256xf32>
    %274 = vector.extract_strided_slice %259 {offsets = [0, 1152], sizes = [16, 256], strides = [1, 1]} : vector<16x1408xf32> to vector<16x256xf32>
    %275 = arith.mulf %271, %272 : vector<16x256xf32>
    %276 = arith.mulf %271, %273 : vector<16x256xf32>
    %277 = arith.mulf %271, %274 : vector<16x256xf32>
    %278 = arith.mulf %268, %272 : vector<16x256xf32>
    %cst_134 = arith.constant 2.000000e+00 : f32
    %279 = vector.broadcast %cst_134 : f32 to vector<16x256xf32>
    %280 = arith.mulf %279, %278 : vector<16x256xf32>
    %281 = arith.mulf %280, %275 : vector<16x256xf32>
    %282 = arith.subf %277, %281 : vector<16x256xf32>
    %283 = arith.truncf %267 : vector<16x640xf32> to vector<16x640xbf16>
    %c0_135 = arith.constant 0 : index
    %c0_136 = arith.constant 0 : index
    %284 = vector.load %arg9[%c0_135, %c0_136] : memref<128x1408xbf16, #tpu.memory_space<vmem>>, vector<16x640xbf16>
    tpu.vector_store %arg9[%c0_135, %c0_136], %283 {strides = array<i32>} : memref<128x1408xbf16, #tpu.memory_space<vmem>>, vector<16x640xbf16>,
    %285 = arith.truncf %275 : vector<16x256xf32> to vector<16x256xbf16>
    %c0_137 = arith.constant 0 : index
    %c640_138 = arith.constant 640 : index
    %286 = vector.load %arg9[%c0_137, %c640_138] : memref<128x1408xbf16, #tpu.memory_space<vmem>>, vector<16x256xbf16>
    tpu.vector_store %arg9[%c0_137, %c640_138], %285 {strides = array<i32>} : memref<128x1408xbf16, #tpu.memory_space<vmem>>, vector<16x256xbf16>,
    %287 = arith.truncf %276 : vector<16x256xf32> to vector<16x256xbf16>
    %c0_139 = arith.constant 0 : index
    %c896_140 = arith.constant 896 : index
    %288 = vector.load %arg9[%c0_139, %c896_140] : memref<128x1408xbf16, #tpu.memory_space<vmem>>, vector<16x256xbf16>
    tpu.vector_store %arg9[%c0_139, %c896_140], %287 {strides = array<i32>} : memref<128x1408xbf16, #tpu.memory_space<vmem>>, vector<16x256xbf16>,
    %289 = arith.truncf %282 : vector<16x256xf32> to vector<16x256xbf16>
    %c0_141 = arith.constant 0 : index
    %c1152_142 = arith.constant 1152 : index
    %290 = vector.load %arg9[%c0_141, %c1152_142] : memref<128x1408xbf16, #tpu.memory_space<vmem>>, vector<16x256xbf16>
    tpu.vector_store %arg9[%c0_141, %c1152_142], %289 {strides = array<i32>} : memref<128x1408xbf16, #tpu.memory_space<vmem>>, vector<16x256xbf16>,
    %c7_i32 = arith.constant 7 : i32
    %c0_143 = arith.constant 0 : index
    %c0_144 = arith.constant 0 : index
    %291 = vector.load %arg9[%c0_143, %c0_144] : memref<128x1408xbf16, #tpu.memory_space<vmem>>, vector<16x1408xbf16>
    %292 = arith.extf %291 : vector<16x1408xbf16> to vector<16x1408xf32>
    %c0_145 = arith.constant 0 : index
    %c0_146 = arith.constant 0 : index
    %293 = vector.load %arg5[%c0_145, %c0_146] : memref<16x1xf32, #tpu.memory_space<vmem>>, vector<16x1xf32>
    %294 = vector.broadcast %293 : vector<16x1xf32> to vector<16x1408xf32>
    %295 = arith.mulf %292, %294 : vector<16x1408xf32>
    %cst_147 = arith.constant dense<0.000000e+00> : vector<1408xf32>
    %296 = vector.multi_reduction <add>, %295, %cst_147 [0] : vector<16x1408xf32> to vector<1408xf32>
    %297 = vector.shape_cast %296 : vector<1408xf32> to vector<1x1408xf32>
    %c0_148 = arith.constant 0 : index
    %c0_149 = arith.constant 0 : index
    %298 = vector.load %arg6[%c0_148, %c0_149] : memref<1x1xf32, #tpu.memory_space<vmem>>, vector<1x1xf32>
    %299 = vector.extract_strided_slice %297 {offsets = [0, 0], sizes = [1, 640], strides = [1, 1]} : vector<1x1408xf32> to vector<1x640xf32>
    %300 = vector.broadcast %298 : vector<1x1xf32> to vector<1x640xf32>
    %301 = arith.addf %299, %300 : vector<1x640xf32>
    %c0_150 = arith.constant 0 : index
    %c0_151 = arith.constant 0 : index
    %302 = vector.load %arg7[%c0_150, %c0_151] : memref<1x640xf32, #tpu.memory_space<vmem>>, vector<1x640xf32>
    tpu.vector_store %arg7[%c0_150, %c0_151], %301 {strides = array<i32>} : memref<1x640xf32, #tpu.memory_space<vmem>>, vector<1x640xf32>,
    %303 = vector.extract_strided_slice %297 {offsets = [0, 640], sizes = [1, 256], strides = [1, 1]} : vector<1x1408xf32> to vector<1x256xf32>
    %304 = vector.extract_strided_slice %297 {offsets = [0, 896], sizes = [1, 256], strides = [1, 1]} : vector<1x1408xf32> to vector<1x256xf32>
    %305 = vector.extract_strided_slice %297 {offsets = [0, 1152], sizes = [1, 256], strides = [1, 1]} : vector<1x1408xf32> to vector<1x256xf32>
    %306 = vector.extract_strided_slice %301 {offsets = [0, 0], sizes = [1, 256], strides = [1, 1]} : vector<1x640xf32> to vector<1x256xf32>
    %307 = arith.mulf %306, %303 : vector<1x256xf32>
    %308 = arith.addf %304, %307 : vector<1x256xf32>
    %cst_152 = arith.constant 0.00318309898 : f32
    %309 = vector.broadcast %cst_152 : f32 to vector<1x256xf32>
    %310 = arith.mulf %309, %305 : vector<1x256xf32>
    %311 = arith.subf %308, %310 : vector<1x256xf32>
    %312 = arith.mulf %311, %311 : vector<1x256xf32>
    %313 = vector.shape_cast %312 : vector<1x256xf32> to vector<1x1x256xf32>
    %cst_153 = arith.constant dense<0.000000e+00> : vector<1xf32>
    %314 = vector.multi_reduction <add>, %313, %cst_153 [1, 2] : vector<1x1x256xf32> to vector<1xf32>
    %315 = vector.shape_cast %314 : vector<1xf32> to vector<1x1x1xf32>
    %316 = vector.extract %315[0, 0, 0] : f32 from vector<1x1x1xf32>
    %317 = vector.broadcast %316 : f32 to vector<1x1xf32>
    %cst_154 = arith.constant 2.560000e+02 : f32
    %318 = vector.broadcast %cst_154 : f32 to vector<1x1xf32>
    %319 = arith.divf %317, %318 : vector<1x1xf32>
    %320 = vector.extract_strided_slice %301 {offsets = [0, 256], sizes = [1, 128], strides = [1, 1]} : vector<1x640xf32> to vector<1x128xf32>
    %c0_155 = arith.constant 0 : index
    %c0_156 = arith.constant 0 : index
    %321 = vector.load %arg1[%c0_155, %c0_156] : memref<1x128xf32, #tpu.memory_space<vmem>>, vector<1x128xf32>
    %322 = arith.subf %320, %321 : vector<1x128xf32>
    %323 = arith.mulf %322, %322 : vector<1x128xf32>
    %324 = vector.shape_cast %323 : vector<1x128xf32> to vector<1x1x128xf32>
    %cst_157 = arith.constant dense<0.000000e+00> : vector<1xf32>
    %325 = vector.multi_reduction <add>, %324, %cst_157 [1, 2] : vector<1x1x128xf32> to vector<1xf32>
    %326 = vector.shape_cast %325 : vector<1xf32> to vector<1x1x1xf32>
    %327 = vector.extract %326[0, 0, 0] : f32 from vector<1x1x1xf32>
    %328 = vector.broadcast %327 : f32 to vector<1x1xf32>
    %cst_158 = arith.constant 1.280000e+02 : f32
    %329 = vector.broadcast %cst_158 : f32 to vector<1x1xf32>
    %330 = arith.divf %328, %329 : vector<1x1xf32>
    %331 = vector.extract_strided_slice %301 {offsets = [0, 384], sizes = [1, 128], strides = [1, 1]} : vector<1x640xf32> to vector<1x128xf32>
    %332 = vector.extract_strided_slice %301 {offsets = [0, 512], sizes = [1, 128], strides = [1, 1]} : vector<1x640xf32> to vector<1x128xf32>
    %333 = arith.mulf %331, %331 : vector<1x128xf32>
    %334 = vector.shape_cast %333 : vector<1x128xf32> to vector<1x1x128xf32>
    %cst_159 = arith.constant dense<0.000000e+00> : vector<1xf32>
    %335 = vector.multi_reduction <add>, %334, %cst_159 [1, 2] : vector<1x1x128xf32> to vector<1xf32>
    %336 = vector.shape_cast %335 : vector<1xf32> to vector<1x1x1xf32>
    %337 = vector.extract %336[0, 0, 0] : f32 from vector<1x1x1xf32>
    %338 = vector.broadcast %337 : f32 to vector<1x1xf32>
    %cst_160 = arith.constant 1.280000e+02 : f32
    %339 = vector.broadcast %cst_160 : f32 to vector<1x1xf32>
    %340 = arith.divf %338, %339 : vector<1x1xf32>
    %341 = arith.mulf %332, %332 : vector<1x128xf32>
    %342 = vector.shape_cast %341 : vector<1x128xf32> to vector<1x1x128xf32>
    %cst_161 = arith.constant dense<0.000000e+00> : vector<1xf32>
    %343 = vector.multi_reduction <add>, %342, %cst_161 [1, 2] : vector<1x1x128xf32> to vector<1xf32>
    %344 = vector.shape_cast %343 : vector<1xf32> to vector<1x1x1xf32>
    %345 = vector.extract %344[0, 0, 0] : f32 from vector<1x1x1xf32>
    %346 = vector.broadcast %345 : f32 to vector<1x1xf32>
    %cst_162 = arith.constant 1.280000e+02 : f32
    %347 = vector.broadcast %cst_162 : f32 to vector<1x1xf32>
    %348 = arith.divf %346, %347 : vector<1x1xf32>
    %349 = arith.addf %340, %348 : vector<1x1xf32>
    %350 = arith.addf %319, %330 : vector<1x1xf32>
    %351 = arith.addf %350, %349 : vector<1x1xf32>
    %c0_163 = arith.constant 0 : index
    %c0_164 = arith.constant 0 : index
    %352 = vector.load %arg8[%c0_163, %c0_164] : memref<1x1xf32, #tpu.memory_space<vmem>>, vector<1x1xf32>
    tpu.vector_store %arg8[%c0_163, %c0_164], %351 {strides = array<i32>} : memref<1x1xf32, #tpu.memory_space<vmem>>, vector<1x1xf32>,
    return
  }
}

</mosaic_0001>

<llo_original>
// kernel: tpu_custom_call.1
$region0: #{tpu_custom_call.1}
  #allocation0 [shape = 'u32[]', space=smem, size = 0x4, offset = 0x4, fixed_abs, tag = 'smem constant byte address 0x4 - core index']
  #allocation1 [shape = 'u32[144,128]{1,0:T(1,128)}', space=vmem, size = 0x12000, scoped, tag = 'internal scratch']
  #allocation2 [shape = 'bf16[128,1408]{1,0:T(8,128)(2,1)}', space=vmem, size = 0x58000, scoped, tag = 'scratch operand']
  #allocation3 [shape = 'f32[1,1]{1,0:T(1,128)S(1)}', space=vmem, size = 0x200, scoped, tag = 'scoped memory for tpu_custom_call.1']
  %s0 = inlined_call_operand.vmem [shape: f32[2,640], index: 0, kind: input, shape index: {}]
  %s1 = inlined_call_operand.vmem [shape: f32[1,128], index: 1, kind: input, shape index: {}]
  %s2 = inlined_call_operand.vmem [shape: f32[16,2], index: 2, kind: input, shape index: {}]
  %s3 = inlined_call_operand.vmem [shape: bf16[7,16,128], index: 3, kind: input, shape index: {}]
  %s4 = inlined_call_operand.vmem [shape: f32[8,16,1], index: 4, kind: input, shape index: {}]
  %s5 = inlined_call_operand.vmem [shape: f32[16,1], index: 5, kind: input, shape index: {}]
  %s6 = inlined_call_operand.<no memory space> [shape: f32[1,1], index: 6, kind: input, shape index: {}]
  %s7 = inlined_call_operand.hbm [shape: f32[1,640], index: 7, kind: output, shape index: {0}]
  %s8 = inlined_call_operand.hbm [shape: f32[1,1], index: 8, kind: output, shape index: {1}]
  %9 = xla_tuple %s7, %s8
  %s10 = sld [smem:[#allocation0]]
  $region46: #{tpu_custom_call.1} parent=0
    _
  %s12 = ssub.s32 1, %s10
  %s13 = scalar_select 0, %s12, %s10
  %v14 = vstv %s6
  %15 = vst [vmem:[#allocation3] sm:$0x1] %v14
  $region1: #{tpu_custom_call.1} parent=0
    #allocation4 [shape = 'u8[2560]{0}', space=vmem, size = 0xc00, scoped, tag = 'output window, operand 0, single buffered']
    #allocation5 [shape = 's32[1]{0}', space=sflag, size = 0x4, scoped, tag = 'scoped memory for tpu_custom_call.1']
    #allocation6 [shape = 'u8[512]{0}', space=vmem, size = 0x400, scoped, tag = 'output window, operand 1, single buffered']
    #allocation7 [shape = 's32[1]{0}', space=sflag, size = 0x4, scoped, tag = 'scoped memory for tpu_custom_call.1']
    %16 = vsyncpa [#allocation5], 0
    %17 = vsyncpa [#allocation7], 0
    // Predicated region
    $region2: #{tpu_custom_call.1} parent=1 // pred_check
      _
    $region3: #{tpu_custom_call.1} parent=1 // pred_check_branch
      %19 = sbr.rel (0) target = $region5
    $region4: #{tpu_custom_call.1} parent=1 // pred_region
      _
    $region5: #{tpu_custom_call.1} parent=1 // pred_fallthru
      _
    // Predicated region
    $region6: #{tpu_custom_call.1} parent=1 // pred_check
      _
    $region7: #{tpu_custom_call.1} parent=1 // pred_check_branch
      %21 = sbr.rel (0) target = $region9
    $region8: #{tpu_custom_call.1} parent=1 // pred_region
      _
    $region9: #{tpu_custom_call.1} parent=1 // pred_fallthru
      _
    // Predicated region
    $region10: #{tpu_custom_call.1} parent=1 // pred_check
      _
    $region11: #{tpu_custom_call.1} parent=1 // pred_check_branch
      %23 = sbr.rel (0) target = $region13
    $region12: #{tpu_custom_call.1} parent=1 // pred_region
      _
    $region13: #{tpu_custom_call.1} parent=1 // pred_fallthru
      _
    // Predicated region
    $region14: #{tpu_custom_call.1} parent=1 // pred_check
      _
    $region15: #{tpu_custom_call.1} parent=1 // pred_check_branch
      %25 = sbr.rel (0) target = $region17
    $region16: #{tpu_custom_call.1} parent=1 // pred_region
      _
    $region17: #{tpu_custom_call.1} parent=1 // pred_fallthru
      _
    // Predicated region
    $region18: #{tpu_custom_call.1} parent=1 // pred_check
      _
    $region19: #{tpu_custom_call.1} parent=1 // pred_check_branch
      %27 = sbr.rel (0) target = $region21
    $region20: #{tpu_custom_call.1} parent=1 // pred_region
      _
    $region21: #{tpu_custom_call.1} parent=1 // pred_fallthru
      _
    // Predicated region
    $region22: #{tpu_custom_call.1} parent=1 // pred_check
      _
    $region23: #{tpu_custom_call.1} parent=1 // pred_check_branch
      %29 = sbr.rel (0) target = $region25
    $region24: #{tpu_custom_call.1} parent=1 // pred_region
      _
    $region25: #{tpu_custom_call.1} parent=1 // pred_fallthru
      _
    // Predicated region
    $region26: #{tpu_custom_call.1} parent=1 // pred_check
      _
    $region27: #{tpu_custom_call.1} parent=1 // pred_check_branch
      %31 = sbr.rel (0) target = $region29
    $region28: #{tpu_custom_call.1} parent=1 // pred_region
      _
    $region29: #{tpu_custom_call.1} parent=1 // pred_fallthru
      _
    %33 = vst [vmem:[#allocation2 + $0x58] sm:$0xff] 0
    %34 = vst [vmem:[#allocation2 + $0x60] sm:$0xff] 0
    %35 = vst [vmem:[#allocation2 + $0x68] sm:$0xff] 0
    %36 = vst [vmem:[#allocation2 + $0x70] sm:$0xff] 0
    %37 = vst [vmem:[#allocation2 + $0x78] sm:$0xff] 0
    %38 = vst [vmem:[#allocation2 + $0x80] sm:$0xf] 0
    %39 = vst [vmem:[#allocation2 + $0x84] sm:$0xff] 0
    %40 = vst [vmem:[#allocation2 + $0x8c] sm:$0xff] 0
    %41 = vst [vmem:[#allocation2 + $0x94] sm:$0xff] 0
    %42 = vst [vmem:[#allocation2 + $0x9c] sm:$0xff] 0
    %43 = vst [vmem:[#allocation2 + $0xa4] sm:$0xff] 0
    %44 = vst [vmem:[#allocation2 + $0xac] sm:$0xf] 0
    %45 = vst [vmem:[#allocation2 + $0xb0] sm:$0xff] 0
    %46 = vst [vmem:[#allocation2 + $0xb8] sm:$0xff] 0
    %47 = vst [vmem:[#allocation2 + $0xc0] sm:$0xff] 0
    %48 = vst [vmem:[#allocation2 + $0xc8] sm:$0xff] 0
    %49 = vst [vmem:[#allocation2 + $0xd0] sm:$0xff] 0
    %50 = vst [vmem:[#allocation2 + $0xd8] sm:$0xf] 0
    %51 = vst [vmem:[#allocation2 + $0xdc] sm:$0xff] 0
    %52 = vst [vmem:[#allocation2 + $0xe4] sm:$0xff] 0
    %53 = vst [vmem:[#allocation2 + $0xec] sm:$0xff] 0
    %54 = vst [vmem:[#allocation2 + $0xf4] sm:$0xff] 0
    %55 = vst [vmem:[#allocation2 + $0xfc] sm:$0xff] 0
    %56 = vst [vmem:[#allocation2 + $0x104] sm:$0xf] 0
    %57 = vst [vmem:[#allocation2 + $0x108] sm:$0xff] 0
    %58 = vst [vmem:[#allocation2 + $0x110] sm:$0xff] 0
    %59 = vst [vmem:[#allocation2 + $0x118] sm:$0xff] 0
    %60 = vst [vmem:[#allocation2 + $0x120] sm:$0xff] 0
    %61 = vst [vmem:[#allocation2 + $0x128] sm:$0xff] 0
    %62 = vst [vmem:[#allocation2 + $0x130] sm:$0xf] 0
    %63 = vst [vmem:[#allocation2 + $0x134] sm:$0xff] 0
    %64 = vst [vmem:[#allocation2 + $0x13c] sm:$0xff] 0
    %65 = vst [vmem:[#allocation2 + $0x144] sm:$0xff] 0
    %66 = vst [vmem:[#allocation2 + $0x14c] sm:$0xff] 0
    %67 = vst [vmem:[#allocation2 + $0x154] sm:$0xff] 0
    %68 = vst [vmem:[#allocation2 + $0x15c] sm:$0xf] 0
    %69 = vst [vmem:[#allocation2 + $0x160] sm:$0xff] 0
    %70 = vst [vmem:[#allocation2 + $0x168] sm:$0xff] 0
    %71 = vst [vmem:[#allocation2 + $0x170] sm:$0xff] 0
    %72 = vst [vmem:[#allocation2 + $0x178] sm:$0xff] 0
    %73 = vst [vmem:[#allocation2 + $0x180] sm:$0xff] 0
    %74 = vst [vmem:[#allocation2 + $0x188] sm:$0xf] 0
    %75 = vst [vmem:[#allocation2 + $0x18c] sm:$0xff] 0
    %76 = vst [vmem:[#allocation2 + $0x194] sm:$0xff] 0
    %77 = vst [vmem:[#allocation2 + $0x19c] sm:$0xff] 0
    %78 = vst [vmem:[#allocation2 + $0x1a4] sm:$0xff] 0
    %79 = vst [vmem:[#allocation2 + $0x1ac] sm:$0xff] 0
    %80 = vst [vmem:[#allocation2 + $0x1b4] sm:$0xf] 0
    %81 = vst [vmem:[#allocation2 + $0x1b8] sm:$0xff] 0
    %82 = vst [vmem:[#allocation2 + $0x1c0] sm:$0xff] 0
    %83 = vst [vmem:[#allocation2 + $0x1c8] sm:$0xff] 0
    %84 = vst [vmem:[#allocation2 + $0x1d0] sm:$0xff] 0
    %85 = vst [vmem:[#allocation2 + $0x1d8] sm:$0xff] 0
    %86 = vst [vmem:[#allocation2 + $0x1e0] sm:$0xf] 0
    %87 = vst [vmem:[#allocation2 + $0x1e4] sm:$0xff] 0
    %88 = vst [vmem:[#allocation2 + $0x1ec] sm:$0xff] 0
    %89 = vst [vmem:[#allocation2 + $0x1f4] sm:$0xff] 0
    %90 = vst [vmem:[#allocation2 + $0x1fc] sm:$0xff] 0
    %91 = vst [vmem:[#allocation2 + $0x204] sm:$0xff] 0
    %92 = vst [vmem:[#allocation2 + $0x20c] sm:$0xf] 0
    %93 = vst [vmem:[#allocation2 + $0x210] sm:$0xff] 0
    %94 = vst [vmem:[#allocation2 + $0x218] sm:$0xff] 0
    %95 = vst [vmem:[#allocation2 + $0x220] sm:$0xff] 0
    %96 = vst [vmem:[#allocation2 + $0x228] sm:$0xff] 0
    %97 = vst [vmem:[#allocation2 + $0x230] sm:$0xff] 0
    %98 = vst [vmem:[#allocation2 + $0x238] sm:$0xf] 0
    %99 = vst [vmem:[#allocation2 + $0x23c] sm:$0xff] 0
    %100 = vst [vmem:[#allocation2 + $0x244] sm:$0xff] 0
    %101 = vst [vmem:[#allocation2 + $0x24c] sm:$0xff] 0
    %102 = vst [vmem:[#allocation2 + $0x254] sm:$0xff] 0
    %103 = vst [vmem:[#allocation2 + $0x25c] sm:$0xff] 0
    %104 = vst [vmem:[#allocation2 + $0x264] sm:$0xf] 0
    %105 = vst [vmem:[#allocation2 + $0x268] sm:$0xff] 0
    %106 = vst [vmem:[#allocation2 + $0x270] sm:$0xff] 0
    %107 = vst [vmem:[#allocation2 + $0x278] sm:$0xff] 0
    %108 = vst [vmem:[#allocation2 + $0x280] sm:$0xff] 0
    %109 = vst [vmem:[#allocation2 + $0x288] sm:$0xff] 0
    %110 = vst [vmem:[#allocation2 + $0x290] sm:$0xf] 0
    %111 = vst [vmem:[#allocation2 + $0x294] sm:$0xff] 0
    %112 = vst [vmem:[#allocation2 + $0x29c] sm:$0xff] 0
    %113 = vst [vmem:[#allocation2 + $0x2a4] sm:$0xff] 0
    %114 = vst [vmem:[#allocation2 + $0x2ac] sm:$0xff] 0
    %115 = vst [vmem:[#allocation2 + $0x2b4] sm:$0xff] 0
    %116 = vst [vmem:[#allocation2 + $0x2bc] sm:$0xf] 0
    %v117 = vld [vmem:[%s0] ss:$2 sm:$0x1f]
    %s118 = scalar_lea.vmem %s0, 1
    %v119 = vld [vmem:[%s118] ss:$2 sm:$0x1f]
    %v120 = vld [vmem:[%s2] sm:$0xff]
    %v121 = vld [vmem:[%s2 + $0x8] sm:$0xff]
    %v122 = vld [vmem:[%s4] sm:$0xff]
    %v123 = vld [vmem:[%s4 + $0x8] sm:$0xff]
    %125 = vset.pattern.permute.xlu0 0
    %126 = vperm.xlu0 %125, %v120
    %v127 = vpop.permute.xlu0 %126
    %130 = vset.pattern.permute.xlu0 0
    %131 = vperm.xlu0 %130, %v121
    %v132 = vpop.permute.xlu0 %131
    %v135 = vlaneseq
    %v136 = vshrl.u32 %v135, 7
    %v137 = vsub.s32 0, %v136
    %v138 = vrot.slane %v117, %v137
    %v139 = vlaneseq
    %v140 = vshrl.u32 %v139, 7
    %v141 = vsub.s32 1, %v140
    %v142 = vrot.slane %v117, %v141
    %v143 = vlaneseq
    %v144 = vshrl.u32 %v143, 7
    %v145 = vsub.s32 2, %v144
    %v146 = vrot.slane %v117, %v145
    %v147 = vlaneseq
    %v148 = vshrl.u32 %v147, 7
    %v149 = vsub.s32 3, %v148
    %v150 = vrot.slane %v117, %v149
    %v151 = vlaneseq
    %v152 = vshrl.u32 %v151, 7
    %v153 = vsub.s32 4, %v152
    %v154 = vrot.slane %v117, %v153
    %v160 = vmul.f32 %v127, %v138
    %v161 = vmul.f32 %v127, %v142
    %v162 = vmul.f32 %v127, %v146
    %v163 = vmul.f32 %v127, %v150
    %v164 = vmul.f32 %v127, %v154
    %v165 = vmul.f32 %v132, %v138
    %v166 = vmul.f32 %v132, %v142
    %v167 = vmul.f32 %v132, %v146
    %v168 = vmul.f32 %v132, %v150
    %v169 = vmul.f32 %v132, %v154
    %170 = vset.pattern.permute.xlu0 1
    %171 = vperm.xlu0 %170, %v120
    %v172 = vpop.permute.xlu0 %171
    %174 = vset.pattern.permute.xlu0 1
    %175 = vperm.xlu0 %174, %v121
    %v176 = vpop.permute.xlu0 %175
    %v179 = vlaneseq
    %v180 = vshrl.u32 %v179, 7
    %v181 = vsub.s32 0, %v180
    %v182 = vrot.slane %v119, %v181
    %v183 = vlaneseq
    %v184 = vshrl.u32 %v183, 7
    %v185 = vsub.s32 1, %v184
    %v186 = vrot.slane %v119, %v185
    %v187 = vlaneseq
    %v188 = vshrl.u32 %v187, 7
    %v189 = vsub.s32 2, %v188
    %v190 = vrot.slane %v119, %v189
    %v191 = vlaneseq
    %v192 = vshrl.u32 %v191, 7
    %v193 = vsub.s32 3, %v192
    %v194 = vrot.slane %v119, %v193
    %v195 = vlaneseq
    %v196 = vshrl.u32 %v195, 7
    %v197 = vsub.s32 4, %v196
    %v198 = vrot.slane %v119, %v197
    %v204 = vmul.f32 %v172, %v182
    %v205 = vmul.f32 %v172, %v186
    %v206 = vmul.f32 %v172, %v190
    %v207 = vmul.f32 %v172, %v194
    %v208 = vmul.f32 %v172, %v198
    %v209 = vmul.f32 %v176, %v182
    %v210 = vmul.f32 %v176, %v186
    %v211 = vmul.f32 %v176, %v190
    %v212 = vmul.f32 %v176, %v194
    %v213 = vmul.f32 %v176, %v198
    %v214 = vadd.f32 %v160, %v204
    %v215 = vadd.f32 %v161, %v205
    %v216 = vadd.f32 %v162, %v206
    %v217 = vadd.f32 %v163, %v207
    %v218 = vadd.f32 %v164, %v208
    %v219 = vadd.f32 %v165, %v209
    %v220 = vadd.f32 %v166, %v210
    %v221 = vadd.f32 %v167, %v211
    %v222 = vadd.f32 %v168, %v212
    %v223 = vadd.f32 %v169, %v213
    %225 = vset.pattern.permute.xlu0 0
    %226 = vperm.xlu0 %225, %v122
    %v227 = vpop.permute.xlu0 %226
    %230 = vset.pattern.permute.xlu0 0
    %231 = vperm.xlu0 %230, %v123
    %v232 = vpop.permute.xlu0 %231
    %v234 = vadd.f32 %v214, %v227
    %v235 = vadd.f32 %v215, %v227
    %v236 = vadd.f32 %v216, %v227
    %v237 = vadd.f32 %v217, %v227
    %v238 = vadd.f32 %v218, %v227
    %v239 = vadd.f32 %v219, %v232
    %v240 = vadd.f32 %v220, %v232
    %v241 = vadd.f32 %v221, %v232
    %v242 = vadd.f32 %v222, %v232
    %v243 = vadd.f32 %v223, %v232
    %v244 = vtanh.pop %v234
    %v245 = vtanh.pop %v235
    %v246 = vtanh.pop %v236
    %v247 = vtanh.pop %v237
    %v248 = vtanh.pop %v238
    %v249 = vtanh.pop %v239
    %v250 = vtanh.pop %v240
    %v251 = vtanh.pop %v241
    %v252 = vtanh.pop %v242
    %v253 = vtanh.pop %v243
    %v254 = vmul.f32 %v244, %v244
    %v255 = vmul.f32 %v245, %v245
    %v256 = vmul.f32 %v249, %v249
    %v257 = vmul.f32 %v250, %v250
    %v258 = vsub.f32 1.0, %v254
    %v259 = vsub.f32 1.0, %v255
    %v260 = vsub.f32 1.0, %v256
    %v261 = vsub.f32 1.0, %v257
    %v262 = vmul.f32 %v258, %v127
    %v263 = vmul.f32 %v259, %v127
    %v264 = vmul.f32 %v260, %v132
    %v265 = vmul.f32 %v261, %v132
    %v266 = vmul.f32 %v258, %v172
    %v267 = vmul.f32 %v259, %v172
    %v268 = vmul.f32 %v260, %v176
    %v269 = vmul.f32 %v261, %v176
    %v270 = vmul.f32 %v244, %v127
    %v271 = vmul.f32 %v245, %v127
    %v272 = vmul.f32 %v249, %v132
    %v273 = vmul.f32 %v250, %v132
    %v274 = vmul.f32 %v270, -2.0
    %v275 = vmul.f32 %v271, -2.0
    %v276 = vmul.f32 %v272, -2.0
    %v277 = vmul.f32 %v273, -2.0
    %v278 = vmul.f32 %v274, %v262
    %v279 = vmul.f32 %v275, %v263
    %v280 = vmul.f32 %v276, %v264
    %v281 = vmul.f32 %v277, %v265
    %v282 = vpack.c.bf16 %v249, %v244
    %v283 = vpack.c.bf16 %v250, %v245
    %v284 = vpack.c.bf16 %v251, %v246
    %v285 = vpack.c.bf16 %v252, %v247
    %v286 = vpack.c.bf16 %v253, %v248
    %v292 = vunpack.c.l.b16 %v282
    %v293 = vunpack.c.l.b16 %v283
    %v294 = vunpack.c.l.b16 %v284
    %v295 = vunpack.c.l.b16 %v285
    %v296 = vunpack.c.l.b16 %v286
    %v297 = vunpack.c.h.b16 %v282
    %v298 = vunpack.c.h.b16 %v283
    %v299 = vunpack.c.h.b16 %v284
    %v300 = vunpack.c.h.b16 %v285
    %v301 = vunpack.c.h.b16 %v286
    %v302 = vpack.c.b16 %v293, %v292
    %v303 = vpack.c.b16 %v295, %v294
    %v304 = vpack.c.b16 %v296, %v296
    %v305 = vpack.c.b16 %v298, %v297
    %v306 = vpack.c.b16 %v300, %v299
    %v307 = vpack.c.b16 %v301, %v301
    %314 = vst [vmem:[#allocation2] sm:$0xff] %v302
    %315 = vst [vmem:[#allocation2 + $0x8] sm:$0xff] %v303
    %316 = vst [vmem:[#allocation2 + $0x10] sm:$0xf] %v304
    %317 = vst [vmem:[#allocation2 + $0x2c] sm:$0xff] %v305
    %318 = vst [vmem:[#allocation2 + $0x34] sm:$0xff] %v306
    %319 = vst [vmem:[#allocation2 + $0x3c] sm:$0xf] %v307
    %v320 = vpack.c.bf16 %v264, %v262
    %v321 = vpack.c.bf16 %v265, %v263
    %v324 = vunpack.c.l.b16 %v320
    %v325 = vunpack.c.l.b16 %v321
    %v326 = vunpack.c.h.b16 %v320
    %v327 = vunpack.c.h.b16 %v321
    %v328 = vpack.c.b16 %v325, %v324
    %v329 = vpack.c.b16 %v327, %v326
    %332 = vst [vmem:[#allocation2 + $0x14] sm:$0xff] %v328
    %333 = vst [vmem:[#allocation2 + $0x40] sm:$0xff] %v329
    %v334 = vpack.c.bf16 %v268, %v266
    %v335 = vpack.c.bf16 %v269, %v267
    %v338 = vunpack.c.l.b16 %v334
    %v339 = vunpack.c.l.b16 %v335
    %v340 = vunpack.c.h.b16 %v334
    %v341 = vunpack.c.h.b16 %v335
    %v342 = vpack.c.b16 %v339, %v338
    %v343 = vpack.c.b16 %v341, %v340
    %346 = vst [vmem:[#allocation2 + $0x1c] sm:$0xff] %v342
    %347 = vst [vmem:[#allocation2 + $0x48] sm:$0xff] %v343
    %v348 = vpack.c.bf16 %v280, %v278
    %v349 = vpack.c.bf16 %v281, %v279
    %v352 = vunpack.c.l.b16 %v348
    %v353 = vunpack.c.l.b16 %v349
    %v354 = vunpack.c.h.b16 %v348
    %v355 = vunpack.c.h.b16 %v349
    %v356 = vpack.c.b16 %v353, %v352
    %v357 = vpack.c.b16 %v355, %v354
    %360 = vst [vmem:[#allocation2 + $0x24] sm:$0xff] %v356
    %361 = vst [vmem:[#allocation2 + $0x50] sm:$0xff] %v357
    %v362 = vld [vmem:[%s3] sm:$0xf]
    %v363 = vld [vmem:[%s3 + $0x4] sm:$0xf]
    %v364 = vld [vmem:[#allocation2] sm:$0xff]
    %v365 = vld [vmem:[#allocation2 + $0x8] sm:$0xff]
    %v366 = vld [vmem:[#allocation2 + $0x10] sm:$0xff]
    %v367 = vld [vmem:[#allocation2 + $0x18] sm:$0xff]
    %v368 = vld [vmem:[#allocation2 + $0x20] sm:$0xff]
    %v369 = vld [vmem:[#allocation2 + $0x28] sm:$0xf]
    %v370 = vld [vmem:[#allocation2 + $0x2c] sm:$0xff]
    %v371 = vld [vmem:[#allocation2 + $0x34] sm:$0xff]
    %v372 = vld [vmem:[#allocation2 + $0x3c] sm:$0xff]
    %v373 = vld [vmem:[#allocation2 + $0x44] sm:$0xff]
    %v374 = vld [vmem:[#allocation2 + $0x4c] sm:$0xff]
    %v375 = vld [vmem:[#allocation2 + $0x54] sm:$0xf]
    %v376 = vld [vmem:[#allocation2 + $0x58] sm:$0xff]
    %v377 = vld [vmem:[#allocation2 + $0x60] sm:$0xff]
    %v378 = vld [vmem:[#allocation2 + $0x68] sm:$0xff]
    %v379 = vld [vmem:[#allocation2 + $0x70] sm:$0xff]
    %v380 = vld [vmem:[#allocation2 + $0x78] sm:$0xff]
    %v381 = vld [vmem:[#allocation2 + $0x80] sm:$0xf]
    %v382 = vld [vmem:[#allocation2 + $0x84] sm:$0xff]
    %v383 = vld [vmem:[#allocation2 + $0x8c] sm:$0xff]
    %v384 = vld [vmem:[#allocation2 + $0x94] sm:$0xff]
    %v385 = vld [vmem:[#allocation2 + $0x9c] sm:$0xff]
    %v386 = vld [vmem:[#allocation2 + $0xa4] sm:$0xff]
    %v387 = vld [vmem:[#allocation2 + $0xac] sm:$0xf]
    %v388 = vld [vmem:[#allocation2 + $0xb0] sm:$0xff]
    %v389 = vld [vmem:[#allocation2 + $0xb8] sm:$0xff]
    %v390 = vld [vmem:[#allocation2 + $0xc0] sm:$0xff]
    %v391 = vld [vmem:[#allocation2 + $0xc8] sm:$0xff]
    %v392 = vld [vmem:[#allocation2 + $0xd0] sm:$0xff]
    %v393 = vld [vmem:[#allocation2 + $0xd8] sm:$0xf]
    %v394 = vld [vmem:[#allocation2 + $0xdc] sm:$0xff]
    %v395 = vld [vmem:[#allocation2 + $0xe4] sm:$0xff]
    %v396 = vld [vmem:[#allocation2 + $0xec] sm:$0xff]
    %v397 = vld [vmem:[#allocation2 + $0xf4] sm:$0xff]
    %v398 = vld [vmem:[#allocation2 + $0xfc] sm:$0xff]
    %v399 = vld [vmem:[#allocation2 + $0x104] sm:$0xf]
    %v400 = vld [vmem:[#allocation2 + $0x108] sm:$0xff]
    %v401 = vld [vmem:[#allocation2 + $0x110] sm:$0xff]
    %v402 = vld [vmem:[#allocation2 + $0x118] sm:$0xff]
    %v403 = vld [vmem:[#allocation2 + $0x120] sm:$0xff]
    %v404 = vld [vmem:[#allocation2 + $0x128] sm:$0xff]
    %v405 = vld [vmem:[#allocation2 + $0x130] sm:$0xf]
    %v406 = vld [vmem:[#allocation2 + $0x134] sm:$0xff]
    %v407 = vld [vmem:[#allocation2 + $0x13c] sm:$0xff]
    %v408 = vld [vmem:[#allocation2 + $0x144] sm:$0xff]
    %v409 = vld [vmem:[#allocation2 + $0x14c] sm:$0xff]
    %v410 = vld [vmem:[#allocation2 + $0x154] sm:$0xff]
    %v411 = vld [vmem:[#allocation2 + $0x15c] sm:$0xf]
    %v412 = vld [vmem:[#allocation2 + $0x160] sm:$0xff]
    %v413 = vld [vmem:[#allocation2 + $0x168] sm:$0xff]
    %v414 = vld [vmem:[#allocation2 + $0x170] sm:$0xff]
    %v415 = vld [vmem:[#allocation2 + $0x178] sm:$0xff]
    %v416 = vld [vmem:[#allocation2 + $0x180] sm:$0xff]
    %v417 = vld [vmem:[#allocation2 + $0x188] sm:$0xf]
    %v418 = vld [vmem:[#allocation2 + $0x18c] sm:$0xff]
    %v419 = vld [vmem:[#allocation2 + $0x194] sm:$0xff]
    %v420 = vld [vmem:[#allocation2 + $0x19c] sm:$0xff]
    %v421 = vld [vmem:[#allocation2 + $0x1a4] sm:$0xff]
    %v422 = vld [vmem:[#allocation2 + $0x1ac] sm:$0xff]
    %v423 = vld [vmem:[#allocation2 + $0x1b4] sm:$0xf]
    %v424 = vld [vmem:[#allocation2 + $0x1b8] sm:$0xff]
    %v425 = vld [vmem:[#allocation2 + $0x1c0] sm:$0xff]
    %v426 = vld [vmem:[#allocation2 + $0x1c8] sm:$0xff]
    %v427 = vld [vmem:[#allocation2 + $0x1d0] sm:$0xff]
    %v428 = vld [vmem:[#allocation2 + $0x1d8] sm:$0xff]
    %v429 = vld [vmem:[#allocation2 + $0x1e0] sm:$0xf]
    %v430 = vld [vmem:[#allocation2 + $0x1e4] sm:$0xff]
    %v431 = vld [vmem:[#allocation2 + $0x1ec] sm:$0xff]
    %v432 = vld [vmem:[#allocation2 + $0x1f4] sm:$0xff]
    %v433 = vld [vmem:[#allocation2 + $0x1fc] sm:$0xff]
    %v434 = vld [vmem:[#allocation2 + $0x204] sm:$0xff]
    %v435 = vld [vmem:[#allocation2 + $0x20c] sm:$0xf]
    %v436 = vld [vmem:[#allocation2 + $0x210] sm:$0xff]
    %v437 = vld [vmem:[#allocation2 + $0x218] sm:$0xff]
    %v438 = vld [vmem:[#allocation2 + $0x220] sm:$0xff]
    %v439 = vld [vmem:[#allocation2 + $0x228] sm:$0xff]
    %v440 = vld [vmem:[#allocation2 + $0x230] sm:$0xff]
    %v441 = vld [vmem:[#allocation2 + $0x238] sm:$0xf]
    %v442 = vld [vmem:[#allocation2 + $0x23c] sm:$0xff]
    %v443 = vld [vmem:[#allocation2 + $0x244] sm:$0xff]
    %v444 = vld [vmem:[#allocation2 + $0x24c] sm:$0xff]
    %v445 = vld [vmem:[#allocation2 + $0x254] sm:$0xff]
    %v446 = vld [vmem:[#allocation2 + $0x25c] sm:$0xff]
    %v447 = vld [vmem:[#allocation2 + $0x264] sm:$0xf]
    %v448 = vld [vmem:[#allocation2 + $0x268] sm:$0xff]
    %v449 = vld [vmem:[#allocation2 + $0x270] sm:$0xff]
    %v450 = vld [vmem:[#allocation2 + $0x278] sm:$0xff]
    %v451 = vld [vmem:[#allocation2 + $0x280] sm:$0xff]
    %v452 = vld [vmem:[#allocation2 + $0x288] sm:$0xff]
    %v453 = vld [vmem:[#allocation2 + $0x290] sm:$0xf]
    %v454 = vld [vmem:[#allocation2 + $0x294] sm:$0xff]
    %v455 = vld [vmem:[#allocation2 + $0x29c] sm:$0xff]
    %v456 = vld [vmem:[#allocation2 + $0x2a4] sm:$0xff]
    %v457 = vld [vmem:[#allocation2 + $0x2ac] sm:$0xff]
    %v458 = vld [vmem:[#allocation2 + $0x2b4] sm:$0xff]
    %v459 = vld [vmem:[#allocation2 + $0x2bc] sm:$0xf]
    %v462 = vunpack.c.l.b16 %v362
    %v463 = vunpack.c.l.b16 %v363
    %v464 = vpack.c.b16 %v463, %v462
    %v562 = vunpack.c.l.b16 %v364
    %v563 = vunpack.c.h.b16 %v364
    %v564 = vunpack.c.l.b16 %v365
    %v565 = vunpack.c.h.b16 %v365
    %v566 = vunpack.c.l.b16 %v366
    %v567 = vunpack.c.h.b16 %v366
    %v568 = vunpack.c.l.b16 %v367
    %v569 = vunpack.c.h.b16 %v367
    %v570 = vunpack.c.l.b16 %v368
    %v571 = vunpack.c.h.b16 %v368
    %v572 = vunpack.c.l.b16 %v369
    %v573 = vunpack.c.l.b16 %v370
    %v574 = vunpack.c.h.b16 %v370
    %v575 = vunpack.c.l.b16 %v371
    %v576 = vunpack.c.h.b16 %v371
    %v577 = vunpack.c.l.b16 %v372
    %v578 = vunpack.c.h.b16 %v372
    %v579 = vunpack.c.l.b16 %v373
    %v580 = vunpack.c.h.b16 %v373
    %v581 = vunpack.c.l.b16 %v374
    %v582 = vunpack.c.h.b16 %v374
    %v583 = vunpack.c.l.b16 %v375
    %v584 = vunpack.c.l.b16 %v376
    %v585 = vunpack.c.h.b16 %v376
    %v586 = vunpack.c.l.b16 %v377
    %v587 = vunpack.c.h.b16 %v377
    %v588 = vunpack.c.l.b16 %v378
    %v589 = vunpack.c.h.b16 %v378
    %v590 = vunpack.c.l.b16 %v379
    %v591 = vunpack.c.h.b16 %v379
    %v592 = vunpack.c.l.b16 %v380
    %v593 = vunpack.c.h.b16 %v380
    %v594 = vunpack.c.l.b16 %v381
    %v595 = vunpack.c.l.b16 %v382
    %v596 = vunpack.c.h.b16 %v382
    %v597 = vunpack.c.l.b16 %v383
    %v598 = vunpack.c.h.b16 %v383
    %v599 = vunpack.c.l.b16 %v384
    %v600 = vunpack.c.h.b16 %v384
    %v601 = vunpack.c.l.b16 %v385
    %v602 = vunpack.c.h.b16 %v385
    %v603 = vunpack.c.l.b16 %v386
    %v604 = vunpack.c.h.b16 %v386
    %v605 = vunpack.c.l.b16 %v387
    %v606 = vunpack.c.l.b16 %v388
    %v607 = vunpack.c.h.b16 %v388
    %v608 = vunpack.c.l.b16 %v389
    %v609 = vunpack.c.h.b16 %v389
    %v610 = vunpack.c.l.b16 %v390
    %v611 = vunpack.c.h.b16 %v390
    %v612 = vunpack.c.l.b16 %v391
    %v613 = vunpack.c.h.b16 %v391
    %v614 = vunpack.c.l.b16 %v392
    %v615 = vunpack.c.h.b16 %v392
    %v616 = vunpack.c.l.b16 %v393
    %v617 = vunpack.c.l.b16 %v394
    %v618 = vunpack.c.h.b16 %v394
    %v619 = vunpack.c.l.b16 %v395
    %v620 = vunpack.c.h.b16 %v395
    %v621 = vunpack.c.l.b16 %v396
    %v622 = vunpack.c.h.b16 %v396
    %v623 = vunpack.c.l.b16 %v397
    %v624 = vunpack.c.h.b16 %v397
    %v625 = vunpack.c.l.b16 %v398
    %v626 = vunpack.c.h.b16 %v398
    %v627 = vunpack.c.l.b16 %v399
    %v628 = vunpack.c.l.b16 %v400
    %v629 = vunpack.c.h.b16 %v400
    %v630 = vunpack.c.l.b16 %v401
    %v631 = vunpack.c.h.b16 %v401
    %v632 = vunpack.c.l.b16 %v402
    %v633 = vunpack.c.h.b16 %v402
    %v634 = vunpack.c.l.b16 %v403
    %v635 = vunpack.c.h.b16 %v403
    %v636 = vunpack.c.l.b16 %v404
    %v637 = vunpack.c.h.b16 %v404
    %v638 = vunpack.c.l.b16 %v405
    %v639 = vunpack.c.l.b16 %v406
    %v640 = vunpack.c.h.b16 %v406
    %v641 = vunpack.c.l.b16 %v407
    %v642 = vunpack.c.h.b16 %v407
    %v643 = vunpack.c.l.b16 %v408
    %v644 = vunpack.c.h.b16 %v408
    %v645 = vunpack.c.l.b16 %v409
    %v646 = vunpack.c.h.b16 %v409
    %v647 = vunpack.c.l.b16 %v410
    %v648 = vunpack.c.h.b16 %v410
    %v649 = vunpack.c.l.b16 %v411
    %v650 = vunpack.c.l.b16 %v412
    %v651 = vunpack.c.h.b16 %v412
    %v652 = vunpack.c.l.b16 %v413
    %v653 = vunpack.c.h.b16 %v413
    %v654 = vunpack.c.l.b16 %v414
    %v655 = vunpack.c.h.b16 %v414
    %v656 = vunpack.c.l.b16 %v415
    %v657 = vunpack.c.h.b16 %v415
    %v658 = vunpack.c.l.b16 %v416
    %v659 = vunpack.c.h.b16 %v416
    %v660 = vunpack.c.l.b16 %v417
    %v661 = vunpack.c.l.b16 %v418
    %v662 = vunpack.c.h.b16 %v418
    %v663 = vunpack.c.l.b16 %v419
    %v664 = vunpack.c.h.b16 %v419
    %v665 = vunpack.c.l.b16 %v420
    %v666 = vunpack.c.h.b16 %v420
    %v667 = vunpack.c.l.b16 %v421
    %v668 = vunpack.c.h.b16 %v421
    %v669 = vunpack.c.l.b16 %v422
    %v670 = vunpack.c.h.b16 %v422
    %v671 = vunpack.c.l.b16 %v423
    %v672 = vunpack.c.l.b16 %v424
    %v673 = vunpack.c.h.b16 %v424
    %v674 = vunpack.c.l.b16 %v425
    %v675 = vunpack.c.h.b16 %v425
    %v676 = vunpack.c.l.b16 %v426
    %v677 = vunpack.c.h.b16 %v426
    %v678 = vunpack.c.l.b16 %v427
    %v679 = vunpack.c.h.b16 %v427
    %v680 = vunpack.c.l.b16 %v428
    %v681 = vunpack.c.h.b16 %v428
    %v682 = vunpack.c.l.b16 %v429
    %v683 = vunpack.c.l.b16 %v430
    %v684 = vunpack.c.h.b16 %v430
    %v685 = vunpack.c.l.b16 %v431
    %v686 = vunpack.c.h.b16 %v431
    %v687 = vunpack.c.l.b16 %v432
    %v688 = vunpack.c.h.b16 %v432
    %v689 = vunpack.c.l.b16 %v433
    %v690 = vunpack.c.h.b16 %v433
    %v691 = vunpack.c.l.b16 %v434
    %v692 = vunpack.c.h.b16 %v434
    %v693 = vunpack.c.l.b16 %v435
    %v694 = vunpack.c.l.b16 %v436
    %v695 = vunpack.c.h.b16 %v436
    %v696 = vunpack.c.l.b16 %v437
    %v697 = vunpack.c.h.b16 %v437
    %v698 = vunpack.c.l.b16 %v438
    %v699 = vunpack.c.h.b16 %v438
    %v700 = vunpack.c.l.b16 %v439
    %v701 = vunpack.c.h.b16 %v439
    %v702 = vunpack.c.l.b16 %v440
    %v703 = vunpack.c.h.b16 %v440
    %v704 = vunpack.c.l.b16 %v441
    %v705 = vunpack.c.l.b16 %v442
    %v706 = vunpack.c.h.b16 %v442
    %v707 = vunpack.c.l.b16 %v443
    %v708 = vunpack.c.h.b16 %v443
    %v709 = vunpack.c.l.b16 %v444
    %v710 = vunpack.c.h.b16 %v444
    %v711 = vunpack.c.l.b16 %v445
    %v712 = vunpack.c.h.b16 %v445
    %v713 = vunpack.c.l.b16 %v446
    %v714 = vunpack.c.h.b16 %v446
    %v715 = vunpack.c.l.b16 %v447
    %v716 = vunpack.c.l.b16 %v448
    %v717 = vunpack.c.h.b16 %v448
    %v718 = vunpack.c.l.b16 %v449
    %v719 = vunpack.c.h.b16 %v449
    %v720 = vunpack.c.l.b16 %v450
    %v721 = vunpack.c.h.b16 %v450
    %v722 = vunpack.c.l.b16 %v451
    %v723 = vunpack.c.h.b16 %v451
    %v724 = vunpack.c.l.b16 %v452
    %v725 = vunpack.c.h.b16 %v452
    %v726 = vunpack.c.l.b16 %v453
    %v727 = vunpack.c.l.b16 %v454
    %v728 = vunpack.c.h.b16 %v454
    %v729 = vunpack.c.l.b16 %v455
    %v730 = vunpack.c.h.b16 %v455
    %v731 = vunpack.c.l.b16 %v456
    %v732 = vunpack.c.h.b16 %v456
    %v733 = vunpack.c.l.b16 %v457
    %v734 = vunpack.c.h.b16 %v457
    %v735 = vunpack.c.l.b16 %v458
    %v736 = vunpack.c.h.b16 %v458
    %v737 = vunpack.c.l.b16 %v459
    %v738 = vpack.c.b16 %v573, %v562
    %v739 = vpack.c.b16 %v574, %v563
    %v740 = vpack.c.b16 %v575, %v564
    %v741 = vpack.c.b16 %v576, %v565
    %v742 = vpack.c.b16 %v577, %v566
    %v743 = vpack.c.b16 %v578, %v567
    %v744 = vpack.c.b16 %v579, %v568
    %v745 = vpack.c.b16 %v580, %v569
    %v746 = vpack.c.b16 %v581, %v570
    %v747 = vpack.c.b16 %v582, %v571
    %v748 = vpack.c.b16 %v583, %v572
    %v749 = vpack.c.b16 %v595, %v584
    %v750 = vpack.c.b16 %v596, %v585
    %v751 = vpack.c.b16 %v597, %v586
    %v752 = vpack.c.b16 %v598, %v587
    %v753 = vpack.c.b16 %v599, %v588
    %v754 = vpack.c.b16 %v600, %v589
    %v755 = vpack.c.b16 %v601, %v590
    %v756 = vpack.c.b16 %v602, %v591
    %v757 = vpack.c.b16 %v603, %v592
    %v758 = vpack.c.b16 %v604, %v593
    %v759 = vpack.c.b16 %v605, %v594
    %v760 = vpack.c.b16 %v617, %v606
    %v761 = vpack.c.b16 %v618, %v607
    %v762 = vpack.c.b16 %v619, %v608
    %v763 = vpack.c.b16 %v620, %v609
    %v764 = vpack.c.b16 %v621, %v610
    %v765 = vpack.c.b16 %v622, %v611
    %v766 = vpack.c.b16 %v623, %v612
    %v767 = vpack.c.b16 %v624, %v613
    %v768 = vpack.c.b16 %v625, %v614
    %v769 = vpack.c.b16 %v626, %v615
    %v770 = vpack.c.b16 %v627, %v616
    %v771 = vpack.c.b16 %v639, %v628
    %v772 = vpack.c.b16 %v640, %v629
    %v773 = vpack.c.b16 %v641, %v630
    %v774 = vpack.c.b16 %v642, %v631
    %v775 = vpack.c.b16 %v643, %v632
    %v776 = vpack.c.b16 %v644, %v633
    %v777 = vpack.c.b16 %v645, %v634
    %v778 = vpack.c.b16 %v646, %v635
    %v779 = vpack.c.b16 %v647, %v636
    %v780 = vpack.c.b16 %v648, %v637
    %v781 = vpack.c.b16 %v649, %v638
    %v782 = vpack.c.b16 %v661, %v650
    %v783 = vpack.c.b16 %v662, %v651
    %v784 = vpack.c.b16 %v663, %v652
    %v785 = vpack.c.b16 %v664, %v653
    %v786 = vpack.c.b16 %v665, %v654
    %v787 = vpack.c.b16 %v666, %v655
    %v788 = vpack.c.b16 %v667, %v656
    %v789 = vpack.c.b16 %v668, %v657
    %v790 = vpack.c.b16 %v669, %v658
    %v791 = vpack.c.b16 %v670, %v659
    %v792 = vpack.c.b16 %v671, %v660
    %v793 = vpack.c.b16 %v683, %v672
    %v794 = vpack.c.b16 %v684, %v673
    %v795 = vpack.c.b16 %v685, %v674
    %v796 = vpack.c.b16 %v686, %v675
    %v797 = vpack.c.b16 %v687, %v676
    %v798 = vpack.c.b16 %v688, %v677
    %v799 = vpack.c.b16 %v689, %v678
    %v800 = vpack.c.b16 %v690, %v679
    %v801 = vpack.c.b16 %v691, %v680
    %v802 = vpack.c.b16 %v692, %v681
    %v803 = vpack.c.b16 %v693, %v682
    %v804 = vpack.c.b16 %v705, %v694
    %v805 = vpack.c.b16 %v706, %v695
    %v806 = vpack.c.b16 %v707, %v696
    %v807 = vpack.c.b16 %v708, %v697
    %v808 = vpack.c.b16 %v709, %v698
    %v809 = vpack.c.b16 %v710, %v699
    %v810 = vpack.c.b16 %v711, %v700
    %v811 = vpack.c.b16 %v712, %v701
    %v812 = vpack.c.b16 %v713, %v702
    %v813 = vpack.c.b16 %v714, %v703
    %v814 = vpack.c.b16 %v715, %v704
    %v815 = vpack.c.b16 %v727, %v716
    %v816 = vpack.c.b16 %v728, %v717
    %v817 = vpack.c.b16 %v729, %v718
    %v818 = vpack.c.b16 %v730, %v719
    %v819 = vpack.c.b16 %v731, %v720
    %v820 = vpack.c.b16 %v732, %v721
    %v821 = vpack.c.b16 %v733, %v722
    %v822 = vpack.c.b16 %v734, %v723
    %v823 = vpack.c.b16 %v735, %v724
    %v824 = vpack.c.b16 %v736, %v725
    %v825 = vpack.c.b16 %v737, %v726
    %914 = vmatprep.subr.bf16.mxu0 %v816
    %915 = vmatpush1.bf16.msra.mxu0 %v815
    %916 = vmatprep.subr.bf16.mxu0 %v805
    %917 = vmatpush1.bf16.msra.mxu0 %v804
    %918 = vmatprep.subr.bf16.mxu0 %v794
    %919 = vmatpush1.bf16.msra.mxu0 %v793
    %920 = vmatprep.subr.bf16.mxu0 %v783
    %921 = vmatpush1.bf16.msra.mxu0 %v782
    %922 = vmatprep.subr.bf16.mxu0 %v772
    %923 = vmatpush1.bf16.msra.mxu0 %v771
    %924 = vmatprep.subr.bf16.mxu0 %v761
    %925 = vmatpush1.bf16.msra.mxu0 %v760
    %926 = vmatprep.subr.bf16.mxu0 %v750
    %927 = vmatpush1.bf16.msra.mxu0 %v749
    %928 = vmatprep.subr.bf16.mxu0 %v739
    %929 = vmatpush1.bf16.msra.mxu0 %v738
    %930 = vmatprep.subr.bf16.mxu0 0
    %931 = vmatpush2.bf16.msra.mxu0 0
    %932 = vmatprep.subr.bf16.mxu0 0
    %933 = vmatpush2.bf16.msra.mxu0 0
    %934 = vmatprep.subr.bf16.mxu0 0
    %935 = vmatpush2.bf16.msra.mxu0 0
    %936 = vmatprep.subr.bf16.mxu0 0
    %937 = vmatpush2.bf16.msra.mxu0 0
    %938 = vmatprep.subr.bf16.mxu0 0
    %939 = vmatpush2.bf16.msra.mxu0 0
    %940 = vmatprep.subr.bf16.mxu0 0
    %941 = vmatpush2.bf16.msra.mxu0 0
    %942 = vmatprep.subr.bf16.mxu0 0
    %943 = vmatpush2.bf16.msra.mxu0 0
    %944 = vmatprep.subr.bf16.mxu0 0
    %945 = vmatpush2.bf16.msra.mxu0 0
    %946 = vmatprep.mubr.bf16.mxu0 0
    %947 = vmatmul.mubr.bf16.gmra.mxu0 %v464
    %v948 = vpop.f32.mrf.mxu0
    %v949 = vadd.f32 0.0, %v948
    %v950 = vpop.f32.mrf.mxu0
    %v951 = vadd.f32 0.0, %v950
    %v952 = vpop.f32.mrf.mxu0
    %v953 = vadd.f32 0.0, %v952
    %v954 = vpop.f32.mrf.mxu0
    %v955 = vadd.f32 0.0, %v954
    %956 = vdwg.mxu0
    %957 = vmatprep.subr.bf16.mxu0 %v818
    %958 = vmatpush1.bf16.msra.mxu0 %v817
    %959 = vmatprep.subr.bf16.mxu0 %v807
    %960 = vmatpush1.bf16.msra.mxu0 %v806
    %961 = vmatprep.subr.bf16.mxu0 %v796
    %962 = vmatpush1.bf16.msra.mxu0 %v795
    %963 = vmatprep.subr.bf16.mxu0 %v785
    %964 = vmatpush1.bf16.msra.mxu0 %v784
    %965 = vmatprep.subr.bf16.mxu0 %v774
    %966 = vmatpush1.bf16.msra.mxu0 %v773
    %967 = vmatprep.subr.bf16.mxu0 %v763
    %968 = vmatpush1.bf16.msra.mxu0 %v762
    %969 = vmatprep.subr.bf16.mxu0 %v752
    %970 = vmatpush1.bf16.msra.mxu0 %v751
    %971 = vmatprep.subr.bf16.mxu0 %v741
    %972 = vmatpush1.bf16.msra.mxu0 %v740
    %973 = vmatprep.subr.bf16.mxu0 0
    %974 = vmatpush2.bf16.msra.mxu0 0
    %975 = vmatprep.subr.bf16.mxu0 0
    %976 = vmatpush2.bf16.msra.mxu0 0
    %977 = vmatprep.subr.bf16.mxu0 0
    %978 = vmatpush2.bf16.msra.mxu0 0
    %979 = vmatprep.subr.bf16.mxu0 0
    %980 = vmatpush2.bf16.msra.mxu0 0
    %981 = vmatprep.subr.bf16.mxu0 0
    %982 = vmatpush2.bf16.msra.mxu0 0
    %983 = vmatprep.subr.bf16.mxu0 0
    %984 = vmatpush2.bf16.msra.mxu0 0
    %985 = vmatprep.subr.bf16.mxu0 0
    %986 = vmatpush2.bf16.msra.mxu0 0
    %987 = vmatprep.subr.bf16.mxu0 0
    %988 = vmatpush2.bf16.msra.mxu0 0
    %989 = vmatprep.mubr.bf16.mxu0 0
    %990 = vmatmul.mubr.bf16.gmra.mxu0 %v464
    %v991 = vpop.f32.mrf.mxu0
    %v992 = vadd.f32 0.0, %v991
    %v993 = vpop.f32.mrf.mxu0
    %v994 = vadd.f32 0.0, %v993
    %v995 = vpop.f32.mrf.mxu0
    %v996 = vadd.f32 0.0, %v995
    %v997 = vpop.f32.mrf.mxu0
    %v998 = vadd.f32 0.0, %v997
    %999 = vdwg.mxu0
    %1000 = vmatprep.subr.bf16.mxu0 %v820
    %1001 = vmatpush1.bf16.msra.mxu0 %v819
    %1002 = vmatprep.subr.bf16.mxu0 %v809
    %1003 = vmatpush1.bf16.msra.mxu0 %v808
    %1004 = vmatprep.subr.bf16.mxu0 %v798
    %1005 = vmatpush1.bf16.msra.mxu0 %v797
    %1006 = vmatprep.subr.bf16.mxu0 %v787
    %1007 = vmatpush1.bf16.msra.mxu0 %v786
    %1008 = vmatprep.subr.bf16.mxu0 %v776
    %1009 = vmatpush1.bf16.msra.mxu0 %v775
    %1010 = vmatprep.subr.bf16.mxu0 %v765
    %1011 = vmatpush1.bf16.msra.mxu0 %v764
    %1012 = vmatprep.subr.bf16.mxu0 %v754
    %1013 = vmatpush1.bf16.msra.mxu0 %v753
    %1014 = vmatprep.subr.bf16.mxu0 %v743
    %1015 = vmatpush1.bf16.msra.mxu0 %v742
    %1016 = vmatprep.subr.bf16.mxu0 0
    %1017 = vmatpush2.bf16.msra.mxu0 0
    %1018 = vmatprep.subr.bf16.mxu0 0
    %1019 = vmatpush2.bf16.msra.mxu0 0
    %1020 = vmatprep.subr.bf16.mxu0 0
    %1021 = vmatpush2.bf16.msra.mxu0 0
    %1022 = vmatprep.subr.bf16.mxu0 0
    %1023 = vmatpush2.bf16.msra.mxu0 0
    %1024 = vmatprep.subr.bf16.mxu0 0
    %1025 = vmatpush2.bf16.msra.mxu0 0
    %1026 = vmatprep.subr.bf16.mxu0 0
    %1027 = vmatpush2.bf16.msra.mxu0 0
    %1028 = vmatprep.subr.bf16.mxu0 0
    %1029 = vmatpush2.bf16.msra.mxu0 0
    %1030 = vmatprep.subr.bf16.mxu0 0
    %1031 = vmatpush2.bf16.msra.mxu0 0
    %1032 = vmatprep.mubr.bf16.mxu0 0
    %1033 = vmatmul.mubr.bf16.gmra.mxu0 %v464
    %v1034 = vpop.f32.mrf.mxu0
    %v1035 = vadd.f32 0.0, %v1034
    %v1036 = vpop.f32.mrf.mxu0
    %v1037 = vadd.f32 0.0, %v1036
    %v1038 = vpop.f32.mrf.mxu0
    %v1039 = vadd.f32 0.0, %v1038
    %v1040 = vpop.f32.mrf.mxu0
    %v1041 = vadd.f32 0.0, %v1040
    %1042 = vdwg.mxu0
    %1043 = vmatprep.subr.bf16.mxu0 %v822
    %1044 = vmatpush1.bf16.msra.mxu0 %v821
    %1045 = vmatprep.subr.bf16.mxu0 %v811
    %1046 = vmatpush1.bf16.msra.mxu0 %v810
    %1047 = vmatprep.subr.bf16.mxu0 %v800
    %1048 = vmatpush1.bf16.msra.mxu0 %v799
    %1049 = vmatprep.subr.bf16.mxu0 %v789
    %1050 = vmatpush1.bf16.msra.mxu0 %v788
    %1051 = vmatprep.subr.bf16.mxu0 %v778
    %1052 = vmatpush1.bf16.msra.mxu0 %v777
    %1053 = vmatprep.subr.bf16.mxu0 %v767
    %1054 = vmatpush1.bf16.msra.mxu0 %v766
    %1055 = vmatprep.subr.bf16.mxu0 %v756
    %1056 = vmatpush1.bf16.msra.mxu0 %v755
    %1057 = vmatprep.subr.bf16.mxu0 %v745
    %1058 = vmatpush1.bf16.msra.mxu0 %v744
    %1059 = vmatprep.subr.bf16.mxu0 0
    %1060 = vmatpush2.bf16.msra.mxu0 0
    %1061 = vmatprep.subr.bf16.mxu0 0
    %1062 = vmatpush2.bf16.msra.mxu0 0
    %1063 = vmatprep.subr.bf16.mxu0 0
    %1064 = vmatpush2.bf16.msra.mxu0 0
    %1065 = vmatprep.subr.bf16.mxu0 0
    %1066 = vmatpush2.bf16.msra.mxu0 0
    %1067 = vmatprep.subr.bf16.mxu0 0
    %1068 = vmatpush2.bf16.msra.mxu0 0
    %1069 = vmatprep.subr.bf16.mxu0 0
    %1070 = vmatpush2.bf16.msra.mxu0 0
    %1071 = vmatprep.subr.bf16.mxu0 0
    %1072 = vmatpush2.bf16.msra.mxu0 0
    %1073 = vmatprep.subr.bf16.mxu0 0
    %1074 = vmatpush2.bf16.msra.mxu0 0
    %1075 = vmatprep.mubr.bf16.mxu0 0
    %1076 = vmatmul.mubr.bf16.gmra.mxu0 %v464
    %v1077 = vpop.f32.mrf.mxu0
    %v1078 = vadd.f32 0.0, %v1077
    %v1079 = vpop.f32.mrf.mxu0
    %v1080 = vadd.f32 0.0, %v1079
    %v1081 = vpop.f32.mrf.mxu0
    %v1082 = vadd.f32 0.0, %v1081
    %v1083 = vpop.f32.mrf.mxu0
    %v1084 = vadd.f32 0.0, %v1083
    %1085 = vdwg.mxu0
    %1086 = vmatprep.subr.bf16.mxu0 %v824
    %1087 = vmatpush1.bf16.msra.mxu0 %v823
    %1088 = vmatprep.subr.bf16.mxu0 %v813
    %1089 = vmatpush1.bf16.msra.mxu0 %v812
    %1090 = vmatprep.subr.bf16.mxu0 %v802
    %1091 = vmatpush1.bf16.msra.mxu0 %v801
    %1092 = vmatprep.subr.bf16.mxu0 %v791
    %1093 = vmatpush1.bf16.msra.mxu0 %v790
    %1094 = vmatprep.subr.bf16.mxu0 %v780
    %1095 = vmatpush1.bf16.msra.mxu0 %v779
    %1096 = vmatprep.subr.bf16.mxu0 %v769
    %1097 = vmatpush1.bf16.msra.mxu0 %v768
    %1098 = vmatprep.subr.bf16.mxu0 %v758
    %1099 = vmatpush1.bf16.msra.mxu0 %v757
    %1100 = vmatprep.subr.bf16.mxu0 %v747
    %1101 = vmatpush1.bf16.msra.mxu0 %v746
    %1102 = vmatprep.subr.bf16.mxu0 0
    %1103 = vmatpush2.bf16.msra.mxu0 0
    %1104 = vmatprep.subr.bf16.mxu0 0
    %1105 = vmatpush2.bf16.msra.mxu0 0
    %1106 = vmatprep.subr.bf16.mxu0 0
    %1107 = vmatpush2.bf16.msra.mxu0 0
    %1108 = vmatprep.subr.bf16.mxu0 0
    %1109 = vmatpush2.bf16.msra.mxu0 0
    %1110 = vmatprep.subr.bf16.mxu0 0
    %1111 = vmatpush2.bf16.msra.mxu0 0
    %1112 = vmatprep.subr.bf16.mxu0 0
    %1113 = vmatpush2.bf16.msra.mxu0 0
    %1114 = vmatprep.subr.bf16.mxu0 0
    %1115 = vmatpush2.bf16.msra.mxu0 0
    %1116 = vmatprep.subr.bf16.mxu0 0
    %1117 = vmatpush2.bf16.msra.mxu0 0
    %1118 = vmatprep.mubr.bf16.mxu0 0
    %1119 = vmatmul.mubr.bf16.gmra.mxu0 %v464
    %v1120 = vpop.f32.mrf.mxu0
    %v1121 = vadd.f32 0.0, %v1120
    %v1122 = vpop.f32.mrf.mxu0
    %v1123 = vadd.f32 0.0, %v1122
    %v1124 = vpop.f32.mrf.mxu0
    %v1125 = vadd.f32 0.0, %v1124
    %v1126 = vpop.f32.mrf.mxu0
    %v1127 = vadd.f32 0.0, %v1126
    %1128 = vdwg.mxu0
    %1129 = vmatprep.subr.bf16.mxu0 0
    %1130 = vmatpush1.bf16.msra.mxu0 %v825
    %1131 = vmatprep.subr.bf16.mxu0 0
    %1132 = vmatpush1.bf16.msra.mxu0 %v814
    %1133 = vmatprep.subr.bf16.mxu0 0
    %1134 = vmatpush1.bf16.msra.mxu0 %v803
    %1135 = vmatprep.subr.bf16.mxu0 0
    %1136 = vmatpush1.bf16.msra.mxu0 %v792
    %1137 = vmatprep.subr.bf16.mxu0 0
    %1138 = vmatpush1.bf16.msra.mxu0 %v781
    %1139 = vmatprep.subr.bf16.mxu0 0
    %1140 = vmatpush1.bf16.msra.mxu0 %v770
    %1141 = vmatprep.subr.bf16.mxu0 0
    %1142 = vmatpush1.bf16.msra.mxu0 %v759
    %1143 = vmatprep.subr.bf16.mxu0 0
    %1144 = vmatpush1.bf16.msra.mxu0 %v748
    %1145 = vmatprep.subr.bf16.mxu0 0
    %1146 = vmatpush2.bf16.msra.mxu0 0
    %1147 = vmatprep.subr.bf16.mxu0 0
    %1148 = vmatpush2.bf16.msra.mxu0 0
    %1149 = vmatprep.subr.bf16.mxu0 0
    %1150 = vmatpush2.bf16.msra.mxu0 0
    %1151 = vmatprep.subr.bf16.mxu0 0
    %1152 = vmatpush2.bf16.msra.mxu0 0
    %1153 = vmatprep.subr.bf16.mxu0 0
    %1154 = vmatpush2.bf16.msra.mxu0 0
    %1155 = vmatprep.subr.bf16.mxu0 0
    %1156 = vmatpush2.bf16.msra.mxu0 0
    %1157 = vmatprep.subr.bf16.mxu0 0
    %1158 = vmatpush2.bf16.msra.mxu0 0
    %1159 = vmatprep.subr.bf16.mxu0 0
    %1160 = vmatpush2.bf16.msra.mxu0 0
    %1161 = vmatprep.mubr.bf16.mxu0 0
    %1162 = vmatmul.mubr.bf16.gmra.mxu0 %v464
    %v1163 = vpop.f32.mrf.mxu0
    %v1164 = vadd.f32 0.0, %v1163
    %v1165 = vpop.f32.mrf.mxu0
    %v1166 = vpop.f32.mrf.mxu0
    %v1167 = vadd.f32 0.0, %v1166
    %v1168 = vpop.f32.mrf.mxu0
    %1169 = vdwg.mxu0
    %s1170 = scalar_lea.vmem %s4, 16
    %v1171 = vld [vmem:[%s1170] sm:$0xff]
    %v1172 = vld [vmem:[%s1170 + $0x8] sm:$0xff]
    %1174 = vset.pattern.permute.xlu0 0
    %1175 = vperm.xlu0 %1174, %v1171
    %v1176 = vpop.permute.xlu0 %1175
    %1179 = vset.pattern.permute.xlu0 0
    %1180 = vperm.xlu0 %1179, %v1172
    %v1181 = vpop.permute.xlu0 %1180
    %v1183 = vadd.f32 %v949, %v1176
    %v1184 = vadd.f32 %v951, %v1176
    %v1185 = vadd.f32 %v992, %v1176
    %v1186 = vadd.f32 %v994, %v1176
    %v1187 = vadd.f32 %v1035, %v1176
    %v1188 = vadd.f32 %v953, %v1181
    %v1189 = vadd.f32 %v955, %v1181
    %v1190 = vadd.f32 %v996, %v1181
    %v1191 = vadd.f32 %v998, %v1181
    %v1192 = vadd.f32 %v1039, %v1181
    %v1193 = vtanh.pop %v1183
    %v1194 = vtanh.pop %v1184
    %v1195 = vtanh.pop %v1185
    %v1196 = vtanh.pop %v1186
    %v1197 = vtanh.pop %v1187
    %v1198 = vtanh.pop %v1188
    %v1199 = vtanh.pop %v1189
    %v1200 = vtanh.pop %v1190
    %v1201 = vtanh.pop %v1191
    %v1202 = vtanh.pop %v1192
    %v1203 = vmul.f32 %v1193, %v1193
    %v1204 = vmul.f32 %v1194, %v1194
    %v1205 = vmul.f32 %v1198, %v1198
    %v1206 = vmul.f32 %v1199, %v1199
    %v1207 = vsub.f32 1.0, %v1203
    %v1208 = vsub.f32 1.0, %v1204
    %v1209 = vsub.f32 1.0, %v1205
    %v1210 = vsub.f32 1.0, %v1206
    %v1211 = vmul.f32 %v1207, %v1037
    %v1212 = vmul.f32 %v1208, %v1078
    %v1213 = vmul.f32 %v1209, %v1041
    %v1214 = vmul.f32 %v1210, %v1082
    %v1215 = vmul.f32 %v1207, %v1080
    %v1216 = vmul.f32 %v1208, %v1121
    %v1217 = vmul.f32 %v1209, %v1084
    %v1218 = vmul.f32 %v1210, %v1125
    %v1219 = vmul.f32 %v1207, %v1123
    %v1220 = vmul.f32 %v1208, %v1164
    %v1221 = vmul.f32 %v1209, %v1127
    %v1222 = vmul.f32 %v1210, %v1167
    %v1223 = vmul.f32 %v1193, %v1037
    %v1224 = vmul.f32 %v1194, %v1078
    %v1225 = vmul.f32 %v1198, %v1041
    %v1226 = vmul.f32 %v1199, %v1082
    %v1227 = vmul.f32 %v1223, 2.0
    %v1228 = vmul.f32 %v1224, 2.0
    %v1229 = vmul.f32 %v1225, 2.0
    %v1230 = vmul.f32 %v1226, 2.0
    %v1231 = vmul.f32 %v1227, %v1211
    %v1232 = vmul.f32 %v1228, %v1212
    %v1233 = vmul.f32 %v1229, %v1213
    %v1234 = vmul.f32 %v1230, %v1214
    %v1235 = vsub.f32 %v1219, %v1231
    %v1236 = vsub.f32 %v1220, %v1232
    %v1237 = vsub.f32 %v1221, %v1233
    %v1238 = vsub.f32 %v1222, %v1234
    %v1239 = vpack.c.bf16 %v1198, %v1193
    %v1240 = vpack.c.bf16 %v1199, %v1194
    %v1241 = vpack.c.bf16 %v1200, %v1195
    %v1242 = vpack.c.bf16 %v1201, %v1196
    %v1243 = vpack.c.bf16 %v1202, %v1197
    %v1249 = vunpack.c.l.b16 %v1239
    %v1250 = vunpack.c.l.b16 %v1240
    %v1251 = vunpack.c.l.b16 %v1241
    %v1252 = vunpack.c.l.b16 %v1242
    %v1253 = vunpack.c.l.b16 %v1243
    %v1254 = vunpack.c.h.b16 %v1239
    %v1255 = vunpack.c.h.b16 %v1240
    %v1256 = vunpack.c.h.b16 %v1241
    %v1257 = vunpack.c.h.b16 %v1242
    %v1258 = vunpack.c.h.b16 %v1243
    %v1259 = vpack.c.b16 %v1250, %v1249
    %v1260 = vpack.c.b16 %v1252, %v1251
    %v1261 = vpack.c.b16 %v1253, %v1253
    %v1262 = vpack.c.b16 %v1255, %v1254
    %v1263 = vpack.c.b16 %v1257, %v1256
    %v1264 = vpack.c.b16 %v1258, %v1258
    %1271 = vst [vmem:[#allocation2] sm:$0xff] %v1259
    %1272 = vst [vmem:[#allocation2 + $0x8] sm:$0xff] %v1260
    %1273 = vst [vmem:[#allocation2 + $0x10] sm:$0xf] %v1261
    %1274 = vst [vmem:[#allocation2 + $0x2c] sm:$0xff] %v1262
    %1275 = vst [vmem:[#allocation2 + $0x34] sm:$0xff] %v1263
    %1276 = vst [vmem:[#allocation2 + $0x3c] sm:$0xf] %v1264
    %v1277 = vpack.c.bf16 %v1213, %v1211
    %v1278 = vpack.c.bf16 %v1214, %v1212
    %v1281 = vunpack.c.l.b16 %v1277
    %v1282 = vunpack.c.l.b16 %v1278
    %v1283 = vunpack.c.h.b16 %v1277
    %v1284 = vunpack.c.h.b16 %v1278
    %v1285 = vpack.c.b16 %v1282, %v1281
    %v1286 = vpack.c.b16 %v1284, %v1283
    %1289 = vst [vmem:[#allocation2 + $0x14] sm:$0xff] %v1285
    %1290 = vst [vmem:[#allocation2 + $0x40] sm:$0xff] %v1286
    %v1291 = vpack.c.bf16 %v1217, %v1215
    %v1292 = vpack.c.bf16 %v1218, %v1216
    %v1295 = vunpack.c.l.b16 %v1291
    %v1296 = vunpack.c.l.b16 %v1292
    %v1297 = vunpack.c.h.b16 %v1291
    %v1298 = vunpack.c.h.b16 %v1292
    %v1299 = vpack.c.b16 %v1296, %v1295
    %v1300 = vpack.c.b16 %v1298, %v1297
    %1303 = vst [vmem:[#allocation2 + $0x1c] sm:$0xff] %v1299
    %1304 = vst [vmem:[#allocation2 + $0x48] sm:$0xff] %v1300
    %v1305 = vpack.c.bf16 %v1237, %v1235
    %v1306 = vpack.c.bf16 %v1238, %v1236
    %v1309 = vunpack.c.l.b16 %v1305
    %v1310 = vunpack.c.l.b16 %v1306
    %v1311 = vunpack.c.h.b16 %v1305
    %v1312 = vunpack.c.h.b16 %v1306
    %v1313 = vpack.c.b16 %v1310, %v1309
    %v1314 = vpack.c.b16 %v1312, %v1311
    %1317 = vst [vmem:[#allocation2 + $0x24] sm:$0xff] %v1313
    %1318 = vst [vmem:[#allocation2 + $0x50] sm:$0xff] %v1314
    %s1319 = scalar_lea.vmem %s3, 8
    %v1320 = vld [vmem:[%s1319] sm:$0xf]
    %v1321 = vld [vmem:[%s1319 + $0x4] sm:$0xf]
    %v1322 = vld [vmem:[#allocation2] sm:$0xff]
    %v1323 = vld [vmem:[#allocation2 + $0x8] sm:$0xff]
    %v1324 = vld [vmem:[#allocation2 + $0x10] sm:$0xff]
    %v1325 = vld [vmem:[#allocation2 + $0x18] sm:$0xff]
    %v1326 = vld [vmem:[#allocation2 + $0x20] sm:$0xff]
    %v1327 = vld [vmem:[#allocation2 + $0x28] sm:$0xf]
    %v1328 = vld [vmem:[#allocation2 + $0x2c] sm:$0xff]
    %v1329 = vld [vmem:[#allocation2 + $0x34] sm:$0xff]
    %v1330 = vld [vmem:[#allocation2 + $0x3c] sm:$0xff]
    %v1331 = vld [vmem:[#allocation2 + $0x44] sm:$0xff]
    %v1332 = vld [vmem:[#allocation2 + $0x4c] sm:$0xff]
    %v1333 = vld [vmem:[#allocation2 + $0x54] sm:$0xf]
    %v1334 = vld [vmem:[#allocation2 + $0x58] sm:$0xff]
    %v1335 = vld [vmem:[#allocation2 + $0x60] sm:$0xff]
    %v1336 = vld [vmem:[#allocation2 + $0x68] sm:$0xff]
    %v1337 = vld [vmem:[#allocation2 + $0x70] sm:$0xff]
    %v1338 = vld [vmem:[#allocation2 + $0x78] sm:$0xff]
    %v1339 = vld [vmem:[#allocation2 + $0x80] sm:$0xf]
    %v1340 = vld [vmem:[#allocation2 + $0x84] sm:$0xff]
    %v1341 = vld [vmem:[#allocation2 + $0x8c] sm:$0xff]
    %v1342 = vld [vmem:[#allocation2 + $0x94] sm:$0xff]
    %v1343 = vld [vmem:[#allocation2 + $0x9c] sm:$0xff]
    %v1344 = vld [vmem:[#allocation2 + $0xa4] sm:$0xff]
    %v1345 = vld [vmem:[#allocation2 + $0xac] sm:$0xf]
    %v1346 = vld [vmem:[#allocation2 + $0xb0] sm:$0xff]
    %v1347 = vld [vmem:[#allocation2 + $0xb8] sm:$0xff]
    %v1348 = vld [vmem:[#allocation2 + $0xc0] sm:$0xff]
    %v1349 = vld [vmem:[#allocation2 + $0xc8] sm:$0xff]
    %v1350 = vld [vmem:[#allocation2 + $0xd0] sm:$0xff]
    %v1351 = vld [vmem:[#allocation2 + $0xd8] sm:$0xf]
    %v1352 = vld [vmem:[#allocation2 + $0xdc] sm:$0xff]
    %v1353 = vld [vmem:[#allocation2 + $0xe4] sm:$0xff]
    %v1354 = vld [vmem:[#allocation2 + $0xec] sm:$0xff]
    %v1355 = vld [vmem:[#allocation2 + $0xf4] sm:$0xff]
    %v1356 = vld [vmem:[#allocation2 + $0xfc] sm:$0xff]
    %v1357 = vld [vmem:[#allocation2 + $0x104] sm:$0xf]
    %v1358 = vld [vmem:[#allocation2 + $0x108] sm:$0xff]
    %v1359 = vld [vmem:[#allocation2 + $0x110] sm:$0xff]
    %v1360 = vld [vmem:[#allocation2 + $0x118] sm:$0xff]
    %v1361 = vld [vmem:[#allocation2 + $0x120] sm:$0xff]
    %v1362 = vld [vmem:[#allocation2 + $0x128] sm:$0xff]
    %v1363 = vld [vmem:[#allocation2 + $0x130] sm:$0xf]
    %v1364 = vld [vmem:[#allocation2 + $0x134] sm:$0xff]
    %v1365 = vld [vmem:[#allocation2 + $0x13c] sm:$0xff]
    %v1366 = vld [vmem:[#allocation2 + $0x144] sm:$0xff]
    %v1367 = vld [vmem:[#allocation2 + $0x14c] sm:$0xff]
    %v1368 = vld [vmem:[#allocation2 + $0x154] sm:$0xff]
    %v1369 = vld [vmem:[#allocation2 + $0x15c] sm:$0xf]
    %v1370 = vld [vmem:[#allocation2 + $0x160] sm:$0xff]
    %v1371 = vld [vmem:[#allocation2 + $0x168] sm:$0xff]
    %v1372 = vld [vmem:[#allocation2 + $0x170] sm:$0xff]
    %v1373 = vld [vmem:[#allocation2 + $0x178] sm:$0xff]
    %v1374 = vld [vmem:[#allocation2 + $0x180] sm:$0xff]
    %v1375 = vld [vmem:[#allocation2 + $0x188] sm:$0xf]
    %v1376 = vld [vmem:[#allocation2 + $0x18c] sm:$0xff]
    %v1377 = vld [vmem:[#allocation2 + $0x194] sm:$0xff]
    %v1378 = vld [vmem:[#allocation2 + $0x19c] sm:$0xff]
    %v1379 = vld [vmem:[#allocation2 + $0x1a4] sm:$0xff]
    %v1380 = vld [vmem:[#allocation2 + $0x1ac] sm:$0xff]
    %v1381 = vld [vmem:[#allocation2 + $0x1b4] sm:$0xf]
    %v1382 = vld [vmem:[#allocation2 + $0x1b8] sm:$0xff]
    %v1383 = vld [vmem:[#allocation2 + $0x1c0] sm:$0xff]
    %v1384 = vld [vmem:[#allocation2 + $0x1c8] sm:$0xff]
    %v1385 = vld [vmem:[#allocation2 + $0x1d0] sm:$0xff]
    %v1386 = vld [vmem:[#allocation2 + $0x1d8] sm:$0xff]
    %v1387 = vld [vmem:[#allocation2 + $0x1e0] sm:$0xf]
    %v1388 = vld [vmem:[#allocation2 + $0x1e4] sm:$0xff]
    %v1389 = vld [vmem:[#allocation2 + $0x1ec] sm:$0xff]
    %v1390 = vld [vmem:[#allocation2 + $0x1f4] sm:$0xff]
    %v1391 = vld [vmem:[#allocation2 + $0x1fc] sm:$0xff]
    %v1392 = vld [vmem:[#allocation2 + $0x204] sm:$0xff]
    %v1393 = vld [vmem:[#allocation2 + $0x20c] sm:$0xf]
    %v1394 = vld [vmem:[#allocation2 + $0x210] sm:$0xff]
    %v1395 = vld [vmem:[#allocation2 + $0x218] sm:$0xff]
    %v1396 = vld [vmem:[#allocation2 + $0x220] sm:$0xff]
    %v1397 = vld [vmem:[#allocation2 + $0x228] sm:$0xff]
    %v1398 = vld [vmem:[#allocation2 + $0x230] sm:$0xff]
    %v1399 = vld [vmem:[#allocation2 + $0x238] sm:$0xf]
    %v1400 = vld [vmem:[#allocation2 + $0x23c] sm:$0xff]
    %v1401 = vld [vmem:[#allocation2 + $0x244] sm:$0xff]
    %v1402 = vld [vmem:[#allocation2 + $0x24c] sm:$0xff]
    %v1403 = vld [vmem:[#allocation2 + $0x254] sm:$0xff]
    %v1404 = vld [vmem:[#allocation2 + $0x25c] sm:$0xff]
    %v1405 = vld [vmem:[#allocation2 + $0x264] sm:$0xf]
    %v1406 = vld [vmem:[#allocation2 + $0x268] sm:$0xff]
    %v1407 = vld [vmem:[#allocation2 + $0x270] sm:$0xff]
    %v1408 = vld [vmem:[#allocation2 + $0x278] sm:$0xff]
    %v1409 = vld [vmem:[#allocation2 + $0x280] sm:$0xff]
    %v1410 = vld [vmem:[#allocation2 + $0x288] sm:$0xff]
    %v1411 = vld [vmem:[#allocation2 + $0x290] sm:$0xf]
    %v1412 = vld [vmem:[#allocation2 + $0x294] sm:$0xff]
    %v1413 = vld [vmem:[#allocation2 + $0x29c] sm:$0xff]
    %v1414 = vld [vmem:[#allocation2 + $0x2a4] sm:$0xff]
    %v1415 = vld [vmem:[#allocation2 + $0x2ac] sm:$0xff]
    %v1416 = vld [vmem:[#allocation2 + $0x2b4] sm:$0xff]
    %v1417 = vld [vmem:[#allocation2 + $0x2bc] sm:$0xf]
    %v1420 = vunpack.c.l.b16 %v1320
    %v1421 = vunpack.c.l.b16 %v1321
    %v1422 = vpack.c.b16 %v1421, %v1420
    %v1520 = vunpack.c.l.b16 %v1322
    %v1521 = vunpack.c.h.b16 %v1322
    %v1522 = vunpack.c.l.b16 %v1323
    %v1523 = vunpack.c.h.b16 %v1323
    %v1524 = vunpack.c.l.b16 %v1324
    %v1525 = vunpack.c.h.b16 %v1324
    %v1526 = vunpack.c.l.b16 %v1325
    %v1527 = vunpack.c.h.b16 %v1325
    %v1528 = vunpack.c.l.b16 %v1326
    %v1529 = vunpack.c.h.b16 %v1326
    %v1530 = vunpack.c.l.b16 %v1327
    %v1531 = vunpack.c.l.b16 %v1328
    %v1532 = vunpack.c.h.b16 %v1328
    %v1533 = vunpack.c.l.b16 %v1329
    %v1534 = vunpack.c.h.b16 %v1329
    %v1535 = vunpack.c.l.b16 %v1330
    %v1536 = vunpack.c.h.b16 %v1330
    %v1537 = vunpack.c.l.b16 %v1331
    %v1538 = vunpack.c.h.b16 %v1331
    %v1539 = vunpack.c.l.b16 %v1332
    %v1540 = vunpack.c.h.b16 %v1332
    %v1541 = vunpack.c.l.b16 %v1333
    %v1542 = vunpack.c.l.b16 %v1334
    %v1543 = vunpack.c.h.b16 %v1334
    %v1544 = vunpack.c.l.b16 %v1335
    %v1545 = vunpack.c.h.b16 %v1335
    %v1546 = vunpack.c.l.b16 %v1336
    %v1547 = vunpack.c.h.b16 %v1336
    %v1548 = vunpack.c.l.b16 %v1337
    %v1549 = vunpack.c.h.b16 %v1337
    %v1550 = vunpack.c.l.b16 %v1338
    %v1551 = vunpack.c.h.b16 %v1338
    %v1552 = vunpack.c.l.b16 %v1339
    %v1553 = vunpack.c.l.b16 %v1340
    %v1554 = vunpack.c.h.b16 %v1340
    %v1555 = vunpack.c.l.b16 %v1341
    %v1556 = vunpack.c.h.b16 %v1341
    %v1557 = vunpack.c.l.b16 %v1342
    %v1558 = vunpack.c.h.b16 %v1342
    %v1559 = vunpack.c.l.b16 %v1343
    %v1560 = vunpack.c.h.b16 %v1343
    %v1561 = vunpack.c.l.b16 %v1344
    %v1562 = vunpack.c.h.b16 %v1344
    %v1563 = vunpack.c.l.b16 %v1345
    %v1564 = vunpack.c.l.b16 %v1346
    %v1565 = vunpack.c.h.b16 %v1346
    %v1566 = vunpack.c.l.b16 %v1347
    %v1567 = vunpack.c.h.b16 %v1347
    %v1568 = vunpack.c.l.b16 %v1348
    %v1569 = vunpack.c.h.b16 %v1348
    %v1570 = vunpack.c.l.b16 %v1349
    %v1571 = vunpack.c.h.b16 %v1349
    %v1572 = vunpack.c.l.b16 %v1350
    %v1573 = vunpack.c.h.b16 %v1350
    %v1574 = vunpack.c.l.b16 %v1351
    %v1575 = vunpack.c.l.b16 %v1352
    %v1576 = vunpack.c.h.b16 %v1352
    %v1577 = vunpack.c.l.b16 %v1353
    %v1578 = vunpack.c.h.b16 %v1353
    %v1579 = vunpack.c.l.b16 %v1354
    %v1580 = vunpack.c.h.b16 %v1354
    %v1581 = vunpack.c.l.b16 %v1355
    %v1582 = vunpack.c.h.b16 %v1355
    %v1583 = vunpack.c.l.b16 %v1356
    %v1584 = vunpack.c.h.b16 %v1356
    %v1585 = vunpack.c.l.b16 %v1357
    %v1586 = vunpack.c.l.b16 %v1358
    %v1587 = vunpack.c.h.b16 %v1358
    %v1588 = vunpack.c.l.b16 %v1359
    %v1589 = vunpack.c.h.b16 %v1359
    %v1590 = vunpack.c.l.b16 %v1360
    %v1591 = vunpack.c.h.b16 %v1360
    %v1592 = vunpack.c.l.b16 %v1361
    %v1593 = vunpack.c.h.b16 %v1361
    %v1594 = vunpack.c.l.b16 %v1362
    %v1595 = vunpack.c.h.b16 %v1362
    %v1596 = vunpack.c.l.b16 %v1363
    %v1597 = vunpack.c.l.b16 %v1364
    %v1598 = vunpack.c.h.b16 %v1364
    %v1599 = vunpack.c.l.b16 %v1365
    %v1600 = vunpack.c.h.b16 %v1365
    %v1601 = vunpack.c.l.b16 %v1366
    %v1602 = vunpack.c.h.b16 %v1366
    %v1603 = vunpack.c.l.b16 %v1367
    %v1604 = vunpack.c.h.b16 %v1367
    %v1605 = vunpack.c.l.b16 %v1368
    %v1606 = vunpack.c.h.b16 %v1368
    %v1607 = vunpack.c.l.b16 %v1369
    %v1608 = vunpack.c.l.b16 %v1370
    %v1609 = vunpack.c.h.b16 %v1370
    %v1610 = vunpack.c.l.b16 %v1371
    %v1611 = vunpack.c.h.b16 %v1371
    %v1612 = vunpack.c.l.b16 %v1372
    %v1613 = vunpack.c.h.b16 %v1372
    %v1614 = vunpack.c.l.b16 %v1373
    %v1615 = vunpack.c.h.b16 %v1373
    %v1616 = vunpack.c.l.b16 %v1374
    %v1617 = vunpack.c.h.b16 %v1374
    %v1618 = vunpack.c.l.b16 %v1375
    %v1619 = vunpack.c.l.b16 %v1376
    %v1620 = vunpack.c.h.b16 %v1376
    %v1621 = vunpack.c.l.b16 %v1377
    %v1622 = vunpack.c.h.b16 %v1377
    %v1623 = vunpack.c.l.b16 %v1378
    %v1624 = vunpack.c.h.b16 %v1378
    %v1625 = vunpack.c.l.b16 %v1379
    %v1626 = vunpack.c.h.b16 %v1379
    %v1627 = vunpack.c.l.b16 %v1380
    %v1628 = vunpack.c.h.b16 %v1380
    %v1629 = vunpack.c.l.b16 %v1381
    %v1630 = vunpack.c.l.b16 %v1382
    %v1631 = vunpack.c.h.b16 %v1382
    %v1632 = vunpack.c.l.b16 %v1383
    %v1633 = vunpack.c.h.b16 %v1383
    %v1634 = vunpack.c.l.b16 %v1384
    %v1635 = vunpack.c.h.b16 %v1384
    %v1636 = vunpack.c.l.b16 %v1385
    %v1637 = vunpack.c.h.b16 %v1385
    %v1638 = vunpack.c.l.b16 %v1386
    %v1639 = vunpack.c.h.b16 %v1386
    %v1640 = vunpack.c.l.b16 %v1387
    %v1641 = vunpack.c.l.b16 %v1388
    %v1642 = vunpack.c.h.b16 %v1388
    %v1643 = vunpack.c.l.b16 %v1389
    %v1644 = vunpack.c.h.b16 %v1389
    %v1645 = vunpack.c.l.b16 %v1390
    %v1646 = vunpack.c.h.b16 %v1390
    %v1647 = vunpack.c.l.b16 %v1391
    %v1648 = vunpack.c.h.b16 %v1391
    %v1649 = vunpack.c.l.b16 %v1392
    %v1650 = vunpack.c.h.b16 %v1392
    %v1651 = vunpack.c.l.b16 %v1393
    %v1652 = vunpack.c.l.b16 %v1394
    %v1653 = vunpack.c.h.b16 %v1394
    %v1654 = vunpack.c.l.b16 %v1395
    %v1655 = vunpack.c.h.b16 %v1395
    %v1656 = vunpack.c.l.b16 %v1396
    %v1657 = vunpack.c.h.b16 %v1396
    %v1658 = vunpack.c.l.b16 %v1397
    %v1659 = vunpack.c.h.b16 %v1397
    %v1660 = vunpack.c.l.b16 %v1398
    %v1661 = vunpack.c.h.b16 %v1398
    %v1662 = vunpack.c.l.b16 %v1399
    %v1663 = vunpack.c.l.b16 %v1400
    %v1664 = vunpack.c.h.b16 %v1400
    %v1665 = vunpack.c.l.b16 %v1401
    %v1666 = vunpack.c.h.b16 %v1401
    %v1667 = vunpack.c.l.b16 %v1402
    %v1668 = vunpack.c.h.b16 %v1402
    %v1669 = vunpack.c.l.b16 %v1403
    %v1670 = vunpack.c.h.b16 %v1403
    %v1671 = vunpack.c.l.b16 %v1404
    %v1672 = vunpack.c.h.b16 %v1404
    %v1673 = vunpack.c.l.b16 %v1405
    %v1674 = vunpack.c.l.b16 %v1406
    %v1675 = vunpack.c.h.b16 %v1406
    %v1676 = vunpack.c.l.b16 %v1407
    %v1677 = vunpack.c.h.b16 %v1407
    %v1678 = vunpack.c.l.b16 %v1408
    %v1679 = vunpack.c.h.b16 %v1408
    %v1680 = vunpack.c.l.b16 %v1409
    %v1681 = vunpack.c.h.b16 %v1409
    %v1682 = vunpack.c.l.b16 %v1410
    %v1683 = vunpack.c.h.b16 %v1410
    %v1684 = vunpack.c.l.b16 %v1411
    %v1685 = vunpack.c.l.b16 %v1412
    %v1686 = vunpack.c.h.b16 %v1412
    %v1687 = vunpack.c.l.b16 %v1413
    %v1688 = vunpack.c.h.b16 %v1413
    %v1689 = vunpack.c.l.b16 %v1414
    %v1690 = vunpack.c.h.b16 %v1414
    %v1691 = vunpack.c.l.b16 %v1415
    %v1692 = vunpack.c.h.b16 %v1415
    %v1693 = vunpack.c.l.b16 %v1416
    %v1694 = vunpack.c.h.b16 %v1416
    %v1695 = vunpack.c.l.b16 %v1417
    %v1696 = vpack.c.b16 %v1531, %v1520
    %v1697 = vpack.c.b16 %v1532, %v1521
    %v1698 = vpack.c.b16 %v1533, %v1522
    %v1699 = vpack.c.b16 %v1534, %v1523
    %v1700 = vpack.c.b16 %v1535, %v1524
    %v1701 = vpack.c.b16 %v1536, %v1525
    %v1702 = vpack.c.b16 %v1537, %v1526
    %v1703 = vpack.c.b16 %v1538, %v1527
    %v1704 = vpack.c.b16 %v1539, %v1528
    %v1705 = vpack.c.b16 %v1540, %v1529
    %v1706 = vpack.c.b16 %v1541, %v1530
    %v1707 = vpack.c.b16 %v1553, %v1542
    %v1708 = vpack.c.b16 %v1554, %v1543
    %v1709 = vpack.c.b16 %v1555, %v1544
    %v1710 = vpack.c.b16 %v1556, %v1545
    %v1711 = vpack.c.b16 %v1557, %v1546
    %v1712 = vpack.c.b16 %v1558, %v1547
    %v1713 = vpack.c.b16 %v1559, %v1548
    %v1714 = vpack.c.b16 %v1560, %v1549
    %v1715 = vpack.c.b16 %v1561, %v1550
    %v1716 = vpack.c.b16 %v1562, %v1551
    %v1717 = vpack.c.b16 %v1563, %v1552
    %v1718 = vpack.c.b16 %v1575, %v1564
    %v1719 = vpack.c.b16 %v1576, %v1565
    %v1720 = vpack.c.b16 %v1577, %v1566
    %v1721 = vpack.c.b16 %v1578, %v1567
    %v1722 = vpack.c.b16 %v1579, %v1568
    %v1723 = vpack.c.b16 %v1580, %v1569
    %v1724 = vpack.c.b16 %v1581, %v1570
    %v1725 = vpack.c.b16 %v1582, %v1571
    %v1726 = vpack.c.b16 %v1583, %v1572
    %v1727 = vpack.c.b16 %v1584, %v1573
    %v1728 = vpack.c.b16 %v1585, %v1574
    %v1729 = vpack.c.b16 %v1597, %v1586
    %v1730 = vpack.c.b16 %v1598, %v1587
    %v1731 = vpack.c.b16 %v1599, %v1588
    %v1732 = vpack.c.b16 %v1600, %v1589
    %v1733 = vpack.c.b16 %v1601, %v1590
    %v1734 = vpack.c.b16 %v1602, %v1591
    %v1735 = vpack.c.b16 %v1603, %v1592
    %v1736 = vpack.c.b16 %v1604, %v1593
    %v1737 = vpack.c.b16 %v1605, %v1594
    %v1738 = vpack.c.b16 %v1606, %v1595
    %v1739 = vpack.c.b16 %v1607, %v1596
    %v1740 = vpack.c.b16 %v1619, %v1608
    %v1741 = vpack.c.b16 %v1620, %v1609
    %v1742 = vpack.c.b16 %v1621, %v1610
    %v1743 = vpack.c.b16 %v1622, %v1611
    %v1744 = vpack.c.b16 %v1623, %v1612
    %v1745 = vpack.c.b16 %v1624, %v1613
    %v1746 = vpack.c.b16 %v1625, %v1614
    %v1747 = vpack.c.b16 %v1626, %v1615
    %v1748 = vpack.c.b16 %v1627, %v1616
    %v1749 = vpack.c.b16 %v1628, %v1617
    %v1750 = vpack.c.b16 %v1629, %v1618
    %v1751 = vpack.c.b16 %v1641, %v1630
    %v1752 = vpack.c.b16 %v1642, %v1631
    %v1753 = vpack.c.b16 %v1643, %v1632
    %v1754 = vpack.c.b16 %v1644, %v1633
    %v1755 = vpack.c.b16 %v1645, %v1634
    %v1756 = vpack.c.b16 %v1646, %v1635
    %v1757 = vpack.c.b16 %v1647, %v1636
    %v1758 = vpack.c.b16 %v1648, %v1637
    %v1759 = vpack.c.b16 %v1649, %v1638
    %v1760 = vpack.c.b16 %v1650, %v1639
    %v1761 = vpack.c.b16 %v1651, %v1640
    %v1762 = vpack.c.b16 %v1663, %v1652
    %v1763 = vpack.c.b16 %v1664, %v1653
    %v1764 = vpack.c.b16 %v1665, %v1654
    %v1765 = vpack.c.b16 %v1666, %v1655
    %v1766 = vpack.c.b16 %v1667, %v1656
    %v1767 = vpack.c.b16 %v1668, %v1657
    %v1768 = vpack.c.b16 %v1669, %v1658
    %v1769 = vpack.c.b16 %v1670, %v1659
    %v1770 = vpack.c.b16 %v1671, %v1660
    %v1771 = vpack.c.b16 %v1672, %v1661
    %v1772 = vpack.c.b16 %v1673, %v1662
    %v1773 = vpack.c.b16 %v1685, %v1674
    %v1774 = vpack.c.b16 %v1686, %v1675
    %v1775 = vpack.c.b16 %v1687, %v1676
    %v1776 = vpack.c.b16 %v1688, %v1677
    %v1777 = vpack.c.b16 %v1689, %v1678
    %v1778 = vpack.c.b16 %v1690, %v1679
    %v1779 = vpack.c.b16 %v1691, %v1680
    %v1780 = vpack.c.b16 %v1692, %v1681
    %v1781 = vpack.c.b16 %v1693, %v1682
    %v1782 = vpack.c.b16 %v1694, %v1683
    %v1783 = vpack.c.b16 %v1695, %v1684
    %1872 = vmatprep.subr.bf16.mxu0 %v1774
    %1873 = vmatpush1.bf16.msra.mxu0 %v1773
    %1874 = vmatprep.subr.bf16.mxu0 %v1763
    %1875 = vmatpush1.bf16.msra.mxu0 %v1762
    %1876 = vmatprep.subr.bf16.mxu0 %v1752
    %1877 = vmatpush1.bf16.msra.mxu0 %v1751
    %1878 = vmatprep.subr.bf16.mxu0 %v1741
    %1879 = vmatpush1.bf16.msra.mxu0 %v1740
    %1880 = vmatprep.subr.bf16.mxu0 %v1730
    %1881 = vmatpush1.bf16.msra.mxu0 %v1729
    %1882 = vmatprep.subr.bf16.mxu0 %v1719
    %1883 = vmatpush1.bf16.msra.mxu0 %v1718
    %1884 = vmatprep.subr.bf16.mxu0 %v1708
    %1885 = vmatpush1.bf16.msra.mxu0 %v1707
    %1886 = vmatprep.subr.bf16.mxu0 %v1697
    %1887 = vmatpush1.bf16.msra.mxu0 %v1696
    %1888 = vmatprep.subr.bf16.mxu0 0
    %1889 = vmatpush2.bf16.msra.mxu0 0
    %1890 = vmatprep.subr.bf16.mxu0 0
    %1891 = vmatpush2.bf16.msra.mxu0 0
    %1892 = vmatprep.subr.bf16.mxu0 0
    %1893 = vmatpush2.bf16.msra.mxu0 0
    %1894 = vmatprep.subr.bf16.mxu0 0
    %1895 = vmatpush2.bf16.msra.mxu0 0
    %1896 = vmatprep.subr.bf16.mxu0 0
    %1897 = vmatpush2.bf16.msra.mxu0 0
    %1898 = vmatprep.subr.bf16.mxu0 0
    %1899 = vmatpush2.bf16.msra.mxu0 0
    %1900 = vmatprep.subr.bf16.mxu0 0
    %1901 = vmatpush2.bf16.msra.mxu0 0
    %1902 = vmatprep.subr.bf16.mxu0 0
    %1903 = vmatpush2.bf16.msra.mxu0 0
    %1904 = vmatprep.mubr.bf16.mxu0 0
    %1905 = vmatmul.mubr.bf16.gmra.mxu0 %v1422
    %v1906 = vpop.f32.mrf.mxu0
    %v1907 = vadd.f32 0.0, %v1906
    %v1908 = vpop.f32.mrf.mxu0
    %v1909 = vadd.f32 0.0, %v1908
    %v1910 = vpop.f32.mrf.mxu0
    %v1911 = vadd.f32 0.0, %v1910
    %v1912 = vpop.f32.mrf.mxu0
    %v1913 = vadd.f32 0.0, %v1912
    %1914 = vdwg.mxu0
    %1915 = vmatprep.subr.bf16.mxu0 %v1776
    %1916 = vmatpush1.bf16.msra.mxu0 %v1775
    %1917 = vmatprep.subr.bf16.mxu0 %v1765
    %1918 = vmatpush1.bf16.msra.mxu0 %v1764
    %1919 = vmatprep.subr.bf16.mxu0 %v1754
    %1920 = vmatpush1.bf16.msra.mxu0 %v1753
    %1921 = vmatprep.subr.bf16.mxu0 %v1743
    %1922 = vmatpush1.bf16.msra.mxu0 %v1742
    %1923 = vmatprep.subr.bf16.mxu0 %v1732
    %1924 = vmatpush1.bf16.msra.mxu0 %v1731
    %1925 = vmatprep.subr.bf16.mxu0 %v1721
    %1926 = vmatpush1.bf16.msra.mxu0 %v1720
    %1927 = vmatprep.subr.bf16.mxu0 %v1710
    %1928 = vmatpush1.bf16.msra.mxu0 %v1709
    %1929 = vmatprep.subr.bf16.mxu0 %v1699
    %1930 = vmatpush1.bf16.msra.mxu0 %v1698
    %1931 = vmatprep.subr.bf16.mxu0 0
    %1932 = vmatpush2.bf16.msra.mxu0 0
    %1933 = vmatprep.subr.bf16.mxu0 0
    %1934 = vmatpush2.bf16.msra.mxu0 0
    %1935 = vmatprep.subr.bf16.mxu0 0
    %1936 = vmatpush2.bf16.msra.mxu0 0
    %1937 = vmatprep.subr.bf16.mxu0 0
    %1938 = vmatpush2.bf16.msra.mxu0 0
    %1939 = vmatprep.subr.bf16.mxu0 0
    %1940 = vmatpush2.bf16.msra.mxu0 0
    %1941 = vmatprep.subr.bf16.mxu0 0
    %1942 = vmatpush2.bf16.msra.mxu0 0
    %1943 = vmatprep.subr.bf16.mxu0 0
    %1944 = vmatpush2.bf16.msra.mxu0 0
    %1945 = vmatprep.subr.bf16.mxu0 0
    %1946 = vmatpush2.bf16.msra.mxu0 0
    %1947 = vmatprep.mubr.bf16.mxu0 0
    %1948 = vmatmul.mubr.bf16.gmra.mxu0 %v1422
    %v1949 = vpop.f32.mrf.mxu0
    %v1950 = vadd.f32 0.0, %v1949
    %v1951 = vpop.f32.mrf.mxu0
    %v1952 = vadd.f32 0.0, %v1951
    %v1953 = vpop.f32.mrf.mxu0
    %v1954 = vadd.f32 0.0, %v1953
    %v1955 = vpop.f32.mrf.mxu0
    %v1956 = vadd.f32 0.0, %v1955
    %1957 = vdwg.mxu0
    %1958 = vmatprep.subr.bf16.mxu0 %v1778
    %1959 = vmatpush1.bf16.msra.mxu0 %v1777
    %1960 = vmatprep.subr.bf16.mxu0 %v1767
    %1961 = vmatpush1.bf16.msra.mxu0 %v1766
    %1962 = vmatprep.subr.bf16.mxu0 %v1756
    %1963 = vmatpush1.bf16.msra.mxu0 %v1755
    %1964 = vmatprep.subr.bf16.mxu0 %v1745
    %1965 = vmatpush1.bf16.msra.mxu0 %v1744
    %1966 = vmatprep.subr.bf16.mxu0 %v1734
    %1967 = vmatpush1.bf16.msra.mxu0 %v1733
    %1968 = vmatprep.subr.bf16.mxu0 %v1723
    %1969 = vmatpush1.bf16.msra.mxu0 %v1722
    %1970 = vmatprep.subr.bf16.mxu0 %v1712
    %1971 = vmatpush1.bf16.msra.mxu0 %v1711
    %1972 = vmatprep.subr.bf16.mxu0 %v1701
    %1973 = vmatpush1.bf16.msra.mxu0 %v1700
    %1974 = vmatprep.subr.bf16.mxu0 0
    %1975 = vmatpush2.bf16.msra.mxu0 0
    %1976 = vmatprep.subr.bf16.mxu0 0
    %1977 = vmatpush2.bf16.msra.mxu0 0
    %1978 = vmatprep.subr.bf16.mxu0 0
    %1979 = vmatpush2.bf16.msra.mxu0 0
    %1980 = vmatprep.subr.bf16.mxu0 0
    %1981 = vmatpush2.bf16.msra.mxu0 0
    %1982 = vmatprep.subr.bf16.mxu0 0
    %1983 = vmatpush2.bf16.msra.mxu0 0
    %1984 = vmatprep.subr.bf16.mxu0 0
    %1985 = vmatpush2.bf16.msra.mxu0 0
    %1986 = vmatprep.subr.bf16.mxu0 0
    %1987 = vmatpush2.bf16.msra.mxu0 0
    %1988 = vmatprep.subr.bf16.mxu0 0
    %1989 = vmatpush2.bf16.msra.mxu0 0
    %1990 = vmatprep.mubr.bf16.mxu0 0
    %1991 = vmatmul.mubr.bf16.gmra.mxu0 %v1422
    %v1992 = vpop.f32.mrf.mxu0
    %v1993 = vadd.f32 0.0, %v1992
    %v1994 = vpop.f32.mrf.mxu0
    %v1995 = vadd.f32 0.0, %v1994
    %v1996 = vpop.f32.mrf.mxu0
    %v1997 = vadd.f32 0.0, %v1996
    %v1998 = vpop.f32.mrf.mxu0
    %v1999 = vadd.f32 0.0, %v1998
    %2000 = vdwg.mxu0
    %2001 = vmatprep.subr.bf16.mxu0 %v1780
    %2002 = vmatpush1.bf16.msra.mxu0 %v1779
    %2003 = vmatprep.subr.bf16.mxu0 %v1769
    %2004 = vmatpush1.bf16.msra.mxu0 %v1768
    %2005 = vmatprep.subr.bf16.mxu0 %v1758
    %2006 = vmatpush1.bf16.msra.mxu0 %v1757
    %2007 = vmatprep.subr.bf16.mxu0 %v1747
    %2008 = vmatpush1.bf16.msra.mxu0 %v1746
    %2009 = vmatprep.subr.bf16.mxu0 %v1736
    %2010 = vmatpush1.bf16.msra.mxu0 %v1735
    %2011 = vmatprep.subr.bf16.mxu0 %v1725
    %2012 = vmatpush1.bf16.msra.mxu0 %v1724
    %2013 = vmatprep.subr.bf16.mxu0 %v1714
    %2014 = vmatpush1.bf16.msra.mxu0 %v1713
    %2015 = vmatprep.subr.bf16.mxu0 %v1703
    %2016 = vmatpush1.bf16.msra.mxu0 %v1702
    %2017 = vmatprep.subr.bf16.mxu0 0
    %2018 = vmatpush2.bf16.msra.mxu0 0
    %2019 = vmatprep.subr.bf16.mxu0 0
    %2020 = vmatpush2.bf16.msra.mxu0 0
    %2021 = vmatprep.subr.bf16.mxu0 0
    %2022 = vmatpush2.bf16.msra.mxu0 0
    %2023 = vmatprep.subr.bf16.mxu0 0
    %2024 = vmatpush2.bf16.msra.mxu0 0
    %2025 = vmatprep.subr.bf16.mxu0 0
    %2026 = vmatpush2.bf16.msra.mxu0 0
    %2027 = vmatprep.subr.bf16.mxu0 0
    %2028 = vmatpush2.bf16.msra.mxu0 0
    %2029 = vmatprep.subr.bf16.mxu0 0
    %2030 = vmatpush2.bf16.msra.mxu0 0
    %2031 = vmatprep.subr.bf16.mxu0 0
    %2032 = vmatpush2.bf16.msra.mxu0 0
    %2033 = vmatprep.mubr.bf16.mxu0 0
    %2034 = vmatmul.mubr.bf16.gmra.mxu0 %v1422
    %v2035 = vpop.f32.mrf.mxu0
    %v2036 = vadd.f32 0.0, %v2035
    %v2037 = vpop.f32.mrf.mxu0
    %v2038 = vadd.f32 0.0, %v2037
    %v2039 = vpop.f32.mrf.mxu0
    %v2040 = vadd.f32 0.0, %v2039
    %v2041 = vpop.f32.mrf.mxu0
    %v2042 = vadd.f32 0.0, %v2041
    %2043 = vdwg.mxu0
    %2044 = vmatprep.subr.bf16.mxu0 %v1782
    %2045 = vmatpush1.bf16.msra.mxu0 %v1781
    %2046 = vmatprep.subr.bf16.mxu0 %v1771
    %2047 = vmatpush1.bf16.msra.mxu0 %v1770
    %2048 = vmatprep.subr.bf16.mxu0 %v1760
    %2049 = vmatpush1.bf16.msra.mxu0 %v1759
    %2050 = vmatprep.subr.bf16.mxu0 %v1749
    %2051 = vmatpush1.bf16.msra.mxu0 %v1748
    %2052 = vmatprep.subr.bf16.mxu0 %v1738
    %2053 = vmatpush1.bf16.msra.mxu0 %v1737
    %2054 = vmatprep.subr.bf16.mxu0 %v1727
    %2055 = vmatpush1.bf16.msra.mxu0 %v1726
    %2056 = vmatprep.subr.bf16.mxu0 %v1716
    %2057 = vmatpush1.bf16.msra.mxu0 %v1715
    %2058 = vmatprep.subr.bf16.mxu0 %v1705
    %2059 = vmatpush1.bf16.msra.mxu0 %v1704
    %2060 = vmatprep.subr.bf16.mxu0 0
    %2061 = vmatpush2.bf16.msra.mxu0 0
    %2062 = vmatprep.subr.bf16.mxu0 0
    %2063 = vmatpush2.bf16.msra.mxu0 0
    %2064 = vmatprep.subr.bf16.mxu0 0
    %2065 = vmatpush2.bf16.msra.mxu0 0
    %2066 = vmatprep.subr.bf16.mxu0 0
    %2067 = vmatpush2.bf16.msra.mxu0 0
    %2068 = vmatprep.subr.bf16.mxu0 0
    %2069 = vmatpush2.bf16.msra.mxu0 0
    %2070 = vmatprep.subr.bf16.mxu0 0
    %2071 = vmatpush2.bf16.msra.mxu0 0
    %2072 = vmatprep.subr.bf16.mxu0 0
    %2073 = vmatpush2.bf16.msra.mxu0 0
    %2074 = vmatprep.subr.bf16.mxu0 0
    %2075 = vmatpush2.bf16.msra.mxu0 0
    %2076 = vmatprep.mubr.bf16.mxu0 0
    %2077 = vmatmul.mubr.bf16.gmra.mxu0 %v1422
    %v2078 = vpop.f32.mrf.mxu0
    %v2079 = vadd.f32 0.0, %v2078
    %v2080 = vpop.f32.mrf.mxu0
    %v2081 = vadd.f32 0.0, %v2080
    %v2082 = vpop.f32.mrf.mxu0
    %v2083 = vadd.f32 0.0, %v2082
    %v2084 = vpop.f32.mrf.mxu0
    %v2085 = vadd.f32 0.0, %v2084
    %2086 = vdwg.mxu0
    %2087 = vmatprep.subr.bf16.mxu0 0
    %2088 = vmatpush1.bf16.msra.mxu0 %v1783
    %2089 = vmatprep.subr.bf16.mxu0 0
    %2090 = vmatpush1.bf16.msra.mxu0 %v1772
    %2091 = vmatprep.subr.bf16.mxu0 0
    %2092 = vmatpush1.bf16.msra.mxu0 %v1761
    %2093 = vmatprep.subr.bf16.mxu0 0
    %2094 = vmatpush1.bf16.msra.mxu0 %v1750
    %2095 = vmatprep.subr.bf16.mxu0 0
    %2096 = vmatpush1.bf16.msra.mxu0 %v1739
    %2097 = vmatprep.subr.bf16.mxu0 0
    %2098 = vmatpush1.bf16.msra.mxu0 %v1728
    %2099 = vmatprep.subr.bf16.mxu0 0
    %2100 = vmatpush1.bf16.msra.mxu0 %v1717
    %2101 = vmatprep.subr.bf16.mxu0 0
    %2102 = vmatpush1.bf16.msra.mxu0 %v1706
    %2103 = vmatprep.subr.bf16.mxu0 0
    %2104 = vmatpush2.bf16.msra.mxu0 0
    %2105 = vmatprep.subr.bf16.mxu0 0
    %2106 = vmatpush2.bf16.msra.mxu0 0
    %2107 = vmatprep.subr.bf16.mxu0 0
    %2108 = vmatpush2.bf16.msra.mxu0 0
    %2109 = vmatprep.subr.bf16.mxu0 0
    %2110 = vmatpush2.bf16.msra.mxu0 0
    %2111 = vmatprep.subr.bf16.mxu0 0
    %2112 = vmatpush2.bf16.msra.mxu0 0
    %2113 = vmatprep.subr.bf16.mxu0 0
    %2114 = vmatpush2.bf16.msra.mxu0 0
    %2115 = vmatprep.subr.bf16.mxu0 0
    %2116 = vmatpush2.bf16.msra.mxu0 0
    %2117 = vmatprep.subr.bf16.mxu0 0
    %2118 = vmatpush2.bf16.msra.mxu0 0
    %2119 = vmatprep.mubr.bf16.mxu0 0
    %2120 = vmatmul.mubr.bf16.gmra.mxu0 %v1422
    %v2121 = vpop.f32.mrf.mxu0
    %v2122 = vadd.f32 0.0, %v2121
    %v2123 = vpop.f32.mrf.mxu0
    %v2124 = vpop.f32.mrf.mxu0
    %v2125 = vadd.f32 0.0, %v2124
    %v2126 = vpop.f32.mrf.mxu0
    %2127 = vdwg.mxu0
    %s2128 = scalar_lea.vmem %s4, 32
    %v2129 = vld [vmem:[%s2128] sm:$0xff]
    %v2130 = vld [vmem:[%s2128 + $0x8] sm:$0xff]
    %2132 = vset.pattern.permute.xlu0 0
    %2133 = vperm.xlu0 %2132, %v2129
    %v2134 = vpop.permute.xlu0 %2133
    %2137 = vset.pattern.permute.xlu0 0
    %2138 = vperm.xlu0 %2137, %v2130
    %v2139 = vpop.permute.xlu0 %2138
    %v2141 = vadd.f32 %v1907, %v2134
    %v2142 = vadd.f32 %v1909, %v2134
    %v2143 = vadd.f32 %v1950, %v2134
    %v2144 = vadd.f32 %v1952, %v2134
    %v2145 = vadd.f32 %v1993, %v2134
    %v2146 = vadd.f32 %v1911, %v2139
    %v2147 = vadd.f32 %v1913, %v2139
    %v2148 = vadd.f32 %v1954, %v2139
    %v2149 = vadd.f32 %v1956, %v2139
    %v2150 = vadd.f32 %v1997, %v2139
    %v2151 = vtanh.pop %v2141
    %v2152 = vtanh.pop %v2142
    %v2153 = vtanh.pop %v2143
    %v2154 = vtanh.pop %v2144
    %v2155 = vtanh.pop %v2145
    %v2156 = vtanh.pop %v2146
    %v2157 = vtanh.pop %v2147
    %v2158 = vtanh.pop %v2148
    %v2159 = vtanh.pop %v2149
    %v2160 = vtanh.pop %v2150
    %v2161 = vmul.f32 %v2151, %v2151
    %v2162 = vmul.f32 %v2152, %v2152
    %v2163 = vmul.f32 %v2156, %v2156
    %v2164 = vmul.f32 %v2157, %v2157
    %v2165 = vsub.f32 1.0, %v2161
    %v2166 = vsub.f32 1.0, %v2162
    %v2167 = vsub.f32 1.0, %v2163
    %v2168 = vsub.f32 1.0, %v2164
    %v2169 = vmul.f32 %v2165, %v1995
    %v2170 = vmul.f32 %v2166, %v2036
    %v2171 = vmul.f32 %v2167, %v1999
    %v2172 = vmul.f32 %v2168, %v2040
    %v2173 = vmul.f32 %v2165, %v2038
    %v2174 = vmul.f32 %v2166, %v2079
    %v2175 = vmul.f32 %v2167, %v2042
    %v2176 = vmul.f32 %v2168, %v2083
    %v2177 = vmul.f32 %v2165, %v2081
    %v2178 = vmul.f32 %v2166, %v2122
    %v2179 = vmul.f32 %v2167, %v2085
    %v2180 = vmul.f32 %v2168, %v2125
    %v2181 = vmul.f32 %v2151, %v1995
    %v2182 = vmul.f32 %v2152, %v2036
    %v2183 = vmul.f32 %v2156, %v1999
    %v2184 = vmul.f32 %v2157, %v2040
    %v2185 = vmul.f32 %v2181, 2.0
    %v2186 = vmul.f32 %v2182, 2.0
    %v2187 = vmul.f32 %v2183, 2.0
    %v2188 = vmul.f32 %v2184, 2.0
    %v2189 = vmul.f32 %v2185, %v2169
    %v2190 = vmul.f32 %v2186, %v2170
    %v2191 = vmul.f32 %v2187, %v2171
    %v2192 = vmul.f32 %v2188, %v2172
    %v2193 = vsub.f32 %v2177, %v2189
    %v2194 = vsub.f32 %v2178, %v2190
    %v2195 = vsub.f32 %v2179, %v2191
    %v2196 = vsub.f32 %v2180, %v2192
    %v2197 = vpack.c.bf16 %v2156, %v2151
    %v2198 = vpack.c.bf16 %v2157, %v2152
    %v2199 = vpack.c.bf16 %v2158, %v2153
    %v2200 = vpack.c.bf16 %v2159, %v2154
    %v2201 = vpack.c.bf16 %v2160, %v2155
    %v2207 = vunpack.c.l.b16 %v2197
    %v2208 = vunpack.c.l.b16 %v2198
    %v2209 = vunpack.c.l.b16 %v2199
    %v2210 = vunpack.c.l.b16 %v2200
    %v2211 = vunpack.c.l.b16 %v2201
    %v2212 = vunpack.c.h.b16 %v2197
    %v2213 = vunpack.c.h.b16 %v2198
    %v2214 = vunpack.c.h.b16 %v2199
    %v2215 = vunpack.c.h.b16 %v2200
    %v2216 = vunpack.c.h.b16 %v2201
    %v2217 = vpack.c.b16 %v2208, %v2207
    %v2218 = vpack.c.b16 %v2210, %v2209
    %v2219 = vpack.c.b16 %v2211, %v2211
    %v2220 = vpack.c.b16 %v2213, %v2212
    %v2221 = vpack.c.b16 %v2215, %v2214
    %v2222 = vpack.c.b16 %v2216, %v2216
    %2229 = vst [vmem:[#allocation2] sm:$0xff] %v2217
    %2230 = vst [vmem:[#allocation2 + $0x8] sm:$0xff] %v2218
    %2231 = vst [vmem:[#allocation2 + $0x10] sm:$0xf] %v2219
    %2232 = vst [vmem:[#allocation2 + $0x2c] sm:$0xff] %v2220
    %2233 = vst [vmem:[#allocation2 + $0x34] sm:$0xff] %v2221
    %2234 = vst [vmem:[#allocation2 + $0x3c] sm:$0xf] %v2222
    %v2235 = vpack.c.bf16 %v2171, %v2169
    %v2236 = vpack.c.bf16 %v2172, %v2170
    %v2239 = vunpack.c.l.b16 %v2235
    %v2240 = vunpack.c.l.b16 %v2236
    %v2241 = vunpack.c.h.b16 %v2235
    %v2242 = vunpack.c.h.b16 %v2236
    %v2243 = vpack.c.b16 %v2240, %v2239
    %v2244 = vpack.c.b16 %v2242, %v2241
    %2247 = vst [vmem:[#allocation2 + $0x14] sm:$0xff] %v2243
    %2248 = vst [vmem:[#allocation2 + $0x40] sm:$0xff] %v2244
    %v2249 = vpack.c.bf16 %v2175, %v2173
    %v2250 = vpack.c.bf16 %v2176, %v2174
    %v2253 = vunpack.c.l.b16 %v2249
    %v2254 = vunpack.c.l.b16 %v2250
    %v2255 = vunpack.c.h.b16 %v2249
    %v2256 = vunpack.c.h.b16 %v2250
    %v2257 = vpack.c.b16 %v2254, %v2253
    %v2258 = vpack.c.b16 %v2256, %v2255
    %2261 = vst [vmem:[#allocation2 + $0x1c] sm:$0xff] %v2257
    %2262 = vst [vmem:[#allocation2 + $0x48] sm:$0xff] %v2258
    %v2263 = vpack.c.bf16 %v2195, %v2193
    %v2264 = vpack.c.bf16 %v2196, %v2194
    %v2267 = vunpack.c.l.b16 %v2263
    %v2268 = vunpack.c.l.b16 %v2264
    %v2269 = vunpack.c.h.b16 %v2263
    %v2270 = vunpack.c.h.b16 %v2264
    %v2271 = vpack.c.b16 %v2268, %v2267
    %v2272 = vpack.c.b16 %v2270, %v2269
    %2275 = vst [vmem:[#allocation2 + $0x24] sm:$0xff] %v2271
    %2276 = vst [vmem:[#allocation2 + $0x50] sm:$0xff] %v2272
    %s2277 = scalar_lea.vmem %s3, 16
    %v2278 = vld [vmem:[%s2277] sm:$0xf]
    %v2279 = vld [vmem:[%s2277 + $0x4] sm:$0xf]
    %v2280 = vld [vmem:[#allocation2] sm:$0xff]
    %v2281 = vld [vmem:[#allocation2 + $0x8] sm:$0xff]
    %v2282 = vld [vmem:[#allocation2 + $0x10] sm:$0xff]
    %v2283 = vld [vmem:[#allocation2 + $0x18] sm:$0xff]
    %v2284 = vld [vmem:[#allocation2 + $0x20] sm:$0xff]
    %v2285 = vld [vmem:[#allocation2 + $0x28] sm:$0xf]
    %v2286 = vld [vmem:[#allocation2 + $0x2c] sm:$0xff]
    %v2287 = vld [vmem:[#allocation2 + $0x34] sm:$0xff]
    %v2288 = vld [vmem:[#allocation2 + $0x3c] sm:$0xff]
    %v2289 = vld [vmem:[#allocation2 + $0x44] sm:$0xff]
    %v2290 = vld [vmem:[#allocation2 + $0x4c] sm:$0xff]
    %v2291 = vld [vmem:[#allocation2 + $0x54] sm:$0xf]
    %v2292 = vld [vmem:[#allocation2 + $0x58] sm:$0xff]
    %v2293 = vld [vmem:[#allocation2 + $0x60] sm:$0xff]
    %v2294 = vld [vmem:[#allocation2 + $0x68] sm:$0xff]
    %v2295 = vld [vmem:[#allocation2 + $0x70] sm:$0xff]
    %v2296 = vld [vmem:[#allocation2 + $0x78] sm:$0xff]
    %v2297 = vld [vmem:[#allocation2 + $0x80] sm:$0xf]
    %v2298 = vld [vmem:[#allocation2 + $0x84] sm:$0xff]
    %v2299 = vld [vmem:[#allocation2 + $0x8c] sm:$0xff]
    %v2300 = vld [vmem:[#allocation2 + $0x94] sm:$0xff]
    %v2301 = vld [vmem:[#allocation2 + $0x9c] sm:$0xff]
    %v2302 = vld [vmem:[#allocation2 + $0xa4] sm:$0xff]
    %v2303 = vld [vmem:[#allocation2 + $0xac] sm:$0xf]
    %v2304 = vld [vmem:[#allocation2 + $0xb0] sm:$0xff]
    %v2305 = vld [vmem:[#allocation2 + $0xb8] sm:$0xff]
    %v2306 = vld [vmem:[#allocation2 + $0xc0] sm:$0xff]
    %v2307 = vld [vmem:[#allocation2 + $0xc8] sm:$0xff]
    %v2308 = vld [vmem:[#allocation2 + $0xd0] sm:$0xff]
    %v2309 = vld [vmem:[#allocation2 + $0xd8] sm:$0xf]
    %v2310 = vld [vmem:[#allocation2 + $0xdc] sm:$0xff]
    %v2311 = vld [vmem:[#allocation2 + $0xe4] sm:$0xff]
    %v2312 = vld [vmem:[#allocation2 + $0xec] sm:$0xff]
    %v2313 = vld [vmem:[#allocation2 + $0xf4] sm:$0xff]
    %v2314 = vld [vmem:[#allocation2 + $0xfc] sm:$0xff]
    %v2315 = vld [vmem:[#allocation2 + $0x104] sm:$0xf]
    %v2316 = vld [vmem:[#allocation2 + $0x108] sm:$0xff]
    %v2317 = vld [vmem:[#allocation2 + $0x110] sm:$0xff]
    %v2318 = vld [vmem:[#allocation2 + $0x118] sm:$0xff]
    %v2319 = vld [vmem:[#allocation2 + $0x120] sm:$0xff]
    %v2320 = vld [vmem:[#allocation2 + $0x128] sm:$0xff]
    %v2321 = vld [vmem:[#allocation2 + $0x130] sm:$0xf]
    %v2322 = vld [vmem:[#allocation2 + $0x134] sm:$0xff]
    %v2323 = vld [vmem:[#allocation2 + $0x13c] sm:$0xff]
    %v2324 = vld [vmem:[#allocation2 + $0x144] sm:$0xff]
    %v2325 = vld [vmem:[#allocation2 + $0x14c] sm:$0xff]
    %v2326 = vld [vmem:[#allocation2 + $0x154] sm:$0xff]
    %v2327 = vld [vmem:[#allocation2 + $0x15c] sm:$0xf]
    %v2328 = vld [vmem:[#allocation2 + $0x160] sm:$0xff]
    %v2329 = vld [vmem:[#allocation2 + $0x168] sm:$0xff]
    %v2330 = vld [vmem:[#allocation2 + $0x170] sm:$0xff]
    %v2331 = vld [vmem:[#allocation2 + $0x178] sm:$0xff]
    %v2332 = vld [vmem:[#allocation2 + $0x180] sm:$0xff]
    %v2333 = vld [vmem:[#allocation2 + $0x188] sm:$0xf]
    %v2334 = vld [vmem:[#allocation2 + $0x18c] sm:$0xff]
    %v2335 = vld [vmem:[#allocation2 + $0x194] sm:$0xff]
    %v2336 = vld [vmem:[#allocation2 + $0x19c] sm:$0xff]
    %v2337 = vld [vmem:[#allocation2 + $0x1a4] sm:$0xff]
    %v2338 = vld [vmem:[#allocation2 + $0x1ac] sm:$0xff]
    %v2339 = vld [vmem:[#allocation2 + $0x1b4] sm:$0xf]
    %v2340 = vld [vmem:[#allocation2 + $0x1b8] sm:$0xff]
    %v2341 = vld [vmem:[#allocation2 + $0x1c0] sm:$0xff]
    %v2342 = vld [vmem:[#allocation2 + $0x1c8] sm:$0xff]
    %v2343 = vld [vmem:[#allocation2 + $0x1d0] sm:$0xff]
    %v2344 = vld [vmem:[#allocation2 + $0x1d8] sm:$0xff]
    %v2345 = vld [vmem:[#allocation2 + $0x1e0] sm:$0xf]
    %v2346 = vld [vmem:[#allocation2 + $0x1e4] sm:$0xff]
    %v2347 = vld [vmem:[#allocation2 + $0x1ec] sm:$0xff]
    %v2348 = vld [vmem:[#allocation2 + $0x1f4] sm:$0xff]
    %v2349 = vld [vmem:[#allocation2 + $0x1fc] sm:$0xff]
    %v2350 = vld [vmem:[#allocation2 + $0x204] sm:$0xff]
    %v2351 = vld [vmem:[#allocation2 + $0x20c] sm:$0xf]
    %v2352 = vld [vmem:[#allocation2 + $0x210] sm:$0xff]
    %v2353 = vld [vmem:[#allocation2 + $0x218] sm:$0xff]
    %v2354 = vld [vmem:[#allocation2 + $0x220] sm:$0xff]
    %v2355 = vld [vmem:[#allocation2 + $0x228] sm:$0xff]
    %v2356 = vld [vmem:[#allocation2 + $0x230] sm:$0xff]
    %v2357 = vld [vmem:[#allocation2 + $0x238] sm:$0xf]
    %v2358 = vld [vmem:[#allocation2 + $0x23c] sm:$0xff]
    %v2359 = vld [vmem:[#allocation2 + $0x244] sm:$0xff]
    %v2360 = vld [vmem:[#allocation2 + $0x24c] sm:$0xff]
    %v2361 = vld [vmem:[#allocation2 + $0x254] sm:$0xff]
    %v2362 = vld [vmem:[#allocation2 + $0x25c] sm:$0xff]
    %v2363 = vld [vmem:[#allocation2 + $0x264] sm:$0xf]
    %v2364 = vld [vmem:[#allocation2 + $0x268] sm:$0xff]
    %v2365 = vld [vmem:[#allocation2 + $0x270] sm:$0xff]
    %v2366 = vld [vmem:[#allocation2 + $0x278] sm:$0xff]
    %v2367 = vld [vmem:[#allocation2 + $0x280] sm:$0xff]
    %v2368 = vld [vmem:[#allocation2 + $0x288] sm:$0xff]
    %v2369 = vld [vmem:[#allocation2 + $0x290] sm:$0xf]
    %v2370 = vld [vmem:[#allocation2 + $0x294] sm:$0xff]
    %v2371 = vld [vmem:[#allocation2 + $0x29c] sm:$0xff]
    %v2372 = vld [vmem:[#allocation2 + $0x2a4] sm:$0xff]
    %v2373 = vld [vmem:[#allocation2 + $0x2ac] sm:$0xff]
    %v2374 = vld [vmem:[#allocation2 + $0x2b4] sm:$0xff]
    %v2375 = vld [vmem:[#allocation2 + $0x2bc] sm:$0xf]
    %v2378 = vunpack.c.l.b16 %v2278
    %v2379 = vunpack.c.l.b16 %v2279
    %v2380 = vpack.c.b16 %v2379, %v2378
    %v2478 = vunpack.c.l.b16 %v2280
    %v2479 = vunpack.c.h.b16 %v2280
    %v2480 = vunpack.c.l.b16 %v2281
    %v2481 = vunpack.c.h.b16 %v2281
    %v2482 = vunpack.c.l.b16 %v2282
    %v2483 = vunpack.c.h.b16 %v2282
    %v2484 = vunpack.c.l.b16 %v2283
    %v2485 = vunpack.c.h.b16 %v2283
    %v2486 = vunpack.c.l.b16 %v2284
    %v2487 = vunpack.c.h.b16 %v2284
    %v2488 = vunpack.c.l.b16 %v2285
    %v2489 = vunpack.c.l.b16 %v2286
    %v2490 = vunpack.c.h.b16 %v2286
    %v2491 = vunpack.c.l.b16 %v2287
    %v2492 = vunpack.c.h.b16 %v2287
    %v2493 = vunpack.c.l.b16 %v2288
    %v2494 = vunpack.c.h.b16 %v2288
    %v2495 = vunpack.c.l.b16 %v2289
    %v2496 = vunpack.c.h.b16 %v2289
    %v2497 = vunpack.c.l.b16 %v2290
    %v2498 = vunpack.c.h.b16 %v2290
    %v2499 = vunpack.c.l.b16 %v2291
    %v2500 = vunpack.c.l.b16 %v2292
    %v2501 = vunpack.c.h.b16 %v2292
    %v2502 = vunpack.c.l.b16 %v2293
    %v2503 = vunpack.c.h.b16 %v2293
    %v2504 = vunpack.c.l.b16 %v2294
    %v2505 = vunpack.c.h.b16 %v2294
    %v2506 = vunpack.c.l.b16 %v2295
    %v2507 = vunpack.c.h.b16 %v2295
    %v2508 = vunpack.c.l.b16 %v2296
    %v2509 = vunpack.c.h.b16 %v2296
    %v2510 = vunpack.c.l.b16 %v2297
    %v2511 = vunpack.c.l.b16 %v2298
    %v2512 = vunpack.c.h.b16 %v2298
    %v2513 = vunpack.c.l.b16 %v2299
    %v2514 = vunpack.c.h.b16 %v2299
    %v2515 = vunpack.c.l.b16 %v2300
    %v2516 = vunpack.c.h.b16 %v2300
    %v2517 = vunpack.c.l.b16 %v2301
    %v2518 = vunpack.c.h.b16 %v2301
    %v2519 = vunpack.c.l.b16 %v2302
    %v2520 = vunpack.c.h.b16 %v2302
    %v2521 = vunpack.c.l.b16 %v2303
    %v2522 = vunpack.c.l.b16 %v2304
    %v2523 = vunpack.c.h.b16 %v2304
    %v2524 = vunpack.c.l.b16 %v2305
    %v2525 = vunpack.c.h.b16 %v2305
    %v2526 = vunpack.c.l.b16 %v2306
    %v2527 = vunpack.c.h.b16 %v2306
    %v2528 = vunpack.c.l.b16 %v2307
    %v2529 = vunpack.c.h.b16 %v2307
    %v2530 = vunpack.c.l.b16 %v2308
    %v2531 = vunpack.c.h.b16 %v2308
    %v2532 = vunpack.c.l.b16 %v2309
    %v2533 = vunpack.c.l.b16 %v2310
    %v2534 = vunpack.c.h.b16 %v2310
    %v2535 = vunpack.c.l.b16 %v2311
    %v2536 = vunpack.c.h.b16 %v2311
    %v2537 = vunpack.c.l.b16 %v2312
    %v2538 = vunpack.c.h.b16 %v2312
    %v2539 = vunpack.c.l.b16 %v2313
    %v2540 = vunpack.c.h.b16 %v2313
    %v2541 = vunpack.c.l.b16 %v2314
    %v2542 = vunpack.c.h.b16 %v2314
    %v2543 = vunpack.c.l.b16 %v2315
    %v2544 = vunpack.c.l.b16 %v2316
    %v2545 = vunpack.c.h.b16 %v2316
    %v2546 = vunpack.c.l.b16 %v2317
    %v2547 = vunpack.c.h.b16 %v2317
    %v2548 = vunpack.c.l.b16 %v2318
    %v2549 = vunpack.c.h.b16 %v2318
    %v2550 = vunpack.c.l.b16 %v2319
    %v2551 = vunpack.c.h.b16 %v2319
    %v2552 = vunpack.c.l.b16 %v2320
    %v2553 = vunpack.c.h.b16 %v2320
    %v2554 = vunpack.c.l.b16 %v2321
    %v2555 = vunpack.c.l.b16 %v2322
    %v2556 = vunpack.c.h.b16 %v2322
    %v2557 = vunpack.c.l.b16 %v2323
    %v2558 = vunpack.c.h.b16 %v2323
    %v2559 = vunpack.c.l.b16 %v2324
    %v2560 = vunpack.c.h.b16 %v2324
    %v2561 = vunpack.c.l.b16 %v2325
    %v2562 = vunpack.c.h.b16 %v2325
    %v2563 = vunpack.c.l.b16 %v2326
    %v2564 = vunpack.c.h.b16 %v2326
    %v2565 = vunpack.c.l.b16 %v2327
    %v2566 = vunpack.c.l.b16 %v2328
    %v2567 = vunpack.c.h.b16 %v2328
    %v2568 = vunpack.c.l.b16 %v2329
    %v2569 = vunpack.c.h.b16 %v2329
    %v2570 = vunpack.c.l.b16 %v2330
    %v2571 = vunpack.c.h.b16 %v2330
    %v2572 = vunpack.c.l.b16 %v2331
    %v2573 = vunpack.c.h.b16 %v2331
    %v2574 = vunpack.c.l.b16 %v2332
    %v2575 = vunpack.c.h.b16 %v2332
    %v2576 = vunpack.c.l.b16 %v2333
    %v2577 = vunpack.c.l.b16 %v2334
    %v2578 = vunpack.c.h.b16 %v2334
    %v2579 = vunpack.c.l.b16 %v2335
    %v2580 = vunpack.c.h.b16 %v2335
    %v2581 = vunpack.c.l.b16 %v2336
    %v2582 = vunpack.c.h.b16 %v2336
    %v2583 = vunpack.c.l.b16 %v2337
    %v2584 = vunpack.c.h.b16 %v2337
    %v2585 = vunpack.c.l.b16 %v2338
    %v2586 = vunpack.c.h.b16 %v2338
    %v2587 = vunpack.c.l.b16 %v2339
    %v2588 = vunpack.c.l.b16 %v2340
    %v2589 = vunpack.c.h.b16 %v2340
    %v2590 = vunpack.c.l.b16 %v2341
    %v2591 = vunpack.c.h.b16 %v2341
    %v2592 = vunpack.c.l.b16 %v2342
    %v2593 = vunpack.c.h.b16 %v2342
    %v2594 = vunpack.c.l.b16 %v2343
    %v2595 = vunpack.c.h.b16 %v2343
    %v2596 = vunpack.c.l.b16 %v2344
    %v2597 = vunpack.c.h.b16 %v2344
    %v2598 = vunpack.c.l.b16 %v2345
    %v2599 = vunpack.c.l.b16 %v2346
    %v2600 = vunpack.c.h.b16 %v2346
    %v2601 = vunpack.c.l.b16 %v2347
    %v2602 = vunpack.c.h.b16 %v2347
    %v2603 = vunpack.c.l.b16 %v2348
    %v2604 = vunpack.c.h.b16 %v2348
    %v2605 = vunpack.c.l.b16 %v2349
    %v2606 = vunpack.c.h.b16 %v2349
    %v2607 = vunpack.c.l.b16 %v2350
    %v2608 = vunpack.c.h.b16 %v2350
    %v2609 = vunpack.c.l.b16 %v2351
    %v2610 = vunpack.c.l.b16 %v2352
    %v2611 = vunpack.c.h.b16 %v2352
    %v2612 = vunpack.c.l.b16 %v2353
    %v2613 = vunpack.c.h.b16 %v2353
    %v2614 = vunpack.c.l.b16 %v2354
    %v2615 = vunpack.c.h.b16 %v2354
    %v2616 = vunpack.c.l.b16 %v2355
    %v2617 = vunpack.c.h.b16 %v2355
    %v2618 = vunpack.c.l.b16 %v2356
    %v2619 = vunpack.c.h.b16 %v2356
    %v2620 = vunpack.c.l.b16 %v2357
    %v2621 = vunpack.c.l.b16 %v2358
    %v2622 = vunpack.c.h.b16 %v2358
    %v2623 = vunpack.c.l.b16 %v2359
    %v2624 = vunpack.c.h.b16 %v2359
    %v2625 = vunpack.c.l.b16 %v2360
    %v2626 = vunpack.c.h.b16 %v2360
    %v2627 = vunpack.c.l.b16 %v2361
    %v2628 = vunpack.c.h.b16 %v2361
    %v2629 = vunpack.c.l.b16 %v2362
    %v2630 = vunpack.c.h.b16 %v2362
    %v2631 = vunpack.c.l.b16 %v2363
    %v2632 = vunpack.c.l.b16 %v2364
    %v2633 = vunpack.c.h.b16 %v2364
    %v2634 = vunpack.c.l.b16 %v2365
    %v2635 = vunpack.c.h.b16 %v2365
    %v2636 = vunpack.c.l.b16 %v2366
    %v2637 = vunpack.c.h.b16 %v2366
    %v2638 = vunpack.c.l.b16 %v2367
    %v2639 = vunpack.c.h.b16 %v2367
    %v2640 = vunpack.c.l.b16 %v2368
    %v2641 = vunpack.c.h.b16 %v2368
    %v2642 = vunpack.c.l.b16 %v2369
    %v2643 = vunpack.c.l.b16 %v2370
    %v2644 = vunpack.c.h.b16 %v2370
    %v2645 = vunpack.c.l.b16 %v2371
    %v2646 = vunpack.c.h.b16 %v2371
    %v2647 = vunpack.c.l.b16 %v2372
    %v2648 = vunpack.c.h.b16 %v2372
    %v2649 = vunpack.c.l.b16 %v2373
    %v2650 = vunpack.c.h.b16 %v2373
    %v2651 = vunpack.c.l.b16 %v2374
    %v2652 = vunpack.c.h.b16 %v2374
    %v2653 = vunpack.c.l.b16 %v2375
    %v2654 = vpack.c.b16 %v2489, %v2478
    %v2655 = vpack.c.b16 %v2490, %v2479
    %v2656 = vpack.c.b16 %v2491, %v2480
    %v2657 = vpack.c.b16 %v2492, %v2481
    %v2658 = vpack.c.b16 %v2493, %v2482
    %v2659 = vpack.c.b16 %v2494, %v2483
    %v2660 = vpack.c.b16 %v2495, %v2484
    %v2661 = vpack.c.b16 %v2496, %v2485
    %v2662 = vpack.c.b16 %v2497, %v2486
    %v2663 = vpack.c.b16 %v2498, %v2487
    %v2664 = vpack.c.b16 %v2499, %v2488
    %v2665 = vpack.c.b16 %v2511, %v2500
    %v2666 = vpack.c.b16 %v2512, %v2501
    %v2667 = vpack.c.b16 %v2513, %v2502
    %v2668 = vpack.c.b16 %v2514, %v2503
    %v2669 = vpack.c.b16 %v2515, %v2504
    %v2670 = vpack.c.b16 %v2516, %v2505
    %v2671 = vpack.c.b16 %v2517, %v2506
    %v2672 = vpack.c.b16 %v2518, %v2507
    %v2673 = vpack.c.b16 %v2519, %v2508
    %v2674 = vpack.c.b16 %v2520, %v2509
    %v2675 = vpack.c.b16 %v2521, %v2510
    %v2676 = vpack.c.b16 %v2533, %v2522
    %v2677 = vpack.c.b16 %v2534, %v2523
    %v2678 = vpack.c.b16 %v2535, %v2524
    %v2679 = vpack.c.b16 %v2536, %v2525
    %v2680 = vpack.c.b16 %v2537, %v2526
    %v2681 = vpack.c.b16 %v2538, %v2527
    %v2682 = vpack.c.b16 %v2539, %v2528
    %v2683 = vpack.c.b16 %v2540, %v2529
    %v2684 = vpack.c.b16 %v2541, %v2530
    %v2685 = vpack.c.b16 %v2542, %v2531
    %v2686 = vpack.c.b16 %v2543, %v2532
    %v2687 = vpack.c.b16 %v2555, %v2544
    %v2688 = vpack.c.b16 %v2556, %v2545
    %v2689 = vpack.c.b16 %v2557, %v2546
    %v2690 = vpack.c.b16 %v2558, %v2547
    %v2691 = vpack.c.b16 %v2559, %v2548
    %v2692 = vpack.c.b16 %v2560, %v2549
    %v2693 = vpack.c.b16 %v2561, %v2550
    %v2694 = vpack.c.b16 %v2562, %v2551
    %v2695 = vpack.c.b16 %v2563, %v2552
    %v2696 = vpack.c.b16 %v2564, %v2553
    %v2697 = vpack.c.b16 %v2565, %v2554
    %v2698 = vpack.c.b16 %v2577, %v2566
    %v2699 = vpack.c.b16 %v2578, %v2567
    %v2700 = vpack.c.b16 %v2579, %v2568
    %v2701 = vpack.c.b16 %v2580, %v2569
    %v2702 = vpack.c.b16 %v2581, %v2570
    %v2703 = vpack.c.b16 %v2582, %v2571
    %v2704 = vpack.c.b16 %v2583, %v2572
    %v2705 = vpack.c.b16 %v2584, %v2573
    %v2706 = vpack.c.b16 %v2585, %v2574
    %v2707 = vpack.c.b16 %v2586, %v2575
    %v2708 = vpack.c.b16 %v2587, %v2576
    %v2709 = vpack.c.b16 %v2599, %v2588
    %v2710 = vpack.c.b16 %v2600, %v2589
    %v2711 = vpack.c.b16 %v2601, %v2590
    %v2712 = vpack.c.b16 %v2602, %v2591
    %v2713 = vpack.c.b16 %v2603, %v2592
    %v2714 = vpack.c.b16 %v2604, %v2593
    %v2715 = vpack.c.b16 %v2605, %v2594
    %v2716 = vpack.c.b16 %v2606, %v2595
    %v2717 = vpack.c.b16 %v2607, %v2596
    %v2718 = vpack.c.b16 %v2608, %v2597
    %v2719 = vpack.c.b16 %v2609, %v2598
    %v2720 = vpack.c.b16 %v2621, %v2610
    %v2721 = vpack.c.b16 %v2622, %v2611
    %v2722 = vpack.c.b16 %v2623, %v2612
    %v2723 = vpack.c.b16 %v2624, %v2613
    %v2724 = vpack.c.b16 %v2625, %v2614
    %v2725 = vpack.c.b16 %v2626, %v2615
    %v2726 = vpack.c.b16 %v2627, %v2616
    %v2727 = vpack.c.b16 %v2628, %v2617
    %v2728 = vpack.c.b16 %v2629, %v2618
    %v2729 = vpack.c.b16 %v2630, %v2619
    %v2730 = vpack.c.b16 %v2631, %v2620
    %v2731 = vpack.c.b16 %v2643, %v2632
    %v2732 = vpack.c.b16 %v2644, %v2633
    %v2733 = vpack.c.b16 %v2645, %v2634
    %v2734 = vpack.c.b16 %v2646, %v2635
    %v2735 = vpack.c.b16 %v2647, %v2636
    %v2736 = vpack.c.b16 %v2648, %v2637
    %v2737 = vpack.c.b16 %v2649, %v2638
    %v2738 = vpack.c.b16 %v2650, %v2639
    %v2739 = vpack.c.b16 %v2651, %v2640
    %v2740 = vpack.c.b16 %v2652, %v2641
    %v2741 = vpack.c.b16 %v2653, %v2642
    %2830 = vmatprep.subr.bf16.mxu0 %v2732
    %2831 = vmatpush1.bf16.msra.mxu0 %v2731
    %2832 = vmatprep.subr.bf16.mxu0 %v2721
    %2833 = vmatpush1.bf16.msra.mxu0 %v2720
    %2834 = vmatprep.subr.bf16.mxu0 %v2710
    %2835 = vmatpush1.bf16.msra.mxu0 %v2709
    %2836 = vmatprep.subr.bf16.mxu0 %v2699
    %2837 = vmatpush1.bf16.msra.mxu0 %v2698
    %2838 = vmatprep.subr.bf16.mxu0 %v2688
    %2839 = vmatpush1.bf16.msra.mxu0 %v2687
    %2840 = vmatprep.subr.bf16.mxu0 %v2677
    %2841 = vmatpush1.bf16.msra.mxu0 %v2676
    %2842 = vmatprep.subr.bf16.mxu0 %v2666
    %2843 = vmatpush1.bf16.msra.mxu0 %v2665
    %2844 = vmatprep.subr.bf16.mxu0 %v2655
    %2845 = vmatpush1.bf16.msra.mxu0 %v2654
    %2846 = vmatprep.subr.bf16.mxu0 0
    %2847 = vmatpush2.bf16.msra.mxu0 0
    %2848 = vmatprep.subr.bf16.mxu0 0
    %2849 = vmatpush2.bf16.msra.mxu0 0
    %2850 = vmatprep.subr.bf16.mxu0 0
    %2851 = vmatpush2.bf16.msra.mxu0 0
    %2852 = vmatprep.subr.bf16.mxu0 0
    %2853 = vmatpush2.bf16.msra.mxu0 0
    %2854 = vmatprep.subr.bf16.mxu0 0
    %2855 = vmatpush2.bf16.msra.mxu0 0
    %2856 = vmatprep.subr.bf16.mxu0 0
    %2857 = vmatpush2.bf16.msra.mxu0 0
    %2858 = vmatprep.subr.bf16.mxu0 0
    %2859 = vmatpush2.bf16.msra.mxu0 0
    %2860 = vmatprep.subr.bf16.mxu0 0
    %2861 = vmatpush2.bf16.msra.mxu0 0
    %2862 = vmatprep.mubr.bf16.mxu0 0
    %2863 = vmatmul.mubr.bf16.gmra.mxu0 %v2380
    %v2864 = vpop.f32.mrf.mxu0
    %v2865 = vadd.f32 0.0, %v2864
    %v2866 = vpop.f32.mrf.mxu0
    %v2867 = vadd.f32 0.0, %v2866
    %v2868 = vpop.f32.mrf.mxu0
    %v2869 = vadd.f32 0.0, %v2868
    %v2870 = vpop.f32.mrf.mxu0
    %v2871 = vadd.f32 0.0, %v2870
    %2872 = vdwg.mxu0
    %2873 = vmatprep.subr.bf16.mxu0 %v2734
    %2874 = vmatpush1.bf16.msra.mxu0 %v2733
    %2875 = vmatprep.subr.bf16.mxu0 %v2723
    %2876 = vmatpush1.bf16.msra.mxu0 %v2722
    %2877 = vmatprep.subr.bf16.mxu0 %v2712
    %2878 = vmatpush1.bf16.msra.mxu0 %v2711
    %2879 = vmatprep.subr.bf16.mxu0 %v2701
    %2880 = vmatpush1.bf16.msra.mxu0 %v2700
    %2881 = vmatprep.subr.bf16.mxu0 %v2690
    %2882 = vmatpush1.bf16.msra.mxu0 %v2689
    %2883 = vmatprep.subr.bf16.mxu0 %v2679
    %2884 = vmatpush1.bf16.msra.mxu0 %v2678
    %2885 = vmatprep.subr.bf16.mxu0 %v2668
    %2886 = vmatpush1.bf16.msra.mxu0 %v2667
    %2887 = vmatprep.subr.bf16.mxu0 %v2657
    %2888 = vmatpush1.bf16.msra.mxu0 %v2656
    %2889 = vmatprep.subr.bf16.mxu0 0
    %2890 = vmatpush2.bf16.msra.mxu0 0
    %2891 = vmatprep.subr.bf16.mxu0 0
    %2892 = vmatpush2.bf16.msra.mxu0 0
    %2893 = vmatprep.subr.bf16.mxu0 0
    %2894 = vmatpush2.bf16.msra.mxu0 0
    %2895 = vmatprep.subr.bf16.mxu0 0
    %2896 = vmatpush2.bf16.msra.mxu0 0
    %2897 = vmatprep.subr.bf16.mxu0 0
    %2898 = vmatpush2.bf16.msra.mxu0 0
    %2899 = vmatprep.subr.bf16.mxu0 0
    %2900 = vmatpush2.bf16.msra.mxu0 0
    %2901 = vmatprep.subr.bf16.mxu0 0
    %2902 = vmatpush2.bf16.msra.mxu0 0
    %2903 = vmatprep.subr.bf16.mxu0 0
    %2904 = vmatpush2.bf16.msra.mxu0 0
    %2905 = vmatprep.mubr.bf16.mxu0 0
    %2906 = vmatmul.mubr.bf16.gmra.mxu0 %v2380
    %v2907 = vpop.f32.mrf.mxu0
    %v2908 = vadd.f32 0.0, %v2907
    %v2909 = vpop.f32.mrf.mxu0
    %v2910 = vadd.f32 0.0, %v2909
    %v2911 = vpop.f32.mrf.mxu0
    %v2912 = vadd.f32 0.0, %v2911
    %v2913 = vpop.f32.mrf.mxu0
    %v2914 = vadd.f32 0.0, %v2913
    %2915 = vdwg.mxu0
    %2916 = vmatprep.subr.bf16.mxu0 %v2736
    %2917 = vmatpush1.bf16.msra.mxu0 %v2735
    %2918 = vmatprep.subr.bf16.mxu0 %v2725
    %2919 = vmatpush1.bf16.msra.mxu0 %v2724
    %2920 = vmatprep.subr.bf16.mxu0 %v2714
    %2921 = vmatpush1.bf16.msra.mxu0 %v2713
    %2922 = vmatprep.subr.bf16.mxu0 %v2703
    %2923 = vmatpush1.bf16.msra.mxu0 %v2702
    %2924 = vmatprep.subr.bf16.mxu0 %v2692
    %2925 = vmatpush1.bf16.msra.mxu0 %v2691
    %2926 = vmatprep.subr.bf16.mxu0 %v2681
    %2927 = vmatpush1.bf16.msra.mxu0 %v2680
    %2928 = vmatprep.subr.bf16.mxu0 %v2670
    %2929 = vmatpush1.bf16.msra.mxu0 %v2669
    %2930 = vmatprep.subr.bf16.mxu0 %v2659
    %2931 = vmatpush1.bf16.msra.mxu0 %v2658
    %2932 = vmatprep.subr.bf16.mxu0 0
    %2933 = vmatpush2.bf16.msra.mxu0 0
    %2934 = vmatprep.subr.bf16.mxu0 0
    %2935 = vmatpush2.bf16.msra.mxu0 0
    %2936 = vmatprep.subr.bf16.mxu0 0
    %2937 = vmatpush2.bf16.msra.mxu0 0
    %2938 = vmatprep.subr.bf16.mxu0 0
    %2939 = vmatpush2.bf16.msra.mxu0 0
    %2940 = vmatprep.subr.bf16.mxu0 0
    %2941 = vmatpush2.bf16.msra.mxu0 0
    %2942 = vmatprep.subr.bf16.mxu0 0
    %2943 = vmatpush2.bf16.msra.mxu0 0
    %2944 = vmatprep.subr.bf16.mxu0 0
    %2945 = vmatpush2.bf16.msra.mxu0 0
    %2946 = vmatprep.subr.bf16.mxu0 0
    %2947 = vmatpush2.bf16.msra.mxu0 0
    %2948 = vmatprep.mubr.bf16.mxu0 0
    %2949 = vmatmul.mubr.bf16.gmra.mxu0 %v2380
    %v2950 = vpop.f32.mrf.mxu0
    %v2951 = vadd.f32 0.0, %v2950
    %v2952 = vpop.f32.mrf.mxu0
    %v2953 = vadd.f32 0.0, %v2952
    %v2954 = vpop.f32.mrf.mxu0
    %v2955 = vadd.f32 0.0, %v2954
    %v2956 = vpop.f32.mrf.mxu0
    %v2957 = vadd.f32 0.0, %v2956
    %2958 = vdwg.mxu0
    %2959 = vmatprep.subr.bf16.mxu0 %v2738
    %2960 = vmatpush1.bf16.msra.mxu0 %v2737
    %2961 = vmatprep.subr.bf16.mxu0 %v2727
    %2962 = vmatpush1.bf16.msra.mxu0 %v2726
    %2963 = vmatprep.subr.bf16.mxu0 %v2716
    %2964 = vmatpush1.bf16.msra.mxu0 %v2715
    %2965 = vmatprep.subr.bf16.mxu0 %v2705
    %2966 = vmatpush1.bf16.msra.mxu0 %v2704
    %2967 = vmatprep.subr.bf16.mxu0 %v2694
    %2968 = vmatpush1.bf16.msra.mxu0 %v2693
    %2969 = vmatprep.subr.bf16.mxu0 %v2683
    %2970 = vmatpush1.bf16.msra.mxu0 %v2682
    %2971 = vmatprep.subr.bf16.mxu0 %v2672
    %2972 = vmatpush1.bf16.msra.mxu0 %v2671
    %2973 = vmatprep.subr.bf16.mxu0 %v2661
    %2974 = vmatpush1.bf16.msra.mxu0 %v2660
    %2975 = vmatprep.subr.bf16.mxu0 0
    %2976 = vmatpush2.bf16.msra.mxu0 0
    %2977 = vmatprep.subr.bf16.mxu0 0
    %2978 = vmatpush2.bf16.msra.mxu0 0
    %2979 = vmatprep.subr.bf16.mxu0 0
    %2980 = vmatpush2.bf16.msra.mxu0 0
    %2981 = vmatprep.subr.bf16.mxu0 0
    %2982 = vmatpush2.bf16.msra.mxu0 0
    %2983 = vmatprep.subr.bf16.mxu0 0
    %2984 = vmatpush2.bf16.msra.mxu0 0
    %2985 = vmatprep.subr.bf16.mxu0 0
    %2986 = vmatpush2.bf16.msra.mxu0 0
    %2987 = vmatprep.subr.bf16.mxu0 0
    %2988 = vmatpush2.bf16.msra.mxu0 0
    %2989 = vmatprep.subr.bf16.mxu0 0
    %2990 = vmatpush2.bf16.msra.mxu0 0
    %2991 = vmatprep.mubr.bf16.mxu0 0
    %2992 = vmatmul.mubr.bf16.gmra.mxu0 %v2380
    %v2993 = vpop.f32.mrf.mxu0
    %v2994 = vadd.f32 0.0, %v2993
    %v2995 = vpop.f32.mrf.mxu0
    %v2996 = vadd.f32 0.0, %v2995
    %v2997 = vpop.f32.mrf.mxu0
    %v2998 = vadd.f32 0.0, %v2997
    %v2999 = vpop.f32.mrf.mxu0
    %v3000 = vadd.f32 0.0, %v2999
    %3001 = vdwg.mxu0
    %3002 = vmatprep.subr.bf16.mxu0 %v2740
    %3003 = vmatpush1.bf16.msra.mxu0 %v2739
    %3004 = vmatprep.subr.bf16.mxu0 %v2729
    %3005 = vmatpush1.bf16.msra.mxu0 %v2728
    %3006 = vmatprep.subr.bf16.mxu0 %v2718
    %3007 = vmatpush1.bf16.msra.mxu0 %v2717
    %3008 = vmatprep.subr.bf16.mxu0 %v2707
    %3009 = vmatpush1.bf16.msra.mxu0 %v2706
    %3010 = vmatprep.subr.bf16.mxu0 %v2696
    %3011 = vmatpush1.bf16.msra.mxu0 %v2695
    %3012 = vmatprep.subr.bf16.mxu0 %v2685
    %3013 = vmatpush1.bf16.msra.mxu0 %v2684
    %3014 = vmatprep.subr.bf16.mxu0 %v2674
    %3015 = vmatpush1.bf16.msra.mxu0 %v2673
    %3016 = vmatprep.subr.bf16.mxu0 %v2663
    %3017 = vmatpush1.bf16.msra.mxu0 %v2662
    %3018 = vmatprep.subr.bf16.mxu0 0
    %3019 = vmatpush2.bf16.msra.mxu0 0
    %3020 = vmatprep.subr.bf16.mxu0 0
    %3021 = vmatpush2.bf16.msra.mxu0 0
    %3022 = vmatprep.subr.bf16.mxu0 0
    %3023 = vmatpush2.bf16.msra.mxu0 0
    %3024 = vmatprep.subr.bf16.mxu0 0
    %3025 = vmatpush2.bf16.msra.mxu0 0
    %3026 = vmatprep.subr.bf16.mxu0 0
    %3027 = vmatpush2.bf16.msra.mxu0 0
    %3028 = vmatprep.subr.bf16.mxu0 0
    %3029 = vmatpush2.bf16.msra.mxu0 0
    %3030 = vmatprep.subr.bf16.mxu0 0
    %3031 = vmatpush2.bf16.msra.mxu0 0
    %3032 = vmatprep.subr.bf16.mxu0 0
    %3033 = vmatpush2.bf16.msra.mxu0 0
    %3034 = vmatprep.mubr.bf16.mxu0 0
    %3035 = vmatmul.mubr.bf16.gmra.mxu0 %v2380
    %v3036 = vpop.f32.mrf.mxu0
    %v3037 = vadd.f32 0.0, %v3036
    %v3038 = vpop.f32.mrf.mxu0
    %v3039 = vadd.f32 0.0, %v3038
    %v3040 = vpop.f32.mrf.mxu0
    %v3041 = vadd.f32 0.0, %v3040
    %v3042 = vpop.f32.mrf.mxu0
    %v3043 = vadd.f32 0.0, %v3042
    %3044 = vdwg.mxu0
    %3045 = vmatprep.subr.bf16.mxu0 0
    %3046 = vmatpush1.bf16.msra.mxu0 %v2741
    %3047 = vmatprep.subr.bf16.mxu0 0
    %3048 = vmatpush1.bf16.msra.mxu0 %v2730
    %3049 = vmatprep.subr.bf16.mxu0 0
    %3050 = vmatpush1.bf16.msra.mxu0 %v2719
    %3051 = vmatprep.subr.bf16.mxu0 0
    %3052 = vmatpush1.bf16.msra.mxu0 %v2708
    %3053 = vmatprep.subr.bf16.mxu0 0
    %3054 = vmatpush1.bf16.msra.mxu0 %v2697
    %3055 = vmatprep.subr.bf16.mxu0 0
    %3056 = vmatpush1.bf16.msra.mxu0 %v2686
    %3057 = vmatprep.subr.bf16.mxu0 0
    %3058 = vmatpush1.bf16.msra.mxu0 %v2675
    %3059 = vmatprep.subr.bf16.mxu0 0
    %3060 = vmatpush1.bf16.msra.mxu0 %v2664
    %3061 = vmatprep.subr.bf16.mxu0 0
    %3062 = vmatpush2.bf16.msra.mxu0 0
    %3063 = vmatprep.subr.bf16.mxu0 0
    %3064 = vmatpush2.bf16.msra.mxu0 0
    %3065 = vmatprep.subr.bf16.mxu0 0
    %3066 = vmatpush2.bf16.msra.mxu0 0
    %3067 = vmatprep.subr.bf16.mxu0 0
    %3068 = vmatpush2.bf16.msra.mxu0 0
    %3069 = vmatprep.subr.bf16.mxu0 0
    %3070 = vmatpush2.bf16.msra.mxu0 0
    %3071 = vmatprep.subr.bf16.mxu0 0
    %3072 = vmatpush2.bf16.msra.mxu0 0
    %3073 = vmatprep.subr.bf16.mxu0 0
    %3074 = vmatpush2.bf16.msra.mxu0 0
    %3075 = vmatprep.subr.bf16.mxu0 0
    %3076 = vmatpush2.bf16.msra.mxu0 0
    %3077 = vmatprep.mubr.bf16.mxu0 0
    %3078 = vmatmul.mubr.bf16.gmra.mxu0 %v2380
    %v3079 = vpop.f32.mrf.mxu0
    %v3080 = vadd.f32 0.0, %v3079
    %v3081 = vpop.f32.mrf.mxu0
    %v3082 = vpop.f32.mrf.mxu0
    %v3083 = vadd.f32 0.0, %v3082
    %v3084 = vpop.f32.mrf.mxu0
    %3085 = vdwg.mxu0
    %s3086 = scalar_lea.vmem %s4, 48
    %v3087 = vld [vmem:[%s3086] sm:$0xff]
    %v3088 = vld [vmem:[%s3086 + $0x8] sm:$0xff]
    %3090 = vset.pattern.permute.xlu0 0
    %3091 = vperm.xlu0 %3090, %v3087
    %v3092 = vpop.permute.xlu0 %3091
    %3095 = vset.pattern.permute.xlu0 0
    %3096 = vperm.xlu0 %3095, %v3088
    %v3097 = vpop.permute.xlu0 %3096
    %v3099 = vadd.f32 %v2865, %v3092
    %v3100 = vadd.f32 %v2867, %v3092
    %v3101 = vadd.f32 %v2908, %v3092
    %v3102 = vadd.f32 %v2910, %v3092
    %v3103 = vadd.f32 %v2951, %v3092
    %v3104 = vadd.f32 %v2869, %v3097
    %v3105 = vadd.f32 %v2871, %v3097
    %v3106 = vadd.f32 %v2912, %v3097
    %v3107 = vadd.f32 %v2914, %v3097
    %v3108 = vadd.f32 %v2955, %v3097
    %v3109 = vtanh.pop %v3099
    %v3110 = vtanh.pop %v3100
    %v3111 = vtanh.pop %v3101
    %v3112 = vtanh.pop %v3102
    %v3113 = vtanh.pop %v3103
    %v3114 = vtanh.pop %v3104
    %v3115 = vtanh.pop %v3105
    %v3116 = vtanh.pop %v3106
    %v3117 = vtanh.pop %v3107
    %v3118 = vtanh.pop %v3108
    %v3119 = vmul.f32 %v3109, %v3109
    %v3120 = vmul.f32 %v3110, %v3110
    %v3121 = vmul.f32 %v3114, %v3114
    %v3122 = vmul.f32 %v3115, %v3115
    %v3123 = vsub.f32 1.0, %v3119
    %v3124 = vsub.f32 1.0, %v3120
    %v3125 = vsub.f32 1.0, %v3121
    %v3126 = vsub.f32 1.0, %v3122
    %v3127 = vmul.f32 %v3123, %v2953
    %v3128 = vmul.f32 %v3124, %v2994
    %v3129 = vmul.f32 %v3125, %v2957
    %v3130 = vmul.f32 %v3126, %v2998
    %v3131 = vmul.f32 %v3123, %v2996
    %v3132 = vmul.f32 %v3124, %v3037
    %v3133 = vmul.f32 %v3125, %v3000
    %v3134 = vmul.f32 %v3126, %v3041
    %v3135 = vmul.f32 %v3123, %v3039
    %v3136 = vmul.f32 %v3124, %v3080
    %v3137 = vmul.f32 %v3125, %v3043
    %v3138 = vmul.f32 %v3126, %v3083
    %v3139 = vmul.f32 %v3109, %v2953
    %v3140 = vmul.f32 %v3110, %v2994
    %v3141 = vmul.f32 %v3114, %v2957
    %v3142 = vmul.f32 %v3115, %v2998
    %v3143 = vmul.f32 %v3139, 2.0
    %v3144 = vmul.f32 %v3140, 2.0
    %v3145 = vmul.f32 %v3141, 2.0
    %v3146 = vmul.f32 %v3142, 2.0
    %v3147 = vmul.f32 %v3143, %v3127
    %v3148 = vmul.f32 %v3144, %v3128
    %v3149 = vmul.f32 %v3145, %v3129
    %v3150 = vmul.f32 %v3146, %v3130
    %v3151 = vsub.f32 %v3135, %v3147
    %v3152 = vsub.f32 %v3136, %v3148
    %v3153 = vsub.f32 %v3137, %v3149
    %v3154 = vsub.f32 %v3138, %v3150
    %v3155 = vpack.c.bf16 %v3114, %v3109
    %v3156 = vpack.c.bf16 %v3115, %v3110
    %v3157 = vpack.c.bf16 %v3116, %v3111
    %v3158 = vpack.c.bf16 %v3117, %v3112
    %v3159 = vpack.c.bf16 %v3118, %v3113
    %v3165 = vunpack.c.l.b16 %v3155
    %v3166 = vunpack.c.l.b16 %v3156
    %v3167 = vunpack.c.l.b16 %v3157
    %v3168 = vunpack.c.l.b16 %v3158
    %v3169 = vunpack.c.l.b16 %v3159
    %v3170 = vunpack.c.h.b16 %v3155
    %v3171 = vunpack.c.h.b16 %v3156
    %v3172 = vunpack.c.h.b16 %v3157
    %v3173 = vunpack.c.h.b16 %v3158
    %v3174 = vunpack.c.h.b16 %v3159
    %v3175 = vpack.c.b16 %v3166, %v3165
    %v3176 = vpack.c.b16 %v3168, %v3167
    %v3177 = vpack.c.b16 %v3169, %v3169
    %v3178 = vpack.c.b16 %v3171, %v3170
    %v3179 = vpack.c.b16 %v3173, %v3172
    %v3180 = vpack.c.b16 %v3174, %v3174
    %3187 = vst [vmem:[#allocation2] sm:$0xff] %v3175
    %3188 = vst [vmem:[#allocation2 + $0x8] sm:$0xff] %v3176
    %3189 = vst [vmem:[#allocation2 + $0x10] sm:$0xf] %v3177
    %3190 = vst [vmem:[#allocation2 + $0x2c] sm:$0xff] %v3178
    %3191 = vst [vmem:[#allocation2 + $0x34] sm:$0xff] %v3179
    %3192 = vst [vmem:[#allocation2 + $0x3c] sm:$0xf] %v3180
    %v3193 = vpack.c.bf16 %v3129, %v3127
    %v3194 = vpack.c.bf16 %v3130, %v3128
    %v3197 = vunpack.c.l.b16 %v3193
    %v3198 = vunpack.c.l.b16 %v3194
    %v3199 = vunpack.c.h.b16 %v3193
    %v3200 = vunpack.c.h.b16 %v3194
    %v3201 = vpack.c.b16 %v3198, %v3197
    %v3202 = vpack.c.b16 %v3200, %v3199
    %3205 = vst [vmem:[#allocation2 + $0x14] sm:$0xff] %v3201
    %3206 = vst [vmem:[#allocation2 + $0x40] sm:$0xff] %v3202
    %v3207 = vpack.c.bf16 %v3133, %v3131
    %v3208 = vpack.c.bf16 %v3134, %v3132
    %v3211 = vunpack.c.l.b16 %v3207
    %v3212 = vunpack.c.l.b16 %v3208
    %v3213 = vunpack.c.h.b16 %v3207
    %v3214 = vunpack.c.h.b16 %v3208
    %v3215 = vpack.c.b16 %v3212, %v3211
    %v3216 = vpack.c.b16 %v3214, %v3213
    %3219 = vst [vmem:[#allocation2 + $0x1c] sm:$0xff] %v3215
    %3220 = vst [vmem:[#allocation2 + $0x48] sm:$0xff] %v3216
    %v3221 = vpack.c.bf16 %v3153, %v3151
    %v3222 = vpack.c.bf16 %v3154, %v3152
    %v3225 = vunpack.c.l.b16 %v3221
    %v3226 = vunpack.c.l.b16 %v3222
    %v3227 = vunpack.c.h.b16 %v3221
    %v3228 = vunpack.c.h.b16 %v3222
    %v3229 = vpack.c.b16 %v3226, %v3225
    %v3230 = vpack.c.b16 %v3228, %v3227
    %3233 = vst [vmem:[#allocation2 + $0x24] sm:$0xff] %v3229
    %3234 = vst [vmem:[#allocation2 + $0x50] sm:$0xff] %v3230
    %s3235 = scalar_lea.vmem %s3, 24
    %v3236 = vld [vmem:[%s3235] sm:$0xf]
    %v3237 = vld [vmem:[%s3235 + $0x4] sm:$0xf]
    %v3238 = vld [vmem:[#allocation2] sm:$0xff]
    %v3239 = vld [vmem:[#allocation2 + $0x8] sm:$0xff]
    %v3240 = vld [vmem:[#allocation2 + $0x10] sm:$0xff]
    %v3241 = vld [vmem:[#allocation2 + $0x18] sm:$0xff]
    %v3242 = vld [vmem:[#allocation2 + $0x20] sm:$0xff]
    %v3243 = vld [vmem:[#allocation2 + $0x28] sm:$0xf]
    %v3244 = vld [vmem:[#allocation2 + $0x2c] sm:$0xff]
    %v3245 = vld [vmem:[#allocation2 + $0x34] sm:$0xff]
    %v3246 = vld [vmem:[#allocation2 + $0x3c] sm:$0xff]
    %v3247 = vld [vmem:[#allocation2 + $0x44] sm:$0xff]
    %v3248 = vld [vmem:[#allocation2 + $0x4c] sm:$0xff]
    %v3249 = vld [vmem:[#allocation2 + $0x54] sm:$0xf]
    %v3250 = vld [vmem:[#allocation2 + $0x58] sm:$0xff]
    %v3251 = vld [vmem:[#allocation2 + $0x60] sm:$0xff]
    %v3252 = vld [vmem:[#allocation2 + $0x68] sm:$0xff]
    %v3253 = vld [vmem:[#allocation2 + $0x70] sm:$0xff]
    %v3254 = vld [vmem:[#allocation2 + $0x78] sm:$0xff]
    %v3255 = vld [vmem:[#allocation2 + $0x80] sm:$0xf]
    %v3256 = vld [vmem:[#allocation2 + $0x84] sm:$0xff]
    %v3257 = vld [vmem:[#allocation2 + $0x8c] sm:$0xff]
    %v3258 = vld [vmem:[#allocation2 + $0x94] sm:$0xff]
    %v3259 = vld [vmem:[#allocation2 + $0x9c] sm:$0xff]
    %v3260 = vld [vmem:[#allocation2 + $0xa4] sm:$0xff]
    %v3261 = vld [vmem:[#allocation2 + $0xac] sm:$0xf]
    %v3262 = vld [vmem:[#allocation2 + $0xb0] sm:$0xff]
    %v3263 = vld [vmem:[#allocation2 + $0xb8] sm:$0xff]
    %v3264 = vld [vmem:[#allocation2 + $0xc0] sm:$0xff]
    %v3265 = vld [vmem:[#allocation2 + $0xc8] sm:$0xff]
    %v3266 = vld [vmem:[#allocation2 + $0xd0] sm:$0xff]
    %v3267 = vld [vmem:[#allocation2 + $0xd8] sm:$0xf]
    %v3268 = vld [vmem:[#allocation2 + $0xdc] sm:$0xff]
    %v3269 = vld [vmem:[#allocation2 + $0xe4] sm:$0xff]
    %v3270 = vld [vmem:[#allocation2 + $0xec] sm:$0xff]
    %v3271 = vld [vmem:[#allocation2 + $0xf4] sm:$0xff]
    %v3272 = vld [vmem:[#allocation2 + $0xfc] sm:$0xff]
    %v3273 = vld [vmem:[#allocation2 + $0x104] sm:$0xf]
    %v3274 = vld [vmem:[#allocation2 + $0x108] sm:$0xff]
    %v3275 = vld [vmem:[#allocation2 + $0x110] sm:$0xff]
    %v3276 = vld [vmem:[#allocation2 + $0x118] sm:$0xff]
    %v3277 = vld [vmem:[#allocation2 + $0x120] sm:$0xff]
    %v3278 = vld [vmem:[#allocation2 + $0x128] sm:$0xff]
    %v3279 = vld [vmem:[#allocation2 + $0x130] sm:$0xf]
    %v3280 = vld [vmem:[#allocation2 + $0x134] sm:$0xff]
    %v3281 = vld [vmem:[#allocation2 + $0x13c] sm:$0xff]
    %v3282 = vld [vmem:[#allocation2 + $0x144] sm:$0xff]
    %v3283 = vld [vmem:[#allocation2 + $0x14c] sm:$0xff]
    %v3284 = vld [vmem:[#allocation2 + $0x154] sm:$0xff]
    %v3285 = vld [vmem:[#allocation2 + $0x15c] sm:$0xf]
    %v3286 = vld [vmem:[#allocation2 + $0x160] sm:$0xff]
    %v3287 = vld [vmem:[#allocation2 + $0x168] sm:$0xff]
    %v3288 = vld [vmem:[#allocation2 + $0x170] sm:$0xff]
    %v3289 = vld [vmem:[#allocation2 + $0x178] sm:$0xff]
    %v3290 = vld [vmem:[#allocation2 + $0x180] sm:$0xff]
    %v3291 = vld [vmem:[#allocation2 + $0x188] sm:$0xf]
    %v3292 = vld [vmem:[#allocation2 + $0x18c] sm:$0xff]
    %v3293 = vld [vmem:[#allocation2 + $0x194] sm:$0xff]
    %v3294 = vld [vmem:[#allocation2 + $0x19c] sm:$0xff]
    %v3295 = vld [vmem:[#allocation2 + $0x1a4] sm:$0xff]
    %v3296 = vld [vmem:[#allocation2 + $0x1ac] sm:$0xff]
    %v3297 = vld [vmem:[#allocation2 + $0x1b4] sm:$0xf]
    %v3298 = vld [vmem:[#allocation2 + $0x1b8] sm:$0xff]
    %v3299 = vld [vmem:[#allocation2 + $0x1c0] sm:$0xff]
    %v3300 = vld [vmem:[#allocation2 + $0x1c8] sm:$0xff]
    %v3301 = vld [vmem:[#allocation2 + $0x1d0] sm:$0xff]
    %v3302 = vld [vmem:[#allocation2 + $0x1d8] sm:$0xff]
    %v3303 = vld [vmem:[#allocation2 + $0x1e0] sm:$0xf]
    %v3304 = vld [vmem:[#allocation2 + $0x1e4] sm:$0xff]
    %v3305 = vld [vmem:[#allocation2 + $0x1ec] sm:$0xff]
    %v3306 = vld [vmem:[#allocation2 + $0x1f4] sm:$0xff]
    %v3307 = vld [vmem:[#allocation2 + $0x1fc] sm:$0xff]
    %v3308 = vld [vmem:[#allocation2 + $0x204] sm:$0xff]
    %v3309 = vld [vmem:[#allocation2 + $0x20c] sm:$0xf]
    %v3310 = vld [vmem:[#allocation2 + $0x210] sm:$0xff]
    %v3311 = vld [vmem:[#allocation2 + $0x218] sm:$0xff]
    %v3312 = vld [vmem:[#allocation2 + $0x220] sm:$0xff]
    %v3313 = vld [vmem:[#allocation2 + $0x228] sm:$0xff]
    %v3314 = vld [vmem:[#allocation2 + $0x230] sm:$0xff]
    %v3315 = vld [vmem:[#allocation2 + $0x238] sm:$0xf]
    %v3316 = vld [vmem:[#allocation2 + $0x23c] sm:$0xff]
    %v3317 = vld [vmem:[#allocation2 + $0x244] sm:$0xff]
    %v3318 = vld [vmem:[#allocation2 + $0x24c] sm:$0xff]
    %v3319 = vld [vmem:[#allocation2 + $0x254] sm:$0xff]
    %v3320 = vld [vmem:[#allocation2 + $0x25c] sm:$0xff]
    %v3321 = vld [vmem:[#allocation2 + $0x264] sm:$0xf]
    %v3322 = vld [vmem:[#allocation2 + $0x268] sm:$0xff]
    %v3323 = vld [vmem:[#allocation2 + $0x270] sm:$0xff]
    %v3324 = vld [vmem:[#allocation2 + $0x278] sm:$0xff]
    %v3325 = vld [vmem:[#allocation2 + $0x280] sm:$0xff]
    %v3326 = vld [vmem:[#allocation2 + $0x288] sm:$0xff]
    %v3327 = vld [vmem:[#allocation2 + $0x290] sm:$0xf]
    %v3328 = vld [vmem:[#allocation2 + $0x294] sm:$0xff]
    %v3329 = vld [vmem:[#allocation2 + $0x29c] sm:$0xff]
    %v3330 = vld [vmem:[#allocation2 + $0x2a4] sm:$0xff]
    %v3331 = vld [vmem:[#allocation2 + $0x2ac] sm:$0xff]
    %v3332 = vld [vmem:[#allocation2 + $0x2b4] sm:$0xff]
    %v3333 = vld [vmem:[#allocation2 + $0x2bc] sm:$0xf]
    %v3336 = vunpack.c.l.b16 %v3236
    %v3337 = vunpack.c.l.b16 %v3237
    %v3338 = vpack.c.b16 %v3337, %v3336
    %v3436 = vunpack.c.l.b16 %v3238
    %v3437 = vunpack.c.h.b16 %v3238
    %v3438 = vunpack.c.l.b16 %v3239
    %v3439 = vunpack.c.h.b16 %v3239
    %v3440 = vunpack.c.l.b16 %v3240
    %v3441 = vunpack.c.h.b16 %v3240
    %v3442 = vunpack.c.l.b16 %v3241
    %v3443 = vunpack.c.h.b16 %v3241
    %v3444 = vunpack.c.l.b16 %v3242
    %v3445 = vunpack.c.h.b16 %v3242
    %v3446 = vunpack.c.l.b16 %v3243
    %v3447 = vunpack.c.l.b16 %v3244
    %v3448 = vunpack.c.h.b16 %v3244
    %v3449 = vunpack.c.l.b16 %v3245
    %v3450 = vunpack.c.h.b16 %v3245
    %v3451 = vunpack.c.l.b16 %v3246
    %v3452 = vunpack.c.h.b16 %v3246
    %v3453 = vunpack.c.l.b16 %v3247
    %v3454 = vunpack.c.h.b16 %v3247
    %v3455 = vunpack.c.l.b16 %v3248
    %v3456 = vunpack.c.h.b16 %v3248
    %v3457 = vunpack.c.l.b16 %v3249
    %v3458 = vunpack.c.l.b16 %v3250
    %v3459 = vunpack.c.h.b16 %v3250
    %v3460 = vunpack.c.l.b16 %v3251
    %v3461 = vunpack.c.h.b16 %v3251
    %v3462 = vunpack.c.l.b16 %v3252
    %v3463 = vunpack.c.h.b16 %v3252
    %v3464 = vunpack.c.l.b16 %v3253
    %v3465 = vunpack.c.h.b16 %v3253
    %v3466 = vunpack.c.l.b16 %v3254
    %v3467 = vunpack.c.h.b16 %v3254
    %v3468 = vunpack.c.l.b16 %v3255
    %v3469 = vunpack.c.l.b16 %v3256
    %v3470 = vunpack.c.h.b16 %v3256
    %v3471 = vunpack.c.l.b16 %v3257
    %v3472 = vunpack.c.h.b16 %v3257
    %v3473 = vunpack.c.l.b16 %v3258
    %v3474 = vunpack.c.h.b16 %v3258
    %v3475 = vunpack.c.l.b16 %v3259
    %v3476 = vunpack.c.h.b16 %v3259
    %v3477 = vunpack.c.l.b16 %v3260
    %v3478 = vunpack.c.h.b16 %v3260
    %v3479 = vunpack.c.l.b16 %v3261
    %v3480 = vunpack.c.l.b16 %v3262
    %v3481 = vunpack.c.h.b16 %v3262
    %v3482 = vunpack.c.l.b16 %v3263
    %v3483 = vunpack.c.h.b16 %v3263
    %v3484 = vunpack.c.l.b16 %v3264
    %v3485 = vunpack.c.h.b16 %v3264
    %v3486 = vunpack.c.l.b16 %v3265
    %v3487 = vunpack.c.h.b16 %v3265
    %v3488 = vunpack.c.l.b16 %v3266
    %v3489 = vunpack.c.h.b16 %v3266
    %v3490 = vunpack.c.l.b16 %v3267
    %v3491 = vunpack.c.l.b16 %v3268
    %v3492 = vunpack.c.h.b16 %v3268
    %v3493 = vunpack.c.l.b16 %v3269
    %v3494 = vunpack.c.h.b16 %v3269
    %v3495 = vunpack.c.l.b16 %v3270
    %v3496 = vunpack.c.h.b16 %v3270
    %v3497 = vunpack.c.l.b16 %v3271
    %v3498 = vunpack.c.h.b16 %v3271
    %v3499 = vunpack.c.l.b16 %v3272
    %v3500 = vunpack.c.h.b16 %v3272
    %v3501 = vunpack.c.l.b16 %v3273
    %v3502 = vunpack.c.l.b16 %v3274
    %v3503 = vunpack.c.h.b16 %v3274
    %v3504 = vunpack.c.l.b16 %v3275
    %v3505 = vunpack.c.h.b16 %v3275
    %v3506 = vunpack.c.l.b16 %v3276
    %v3507 = vunpack.c.h.b16 %v3276
    %v3508 = vunpack.c.l.b16 %v3277
    %v3509 = vunpack.c.h.b16 %v3277
    %v3510 = vunpack.c.l.b16 %v3278
    %v3511 = vunpack.c.h.b16 %v3278
    %v3512 = vunpack.c.l.b16 %v3279
    %v3513 = vunpack.c.l.b16 %v3280
    %v3514 = vunpack.c.h.b16 %v3280
    %v3515 = vunpack.c.l.b16 %v3281
    %v3516 = vunpack.c.h.b16 %v3281
    %v3517 = vunpack.c.l.b16 %v3282
    %v3518 = vunpack.c.h.b16 %v3282
    %v3519 = vunpack.c.l.b16 %v3283
    %v3520 = vunpack.c.h.b16 %v3283
    %v3521 = vunpack.c.l.b16 %v3284
    %v3522 = vunpack.c.h.b16 %v3284
    %v3523 = vunpack.c.l.b16 %v3285
    %v3524 = vunpack.c.l.b16 %v3286
    %v3525 = vunpack.c.h.b16 %v3286
    %v3526 = vunpack.c.l.b16 %v3287
    %v3527 = vunpack.c.h.b16 %v3287
    %v3528 = vunpack.c.l.b16 %v3288
    %v3529 = vunpack.c.h.b16 %v3288
    %v3530 = vunpack.c.l.b16 %v3289
    %v3531 = vunpack.c.h.b16 %v3289
    %v3532 = vunpack.c.l.b16 %v3290
    %v3533 = vunpack.c.h.b16 %v3290
    %v3534 = vunpack.c.l.b16 %v3291
    %v3535 = vunpack.c.l.b16 %v3292
    %v3536 = vunpack.c.h.b16 %v3292
    %v3537 = vunpack.c.l.b16 %v3293
    %v3538 = vunpack.c.h.b16 %v3293
    %v3539 = vunpack.c.l.b16 %v3294
    %v3540 = vunpack.c.h.b16 %v3294
    %v3541 = vunpack.c.l.b16 %v3295
    %v3542 = vunpack.c.h.b16 %v3295
    %v3543 = vunpack.c.l.b16 %v3296
    %v3544 = vunpack.c.h.b16 %v3296
    %v3545 = vunpack.c.l.b16 %v3297
    %v3546 = vunpack.c.l.b16 %v3298
    %v3547 = vunpack.c.h.b16 %v3298
    %v3548 = vunpack.c.l.b16 %v3299
    %v3549 = vunpack.c.h.b16 %v3299
    %v3550 = vunpack.c.l.b16 %v3300
    %v3551 = vunpack.c.h.b16 %v3300
    %v3552 = vunpack.c.l.b16 %v3301
    %v3553 = vunpack.c.h.b16 %v3301
    %v3554 = vunpack.c.l.b16 %v3302
    %v3555 = vunpack.c.h.b16 %v3302
    %v3556 = vunpack.c.l.b16 %v3303
    %v3557 = vunpack.c.l.b16 %v3304
    %v3558 = vunpack.c.h.b16 %v3304
    %v3559 = vunpack.c.l.b16 %v3305
    %v3560 = vunpack.c.h.b16 %v3305
    %v3561 = vunpack.c.l.b16 %v3306
    %v3562 = vunpack.c.h.b16 %v3306
    %v3563 = vunpack.c.l.b16 %v3307
    %v3564 = vunpack.c.h.b16 %v3307
    %v3565 = vunpack.c.l.b16 %v3308
    %v3566 = vunpack.c.h.b16 %v3308
    %v3567 = vunpack.c.l.b16 %v3309
    %v3568 = vunpack.c.l.b16 %v3310
    %v3569 = vunpack.c.h.b16 %v3310
    %v3570 = vunpack.c.l.b16 %v3311
    %v3571 = vunpack.c.h.b16 %v3311
    %v3572 = vunpack.c.l.b16 %v3312
    %v3573 = vunpack.c.h.b16 %v3312
    %v3574 = vunpack.c.l.b16 %v3313
    %v3575 = vunpack.c.h.b16 %v3313
    %v3576 = vunpack.c.l.b16 %v3314
    %v3577 = vunpack.c.h.b16 %v3314
    %v3578 = vunpack.c.l.b16 %v3315
    %v3579 = vunpack.c.l.b16 %v3316
    %v3580 = vunpack.c.h.b16 %v3316
    %v3581 = vunpack.c.l.b16 %v3317
    %v3582 = vunpack.c.h.b16 %v3317
    %v3583 = vunpack.c.l.b16 %v3318
    %v3584 = vunpack.c.h.b16 %v3318
    %v3585 = vunpack.c.l.b16 %v3319
    %v3586 = vunpack.c.h.b16 %v3319
    %v3587 = vunpack.c.l.b16 %v3320
    %v3588 = vunpack.c.h.b16 %v3320
    %v3589 = vunpack.c.l.b16 %v3321
    %v3590 = vunpack.c.l.b16 %v3322
    %v3591 = vunpack.c.h.b16 %v3322
    %v3592 = vunpack.c.l.b16 %v3323
    %v3593 = vunpack.c.h.b16 %v3323
    %v3594 = vunpack.c.l.b16 %v3324
    %v3595 = vunpack.c.h.b16 %v3324
    %v3596 = vunpack.c.l.b16 %v3325
    %v3597 = vunpack.c.h.b16 %v3325
    %v3598 = vunpack.c.l.b16 %v3326
    %v3599 = vunpack.c.h.b16 %v3326
    %v3600 = vunpack.c.l.b16 %v3327
    %v3601 = vunpack.c.l.b16 %v3328
    %v3602 = vunpack.c.h.b16 %v3328
    %v3603 = vunpack.c.l.b16 %v3329
    %v3604 = vunpack.c.h.b16 %v3329
    %v3605 = vunpack.c.l.b16 %v3330
    %v3606 = vunpack.c.h.b16 %v3330
    %v3607 = vunpack.c.l.b16 %v3331
    %v3608 = vunpack.c.h.b16 %v3331
    %v3609 = vunpack.c.l.b16 %v3332
    %v3610 = vunpack.c.h.b16 %v3332
    %v3611 = vunpack.c.l.b16 %v3333
    %v3612 = vpack.c.b16 %v3447, %v3436
    %v3613 = vpack.c.b16 %v3448, %v3437
    %v3614 = vpack.c.b16 %v3449, %v3438
    %v3615 = vpack.c.b16 %v3450, %v3439
    %v3616 = vpack.c.b16 %v3451, %v3440
    %v3617 = vpack.c.b16 %v3452, %v3441
    %v3618 = vpack.c.b16 %v3453, %v3442
    %v3619 = vpack.c.b16 %v3454, %v3443
    %v3620 = vpack.c.b16 %v3455, %v3444
    %v3621 = vpack.c.b16 %v3456, %v3445
    %v3622 = vpack.c.b16 %v3457, %v3446
    %v3623 = vpack.c.b16 %v3469, %v3458
    %v3624 = vpack.c.b16 %v3470, %v3459
    %v3625 = vpack.c.b16 %v3471, %v3460
    %v3626 = vpack.c.b16 %v3472, %v3461
    %v3627 = vpack.c.b16 %v3473, %v3462
    %v3628 = vpack.c.b16 %v3474, %v3463
    %v3629 = vpack.c.b16 %v3475, %v3464
    %v3630 = vpack.c.b16 %v3476, %v3465
    %v3631 = vpack.c.b16 %v3477, %v3466
    %v3632 = vpack.c.b16 %v3478, %v3467
    %v3633 = vpack.c.b16 %v3479, %v3468
    %v3634 = vpack.c.b16 %v3491, %v3480
    %v3635 = vpack.c.b16 %v3492, %v3481
    %v3636 = vpack.c.b16 %v3493, %v3482
    %v3637 = vpack.c.b16 %v3494, %v3483
    %v3638 = vpack.c.b16 %v3495, %v3484
    %v3639 = vpack.c.b16 %v3496, %v3485
    %v3640 = vpack.c.b16 %v3497, %v3486
    %v3641 = vpack.c.b16 %v3498, %v3487
    %v3642 = vpack.c.b16 %v3499, %v3488
    %v3643 = vpack.c.b16 %v3500, %v3489
    %v3644 = vpack.c.b16 %v3501, %v3490
    %v3645 = vpack.c.b16 %v3513, %v3502
    %v3646 = vpack.c.b16 %v3514, %v3503
    %v3647 = vpack.c.b16 %v3515, %v3504
    %v3648 = vpack.c.b16 %v3516, %v3505
    %v3649 = vpack.c.b16 %v3517, %v3506
    %v3650 = vpack.c.b16 %v3518, %v3507
    %v3651 = vpack.c.b16 %v3519, %v3508
    %v3652 = vpack.c.b16 %v3520, %v3509
    %v3653 = vpack.c.b16 %v3521, %v3510
    %v3654 = vpack.c.b16 %v3522, %v3511
    %v3655 = vpack.c.b16 %v3523, %v3512
    %v3656 = vpack.c.b16 %v3535, %v3524
    %v3657 = vpack.c.b16 %v3536, %v3525
    %v3658 = vpack.c.b16 %v3537, %v3526
    %v3659 = vpack.c.b16 %v3538, %v3527
    %v3660 = vpack.c.b16 %v3539, %v3528
    %v3661 = vpack.c.b16 %v3540, %v3529
    %v3662 = vpack.c.b16 %v3541, %v3530
    %v3663 = vpack.c.b16 %v3542, %v3531
    %v3664 = vpack.c.b16 %v3543, %v3532
    %v3665 = vpack.c.b16 %v3544, %v3533
    %v3666 = vpack.c.b16 %v3545, %v3534
    %v3667 = vpack.c.b16 %v3557, %v3546
    %v3668 = vpack.c.b16 %v3558, %v3547
    %v3669 = vpack.c.b16 %v3559, %v3548
    %v3670 = vpack.c.b16 %v3560, %v3549
    %v3671 = vpack.c.b16 %v3561, %v3550
    %v3672 = vpack.c.b16 %v3562, %v3551
    %v3673 = vpack.c.b16 %v3563, %v3552
    %v3674 = vpack.c.b16 %v3564, %v3553
    %v3675 = vpack.c.b16 %v3565, %v3554
    %v3676 = vpack.c.b16 %v3566, %v3555
    %v3677 = vpack.c.b16 %v3567, %v3556
    %v3678 = vpack.c.b16 %v3579, %v3568
    %v3679 = vpack.c.b16 %v3580, %v3569
    %v3680 = vpack.c.b16 %v3581, %v3570
    %v3681 = vpack.c.b16 %v3582, %v3571
    %v3682 = vpack.c.b16 %v3583, %v3572
    %v3683 = vpack.c.b16 %v3584, %v3573
    %v3684 = vpack.c.b16 %v3585, %v3574
    %v3685 = vpack.c.b16 %v3586, %v3575
    %v3686 = vpack.c.b16 %v3587, %v3576
    %v3687 = vpack.c.b16 %v3588, %v3577
    %v3688 = vpack.c.b16 %v3589, %v3578
    %v3689 = vpack.c.b16 %v3601, %v3590
    %v3690 = vpack.c.b16 %v3602, %v3591
    %v3691 = vpack.c.b16 %v3603, %v3592
    %v3692 = vpack.c.b16 %v3604, %v3593
    %v3693 = vpack.c.b16 %v3605, %v3594
    %v3694 = vpack.c.b16 %v3606, %v3595
    %v3695 = vpack.c.b16 %v3607, %v3596
    %v3696 = vpack.c.b16 %v3608, %v3597
    %v3697 = vpack.c.b16 %v3609, %v3598
    %v3698 = vpack.c.b16 %v3610, %v3599
    %v3699 = vpack.c.b16 %v3611, %v3600
    %3788 = vmatprep.subr.bf16.mxu0 %v3690
    %3789 = vmatpush1.bf16.msra.mxu0 %v3689
    %3790 = vmatprep.subr.bf16.mxu0 %v3679
    %3791 = vmatpush1.bf16.msra.mxu0 %v3678
    %3792 = vmatprep.subr.bf16.mxu0 %v3668
    %3793 = vmatpush1.bf16.msra.mxu0 %v3667
    %3794 = vmatprep.subr.bf16.mxu0 %v3657
    %3795 = vmatpush1.bf16.msra.mxu0 %v3656
    %3796 = vmatprep.subr.bf16.mxu0 %v3646
    %3797 = vmatpush1.bf16.msra.mxu0 %v3645
    %3798 = vmatprep.subr.bf16.mxu0 %v3635
    %3799 = vmatpush1.bf16.msra.mxu0 %v3634
    %3800 = vmatprep.subr.bf16.mxu0 %v3624
    %3801 = vmatpush1.bf16.msra.mxu0 %v3623
    %3802 = vmatprep.subr.bf16.mxu0 %v3613
    %3803 = vmatpush1.bf16.msra.mxu0 %v3612
    %3804 = vmatprep.subr.bf16.mxu0 0
    %3805 = vmatpush2.bf16.msra.mxu0 0
    %3806 = vmatprep.subr.bf16.mxu0 0
    %3807 = vmatpush2.bf16.msra.mxu0 0
    %3808 = vmatprep.subr.bf16.mxu0 0
    %3809 = vmatpush2.bf16.msra.mxu0 0
    %3810 = vmatprep.subr.bf16.mxu0 0
    %3811 = vmatpush2.bf16.msra.mxu0 0
    %3812 = vmatprep.subr.bf16.mxu0 0
    %3813 = vmatpush2.bf16.msra.mxu0 0
    %3814 = vmatprep.subr.bf16.mxu0 0
    %3815 = vmatpush2.bf16.msra.mxu0 0
    %3816 = vmatprep.subr.bf16.mxu0 0
    %3817 = vmatpush2.bf16.msra.mxu0 0
    %3818 = vmatprep.subr.bf16.mxu0 0
    %3819 = vmatpush2.bf16.msra.mxu0 0
    %3820 = vmatprep.mubr.bf16.mxu0 0
    %3821 = vmatmul.mubr.bf16.gmra.mxu0 %v3338
    %v3822 = vpop.f32.mrf.mxu0
    %v3823 = vadd.f32 0.0, %v3822
    %v3824 = vpop.f32.mrf.mxu0
    %v3825 = vadd.f32 0.0, %v3824
    %v3826 = vpop.f32.mrf.mxu0
    %v3827 = vadd.f32 0.0, %v3826
    %v3828 = vpop.f32.mrf.mxu0
    %v3829 = vadd.f32 0.0, %v3828
    %3830 = vdwg.mxu0
    %3831 = vmatprep.subr.bf16.mxu0 %v3692
    %3832 = vmatpush1.bf16.msra.mxu0 %v3691
    %3833 = vmatprep.subr.bf16.mxu0 %v3681
    %3834 = vmatpush1.bf16.msra.mxu0 %v3680
    %3835 = vmatprep.subr.bf16.mxu0 %v3670
    %3836 = vmatpush1.bf16.msra.mxu0 %v3669
    %3837 = vmatprep.subr.bf16.mxu0 %v3659
    %3838 = vmatpush1.bf16.msra.mxu0 %v3658
    %3839 = vmatprep.subr.bf16.mxu0 %v3648
    %3840 = vmatpush1.bf16.msra.mxu0 %v3647
    %3841 = vmatprep.subr.bf16.mxu0 %v3637
    %3842 = vmatpush1.bf16.msra.mxu0 %v3636
    %3843 = vmatprep.subr.bf16.mxu0 %v3626
    %3844 = vmatpush1.bf16.msra.mxu0 %v3625
    %3845 = vmatprep.subr.bf16.mxu0 %v3615
    %3846 = vmatpush1.bf16.msra.mxu0 %v3614
    %3847 = vmatprep.subr.bf16.mxu0 0
    %3848 = vmatpush2.bf16.msra.mxu0 0
    %3849 = vmatprep.subr.bf16.mxu0 0
    %3850 = vmatpush2.bf16.msra.mxu0 0
    %3851 = vmatprep.subr.bf16.mxu0 0
    %3852 = vmatpush2.bf16.msra.mxu0 0
    %3853 = vmatprep.subr.bf16.mxu0 0
    %3854 = vmatpush2.bf16.msra.mxu0 0
    %3855 = vmatprep.subr.bf16.mxu0 0
    %3856 = vmatpush2.bf16.msra.mxu0 0
    %3857 = vmatprep.subr.bf16.mxu0 0
    %3858 = vmatpush2.bf16.msra.mxu0 0
    %3859 = vmatprep.subr.bf16.mxu0 0
    %3860 = vmatpush2.bf16.msra.mxu0 0
    %3861 = vmatprep.subr.bf16.mxu0 0
    %3862 = vmatpush2.bf16.msra.mxu0 0
    %3863 = vmatprep.mubr.bf16.mxu0 0
    %3864 = vmatmul.mubr.bf16.gmra.mxu0 %v3338
    %v3865 = vpop.f32.mrf.mxu0
    %v3866 = vadd.f32 0.0, %v3865
    %v3867 = vpop.f32.mrf.mxu0
    %v3868 = vadd.f32 0.0, %v3867
    %v3869 = vpop.f32.mrf.mxu0
    %v3870 = vadd.f32 0.0, %v3869
    %v3871 = vpop.f32.mrf.mxu0
    %v3872 = vadd.f32 0.0, %v3871
    %3873 = vdwg.mxu0
    %3874 = vmatprep.subr.bf16.mxu0 %v3694
    %3875 = vmatpush1.bf16.msra.mxu0 %v3693
    %3876 = vmatprep.subr.bf16.mxu0 %v3683
    %3877 = vmatpush1.bf16.msra.mxu0 %v3682
    %3878 = vmatprep.subr.bf16.mxu0 %v3672
    %3879 = vmatpush1.bf16.msra.mxu0 %v3671
    %3880 = vmatprep.subr.bf16.mxu0 %v3661
    %3881 = vmatpush1.bf16.msra.mxu0 %v3660
    %3882 = vmatprep.subr.bf16.mxu0 %v3650
    %3883 = vmatpush1.bf16.msra.mxu0 %v3649
    %3884 = vmatprep.subr.bf16.mxu0 %v3639
    %3885 = vmatpush1.bf16.msra.mxu0 %v3638
    %3886 = vmatprep.subr.bf16.mxu0 %v3628
    %3887 = vmatpush1.bf16.msra.mxu0 %v3627
    %3888 = vmatprep.subr.bf16.mxu0 %v3617
    %3889 = vmatpush1.bf16.msra.mxu0 %v3616
    %3890 = vmatprep.subr.bf16.mxu0 0
    %3891 = vmatpush2.bf16.msra.mxu0 0
    %3892 = vmatprep.subr.bf16.mxu0 0
    %3893 = vmatpush2.bf16.msra.mxu0 0
    %3894 = vmatprep.subr.bf16.mxu0 0
    %3895 = vmatpush2.bf16.msra.mxu0 0
    %3896 = vmatprep.subr.bf16.mxu0 0
    %3897 = vmatpush2.bf16.msra.mxu0 0
    %3898 = vmatprep.subr.bf16.mxu0 0
    %3899 = vmatpush2.bf16.msra.mxu0 0
    %3900 = vmatprep.subr.bf16.mxu0 0
    %3901 = vmatpush2.bf16.msra.mxu0 0
    %3902 = vmatprep.subr.bf16.mxu0 0
    %3903 = vmatpush2.bf16.msra.mxu0 0
    %3904 = vmatprep.subr.bf16.mxu0 0
    %3905 = vmatpush2.bf16.msra.mxu0 0
    %3906 = vmatprep.mubr.bf16.mxu0 0
    %3907 = vmatmul.mubr.bf16.gmra.mxu0 %v3338
    %v3908 = vpop.f32.mrf.mxu0
    %v3909 = vadd.f32 0.0, %v3908
    %v3910 = vpop.f32.mrf.mxu0
    %v3911 = vadd.f32 0.0, %v3910
    %v3912 = vpop.f32.mrf.mxu0
    %v3913 = vadd.f32 0.0, %v3912
    %v3914 = vpop.f32.mrf.mxu0
    %v3915 = vadd.f32 0.0, %v3914
    %3916 = vdwg.mxu0
    %3917 = vmatprep.subr.bf16.mxu0 %v3696
    %3918 = vmatpush1.bf16.msra.mxu0 %v3695
    %3919 = vmatprep.subr.bf16.mxu0 %v3685
    %3920 = vmatpush1.bf16.msra.mxu0 %v3684
    %3921 = vmatprep.subr.bf16.mxu0 %v3674
    %3922 = vmatpush1.bf16.msra.mxu0 %v3673
    %3923 = vmatprep.subr.bf16.mxu0 %v3663
    %3924 = vmatpush1.bf16.msra.mxu0 %v3662
    %3925 = vmatprep.subr.bf16.mxu0 %v3652
    %3926 = vmatpush1.bf16.msra.mxu0 %v3651
    %3927 = vmatprep.subr.bf16.mxu0 %v3641
    %3928 = vmatpush1.bf16.msra.mxu0 %v3640
    %3929 = vmatprep.subr.bf16.mxu0 %v3630
    %3930 = vmatpush1.bf16.msra.mxu0 %v3629
    %3931 = vmatprep.subr.bf16.mxu0 %v3619
    %3932 = vmatpush1.bf16.msra.mxu0 %v3618
    %3933 = vmatprep.subr.bf16.mxu0 0
    %3934 = vmatpush2.bf16.msra.mxu0 0
    %3935 = vmatprep.subr.bf16.mxu0 0
    %3936 = vmatpush2.bf16.msra.mxu0 0
    %3937 = vmatprep.subr.bf16.mxu0 0
    %3938 = vmatpush2.bf16.msra.mxu0 0
    %3939 = vmatprep.subr.bf16.mxu0 0
    %3940 = vmatpush2.bf16.msra.mxu0 0
    %3941 = vmatprep.subr.bf16.mxu0 0
    %3942 = vmatpush2.bf16.msra.mxu0 0
    %3943 = vmatprep.subr.bf16.mxu0 0
    %3944 = vmatpush2.bf16.msra.mxu0 0
    %3945 = vmatprep.subr.bf16.mxu0 0
    %3946 = vmatpush2.bf16.msra.mxu0 0
    %3947 = vmatprep.subr.bf16.mxu0 0
    %3948 = vmatpush2.bf16.msra.mxu0 0
    %3949 = vmatprep.mubr.bf16.mxu0 0
    %3950 = vmatmul.mubr.bf16.gmra.mxu0 %v3338
    %v3951 = vpop.f32.mrf.mxu0
    %v3952 = vadd.f32 0.0, %v3951
    %v3953 = vpop.f32.mrf.mxu0
    %v3954 = vadd.f32 0.0, %v3953
    %v3955 = vpop.f32.mrf.mxu0
    %v3956 = vadd.f32 0.0, %v3955
    %v3957 = vpop.f32.mrf.mxu0
    %v3958 = vadd.f32 0.0, %v3957
    %3959 = vdwg.mxu0
    %3960 = vmatprep.subr.bf16.mxu0 %v3698
    %3961 = vmatpush1.bf16.msra.mxu0 %v3697
    %3962 = vmatprep.subr.bf16.mxu0 %v3687
    %3963 = vmatpush1.bf16.msra.mxu0 %v3686
    %3964 = vmatprep.subr.bf16.mxu0 %v3676
    %3965 = vmatpush1.bf16.msra.mxu0 %v3675
    %3966 = vmatprep.subr.bf16.mxu0 %v3665
    %3967 = vmatpush1.bf16.msra.mxu0 %v3664
    %3968 = vmatprep.subr.bf16.mxu0 %v3654
    %3969 = vmatpush1.bf16.msra.mxu0 %v3653
    %3970 = vmatprep.subr.bf16.mxu0 %v3643
    %3971 = vmatpush1.bf16.msra.mxu0 %v3642
    %3972 = vmatprep.subr.bf16.mxu0 %v3632
    %3973 = vmatpush1.bf16.msra.mxu0 %v3631
    %3974 = vmatprep.subr.bf16.mxu0 %v3621
    %3975 = vmatpush1.bf16.msra.mxu0 %v3620
    %3976 = vmatprep.subr.bf16.mxu0 0
    %3977 = vmatpush2.bf16.msra.mxu0 0
    %3978 = vmatprep.subr.bf16.mxu0 0
    %3979 = vmatpush2.bf16.msra.mxu0 0
    %3980 = vmatprep.subr.bf16.mxu0 0
    %3981 = vmatpush2.bf16.msra.mxu0 0
    %3982 = vmatprep.subr.bf16.mxu0 0
    %3983 = vmatpush2.bf16.msra.mxu0 0
    %3984 = vmatprep.subr.bf16.mxu0 0
    %3985 = vmatpush2.bf16.msra.mxu0 0
    %3986 = vmatprep.subr.bf16.mxu0 0
    %3987 = vmatpush2.bf16.msra.mxu0 0
    %3988 = vmatprep.subr.bf16.mxu0 0
    %3989 = vmatpush2.bf16.msra.mxu0 0
    %3990 = vmatprep.subr.bf16.mxu0 0
    %3991 = vmatpush2.bf16.msra.mxu0 0
    %3992 = vmatprep.mubr.bf16.mxu0 0
    %3993 = vmatmul.mubr.bf16.gmra.mxu0 %v3338
    %v3994 = vpop.f32.mrf.mxu0
    %v3995 = vadd.f32 0.0, %v3994
    %v3996 = vpop.f32.mrf.mxu0
    %v3997 = vadd.f32 0.0, %v3996
    %v3998 = vpop.f32.mrf.mxu0
    %v3999 = vadd.f32 0.0, %v3998
    %v4000 = vpop.f32.mrf.mxu0
    %v4001 = vadd.f32 0.0, %v4000
    %4002 = vdwg.mxu0
    %4003 = vmatprep.subr.bf16.mxu0 0
    %4004 = vmatpush1.bf16.msra.mxu0 %v3699
    %4005 = vmatprep.subr.bf16.mxu0 0
    %4006 = vmatpush1.bf16.msra.mxu0 %v3688
    %4007 = vmatprep.subr.bf16.mxu0 0
    %4008 = vmatpush1.bf16.msra.mxu0 %v3677
    %4009 = vmatprep.subr.bf16.mxu0 0
    %4010 = vmatpush1.bf16.msra.mxu0 %v3666
    %4011 = vmatprep.subr.bf16.mxu0 0
    %4012 = vmatpush1.bf16.msra.mxu0 %v3655
    %4013 = vmatprep.subr.bf16.mxu0 0
    %4014 = vmatpush1.bf16.msra.mxu0 %v3644
    %4015 = vmatprep.subr.bf16.mxu0 0
    %4016 = vmatpush1.bf16.msra.mxu0 %v3633
    %4017 = vmatprep.subr.bf16.mxu0 0
    %4018 = vmatpush1.bf16.msra.mxu0 %v3622
    %4019 = vmatprep.subr.bf16.mxu0 0
    %4020 = vmatpush2.bf16.msra.mxu0 0
    %4021 = vmatprep.subr.bf16.mxu0 0
    %4022 = vmatpush2.bf16.msra.mxu0 0
    %4023 = vmatprep.subr.bf16.mxu0 0
    %4024 = vmatpush2.bf16.msra.mxu0 0
    %4025 = vmatprep.subr.bf16.mxu0 0
    %4026 = vmatpush2.bf16.msra.mxu0 0
    %4027 = vmatprep.subr.bf16.mxu0 0
    %4028 = vmatpush2.bf16.msra.mxu0 0
    %4029 = vmatprep.subr.bf16.mxu0 0
    %4030 = vmatpush2.bf16.msra.mxu0 0
    %4031 = vmatprep.subr.bf16.mxu0 0
    %4032 = vmatpush2.bf16.msra.mxu0 0
    %4033 = vmatprep.subr.bf16.mxu0 0
    %4034 = vmatpush2.bf16.msra.mxu0 0
    %4035 = vmatprep.mubr.bf16.mxu0 0
    %4036 = vmatmul.mubr.bf16.gmra.mxu0 %v3338
    %v4037 = vpop.f32.mrf.mxu0
    %v4038 = vadd.f32 0.0, %v4037
    %v4039 = vpop.f32.mrf.mxu0
    %v4040 = vpop.f32.mrf.mxu0
    %v4041 = vadd.f32 0.0, %v4040
    %v4042 = vpop.f32.mrf.mxu0
    %4043 = vdwg.mxu0
    %s4044 = scalar_lea.vmem %s4, 64
    %v4045 = vld [vmem:[%s4044] sm:$0xff]
    %v4046 = vld [vmem:[%s4044 + $0x8] sm:$0xff]
    %4048 = vset.pattern.permute.xlu0 0
    %4049 = vperm.xlu0 %4048, %v4045
    %v4050 = vpop.permute.xlu0 %4049
    %4053 = vset.pattern.permute.xlu0 0
    %4054 = vperm.xlu0 %4053, %v4046
    %v4055 = vpop.permute.xlu0 %4054
    %v4057 = vadd.f32 %v3823, %v4050
    %v4058 = vadd.f32 %v3825, %v4050
    %v4059 = vadd.f32 %v3866, %v4050
    %v4060 = vadd.f32 %v3868, %v4050
    %v4061 = vadd.f32 %v3909, %v4050
    %v4062 = vadd.f32 %v3827, %v4055
    %v4063 = vadd.f32 %v3829, %v4055
    %v4064 = vadd.f32 %v3870, %v4055
    %v4065 = vadd.f32 %v3872, %v4055
    %v4066 = vadd.f32 %v3913, %v4055
    %v4067 = vtanh.pop %v4057
    %v4068 = vtanh.pop %v4058
    %v4069 = vtanh.pop %v4059
    %v4070 = vtanh.pop %v4060
    %v4071 = vtanh.pop %v4061
    %v4072 = vtanh.pop %v4062
    %v4073 = vtanh.pop %v4063
    %v4074 = vtanh.pop %v4064
    %v4075 = vtanh.pop %v4065
    %v4076 = vtanh.pop %v4066
    %v4077 = vmul.f32 %v4067, %v4067
    %v4078 = vmul.f32 %v4068, %v4068
    %v4079 = vmul.f32 %v4072, %v4072
    %v4080 = vmul.f32 %v4073, %v4073
    %v4081 = vsub.f32 1.0, %v4077
    %v4082 = vsub.f32 1.0, %v4078
    %v4083 = vsub.f32 1.0, %v4079
    %v4084 = vsub.f32 1.0, %v4080
    %v4085 = vmul.f32 %v4081, %v3911
    %v4086 = vmul.f32 %v4082, %v3952
    %v4087 = vmul.f32 %v4083, %v3915
    %v4088 = vmul.f32 %v4084, %v3956
    %v4089 = vmul.f32 %v4081, %v3954
    %v4090 = vmul.f32 %v4082, %v3995
    %v4091 = vmul.f32 %v4083, %v3958
    %v4092 = vmul.f32 %v4084, %v3999
    %v4093 = vmul.f32 %v4081, %v3997
    %v4094 = vmul.f32 %v4082, %v4038
    %v4095 = vmul.f32 %v4083, %v4001
    %v4096 = vmul.f32 %v4084, %v4041
    %v4097 = vmul.f32 %v4067, %v3911
    %v4098 = vmul.f32 %v4068, %v3952
    %v4099 = vmul.f32 %v4072, %v3915
    %v4100 = vmul.f32 %v4073, %v3956
    %v4101 = vmul.f32 %v4097, 2.0
    %v4102 = vmul.f32 %v4098, 2.0
    %v4103 = vmul.f32 %v4099, 2.0
    %v4104 = vmul.f32 %v4100, 2.0
    %v4105 = vmul.f32 %v4101, %v4085
    %v4106 = vmul.f32 %v4102, %v4086
    %v4107 = vmul.f32 %v4103, %v4087
    %v4108 = vmul.f32 %v4104, %v4088
    %v4109 = vsub.f32 %v4093, %v4105
    %v4110 = vsub.f32 %v4094, %v4106
    %v4111 = vsub.f32 %v4095, %v4107
    %v4112 = vsub.f32 %v4096, %v4108
    %v4113 = vpack.c.bf16 %v4072, %v4067
    %v4114 = vpack.c.bf16 %v4073, %v4068
    %v4115 = vpack.c.bf16 %v4074, %v4069
    %v4116 = vpack.c.bf16 %v4075, %v4070
    %v4117 = vpack.c.bf16 %v4076, %v4071
    %v4123 = vunpack.c.l.b16 %v4113
    %v4124 = vunpack.c.l.b16 %v4114
    %v4125 = vunpack.c.l.b16 %v4115
    %v4126 = vunpack.c.l.b16 %v4116
    %v4127 = vunpack.c.l.b16 %v4117
    %v4128 = vunpack.c.h.b16 %v4113
    %v4129 = vunpack.c.h.b16 %v4114
    %v4130 = vunpack.c.h.b16 %v4115
    %v4131 = vunpack.c.h.b16 %v4116
    %v4132 = vunpack.c.h.b16 %v4117
    %v4133 = vpack.c.b16 %v4124, %v4123
    %v4134 = vpack.c.b16 %v4126, %v4125
    %v4135 = vpack.c.b16 %v4127, %v4127
    %v4136 = vpack.c.b16 %v4129, %v4128
    %v4137 = vpack.c.b16 %v4131, %v4130
    %v4138 = vpack.c.b16 %v4132, %v4132
    %4145 = vst [vmem:[#allocation2] sm:$0xff] %v4133
    %4146 = vst [vmem:[#allocation2 + $0x8] sm:$0xff] %v4134
    %4147 = vst [vmem:[#allocation2 + $0x10] sm:$0xf] %v4135
    %4148 = vst [vmem:[#allocation2 + $0x2c] sm:$0xff] %v4136
    %4149 = vst [vmem:[#allocation2 + $0x34] sm:$0xff] %v4137
    %4150 = vst [vmem:[#allocation2 + $0x3c] sm:$0xf] %v4138
    %v4151 = vpack.c.bf16 %v4087, %v4085
    %v4152 = vpack.c.bf16 %v4088, %v4086
    %v4155 = vunpack.c.l.b16 %v4151
    %v4156 = vunpack.c.l.b16 %v4152
    %v4157 = vunpack.c.h.b16 %v4151
    %v4158 = vunpack.c.h.b16 %v4152
    %v4159 = vpack.c.b16 %v4156, %v4155
    %v4160 = vpack.c.b16 %v4158, %v4157
    %4163 = vst [vmem:[#allocation2 + $0x14] sm:$0xff] %v4159
    %4164 = vst [vmem:[#allocation2 + $0x40] sm:$0xff] %v4160
    %v4165 = vpack.c.bf16 %v4091, %v4089
    %v4166 = vpack.c.bf16 %v4092, %v4090
    %v4169 = vunpack.c.l.b16 %v4165
    %v4170 = vunpack.c.l.b16 %v4166
    %v4171 = vunpack.c.h.b16 %v4165
    %v4172 = vunpack.c.h.b16 %v4166
    %v4173 = vpack.c.b16 %v4170, %v4169
    %v4174 = vpack.c.b16 %v4172, %v4171
    %4177 = vst [vmem:[#allocation2 + $0x1c] sm:$0xff] %v4173
    %4178 = vst [vmem:[#allocation2 + $0x48] sm:$0xff] %v4174
    %v4179 = vpack.c.bf16 %v4111, %v4109
    %v4180 = vpack.c.bf16 %v4112, %v4110
    %v4183 = vunpack.c.l.b16 %v4179
    %v4184 = vunpack.c.l.b16 %v4180
    %v4185 = vunpack.c.h.b16 %v4179
    %v4186 = vunpack.c.h.b16 %v4180
    %v4187 = vpack.c.b16 %v4184, %v4183
    %v4188 = vpack.c.b16 %v4186, %v4185
    %4191 = vst [vmem:[#allocation2 + $0x24] sm:$0xff] %v4187
    %4192 = vst [vmem:[#allocation2 + $0x50] sm:$0xff] %v4188
    %s4193 = scalar_lea.vmem %s3, 32
    %v4194 = vld [vmem:[%s4193] sm:$0xf]
    %v4195 = vld [vmem:[%s4193 + $0x4] sm:$0xf]
    %v4196 = vld [vmem:[#allocation2] sm:$0xff]
    %v4197 = vld [vmem:[#allocation2 + $0x8] sm:$0xff]
    %v4198 = vld [vmem:[#allocation2 + $0x10] sm:$0xff]
    %v4199 = vld [vmem:[#allocation2 + $0x18] sm:$0xff]
    %v4200 = vld [vmem:[#allocation2 + $0x20] sm:$0xff]
    %v4201 = vld [vmem:[#allocation2 + $0x28] sm:$0xf]
    %v4202 = vld [vmem:[#allocation2 + $0x2c] sm:$0xff]
    %v4203 = vld [vmem:[#allocation2 + $0x34] sm:$0xff]
    %v4204 = vld [vmem:[#allocation2 + $0x3c] sm:$0xff]
    %v4205 = vld [vmem:[#allocation2 + $0x44] sm:$0xff]
    %v4206 = vld [vmem:[#allocation2 + $0x4c] sm:$0xff]
    %v4207 = vld [vmem:[#allocation2 + $0x54] sm:$0xf]
    %v4208 = vld [vmem:[#allocation2 + $0x58] sm:$0xff]
    %v4209 = vld [vmem:[#allocation2 + $0x60] sm:$0xff]
    %v4210 = vld [vmem:[#allocation2 + $0x68] sm:$0xff]
    %v4211 = vld [vmem:[#allocation2 + $0x70] sm:$0xff]
    %v4212 = vld [vmem:[#allocation2 + $0x78] sm:$0xff]
    %v4213 = vld [vmem:[#allocation2 + $0x80] sm:$0xf]
    %v4214 = vld [vmem:[#allocation2 + $0x84] sm:$0xff]
    %v4215 = vld [vmem:[#allocation2 + $0x8c] sm:$0xff]
    %v4216 = vld [vmem:[#allocation2 + $0x94] sm:$0xff]
    %v4217 = vld [vmem:[#allocation2 + $0x9c] sm:$0xff]
    %v4218 = vld [vmem:[#allocation2 + $0xa4] sm:$0xff]
    %v4219 = vld [vmem:[#allocation2 + $0xac] sm:$0xf]
    %v4220 = vld [vmem:[#allocation2 + $0xb0] sm:$0xff]
    %v4221 = vld [vmem:[#allocation2 + $0xb8] sm:$0xff]
    %v4222 = vld [vmem:[#allocation2 + $0xc0] sm:$0xff]
    %v4223 = vld [vmem:[#allocation2 + $0xc8] sm:$0xff]
    %v4224 = vld [vmem:[#allocation2 + $0xd0] sm:$0xff]
    %v4225 = vld [vmem:[#allocation2 + $0xd8] sm:$0xf]
    %v4226 = vld [vmem:[#allocation2 + $0xdc] sm:$0xff]
    %v4227 = vld [vmem:[#allocation2 + $0xe4] sm:$0xff]
    %v4228 = vld [vmem:[#allocation2 + $0xec] sm:$0xff]
    %v4229 = vld [vmem:[#allocation2 + $0xf4] sm:$0xff]
    %v4230 = vld [vmem:[#allocation2 + $0xfc] sm:$0xff]
    %v4231 = vld [vmem:[#allocation2 + $0x104] sm:$0xf]
    %v4232 = vld [vmem:[#allocation2 + $0x108] sm:$0xff]
    %v4233 = vld [vmem:[#allocation2 + $0x110] sm:$0xff]
    %v4234 = vld [vmem:[#allocation2 + $0x118] sm:$0xff]
    %v4235 = vld [vmem:[#allocation2 + $0x120] sm:$0xff]
    %v4236 = vld [vmem:[#allocation2 + $0x128] sm:$0xff]
    %v4237 = vld [vmem:[#allocation2 + $0x130] sm:$0xf]
    %v4238 = vld [vmem:[#allocation2 + $0x134] sm:$0xff]
    %v4239 = vld [vmem:[#allocation2 + $0x13c] sm:$0xff]
    %v4240 = vld [vmem:[#allocation2 + $0x144] sm:$0xff]
    %v4241 = vld [vmem:[#allocation2 + $0x14c] sm:$0xff]
    %v4242 = vld [vmem:[#allocation2 + $0x154] sm:$0xff]
    %v4243 = vld [vmem:[#allocation2 + $0x15c] sm:$0xf]
    %v4244 = vld [vmem:[#allocation2 + $0x160] sm:$0xff]
    %v4245 = vld [vmem:[#allocation2 + $0x168] sm:$0xff]
    %v4246 = vld [vmem:[#allocation2 + $0x170] sm:$0xff]
    %v4247 = vld [vmem:[#allocation2 + $0x178] sm:$0xff]
    %v4248 = vld [vmem:[#allocation2 + $0x180] sm:$0xff]
    %v4249 = vld [vmem:[#allocation2 + $0x188] sm:$0xf]
    %v4250 = vld [vmem:[#allocation2 + $0x18c] sm:$0xff]
    %v4251 = vld [vmem:[#allocation2 + $0x194] sm:$0xff]
    %v4252 = vld [vmem:[#allocation2 + $0x19c] sm:$0xff]
    %v4253 = vld [vmem:[#allocation2 + $0x1a4] sm:$0xff]
    %v4254 = vld [vmem:[#allocation2 + $0x1ac] sm:$0xff]
    %v4255 = vld [vmem:[#allocation2 + $0x1b4] sm:$0xf]
    %v4256 = vld [vmem:[#allocation2 + $0x1b8] sm:$0xff]
    %v4257 = vld [vmem:[#allocation2 + $0x1c0] sm:$0xff]
    %v4258 = vld [vmem:[#allocation2 + $0x1c8] sm:$0xff]
    %v4259 = vld [vmem:[#allocation2 + $0x1d0] sm:$0xff]
    %v4260 = vld [vmem:[#allocation2 + $0x1d8] sm:$0xff]
    %v4261 = vld [vmem:[#allocation2 + $0x1e0] sm:$0xf]
    %v4262 = vld [vmem:[#allocation2 + $0x1e4] sm:$0xff]
    %v4263 = vld [vmem:[#allocation2 + $0x1ec] sm:$0xff]
    %v4264 = vld [vmem:[#allocation2 + $0x1f4] sm:$0xff]
    %v4265 = vld [vmem:[#allocation2 + $0x1fc] sm:$0xff]
    %v4266 = vld [vmem:[#allocation2 + $0x204] sm:$0xff]
    %v4267 = vld [vmem:[#allocation2 + $0x20c] sm:$0xf]
    %v4268 = vld [vmem:[#allocation2 + $0x210] sm:$0xff]
    %v4269 = vld [vmem:[#allocation2 + $0x218] sm:$0xff]
    %v4270 = vld [vmem:[#allocation2 + $0x220] sm:$0xff]
    %v4271 = vld [vmem:[#allocation2 + $0x228] sm:$0xff]
    %v4272 = vld [vmem:[#allocation2 + $0x230] sm:$0xff]
    %v4273 = vld [vmem:[#allocation2 + $0x238] sm:$0xf]
    %v4274 = vld [vmem:[#allocation2 + $0x23c] sm:$0xff]
    %v4275 = vld [vmem:[#allocation2 + $0x244] sm:$0xff]
    %v4276 = vld [vmem:[#allocation2 + $0x24c] sm:$0xff]
    %v4277 = vld [vmem:[#allocation2 + $0x254] sm:$0xff]
    %v4278 = vld [vmem:[#allocation2 + $0x25c] sm:$0xff]
    %v4279 = vld [vmem:[#allocation2 + $0x264] sm:$0xf]
    %v4280 = vld [vmem:[#allocation2 + $0x268] sm:$0xff]
    %v4281 = vld [vmem:[#allocation2 + $0x270] sm:$0xff]
    %v4282 = vld [vmem:[#allocation2 + $0x278] sm:$0xff]
    %v4283 = vld [vmem:[#allocation2 + $0x280] sm:$0xff]
    %v4284 = vld [vmem:[#allocation2 + $0x288] sm:$0xff]
    %v4285 = vld [vmem:[#allocation2 + $0x290] sm:$0xf]
    %v4286 = vld [vmem:[#allocation2 + $0x294] sm:$0xff]
    %v4287 = vld [vmem:[#allocation2 + $0x29c] sm:$0xff]
    %v4288 = vld [vmem:[#allocation2 + $0x2a4] sm:$0xff]
    %v4289 = vld [vmem:[#allocation2 + $0x2ac] sm:$0xff]
    %v4290 = vld [vmem:[#allocation2 + $0x2b4] sm:$0xff]
    %v4291 = vld [vmem:[#allocation2 + $0x2bc] sm:$0xf]
    %v4294 = vunpack.c.l.b16 %v4194
    %v4295 = vunpack.c.l.b16 %v4195
    %v4296 = vpack.c.b16 %v4295, %v4294
    %v4394 = vunpack.c.l.b16 %v4196
    %v4395 = vunpack.c.h.b16 %v4196
    %v4396 = vunpack.c.l.b16 %v4197
    %v4397 = vunpack.c.h.b16 %v4197
    %v4398 = vunpack.c.l.b16 %v4198
    %v4399 = vunpack.c.h.b16 %v4198
    %v4400 = vunpack.c.l.b16 %v4199
    %v4401 = vunpack.c.h.b16 %v4199
    %v4402 = vunpack.c.l.b16 %v4200
    %v4403 = vunpack.c.h.b16 %v4200
    %v4404 = vunpack.c.l.b16 %v4201
    %v4405 = vunpack.c.l.b16 %v4202
    %v4406 = vunpack.c.h.b16 %v4202
    %v4407 = vunpack.c.l.b16 %v4203
    %v4408 = vunpack.c.h.b16 %v4203
    %v4409 = vunpack.c.l.b16 %v4204
    %v4410 = vunpack.c.h.b16 %v4204
    %v4411 = vunpack.c.l.b16 %v4205
    %v4412 = vunpack.c.h.b16 %v4205
    %v4413 = vunpack.c.l.b16 %v4206
    %v4414 = vunpack.c.h.b16 %v4206
    %v4415 = vunpack.c.l.b16 %v4207
    %v4416 = vunpack.c.l.b16 %v4208
    %v4417 = vunpack.c.h.b16 %v4208
    %v4418 = vunpack.c.l.b16 %v4209
    %v4419 = vunpack.c.h.b16 %v4209
    %v4420 = vunpack.c.l.b16 %v4210
    %v4421 = vunpack.c.h.b16 %v4210
    %v4422 = vunpack.c.l.b16 %v4211
    %v4423 = vunpack.c.h.b16 %v4211
    %v4424 = vunpack.c.l.b16 %v4212
    %v4425 = vunpack.c.h.b16 %v4212
    %v4426 = vunpack.c.l.b16 %v4213
    %v4427 = vunpack.c.l.b16 %v4214
    %v4428 = vunpack.c.h.b16 %v4214
    %v4429 = vunpack.c.l.b16 %v4215
    %v4430 = vunpack.c.h.b16 %v4215
    %v4431 = vunpack.c.l.b16 %v4216
    %v4432 = vunpack.c.h.b16 %v4216
    %v4433 = vunpack.c.l.b16 %v4217
    %v4434 = vunpack.c.h.b16 %v4217
    %v4435 = vunpack.c.l.b16 %v4218
    %v4436 = vunpack.c.h.b16 %v4218
    %v4437 = vunpack.c.l.b16 %v4219
    %v4438 = vunpack.c.l.b16 %v4220
    %v4439 = vunpack.c.h.b16 %v4220
    %v4440 = vunpack.c.l.b16 %v4221
    %v4441 = vunpack.c.h.b16 %v4221
    %v4442 = vunpack.c.l.b16 %v4222
    %v4443 = vunpack.c.h.b16 %v4222
    %v4444 = vunpack.c.l.b16 %v4223
    %v4445 = vunpack.c.h.b16 %v4223
    %v4446 = vunpack.c.l.b16 %v4224
    %v4447 = vunpack.c.h.b16 %v4224
    %v4448 = vunpack.c.l.b16 %v4225
    %v4449 = vunpack.c.l.b16 %v4226
    %v4450 = vunpack.c.h.b16 %v4226
    %v4451 = vunpack.c.l.b16 %v4227
    %v4452 = vunpack.c.h.b16 %v4227
    %v4453 = vunpack.c.l.b16 %v4228
    %v4454 = vunpack.c.h.b16 %v4228
    %v4455 = vunpack.c.l.b16 %v4229
    %v4456 = vunpack.c.h.b16 %v4229
    %v4457 = vunpack.c.l.b16 %v4230
    %v4458 = vunpack.c.h.b16 %v4230
    %v4459 = vunpack.c.l.b16 %v4231
    %v4460 = vunpack.c.l.b16 %v4232
    %v4461 = vunpack.c.h.b16 %v4232
    %v4462 = vunpack.c.l.b16 %v4233
    %v4463 = vunpack.c.h.b16 %v4233
    %v4464 = vunpack.c.l.b16 %v4234
    %v4465 = vunpack.c.h.b16 %v4234
    %v4466 = vunpack.c.l.b16 %v4235
    %v4467 = vunpack.c.h.b16 %v4235
    %v4468 = vunpack.c.l.b16 %v4236
    %v4469 = vunpack.c.h.b16 %v4236
    %v4470 = vunpack.c.l.b16 %v4237
    %v4471 = vunpack.c.l.b16 %v4238
    %v4472 = vunpack.c.h.b16 %v4238
    %v4473 = vunpack.c.l.b16 %v4239
    %v4474 = vunpack.c.h.b16 %v4239
    %v4475 = vunpack.c.l.b16 %v4240
    %v4476 = vunpack.c.h.b16 %v4240
    %v4477 = vunpack.c.l.b16 %v4241
    %v4478 = vunpack.c.h.b16 %v4241
    %v4479 = vunpack.c.l.b16 %v4242
    %v4480 = vunpack.c.h.b16 %v4242
    %v4481 = vunpack.c.l.b16 %v4243
    %v4482 = vunpack.c.l.b16 %v4244
    %v4483 = vunpack.c.h.b16 %v4244
    %v4484 = vunpack.c.l.b16 %v4245
    %v4485 = vunpack.c.h.b16 %v4245
    %v4486 = vunpack.c.l.b16 %v4246
    %v4487 = vunpack.c.h.b16 %v4246
    %v4488 = vunpack.c.l.b16 %v4247
    %v4489 = vunpack.c.h.b16 %v4247
    %v4490 = vunpack.c.l.b16 %v4248
    %v4491 = vunpack.c.h.b16 %v4248
    %v4492 = vunpack.c.l.b16 %v4249
    %v4493 = vunpack.c.l.b16 %v4250
    %v4494 = vunpack.c.h.b16 %v4250
    %v4495 = vunpack.c.l.b16 %v4251
    %v4496 = vunpack.c.h.b16 %v4251
    %v4497 = vunpack.c.l.b16 %v4252
    %v4498 = vunpack.c.h.b16 %v4252
    %v4499 = vunpack.c.l.b16 %v4253
    %v4500 = vunpack.c.h.b16 %v4253
    %v4501 = vunpack.c.l.b16 %v4254
    %v4502 = vunpack.c.h.b16 %v4254
    %v4503 = vunpack.c.l.b16 %v4255
    %v4504 = vunpack.c.l.b16 %v4256
    %v4505 = vunpack.c.h.b16 %v4256
    %v4506 = vunpack.c.l.b16 %v4257
    %v4507 = vunpack.c.h.b16 %v4257
    %v4508 = vunpack.c.l.b16 %v4258
    %v4509 = vunpack.c.h.b16 %v4258
    %v4510 = vunpack.c.l.b16 %v4259
    %v4511 = vunpack.c.h.b16 %v4259
    %v4512 = vunpack.c.l.b16 %v4260
    %v4513 = vunpack.c.h.b16 %v4260
    %v4514 = vunpack.c.l.b16 %v4261
    %v4515 = vunpack.c.l.b16 %v4262
    %v4516 = vunpack.c.h.b16 %v4262
    %v4517 = vunpack.c.l.b16 %v4263
    %v4518 = vunpack.c.h.b16 %v4263
    %v4519 = vunpack.c.l.b16 %v4264
    %v4520 = vunpack.c.h.b16 %v4264
    %v4521 = vunpack.c.l.b16 %v4265
    %v4522 = vunpack.c.h.b16 %v4265
    %v4523 = vunpack.c.l.b16 %v4266
    %v4524 = vunpack.c.h.b16 %v4266
    %v4525 = vunpack.c.l.b16 %v4267
    %v4526 = vunpack.c.l.b16 %v4268
    %v4527 = vunpack.c.h.b16 %v4268
    %v4528 = vunpack.c.l.b16 %v4269
    %v4529 = vunpack.c.h.b16 %v4269
    %v4530 = vunpack.c.l.b16 %v4270
    %v4531 = vunpack.c.h.b16 %v4270
    %v4532 = vunpack.c.l.b16 %v4271
    %v4533 = vunpack.c.h.b16 %v4271
    %v4534 = vunpack.c.l.b16 %v4272
    %v4535 = vunpack.c.h.b16 %v4272
    %v4536 = vunpack.c.l.b16 %v4273
    %v4537 = vunpack.c.l.b16 %v4274
    %v4538 = vunpack.c.h.b16 %v4274
    %v4539 = vunpack.c.l.b16 %v4275
    %v4540 = vunpack.c.h.b16 %v4275
    %v4541 = vunpack.c.l.b16 %v4276
    %v4542 = vunpack.c.h.b16 %v4276
    %v4543 = vunpack.c.l.b16 %v4277
    %v4544 = vunpack.c.h.b16 %v4277
    %v4545 = vunpack.c.l.b16 %v4278
    %v4546 = vunpack.c.h.b16 %v4278
    %v4547 = vunpack.c.l.b16 %v4279
    %v4548 = vunpack.c.l.b16 %v4280
    %v4549 = vunpack.c.h.b16 %v4280
    %v4550 = vunpack.c.l.b16 %v4281
    %v4551 = vunpack.c.h.b16 %v4281
    %v4552 = vunpack.c.l.b16 %v4282
    %v4553 = vunpack.c.h.b16 %v4282
    %v4554 = vunpack.c.l.b16 %v4283
    %v4555 = vunpack.c.h.b16 %v4283
    %v4556 = vunpack.c.l.b16 %v4284
    %v4557 = vunpack.c.h.b16 %v4284
    %v4558 = vunpack.c.l.b16 %v4285
    %v4559 = vunpack.c.l.b16 %v4286
    %v4560 = vunpack.c.h.b16 %v4286
    %v4561 = vunpack.c.l.b16 %v4287
    %v4562 = vunpack.c.h.b16 %v4287
    %v4563 = vunpack.c.l.b16 %v4288
    %v4564 = vunpack.c.h.b16 %v4288
    %v4565 = vunpack.c.l.b16 %v4289
    %v4566 = vunpack.c.h.b16 %v4289
    %v4567 = vunpack.c.l.b16 %v4290
    %v4568 = vunpack.c.h.b16 %v4290
    %v4569 = vunpack.c.l.b16 %v4291
    %v4570 = vpack.c.b16 %v4405, %v4394
    %v4571 = vpack.c.b16 %v4406, %v4395
    %v4572 = vpack.c.b16 %v4407, %v4396
    %v4573 = vpack.c.b16 %v4408, %v4397
    %v4574 = vpack.c.b16 %v4409, %v4398
    %v4575 = vpack.c.b16 %v4410, %v4399
    %v4576 = vpack.c.b16 %v4411, %v4400
    %v4577 = vpack.c.b16 %v4412, %v4401
    %v4578 = vpack.c.b16 %v4413, %v4402
    %v4579 = vpack.c.b16 %v4414, %v4403
    %v4580 = vpack.c.b16 %v4415, %v4404
    %v4581 = vpack.c.b16 %v4427, %v4416
    %v4582 = vpack.c.b16 %v4428, %v4417
    %v4583 = vpack.c.b16 %v4429, %v4418
    %v4584 = vpack.c.b16 %v4430, %v4419
    %v4585 = vpack.c.b16 %v4431, %v4420
    %v4586 = vpack.c.b16 %v4432, %v4421
    %v4587 = vpack.c.b16 %v4433, %v4422
    %v4588 = vpack.c.b16 %v4434, %v4423
    %v4589 = vpack.c.b16 %v4435, %v4424
    %v4590 = vpack.c.b16 %v4436, %v4425
    %v4591 = vpack.c.b16 %v4437, %v4426
    %v4592 = vpack.c.b16 %v4449, %v4438
    %v4593 = vpack.c.b16 %v4450, %v4439
    %v4594 = vpack.c.b16 %v4451, %v4440
    %v4595 = vpack.c.b16 %v4452, %v4441
    %v4596 = vpack.c.b16 %v4453, %v4442
    %v4597 = vpack.c.b16 %v4454, %v4443
    %v4598 = vpack.c.b16 %v4455, %v4444
    %v4599 = vpack.c.b16 %v4456, %v4445
    %v4600 = vpack.c.b16 %v4457, %v4446
    %v4601 = vpack.c.b16 %v4458, %v4447
    %v4602 = vpack.c.b16 %v4459, %v4448
    %v4603 = vpack.c.b16 %v4471, %v4460
    %v4604 = vpack.c.b16 %v4472, %v4461
    %v4605 = vpack.c.b16 %v4473, %v4462
    %v4606 = vpack.c.b16 %v4474, %v4463
    %v4607 = vpack.c.b16 %v4475, %v4464
    %v4608 = vpack.c.b16 %v4476, %v4465
    %v4609 = vpack.c.b16 %v4477, %v4466
    %v4610 = vpack.c.b16 %v4478, %v4467
    %v4611 = vpack.c.b16 %v4479, %v4468
    %v4612 = vpack.c.b16 %v4480, %v4469
    %v4613 = vpack.c.b16 %v4481, %v4470
    %v4614 = vpack.c.b16 %v4493, %v4482
    %v4615 = vpack.c.b16 %v4494, %v4483
    %v4616 = vpack.c.b16 %v4495, %v4484
    %v4617 = vpack.c.b16 %v4496, %v4485
    %v4618 = vpack.c.b16 %v4497, %v4486
    %v4619 = vpack.c.b16 %v4498, %v4487
    %v4620 = vpack.c.b16 %v4499, %v4488
    %v4621 = vpack.c.b16 %v4500, %v4489
    %v4622 = vpack.c.b16 %v4501, %v4490
    %v4623 = vpack.c.b16 %v4502, %v4491
    %v4624 = vpack.c.b16 %v4503, %v4492
    %v4625 = vpack.c.b16 %v4515, %v4504
    %v4626 = vpack.c.b16 %v4516, %v4505
    %v4627 = vpack.c.b16 %v4517, %v4506
    %v4628 = vpack.c.b16 %v4518, %v4507
    %v4629 = vpack.c.b16 %v4519, %v4508
    %v4630 = vpack.c.b16 %v4520, %v4509
    %v4631 = vpack.c.b16 %v4521, %v4510
    %v4632 = vpack.c.b16 %v4522, %v4511
    %v4633 = vpack.c.b16 %v4523, %v4512
    %v4634 = vpack.c.b16 %v4524, %v4513
    %v4635 = vpack.c.b16 %v4525, %v4514
    %v4636 = vpack.c.b16 %v4537, %v4526
    %v4637 = vpack.c.b16 %v4538, %v4527
    %v4638 = vpack.c.b16 %v4539, %v4528
    %v4639 = vpack.c.b16 %v4540, %v4529
    %v4640 = vpack.c.b16 %v4541, %v4530
    %v4641 = vpack.c.b16 %v4542, %v4531
    %v4642 = vpack.c.b16 %v4543, %v4532
    %v4643 = vpack.c.b16 %v4544, %v4533
    %v4644 = vpack.c.b16 %v4545, %v4534
    %v4645 = vpack.c.b16 %v4546, %v4535
    %v4646 = vpack.c.b16 %v4547, %v4536
    %v4647 = vpack.c.b16 %v4559, %v4548
    %v4648 = vpack.c.b16 %v4560, %v4549
    %v4649 = vpack.c.b16 %v4561, %v4550
    %v4650 = vpack.c.b16 %v4562, %v4551
    %v4651 = vpack.c.b16 %v4563, %v4552
    %v4652 = vpack.c.b16 %v4564, %v4553
    %v4653 = vpack.c.b16 %v4565, %v4554
    %v4654 = vpack.c.b16 %v4566, %v4555
    %v4655 = vpack.c.b16 %v4567, %v4556
    %v4656 = vpack.c.b16 %v4568, %v4557
    %v4657 = vpack.c.b16 %v4569, %v4558
    %4746 = vmatprep.subr.bf16.mxu0 %v4648
    %4747 = vmatpush1.bf16.msra.mxu0 %v4647
    %4748 = vmatprep.subr.bf16.mxu0 %v4637
    %4749 = vmatpush1.bf16.msra.mxu0 %v4636
    %4750 = vmatprep.subr.bf16.mxu0 %v4626
    %4751 = vmatpush1.bf16.msra.mxu0 %v4625
    %4752 = vmatprep.subr.bf16.mxu0 %v4615
    %4753 = vmatpush1.bf16.msra.mxu0 %v4614
    %4754 = vmatprep.subr.bf16.mxu0 %v4604
    %4755 = vmatpush1.bf16.msra.mxu0 %v4603
    %4756 = vmatprep.subr.bf16.mxu0 %v4593
    %4757 = vmatpush1.bf16.msra.mxu0 %v4592
    %4758 = vmatprep.subr.bf16.mxu0 %v4582
    %4759 = vmatpush1.bf16.msra.mxu0 %v4581
    %4760 = vmatprep.subr.bf16.mxu0 %v4571
    %4761 = vmatpush1.bf16.msra.mxu0 %v4570
    %4762 = vmatprep.subr.bf16.mxu0 0
    %4763 = vmatpush2.bf16.msra.mxu0 0
    %4764 = vmatprep.subr.bf16.mxu0 0
    %4765 = vmatpush2.bf16.msra.mxu0 0
    %4766 = vmatprep.subr.bf16.mxu0 0
    %4767 = vmatpush2.bf16.msra.mxu0 0
    %4768 = vmatprep.subr.bf16.mxu0 0
    %4769 = vmatpush2.bf16.msra.mxu0 0
    %4770 = vmatprep.subr.bf16.mxu0 0
    %4771 = vmatpush2.bf16.msra.mxu0 0
    %4772 = vmatprep.subr.bf16.mxu0 0
    %4773 = vmatpush2.bf16.msra.mxu0 0
    %4774 = vmatprep.subr.bf16.mxu0 0
    %4775 = vmatpush2.bf16.msra.mxu0 0
    %4776 = vmatprep.subr.bf16.mxu0 0
    %4777 = vmatpush2.bf16.msra.mxu0 0
    %4778 = vmatprep.mubr.bf16.mxu0 0
    %4779 = vmatmul.mubr.bf16.gmra.mxu0 %v4296
    %v4780 = vpop.f32.mrf.mxu0
    %v4781 = vadd.f32 0.0, %v4780
    %v4782 = vpop.f32.mrf.mxu0
    %v4783 = vadd.f32 0.0, %v4782
    %v4784 = vpop.f32.mrf.mxu0
    %v4785 = vadd.f32 0.0, %v4784
    %v4786 = vpop.f32.mrf.mxu0
    %v4787 = vadd.f32 0.0, %v4786
    %4788 = vdwg.mxu0
    %4789 = vmatprep.subr.bf16.mxu0 %v4650
    %4790 = vmatpush1.bf16.msra.mxu0 %v4649
    %4791 = vmatprep.subr.bf16.mxu0 %v4639
    %4792 = vmatpush1.bf16.msra.mxu0 %v4638
    %4793 = vmatprep.subr.bf16.mxu0 %v4628
    %4794 = vmatpush1.bf16.msra.mxu0 %v4627
    %4795 = vmatprep.subr.bf16.mxu0 %v4617
    %4796 = vmatpush1.bf16.msra.mxu0 %v4616
    %4797 = vmatprep.subr.bf16.mxu0 %v4606
    %4798 = vmatpush1.bf16.msra.mxu0 %v4605
    %4799 = vmatprep.subr.bf16.mxu0 %v4595
    %4800 = vmatpush1.bf16.msra.mxu0 %v4594
    %4801 = vmatprep.subr.bf16.mxu0 %v4584
    %4802 = vmatpush1.bf16.msra.mxu0 %v4583
    %4803 = vmatprep.subr.bf16.mxu0 %v4573
    %4804 = vmatpush1.bf16.msra.mxu0 %v4572
    %4805 = vmatprep.subr.bf16.mxu0 0
    %4806 = vmatpush2.bf16.msra.mxu0 0
    %4807 = vmatprep.subr.bf16.mxu0 0
    %4808 = vmatpush2.bf16.msra.mxu0 0
    %4809 = vmatprep.subr.bf16.mxu0 0
    %4810 = vmatpush2.bf16.msra.mxu0 0
    %4811 = vmatprep.subr.bf16.mxu0 0
    %4812 = vmatpush2.bf16.msra.mxu0 0
    %4813 = vmatprep.subr.bf16.mxu0 0
    %4814 = vmatpush2.bf16.msra.mxu0 0
    %4815 = vmatprep.subr.bf16.mxu0 0
    %4816 = vmatpush2.bf16.msra.mxu0 0
    %4817 = vmatprep.subr.bf16.mxu0 0
    %4818 = vmatpush2.bf16.msra.mxu0 0
    %4819 = vmatprep.subr.bf16.mxu0 0
    %4820 = vmatpush2.bf16.msra.mxu0 0
    %4821 = vmatprep.mubr.bf16.mxu0 0
    %4822 = vmatmul.mubr.bf16.gmra.mxu0 %v4296
    %v4823 = vpop.f32.mrf.mxu0
    %v4824 = vadd.f32 0.0, %v4823
    %v4825 = vpop.f32.mrf.mxu0
    %v4826 = vadd.f32 0.0, %v4825
    %v4827 = vpop.f32.mrf.mxu0
    %v4828 = vadd.f32 0.0, %v4827
    %v4829 = vpop.f32.mrf.mxu0
    %v4830 = vadd.f32 0.0, %v4829
    %4831 = vdwg.mxu0
    %4832 = vmatprep.subr.bf16.mxu0 %v4652
    %4833 = vmatpush1.bf16.msra.mxu0 %v4651
    %4834 = vmatprep.subr.bf16.mxu0 %v4641
    %4835 = vmatpush1.bf16.msra.mxu0 %v4640
    %4836 = vmatprep.subr.bf16.mxu0 %v4630
    %4837 = vmatpush1.bf16.msra.mxu0 %v4629
    %4838 = vmatprep.subr.bf16.mxu0 %v4619
    %4839 = vmatpush1.bf16.msra.mxu0 %v4618
    %4840 = vmatprep.subr.bf16.mxu0 %v4608
    %4841 = vmatpush1.bf16.msra.mxu0 %v4607
    %4842 = vmatprep.subr.bf16.mxu0 %v4597
    %4843 = vmatpush1.bf16.msra.mxu0 %v4596
    %4844 = vmatprep.subr.bf16.mxu0 %v4586
    %4845 = vmatpush1.bf16.msra.mxu0 %v4585
    %4846 = vmatprep.subr.bf16.mxu0 %v4575
    %4847 = vmatpush1.bf16.msra.mxu0 %v4574
    %4848 = vmatprep.subr.bf16.mxu0 0
    %4849 = vmatpush2.bf16.msra.mxu0 0
    %4850 = vmatprep.subr.bf16.mxu0 0
    %4851 = vmatpush2.bf16.msra.mxu0 0
    %4852 = vmatprep.subr.bf16.mxu0 0
    %4853 = vmatpush2.bf16.msra.mxu0 0
    %4854 = vmatprep.subr.bf16.mxu0 0
    %4855 = vmatpush2.bf16.msra.mxu0 0
    %4856 = vmatprep.subr.bf16.mxu0 0
    %4857 = vmatpush2.bf16.msra.mxu0 0
    %4858 = vmatprep.subr.bf16.mxu0 0
    %4859 = vmatpush2.bf16.msra.mxu0 0
    %4860 = vmatprep.subr.bf16.mxu0 0
    %4861 = vmatpush2.bf16.msra.mxu0 0
    %4862 = vmatprep.subr.bf16.mxu0 0
    %4863 = vmatpush2.bf16.msra.mxu0 0
    %4864 = vmatprep.mubr.bf16.mxu0 0
    %4865 = vmatmul.mubr.bf16.gmra.mxu0 %v4296
    %v4866 = vpop.f32.mrf.mxu0
    %v4867 = vadd.f32 0.0, %v4866
    %v4868 = vpop.f32.mrf.mxu0
    %v4869 = vadd.f32 0.0, %v4868
    %v4870 = vpop.f32.mrf.mxu0
    %v4871 = vadd.f32 0.0, %v4870
    %v4872 = vpop.f32.mrf.mxu0
    %v4873 = vadd.f32 0.0, %v4872
    %4874 = vdwg.mxu0
    %4875 = vmatprep.subr.bf16.mxu0 %v4654
    %4876 = vmatpush1.bf16.msra.mxu0 %v4653
    %4877 = vmatprep.subr.bf16.mxu0 %v4643
    %4878 = vmatpush1.bf16.msra.mxu0 %v4642
    %4879 = vmatprep.subr.bf16.mxu0 %v4632
    %4880 = vmatpush1.bf16.msra.mxu0 %v4631
    %4881 = vmatprep.subr.bf16.mxu0 %v4621
    %4882 = vmatpush1.bf16.msra.mxu0 %v4620
    %4883 = vmatprep.subr.bf16.mxu0 %v4610
    %4884 = vmatpush1.bf16.msra.mxu0 %v4609
    %4885 = vmatprep.subr.bf16.mxu0 %v4599
    %4886 = vmatpush1.bf16.msra.mxu0 %v4598
    %4887 = vmatprep.subr.bf16.mxu0 %v4588
    %4888 = vmatpush1.bf16.msra.mxu0 %v4587
    %4889 = vmatprep.subr.bf16.mxu0 %v4577
    %4890 = vmatpush1.bf16.msra.mxu0 %v4576
    %4891 = vmatprep.subr.bf16.mxu0 0
    %4892 = vmatpush2.bf16.msra.mxu0 0
    %4893 = vmatprep.subr.bf16.mxu0 0
    %4894 = vmatpush2.bf16.msra.mxu0 0
    %4895 = vmatprep.subr.bf16.mxu0 0
    %4896 = vmatpush2.bf16.msra.mxu0 0
    %4897 = vmatprep.subr.bf16.mxu0 0
    %4898 = vmatpush2.bf16.msra.mxu0 0
    %4899 = vmatprep.subr.bf16.mxu0 0
    %4900 = vmatpush2.bf16.msra.mxu0 0
    %4901 = vmatprep.subr.bf16.mxu0 0
    %4902 = vmatpush2.bf16.msra.mxu0 0
    %4903 = vmatprep.subr.bf16.mxu0 0
    %4904 = vmatpush2.bf16.msra.mxu0 0
    %4905 = vmatprep.subr.bf16.mxu0 0
    %4906 = vmatpush2.bf16.msra.mxu0 0
    %4907 = vmatprep.mubr.bf16.mxu0 0
    %4908 = vmatmul.mubr.bf16.gmra.mxu0 %v4296
    %v4909 = vpop.f32.mrf.mxu0
    %v4910 = vadd.f32 0.0, %v4909
    %v4911 = vpop.f32.mrf.mxu0
    %v4912 = vadd.f32 0.0, %v4911
    %v4913 = vpop.f32.mrf.mxu0
    %v4914 = vadd.f32 0.0, %v4913
    %v4915 = vpop.f32.mrf.mxu0
    %v4916 = vadd.f32 0.0, %v4915
    %4917 = vdwg.mxu0
    %4918 = vmatprep.subr.bf16.mxu0 %v4656
    %4919 = vmatpush1.bf16.msra.mxu0 %v4655
    %4920 = vmatprep.subr.bf16.mxu0 %v4645
    %4921 = vmatpush1.bf16.msra.mxu0 %v4644
    %4922 = vmatprep.subr.bf16.mxu0 %v4634
    %4923 = vmatpush1.bf16.msra.mxu0 %v4633
    %4924 = vmatprep.subr.bf16.mxu0 %v4623
    %4925 = vmatpush1.bf16.msra.mxu0 %v4622
    %4926 = vmatprep.subr.bf16.mxu0 %v4612
    %4927 = vmatpush1.bf16.msra.mxu0 %v4611
    %4928 = vmatprep.subr.bf16.mxu0 %v4601
    %4929 = vmatpush1.bf16.msra.mxu0 %v4600
    %4930 = vmatprep.subr.bf16.mxu0 %v4590
    %4931 = vmatpush1.bf16.msra.mxu0 %v4589
    %4932 = vmatprep.subr.bf16.mxu0 %v4579
    %4933 = vmatpush1.bf16.msra.mxu0 %v4578
    %4934 = vmatprep.subr.bf16.mxu0 0
    %4935 = vmatpush2.bf16.msra.mxu0 0
    %4936 = vmatprep.subr.bf16.mxu0 0
    %4937 = vmatpush2.bf16.msra.mxu0 0
    %4938 = vmatprep.subr.bf16.mxu0 0
    %4939 = vmatpush2.bf16.msra.mxu0 0
    %4940 = vmatprep.subr.bf16.mxu0 0
    %4941 = vmatpush2.bf16.msra.mxu0 0
    %4942 = vmatprep.subr.bf16.mxu0 0
    %4943 = vmatpush2.bf16.msra.mxu0 0
    %4944 = vmatprep.subr.bf16.mxu0 0
    %4945 = vmatpush2.bf16.msra.mxu0 0
    %4946 = vmatprep.subr.bf16.mxu0 0
    %4947 = vmatpush2.bf16.msra.mxu0 0
    %4948 = vmatprep.subr.bf16.mxu0 0
    %4949 = vmatpush2.bf16.msra.mxu0 0
    %4950 = vmatprep.mubr.bf16.mxu0 0
    %4951 = vmatmul.mubr.bf16.gmra.mxu0 %v4296
    %v4952 = vpop.f32.mrf.mxu0
    %v4953 = vadd.f32 0.0, %v4952
    %v4954 = vpop.f32.mrf.mxu0
    %v4955 = vadd.f32 0.0, %v4954
    %v4956 = vpop.f32.mrf.mxu0
    %v4957 = vadd.f32 0.0, %v4956
    %v4958 = vpop.f32.mrf.mxu0
    %v4959 = vadd.f32 0.0, %v4958
    %4960 = vdwg.mxu0
    %4961 = vmatprep.subr.bf16.mxu0 0
    %4962 = vmatpush1.bf16.msra.mxu0 %v4657
    %4963 = vmatprep.subr.bf16.mxu0 0
    %4964 = vmatpush1.bf16.msra.mxu0 %v4646
    %4965 = vmatprep.subr.bf16.mxu0 0
    %4966 = vmatpush1.bf16.msra.mxu0 %v4635
    %4967 = vmatprep.subr.bf16.mxu0 0
    %4968 = vmatpush1.bf16.msra.mxu0 %v4624
    %4969 = vmatprep.subr.bf16.mxu0 0
    %4970 = vmatpush1.bf16.msra.mxu0 %v4613
    %4971 = vmatprep.subr.bf16.mxu0 0
    %4972 = vmatpush1.bf16.msra.mxu0 %v4602
    %4973 = vmatprep.subr.bf16.mxu0 0
    %4974 = vmatpush1.bf16.msra.mxu0 %v4591
    %4975 = vmatprep.subr.bf16.mxu0 0
    %4976 = vmatpush1.bf16.msra.mxu0 %v4580
    %4977 = vmatprep.subr.bf16.mxu0 0
    %4978 = vmatpush2.bf16.msra.mxu0 0
    %4979 = vmatprep.subr.bf16.mxu0 0
    %4980 = vmatpush2.bf16.msra.mxu0 0
    %4981 = vmatprep.subr.bf16.mxu0 0
    %4982 = vmatpush2.bf16.msra.mxu0 0
    %4983 = vmatprep.subr.bf16.mxu0 0
    %4984 = vmatpush2.bf16.msra.mxu0 0
    %4985 = vmatprep.subr.bf16.mxu0 0
    %4986 = vmatpush2.bf16.msra.mxu0 0
    %4987 = vmatprep.subr.bf16.mxu0 0
    %4988 = vmatpush2.bf16.msra.mxu0 0
    %4989 = vmatprep.subr.bf16.mxu0 0
    %4990 = vmatpush2.bf16.msra.mxu0 0
    %4991 = vmatprep.subr.bf16.mxu0 0
    %4992 = vmatpush2.bf16.msra.mxu0 0
    %4993 = vmatprep.mubr.bf16.mxu0 0
    %4994 = vmatmul.mubr.bf16.gmra.mxu0 %v4296
    %v4995 = vpop.f32.mrf.mxu0
    %v4996 = vadd.f32 0.0, %v4995
    %v4997 = vpop.f32.mrf.mxu0
    %v4998 = vpop.f32.mrf.mxu0
    %v4999 = vadd.f32 0.0, %v4998
    %v5000 = vpop.f32.mrf.mxu0
    %5001 = vdwg.mxu0
    %s5002 = scalar_lea.vmem %s4, 80
    %v5003 = vld [vmem:[%s5002] sm:$0xff]
    %v5004 = vld [vmem:[%s5002 + $0x8] sm:$0xff]
    %5006 = vset.pattern.permute.xlu0 0
    %5007 = vperm.xlu0 %5006, %v5003
    %v5008 = vpop.permute.xlu0 %5007
    %5011 = vset.pattern.permute.xlu0 0
    %5012 = vperm.xlu0 %5011, %v5004
    %v5013 = vpop.permute.xlu0 %5012
    %v5015 = vadd.f32 %v4781, %v5008
    %v5016 = vadd.f32 %v4783, %v5008
    %v5017 = vadd.f32 %v4824, %v5008
    %v5018 = vadd.f32 %v4826, %v5008
    %v5019 = vadd.f32 %v4867, %v5008
    %v5020 = vadd.f32 %v4785, %v5013
    %v5021 = vadd.f32 %v4787, %v5013
    %v5022 = vadd.f32 %v4828, %v5013
    %v5023 = vadd.f32 %v4830, %v5013
    %v5024 = vadd.f32 %v4871, %v5013
    %v5025 = vtanh.pop %v5015
    %v5026 = vtanh.pop %v5016
    %v5027 = vtanh.pop %v5017
    %v5028 = vtanh.pop %v5018
    %v5029 = vtanh.pop %v5019
    %v5030 = vtanh.pop %v5020
    %v5031 = vtanh.pop %v5021
    %v5032 = vtanh.pop %v5022
    %v5033 = vtanh.pop %v5023
    %v5034 = vtanh.pop %v5024
    %v5035 = vmul.f32 %v5025, %v5025
    %v5036 = vmul.f32 %v5026, %v5026
    %v5037 = vmul.f32 %v5030, %v5030
    %v5038 = vmul.f32 %v5031, %v5031
    %v5039 = vsub.f32 1.0, %v5035
    %v5040 = vsub.f32 1.0, %v5036
    %v5041 = vsub.f32 1.0, %v5037
    %v5042 = vsub.f32 1.0, %v5038
    %v5043 = vmul.f32 %v5039, %v4869
    %v5044 = vmul.f32 %v5040, %v4910
    %v5045 = vmul.f32 %v5041, %v4873
    %v5046 = vmul.f32 %v5042, %v4914
    %v5047 = vmul.f32 %v5039, %v4912
    %v5048 = vmul.f32 %v5040, %v4953
    %v5049 = vmul.f32 %v5041, %v4916
    %v5050 = vmul.f32 %v5042, %v4957
    %v5051 = vmul.f32 %v5039, %v4955
    %v5052 = vmul.f32 %v5040, %v4996
    %v5053 = vmul.f32 %v5041, %v4959
    %v5054 = vmul.f32 %v5042, %v4999
    %v5055 = vmul.f32 %v5025, %v4869
    %v5056 = vmul.f32 %v5026, %v4910
    %v5057 = vmul.f32 %v5030, %v4873
    %v5058 = vmul.f32 %v5031, %v4914
    %v5059 = vmul.f32 %v5055, 2.0
    %v5060 = vmul.f32 %v5056, 2.0
    %v5061 = vmul.f32 %v5057, 2.0
    %v5062 = vmul.f32 %v5058, 2.0
    %v5063 = vmul.f32 %v5059, %v5043
    %v5064 = vmul.f32 %v5060, %v5044
    %v5065 = vmul.f32 %v5061, %v5045
    %v5066 = vmul.f32 %v5062, %v5046
    %v5067 = vsub.f32 %v5051, %v5063
    %v5068 = vsub.f32 %v5052, %v5064
    %v5069 = vsub.f32 %v5053, %v5065
    %v5070 = vsub.f32 %v5054, %v5066
    %v5071 = vpack.c.bf16 %v5030, %v5025
    %v5072 = vpack.c.bf16 %v5031, %v5026
    %v5073 = vpack.c.bf16 %v5032, %v5027
    %v5074 = vpack.c.bf16 %v5033, %v5028
    %v5075 = vpack.c.bf16 %v5034, %v5029
    %v5081 = vunpack.c.l.b16 %v5071
    %v5082 = vunpack.c.l.b16 %v5072
    %v5083 = vunpack.c.l.b16 %v5073
    %v5084 = vunpack.c.l.b16 %v5074
    %v5085 = vunpack.c.l.b16 %v5075
    %v5086 = vunpack.c.h.b16 %v5071
    %v5087 = vunpack.c.h.b16 %v5072
    %v5088 = vunpack.c.h.b16 %v5073
    %v5089 = vunpack.c.h.b16 %v5074
    %v5090 = vunpack.c.h.b16 %v5075
    %v5091 = vpack.c.b16 %v5082, %v5081
    %v5092 = vpack.c.b16 %v5084, %v5083
    %v5093 = vpack.c.b16 %v5085, %v5085
    %v5094 = vpack.c.b16 %v5087, %v5086
    %v5095 = vpack.c.b16 %v5089, %v5088
    %v5096 = vpack.c.b16 %v5090, %v5090
    %5103 = vst [vmem:[#allocation2] sm:$0xff] %v5091
    %5104 = vst [vmem:[#allocation2 + $0x8] sm:$0xff] %v5092
    %5105 = vst [vmem:[#allocation2 + $0x10] sm:$0xf] %v5093
    %5106 = vst [vmem:[#allocation2 + $0x2c] sm:$0xff] %v5094
    %5107 = vst [vmem:[#allocation2 + $0x34] sm:$0xff] %v5095
    %5108 = vst [vmem:[#allocation2 + $0x3c] sm:$0xf] %v5096
    %v5109 = vpack.c.bf16 %v5045, %v5043
    %v5110 = vpack.c.bf16 %v5046, %v5044
    %v5113 = vunpack.c.l.b16 %v5109
    %v5114 = vunpack.c.l.b16 %v5110
    %v5115 = vunpack.c.h.b16 %v5109
    %v5116 = vunpack.c.h.b16 %v5110
    %v5117 = vpack.c.b16 %v5114, %v5113
    %v5118 = vpack.c.b16 %v5116, %v5115
    %5121 = vst [vmem:[#allocation2 + $0x14] sm:$0xff] %v5117
    %5122 = vst [vmem:[#allocation2 + $0x40] sm:$0xff] %v5118
    %v5123 = vpack.c.bf16 %v5049, %v5047
    %v5124 = vpack.c.bf16 %v5050, %v5048
    %v5127 = vunpack.c.l.b16 %v5123
    %v5128 = vunpack.c.l.b16 %v5124
    %v5129 = vunpack.c.h.b16 %v5123
    %v5130 = vunpack.c.h.b16 %v5124
    %v5131 = vpack.c.b16 %v5128, %v5127
    %v5132 = vpack.c.b16 %v5130, %v5129
    %5135 = vst [vmem:[#allocation2 + $0x1c] sm:$0xff] %v5131
    %5136 = vst [vmem:[#allocation2 + $0x48] sm:$0xff] %v5132
    %v5137 = vpack.c.bf16 %v5069, %v5067
    %v5138 = vpack.c.bf16 %v5070, %v5068
    %v5141 = vunpack.c.l.b16 %v5137
    %v5142 = vunpack.c.l.b16 %v5138
    %v5143 = vunpack.c.h.b16 %v5137
    %v5144 = vunpack.c.h.b16 %v5138
    %v5145 = vpack.c.b16 %v5142, %v5141
    %v5146 = vpack.c.b16 %v5144, %v5143
    %5149 = vst [vmem:[#allocation2 + $0x24] sm:$0xff] %v5145
    %5150 = vst [vmem:[#allocation2 + $0x50] sm:$0xff] %v5146
    %s5151 = scalar_lea.vmem %s3, 40
    %v5152 = vld [vmem:[%s5151] sm:$0xf]
    %v5153 = vld [vmem:[%s5151 + $0x4] sm:$0xf]
    %v5154 = vld [vmem:[#allocation2] sm:$0xff]
    %v5155 = vld [vmem:[#allocation2 + $0x8] sm:$0xff]
    %v5156 = vld [vmem:[#allocation2 + $0x10] sm:$0xff]
    %v5157 = vld [vmem:[#allocation2 + $0x18] sm:$0xff]
    %v5158 = vld [vmem:[#allocation2 + $0x20] sm:$0xff]
    %v5159 = vld [vmem:[#allocation2 + $0x28] sm:$0xf]
    %v5160 = vld [vmem:[#allocation2 + $0x2c] sm:$0xff]
    %v5161 = vld [vmem:[#allocation2 + $0x34] sm:$0xff]
    %v5162 = vld [vmem:[#allocation2 + $0x3c] sm:$0xff]
    %v5163 = vld [vmem:[#allocation2 + $0x44] sm:$0xff]
    %v5164 = vld [vmem:[#allocation2 + $0x4c] sm:$0xff]
    %v5165 = vld [vmem:[#allocation2 + $0x54] sm:$0xf]
    %v5166 = vld [vmem:[#allocation2 + $0x58] sm:$0xff]
    %v5167 = vld [vmem:[#allocation2 + $0x60] sm:$0xff]
    %v5168 = vld [vmem:[#allocation2 + $0x68] sm:$0xff]
    %v5169 = vld [vmem:[#allocation2 + $0x70] sm:$0xff]
    %v5170 = vld [vmem:[#allocation2 + $0x78] sm:$0xff]
    %v5171 = vld [vmem:[#allocation2 + $0x80] sm:$0xf]
    %v5172 = vld [vmem:[#allocation2 + $0x84] sm:$0xff]
    %v5173 = vld [vmem:[#allocation2 + $0x8c] sm:$0xff]
    %v5174 = vld [vmem:[#allocation2 + $0x94] sm:$0xff]
    %v5175 = vld [vmem:[#allocation2 + $0x9c] sm:$0xff]
    %v5176 = vld [vmem:[#allocation2 + $0xa4] sm:$0xff]
    %v5177 = vld [vmem:[#allocation2 + $0xac] sm:$0xf]
    %v5178 = vld [vmem:[#allocation2 + $0xb0] sm:$0xff]
    %v5179 = vld [vmem:[#allocation2 + $0xb8] sm:$0xff]
    %v5180 = vld [vmem:[#allocation2 + $0xc0] sm:$0xff]
    %v5181 = vld [vmem:[#allocation2 + $0xc8] sm:$0xff]
    %v5182 = vld [vmem:[#allocation2 + $0xd0] sm:$0xff]
    %v5183 = vld [vmem:[#allocation2 + $0xd8] sm:$0xf]
    %v5184 = vld [vmem:[#allocation2 + $0xdc] sm:$0xff]
    %v5185 = vld [vmem:[#allocation2 + $0xe4] sm:$0xff]
    %v5186 = vld [vmem:[#allocation2 + $0xec] sm:$0xff]
    %v5187 = vld [vmem:[#allocation2 + $0xf4] sm:$0xff]
    %v5188 = vld [vmem:[#allocation2 + $0xfc] sm:$0xff]
    %v5189 = vld [vmem:[#allocation2 + $0x104] sm:$0xf]
    %v5190 = vld [vmem:[#allocation2 + $0x108] sm:$0xff]
    %v5191 = vld [vmem:[#allocation2 + $0x110] sm:$0xff]
    %v5192 = vld [vmem:[#allocation2 + $0x118] sm:$0xff]
    %v5193 = vld [vmem:[#allocation2 + $0x120] sm:$0xff]
    %v5194 = vld [vmem:[#allocation2 + $0x128] sm:$0xff]
    %v5195 = vld [vmem:[#allocation2 + $0x130] sm:$0xf]
    %v5196 = vld [vmem:[#allocation2 + $0x134] sm:$0xff]
    %v5197 = vld [vmem:[#allocation2 + $0x13c] sm:$0xff]
    %v5198 = vld [vmem:[#allocation2 + $0x144] sm:$0xff]
    %v5199 = vld [vmem:[#allocation2 + $0x14c] sm:$0xff]
    %v5200 = vld [vmem:[#allocation2 + $0x154] sm:$0xff]
    %v5201 = vld [vmem:[#allocation2 + $0x15c] sm:$0xf]
    %v5202 = vld [vmem:[#allocation2 + $0x160] sm:$0xff]
    %v5203 = vld [vmem:[#allocation2 + $0x168] sm:$0xff]
    %v5204 = vld [vmem:[#allocation2 + $0x170] sm:$0xff]
    %v5205 = vld [vmem:[#allocation2 + $0x178] sm:$0xff]
    %v5206 = vld [vmem:[#allocation2 + $0x180] sm:$0xff]
    %v5207 = vld [vmem:[#allocation2 + $0x188] sm:$0xf]
    %v5208 = vld [vmem:[#allocation2 + $0x18c] sm:$0xff]
    %v5209 = vld [vmem:[#allocation2 + $0x194] sm:$0xff]
    %v5210 = vld [vmem:[#allocation2 + $0x19c] sm:$0xff]
    %v5211 = vld [vmem:[#allocation2 + $0x1a4] sm:$0xff]
    %v5212 = vld [vmem:[#allocation2 + $0x1ac] sm:$0xff]
    %v5213 = vld [vmem:[#allocation2 + $0x1b4] sm:$0xf]
    %v5214 = vld [vmem:[#allocation2 + $0x1b8] sm:$0xff]
    %v5215 = vld [vmem:[#allocation2 + $0x1c0] sm:$0xff]
    %v5216 = vld [vmem:[#allocation2 + $0x1c8] sm:$0xff]
    %v5217 = vld [vmem:[#allocation2 + $0x1d0] sm:$0xff]
    %v5218 = vld [vmem:[#allocation2 + $0x1d8] sm:$0xff]
    %v5219 = vld [vmem:[#allocation2 + $0x1e0] sm:$0xf]
    %v5220 = vld [vmem:[#allocation2 + $0x1e4] sm:$0xff]
    %v5221 = vld [vmem:[#allocation2 + $0x1ec] sm:$0xff]
    %v5222 = vld [vmem:[#allocation2 + $0x1f4] sm:$0xff]
    %v5223 = vld [vmem:[#allocation2 + $0x1fc] sm:$0xff]
    %v5224 = vld [vmem:[#allocation2 + $0x204] sm:$0xff]
    %v5225 = vld [vmem:[#allocation2 + $0x20c] sm:$0xf]
    %v5226 = vld [vmem:[#allocation2 + $0x210] sm:$0xff]
    %v5227 = vld [vmem:[#allocation2 + $0x218] sm:$0xff]
    %v5228 = vld [vmem:[#allocation2 + $0x220] sm:$0xff]
    %v5229 = vld [vmem:[#allocation2 + $0x228] sm:$0xff]
    %v5230 = vld [vmem:[#allocation2 + $0x230] sm:$0xff]
    %v5231 = vld [vmem:[#allocation2 + $0x238] sm:$0xf]
    %v5232 = vld [vmem:[#allocation2 + $0x23c] sm:$0xff]
    %v5233 = vld [vmem:[#allocation2 + $0x244] sm:$0xff]
    %v5234 = vld [vmem:[#allocation2 + $0x24c] sm:$0xff]
    %v5235 = vld [vmem:[#allocation2 + $0x254] sm:$0xff]
    %v5236 = vld [vmem:[#allocation2 + $0x25c] sm:$0xff]
    %v5237 = vld [vmem:[#allocation2 + $0x264] sm:$0xf]
    %v5238 = vld [vmem:[#allocation2 + $0x268] sm:$0xff]
    %v5239 = vld [vmem:[#allocation2 + $0x270] sm:$0xff]
    %v5240 = vld [vmem:[#allocation2 + $0x278] sm:$0xff]
    %v5241 = vld [vmem:[#allocation2 + $0x280] sm:$0xff]
    %v5242 = vld [vmem:[#allocation2 + $0x288] sm:$0xff]
    %v5243 = vld [vmem:[#allocation2 + $0x290] sm:$0xf]
    %v5244 = vld [vmem:[#allocation2 + $0x294] sm:$0xff]
    %v5245 = vld [vmem:[#allocation2 + $0x29c] sm:$0xff]
    %v5246 = vld [vmem:[#allocation2 + $0x2a4] sm:$0xff]
    %v5247 = vld [vmem:[#allocation2 + $0x2ac] sm:$0xff]
    %v5248 = vld [vmem:[#allocation2 + $0x2b4] sm:$0xff]
    %v5249 = vld [vmem:[#allocation2 + $0x2bc] sm:$0xf]
    %v5252 = vunpack.c.l.b16 %v5152
    %v5253 = vunpack.c.l.b16 %v5153
    %v5254 = vpack.c.b16 %v5253, %v5252
    %v5352 = vunpack.c.l.b16 %v5154
    %v5353 = vunpack.c.h.b16 %v5154
    %v5354 = vunpack.c.l.b16 %v5155
    %v5355 = vunpack.c.h.b16 %v5155
    %v5356 = vunpack.c.l.b16 %v5156
    %v5357 = vunpack.c.h.b16 %v5156
    %v5358 = vunpack.c.l.b16 %v5157
    %v5359 = vunpack.c.h.b16 %v5157
    %v5360 = vunpack.c.l.b16 %v5158
    %v5361 = vunpack.c.h.b16 %v5158
    %v5362 = vunpack.c.l.b16 %v5159
    %v5363 = vunpack.c.l.b16 %v5160
    %v5364 = vunpack.c.h.b16 %v5160
    %v5365 = vunpack.c.l.b16 %v5161
    %v5366 = vunpack.c.h.b16 %v5161
    %v5367 = vunpack.c.l.b16 %v5162
    %v5368 = vunpack.c.h.b16 %v5162
    %v5369 = vunpack.c.l.b16 %v5163
    %v5370 = vunpack.c.h.b16 %v5163
    %v5371 = vunpack.c.l.b16 %v5164
    %v5372 = vunpack.c.h.b16 %v5164
    %v5373 = vunpack.c.l.b16 %v5165
    %v5374 = vunpack.c.l.b16 %v5166
    %v5375 = vunpack.c.h.b16 %v5166
    %v5376 = vunpack.c.l.b16 %v5167
    %v5377 = vunpack.c.h.b16 %v5167
    %v5378 = vunpack.c.l.b16 %v5168
    %v5379 = vunpack.c.h.b16 %v5168
    %v5380 = vunpack.c.l.b16 %v5169
    %v5381 = vunpack.c.h.b16 %v5169
    %v5382 = vunpack.c.l.b16 %v5170
    %v5383 = vunpack.c.h.b16 %v5170
    %v5384 = vunpack.c.l.b16 %v5171
    %v5385 = vunpack.c.l.b16 %v5172
    %v5386 = vunpack.c.h.b16 %v5172
    %v5387 = vunpack.c.l.b16 %v5173
    %v5388 = vunpack.c.h.b16 %v5173
    %v5389 = vunpack.c.l.b16 %v5174
    %v5390 = vunpack.c.h.b16 %v5174
    %v5391 = vunpack.c.l.b16 %v5175
    %v5392 = vunpack.c.h.b16 %v5175
    %v5393 = vunpack.c.l.b16 %v5176
    %v5394 = vunpack.c.h.b16 %v5176
    %v5395 = vunpack.c.l.b16 %v5177
    %v5396 = vunpack.c.l.b16 %v5178
    %v5397 = vunpack.c.h.b16 %v5178
    %v5398 = vunpack.c.l.b16 %v5179
    %v5399 = vunpack.c.h.b16 %v5179
    %v5400 = vunpack.c.l.b16 %v5180
    %v5401 = vunpack.c.h.b16 %v5180
    %v5402 = vunpack.c.l.b16 %v5181
    %v5403 = vunpack.c.h.b16 %v5181
    %v5404 = vunpack.c.l.b16 %v5182
    %v5405 = vunpack.c.h.b16 %v5182
    %v5406 = vunpack.c.l.b16 %v5183
    %v5407 = vunpack.c.l.b16 %v5184
    %v5408 = vunpack.c.h.b16 %v5184
    %v5409 = vunpack.c.l.b16 %v5185
    %v5410 = vunpack.c.h.b16 %v5185
    %v5411 = vunpack.c.l.b16 %v5186
    %v5412 = vunpack.c.h.b16 %v5186
    %v5413 = vunpack.c.l.b16 %v5187
    %v5414 = vunpack.c.h.b16 %v5187
    %v5415 = vunpack.c.l.b16 %v5188
    %v5416 = vunpack.c.h.b16 %v5188
    %v5417 = vunpack.c.l.b16 %v5189
    %v5418 = vunpack.c.l.b16 %v5190
    %v5419 = vunpack.c.h.b16 %v5190
    %v5420 = vunpack.c.l.b16 %v5191
    %v5421 = vunpack.c.h.b16 %v5191
    %v5422 = vunpack.c.l.b16 %v5192
    %v5423 = vunpack.c.h.b16 %v5192
    %v5424 = vunpack.c.l.b16 %v5193
    %v5425 = vunpack.c.h.b16 %v5193
    %v5426 = vunpack.c.l.b16 %v5194
    %v5427 = vunpack.c.h.b16 %v5194
    %v5428 = vunpack.c.l.b16 %v5195
    %v5429 = vunpack.c.l.b16 %v5196
    %v5430 = vunpack.c.h.b16 %v5196
    %v5431 = vunpack.c.l.b16 %v5197
    %v5432 = vunpack.c.h.b16 %v5197
    %v5433 = vunpack.c.l.b16 %v5198
    %v5434 = vunpack.c.h.b16 %v5198
    %v5435 = vunpack.c.l.b16 %v5199
    %v5436 = vunpack.c.h.b16 %v5199
    %v5437 = vunpack.c.l.b16 %v5200
    %v5438 = vunpack.c.h.b16 %v5200
    %v5439 = vunpack.c.l.b16 %v5201
    %v5440 = vunpack.c.l.b16 %v5202
    %v5441 = vunpack.c.h.b16 %v5202
    %v5442 = vunpack.c.l.b16 %v5203
    %v5443 = vunpack.c.h.b16 %v5203
    %v5444 = vunpack.c.l.b16 %v5204
    %v5445 = vunpack.c.h.b16 %v5204
    %v5446 = vunpack.c.l.b16 %v5205
    %v5447 = vunpack.c.h.b16 %v5205
    %v5448 = vunpack.c.l.b16 %v5206
    %v5449 = vunpack.c.h.b16 %v5206
    %v5450 = vunpack.c.l.b16 %v5207
    %v5451 = vunpack.c.l.b16 %v5208
    %v5452 = vunpack.c.h.b16 %v5208
    %v5453 = vunpack.c.l.b16 %v5209
    %v5454 = vunpack.c.h.b16 %v5209
    %v5455 = vunpack.c.l.b16 %v5210
    %v5456 = vunpack.c.h.b16 %v5210
    %v5457 = vunpack.c.l.b16 %v5211
    %v5458 = vunpack.c.h.b16 %v5211
    %v5459 = vunpack.c.l.b16 %v5212
    %v5460 = vunpack.c.h.b16 %v5212
    %v5461 = vunpack.c.l.b16 %v5213
    %v5462 = vunpack.c.l.b16 %v5214
    %v5463 = vunpack.c.h.b16 %v5214
    %v5464 = vunpack.c.l.b16 %v5215
    %v5465 = vunpack.c.h.b16 %v5215
    %v5466 = vunpack.c.l.b16 %v5216
    %v5467 = vunpack.c.h.b16 %v5216
    %v5468 = vunpack.c.l.b16 %v5217
    %v5469 = vunpack.c.h.b16 %v5217
    %v5470 = vunpack.c.l.b16 %v5218
    %v5471 = vunpack.c.h.b16 %v5218
    %v5472 = vunpack.c.l.b16 %v5219
    %v5473 = vunpack.c.l.b16 %v5220
    %v5474 = vunpack.c.h.b16 %v5220
    %v5475 = vunpack.c.l.b16 %v5221
    %v5476 = vunpack.c.h.b16 %v5221
    %v5477 = vunpack.c.l.b16 %v5222
    %v5478 = vunpack.c.h.b16 %v5222
    %v5479 = vunpack.c.l.b16 %v5223
    %v5480 = vunpack.c.h.b16 %v5223
    %v5481 = vunpack.c.l.b16 %v5224
    %v5482 = vunpack.c.h.b16 %v5224
    %v5483 = vunpack.c.l.b16 %v5225
    %v5484 = vunpack.c.l.b16 %v5226
    %v5485 = vunpack.c.h.b16 %v5226
    %v5486 = vunpack.c.l.b16 %v5227
    %v5487 = vunpack.c.h.b16 %v5227
    %v5488 = vunpack.c.l.b16 %v5228
    %v5489 = vunpack.c.h.b16 %v5228
    %v5490 = vunpack.c.l.b16 %v5229
    %v5491 = vunpack.c.h.b16 %v5229
    %v5492 = vunpack.c.l.b16 %v5230
    %v5493 = vunpack.c.h.b16 %v5230
    %v5494 = vunpack.c.l.b16 %v5231
    %v5495 = vunpack.c.l.b16 %v5232
    %v5496 = vunpack.c.h.b16 %v5232
    %v5497 = vunpack.c.l.b16 %v5233
    %v5498 = vunpack.c.h.b16 %v5233
    %v5499 = vunpack.c.l.b16 %v5234
    %v5500 = vunpack.c.h.b16 %v5234
    %v5501 = vunpack.c.l.b16 %v5235
    %v5502 = vunpack.c.h.b16 %v5235
    %v5503 = vunpack.c.l.b16 %v5236
    %v5504 = vunpack.c.h.b16 %v5236
    %v5505 = vunpack.c.l.b16 %v5237
    %v5506 = vunpack.c.l.b16 %v5238
    %v5507 = vunpack.c.h.b16 %v5238
    %v5508 = vunpack.c.l.b16 %v5239
    %v5509 = vunpack.c.h.b16 %v5239
    %v5510 = vunpack.c.l.b16 %v5240
    %v5511 = vunpack.c.h.b16 %v5240
    %v5512 = vunpack.c.l.b16 %v5241
    %v5513 = vunpack.c.h.b16 %v5241
    %v5514 = vunpack.c.l.b16 %v5242
    %v5515 = vunpack.c.h.b16 %v5242
    %v5516 = vunpack.c.l.b16 %v5243
    %v5517 = vunpack.c.l.b16 %v5244
    %v5518 = vunpack.c.h.b16 %v5244
    %v5519 = vunpack.c.l.b16 %v5245
    %v5520 = vunpack.c.h.b16 %v5245
    %v5521 = vunpack.c.l.b16 %v5246
    %v5522 = vunpack.c.h.b16 %v5246
    %v5523 = vunpack.c.l.b16 %v5247
    %v5524 = vunpack.c.h.b16 %v5247
    %v5525 = vunpack.c.l.b16 %v5248
    %v5526 = vunpack.c.h.b16 %v5248
    %v5527 = vunpack.c.l.b16 %v5249
    %v5528 = vpack.c.b16 %v5363, %v5352
    %v5529 = vpack.c.b16 %v5364, %v5353
    %v5530 = vpack.c.b16 %v5365, %v5354
    %v5531 = vpack.c.b16 %v5366, %v5355
    %v5532 = vpack.c.b16 %v5367, %v5356
    %v5533 = vpack.c.b16 %v5368, %v5357
    %v5534 = vpack.c.b16 %v5369, %v5358
    %v5535 = vpack.c.b16 %v5370, %v5359
    %v5536 = vpack.c.b16 %v5371, %v5360
    %v5537 = vpack.c.b16 %v5372, %v5361
    %v5538 = vpack.c.b16 %v5373, %v5362
    %v5539 = vpack.c.b16 %v5385, %v5374
    %v5540 = vpack.c.b16 %v5386, %v5375
    %v5541 = vpack.c.b16 %v5387, %v5376
    %v5542 = vpack.c.b16 %v5388, %v5377
    %v5543 = vpack.c.b16 %v5389, %v5378
    %v5544 = vpack.c.b16 %v5390, %v5379
    %v5545 = vpack.c.b16 %v5391, %v5380
    %v5546 = vpack.c.b16 %v5392, %v5381
    %v5547 = vpack.c.b16 %v5393, %v5382
    %v5548 = vpack.c.b16 %v5394, %v5383
    %v5549 = vpack.c.b16 %v5395, %v5384
    %v5550 = vpack.c.b16 %v5407, %v5396
    %v5551 = vpack.c.b16 %v5408, %v5397
    %v5552 = vpack.c.b16 %v5409, %v5398
    %v5553 = vpack.c.b16 %v5410, %v5399
    %v5554 = vpack.c.b16 %v5411, %v5400
    %v5555 = vpack.c.b16 %v5412, %v5401
    %v5556 = vpack.c.b16 %v5413, %v5402
    %v5557 = vpack.c.b16 %v5414, %v5403
    %v5558 = vpack.c.b16 %v5415, %v5404
    %v5559 = vpack.c.b16 %v5416, %v5405
    %v5560 = vpack.c.b16 %v5417, %v5406
    %v5561 = vpack.c.b16 %v5429, %v5418
    %v5562 = vpack.c.b16 %v5430, %v5419
    %v5563 = vpack.c.b16 %v5431, %v5420
    %v5564 = vpack.c.b16 %v5432, %v5421
    %v5565 = vpack.c.b16 %v5433, %v5422
    %v5566 = vpack.c.b16 %v5434, %v5423
    %v5567 = vpack.c.b16 %v5435, %v5424
    %v5568 = vpack.c.b16 %v5436, %v5425
    %v5569 = vpack.c.b16 %v5437, %v5426
    %v5570 = vpack.c.b16 %v5438, %v5427
    %v5571 = vpack.c.b16 %v5439, %v5428
    %v5572 = vpack.c.b16 %v5451, %v5440
    %v5573 = vpack.c.b16 %v5452, %v5441
    %v5574 = vpack.c.b16 %v5453, %v5442
    %v5575 = vpack.c.b16 %v5454, %v5443
    %v5576 = vpack.c.b16 %v5455, %v5444
    %v5577 = vpack.c.b16 %v5456, %v5445
    %v5578 = vpack.c.b16 %v5457, %v5446
    %v5579 = vpack.c.b16 %v5458, %v5447
    %v5580 = vpack.c.b16 %v5459, %v5448
    %v5581 = vpack.c.b16 %v5460, %v5449
    %v5582 = vpack.c.b16 %v5461, %v5450
    %v5583 = vpack.c.b16 %v5473, %v5462
    %v5584 = vpack.c.b16 %v5474, %v5463
    %v5585 = vpack.c.b16 %v5475, %v5464
    %v5586 = vpack.c.b16 %v5476, %v5465
    %v5587 = vpack.c.b16 %v5477, %v5466
    %v5588 = vpack.c.b16 %v5478, %v5467
    %v5589 = vpack.c.b16 %v5479, %v5468
    %v5590 = vpack.c.b16 %v5480, %v5469
    %v5591 = vpack.c.b16 %v5481, %v5470
    %v5592 = vpack.c.b16 %v5482, %v5471
    %v5593 = vpack.c.b16 %v5483, %v5472
    %v5594 = vpack.c.b16 %v5495, %v5484
    %v5595 = vpack.c.b16 %v5496, %v5485
    %v5596 = vpack.c.b16 %v5497, %v5486
    %v5597 = vpack.c.b16 %v5498, %v5487
    %v5598 = vpack.c.b16 %v5499, %v5488
    %v5599 = vpack.c.b16 %v5500, %v5489
    %v5600 = vpack.c.b16 %v5501, %v5490
    %v5601 = vpack.c.b16 %v5502, %v5491
    %v5602 = vpack.c.b16 %v5503, %v5492
    %v5603 = vpack.c.b16 %v5504, %v5493
    %v5604 = vpack.c.b16 %v5505, %v5494
    %v5605 = vpack.c.b16 %v5517, %v5506
    %v5606 = vpack.c.b16 %v5518, %v5507
    %v5607 = vpack.c.b16 %v5519, %v5508
    %v5608 = vpack.c.b16 %v5520, %v5509
    %v5609 = vpack.c.b16 %v5521, %v5510
    %v5610 = vpack.c.b16 %v5522, %v5511
    %v5611 = vpack.c.b16 %v5523, %v5512
    %v5612 = vpack.c.b16 %v5524, %v5513
    %v5613 = vpack.c.b16 %v5525, %v5514
    %v5614 = vpack.c.b16 %v5526, %v5515
    %v5615 = vpack.c.b16 %v5527, %v5516
    %5704 = vmatprep.subr.bf16.mxu0 %v5606
    %5705 = vmatpush1.bf16.msra.mxu0 %v5605
    %5706 = vmatprep.subr.bf16.mxu0 %v5595
    %5707 = vmatpush1.bf16.msra.mxu0 %v5594
    %5708 = vmatprep.subr.bf16.mxu0 %v5584
    %5709 = vmatpush1.bf16.msra.mxu0 %v5583
    %5710 = vmatprep.subr.bf16.mxu0 %v5573
    %5711 = vmatpush1.bf16.msra.mxu0 %v5572
    %5712 = vmatprep.subr.bf16.mxu0 %v5562
    %5713 = vmatpush1.bf16.msra.mxu0 %v5561
    %5714 = vmatprep.subr.bf16.mxu0 %v5551
    %5715 = vmatpush1.bf16.msra.mxu0 %v5550
    %5716 = vmatprep.subr.bf16.mxu0 %v5540
    %5717 = vmatpush1.bf16.msra.mxu0 %v5539
    %5718 = vmatprep.subr.bf16.mxu0 %v5529
    %5719 = vmatpush1.bf16.msra.mxu0 %v5528
    %5720 = vmatprep.subr.bf16.mxu0 0
    %5721 = vmatpush2.bf16.msra.mxu0 0
    %5722 = vmatprep.subr.bf16.mxu0 0
    %5723 = vmatpush2.bf16.msra.mxu0 0
    %5724 = vmatprep.subr.bf16.mxu0 0
    %5725 = vmatpush2.bf16.msra.mxu0 0
    %5726 = vmatprep.subr.bf16.mxu0 0
    %5727 = vmatpush2.bf16.msra.mxu0 0
    %5728 = vmatprep.subr.bf16.mxu0 0
    %5729 = vmatpush2.bf16.msra.mxu0 0
    %5730 = vmatprep.subr.bf16.mxu0 0
    %5731 = vmatpush2.bf16.msra.mxu0 0
    %5732 = vmatprep.subr.bf16.mxu0 0
    %5733 = vmatpush2.bf16.msra.mxu0 0
    %5734 = vmatprep.subr.bf16.mxu0 0
    %5735 = vmatpush2.bf16.msra.mxu0 0
    %5736 = vmatprep.mubr.bf16.mxu0 0
    %5737 = vmatmul.mubr.bf16.gmra.mxu0 %v5254
    %v5738 = vpop.f32.mrf.mxu0
    %v5739 = vadd.f32 0.0, %v5738
    %v5740 = vpop.f32.mrf.mxu0
    %v5741 = vadd.f32 0.0, %v5740
    %v5742 = vpop.f32.mrf.mxu0
    %v5743 = vadd.f32 0.0, %v5742
    %v5744 = vpop.f32.mrf.mxu0
    %v5745 = vadd.f32 0.0, %v5744
    %5746 = vdwg.mxu0
    %5747 = vmatprep.subr.bf16.mxu0 %v5608
    %5748 = vmatpush1.bf16.msra.mxu0 %v5607
    %5749 = vmatprep.subr.bf16.mxu0 %v5597
    %5750 = vmatpush1.bf16.msra.mxu0 %v5596
    %5751 = vmatprep.subr.bf16.mxu0 %v5586
    %5752 = vmatpush1.bf16.msra.mxu0 %v5585
    %5753 = vmatprep.subr.bf16.mxu0 %v5575
    %5754 = vmatpush1.bf16.msra.mxu0 %v5574
    %5755 = vmatprep.subr.bf16.mxu0 %v5564
    %5756 = vmatpush1.bf16.msra.mxu0 %v5563
    %5757 = vmatprep.subr.bf16.mxu0 %v5553
    %5758 = vmatpush1.bf16.msra.mxu0 %v5552
    %5759 = vmatprep.subr.bf16.mxu0 %v5542
    %5760 = vmatpush1.bf16.msra.mxu0 %v5541
    %5761 = vmatprep.subr.bf16.mxu0 %v5531
    %5762 = vmatpush1.bf16.msra.mxu0 %v5530
    %5763 = vmatprep.subr.bf16.mxu0 0
    %5764 = vmatpush2.bf16.msra.mxu0 0
    %5765 = vmatprep.subr.bf16.mxu0 0
    %5766 = vmatpush2.bf16.msra.mxu0 0
    %5767 = vmatprep.subr.bf16.mxu0 0
    %5768 = vmatpush2.bf16.msra.mxu0 0
    %5769 = vmatprep.subr.bf16.mxu0 0
    %5770 = vmatpush2.bf16.msra.mxu0 0
    %5771 = vmatprep.subr.bf16.mxu0 0
    %5772 = vmatpush2.bf16.msra.mxu0 0
    %5773 = vmatprep.subr.bf16.mxu0 0
    %5774 = vmatpush2.bf16.msra.mxu0 0
    %5775 = vmatprep.subr.bf16.mxu0 0
    %5776 = vmatpush2.bf16.msra.mxu0 0
    %5777 = vmatprep.subr.bf16.mxu0 0
    %5778 = vmatpush2.bf16.msra.mxu0 0
    %5779 = vmatprep.mubr.bf16.mxu0 0
    %5780 = vmatmul.mubr.bf16.gmra.mxu0 %v5254
    %v5781 = vpop.f32.mrf.mxu0
    %v5782 = vadd.f32 0.0, %v5781
    %v5783 = vpop.f32.mrf.mxu0
    %v5784 = vadd.f32 0.0, %v5783
    %v5785 = vpop.f32.mrf.mxu0
    %v5786 = vadd.f32 0.0, %v5785
    %v5787 = vpop.f32.mrf.mxu0
    %v5788 = vadd.f32 0.0, %v5787
    %5789 = vdwg.mxu0
    %5790 = vmatprep.subr.bf16.mxu0 %v5610
    %5791 = vmatpush1.bf16.msra.mxu0 %v5609
    %5792 = vmatprep.subr.bf16.mxu0 %v5599
    %5793 = vmatpush1.bf16.msra.mxu0 %v5598
    %5794 = vmatprep.subr.bf16.mxu0 %v5588
    %5795 = vmatpush1.bf16.msra.mxu0 %v5587
    %5796 = vmatprep.subr.bf16.mxu0 %v5577
    %5797 = vmatpush1.bf16.msra.mxu0 %v5576
    %5798 = vmatprep.subr.bf16.mxu0 %v5566
    %5799 = vmatpush1.bf16.msra.mxu0 %v5565
    %5800 = vmatprep.subr.bf16.mxu0 %v5555
    %5801 = vmatpush1.bf16.msra.mxu0 %v5554
    %5802 = vmatprep.subr.bf16.mxu0 %v5544
    %5803 = vmatpush1.bf16.msra.mxu0 %v5543
    %5804 = vmatprep.subr.bf16.mxu0 %v5533
    %5805 = vmatpush1.bf16.msra.mxu0 %v5532
    %5806 = vmatprep.subr.bf16.mxu0 0
    %5807 = vmatpush2.bf16.msra.mxu0 0
    %5808 = vmatprep.subr.bf16.mxu0 0
    %5809 = vmatpush2.bf16.msra.mxu0 0
    %5810 = vmatprep.subr.bf16.mxu0 0
    %5811 = vmatpush2.bf16.msra.mxu0 0
    %5812 = vmatprep.subr.bf16.mxu0 0
    %5813 = vmatpush2.bf16.msra.mxu0 0
    %5814 = vmatprep.subr.bf16.mxu0 0
    %5815 = vmatpush2.bf16.msra.mxu0 0
    %5816 = vmatprep.subr.bf16.mxu0 0
    %5817 = vmatpush2.bf16.msra.mxu0 0
    %5818 = vmatprep.subr.bf16.mxu0 0
    %5819 = vmatpush2.bf16.msra.mxu0 0
    %5820 = vmatprep.subr.bf16.mxu0 0
    %5821 = vmatpush2.bf16.msra.mxu0 0
    %5822 = vmatprep.mubr.bf16.mxu0 0
    %5823 = vmatmul.mubr.bf16.gmra.mxu0 %v5254
    %v5824 = vpop.f32.mrf.mxu0
    %v5825 = vadd.f32 0.0, %v5824
    %v5826 = vpop.f32.mrf.mxu0
    %v5827 = vadd.f32 0.0, %v5826
    %v5828 = vpop.f32.mrf.mxu0
    %v5829 = vadd.f32 0.0, %v5828
    %v5830 = vpop.f32.mrf.mxu0
    %v5831 = vadd.f32 0.0, %v5830
    %5832 = vdwg.mxu0
    %5833 = vmatprep.subr.bf16.mxu0 %v5612
    %5834 = vmatpush1.bf16.msra.mxu0 %v5611
    %5835 = vmatprep.subr.bf16.mxu0 %v5601
    %5836 = vmatpush1.bf16.msra.mxu0 %v5600
    %5837 = vmatprep.subr.bf16.mxu0 %v5590
    %5838 = vmatpush1.bf16.msra.mxu0 %v5589
    %5839 = vmatprep.subr.bf16.mxu0 %v5579
    %5840 = vmatpush1.bf16.msra.mxu0 %v5578
    %5841 = vmatprep.subr.bf16.mxu0 %v5568
    %5842 = vmatpush1.bf16.msra.mxu0 %v5567
    %5843 = vmatprep.subr.bf16.mxu0 %v5557
    %5844 = vmatpush1.bf16.msra.mxu0 %v5556
    %5845 = vmatprep.subr.bf16.mxu0 %v5546
    %5846 = vmatpush1.bf16.msra.mxu0 %v5545
    %5847 = vmatprep.subr.bf16.mxu0 %v5535
    %5848 = vmatpush1.bf16.msra.mxu0 %v5534
    %5849 = vmatprep.subr.bf16.mxu0 0
    %5850 = vmatpush2.bf16.msra.mxu0 0
    %5851 = vmatprep.subr.bf16.mxu0 0
    %5852 = vmatpush2.bf16.msra.mxu0 0
    %5853 = vmatprep.subr.bf16.mxu0 0
    %5854 = vmatpush2.bf16.msra.mxu0 0
    %5855 = vmatprep.subr.bf16.mxu0 0
    %5856 = vmatpush2.bf16.msra.mxu0 0
    %5857 = vmatprep.subr.bf16.mxu0 0
    %5858 = vmatpush2.bf16.msra.mxu0 0
    %5859 = vmatprep.subr.bf16.mxu0 0
    %5860 = vmatpush2.bf16.msra.mxu0 0
    %5861 = vmatprep.subr.bf16.mxu0 0
    %5862 = vmatpush2.bf16.msra.mxu0 0
    %5863 = vmatprep.subr.bf16.mxu0 0
    %5864 = vmatpush2.bf16.msra.mxu0 0
    %5865 = vmatprep.mubr.bf16.mxu0 0
    %5866 = vmatmul.mubr.bf16.gmra.mxu0 %v5254
    %v5867 = vpop.f32.mrf.mxu0
    %v5868 = vadd.f32 0.0, %v5867
    %v5869 = vpop.f32.mrf.mxu0
    %v5870 = vadd.f32 0.0, %v5869
    %v5871 = vpop.f32.mrf.mxu0
    %v5872 = vadd.f32 0.0, %v5871
    %v5873 = vpop.f32.mrf.mxu0
    %v5874 = vadd.f32 0.0, %v5873
    %5875 = vdwg.mxu0
    %5876 = vmatprep.subr.bf16.mxu0 %v5614
    %5877 = vmatpush1.bf16.msra.mxu0 %v5613
    %5878 = vmatprep.subr.bf16.mxu0 %v5603
    %5879 = vmatpush1.bf16.msra.mxu0 %v5602
    %5880 = vmatprep.subr.bf16.mxu0 %v5592
    %5881 = vmatpush1.bf16.msra.mxu0 %v5591
    %5882 = vmatprep.subr.bf16.mxu0 %v5581
    %5883 = vmatpush1.bf16.msra.mxu0 %v5580
    %5884 = vmatprep.subr.bf16.mxu0 %v5570
    %5885 = vmatpush1.bf16.msra.mxu0 %v5569
    %5886 = vmatprep.subr.bf16.mxu0 %v5559
    %5887 = vmatpush1.bf16.msra.mxu0 %v5558
    %5888 = vmatprep.subr.bf16.mxu0 %v5548
    %5889 = vmatpush1.bf16.msra.mxu0 %v5547
    %5890 = vmatprep.subr.bf16.mxu0 %v5537
    %5891 = vmatpush1.bf16.msra.mxu0 %v5536
    %5892 = vmatprep.subr.bf16.mxu0 0
    %5893 = vmatpush2.bf16.msra.mxu0 0
    %5894 = vmatprep.subr.bf16.mxu0 0
    %5895 = vmatpush2.bf16.msra.mxu0 0
    %5896 = vmatprep.subr.bf16.mxu0 0
    %5897 = vmatpush2.bf16.msra.mxu0 0
    %5898 = vmatprep.subr.bf16.mxu0 0
    %5899 = vmatpush2.bf16.msra.mxu0 0
    %5900 = vmatprep.subr.bf16.mxu0 0
    %5901 = vmatpush2.bf16.msra.mxu0 0
    %5902 = vmatprep.subr.bf16.mxu0 0
    %5903 = vmatpush2.bf16.msra.mxu0 0
    %5904 = vmatprep.subr.bf16.mxu0 0
    %5905 = vmatpush2.bf16.msra.mxu0 0
    %5906 = vmatprep.subr.bf16.mxu0 0
    %5907 = vmatpush2.bf16.msra.mxu0 0
    %5908 = vmatprep.mubr.bf16.mxu0 0
    %5909 = vmatmul.mubr.bf16.gmra.mxu0 %v5254
    %v5910 = vpop.f32.mrf.mxu0
    %v5911 = vadd.f32 0.0, %v5910
    %v5912 = vpop.f32.mrf.mxu0
    %v5913 = vadd.f32 0.0, %v5912
    %v5914 = vpop.f32.mrf.mxu0
    %v5915 = vadd.f32 0.0, %v5914
    %v5916 = vpop.f32.mrf.mxu0
    %v5917 = vadd.f32 0.0, %v5916
    %5918 = vdwg.mxu0
    %5919 = vmatprep.subr.bf16.mxu0 0
    %5920 = vmatpush1.bf16.msra.mxu0 %v5615
    %5921 = vmatprep.subr.bf16.mxu0 0
    %5922 = vmatpush1.bf16.msra.mxu0 %v5604
    %5923 = vmatprep.subr.bf16.mxu0 0
    %5924 = vmatpush1.bf16.msra.mxu0 %v5593
    %5925 = vmatprep.subr.bf16.mxu0 0
    %5926 = vmatpush1.bf16.msra.mxu0 %v5582
    %5927 = vmatprep.subr.bf16.mxu0 0
    %5928 = vmatpush1.bf16.msra.mxu0 %v5571
    %5929 = vmatprep.subr.bf16.mxu0 0
    %5930 = vmatpush1.bf16.msra.mxu0 %v5560
    %5931 = vmatprep.subr.bf16.mxu0 0
    %5932 = vmatpush1.bf16.msra.mxu0 %v5549
    %5933 = vmatprep.subr.bf16.mxu0 0
    %5934 = vmatpush1.bf16.msra.mxu0 %v5538
    %5935 = vmatprep.subr.bf16.mxu0 0
    %5936 = vmatpush2.bf16.msra.mxu0 0
    %5937 = vmatprep.subr.bf16.mxu0 0
    %5938 = vmatpush2.bf16.msra.mxu0 0
    %5939 = vmatprep.subr.bf16.mxu0 0
    %5940 = vmatpush2.bf16.msra.mxu0 0
    %5941 = vmatprep.subr.bf16.mxu0 0
    %5942 = vmatpush2.bf16.msra.mxu0 0
    %5943 = vmatprep.subr.bf16.mxu0 0
    %5944 = vmatpush2.bf16.msra.mxu0 0
    %5945 = vmatprep.subr.bf16.mxu0 0
    %5946 = vmatpush2.bf16.msra.mxu0 0
    %5947 = vmatprep.subr.bf16.mxu0 0
    %5948 = vmatpush2.bf16.msra.mxu0 0
    %5949 = vmatprep.subr.bf16.mxu0 0
    %5950 = vmatpush2.bf16.msra.mxu0 0
    %5951 = vmatprep.mubr.bf16.mxu0 0
    %5952 = vmatmul.mubr.bf16.gmra.mxu0 %v5254
    %v5953 = vpop.f32.mrf.mxu0
    %v5954 = vadd.f32 0.0, %v5953
    %v5955 = vpop.f32.mrf.mxu0
    %v5956 = vpop.f32.mrf.mxu0
    %v5957 = vadd.f32 0.0, %v5956
    %v5958 = vpop.f32.mrf.mxu0
    %5959 = vdwg.mxu0
    %s5960 = scalar_lea.vmem %s4, 96
    %v5961 = vld [vmem:[%s5960] sm:$0xff]
    %v5962 = vld [vmem:[%s5960 + $0x8] sm:$0xff]
    %5964 = vset.pattern.permute.xlu0 0
    %5965 = vperm.xlu0 %5964, %v5961
    %v5966 = vpop.permute.xlu0 %5965
    %5969 = vset.pattern.permute.xlu0 0
    %5970 = vperm.xlu0 %5969, %v5962
    %v5971 = vpop.permute.xlu0 %5970
    %v5973 = vadd.f32 %v5739, %v5966
    %v5974 = vadd.f32 %v5741, %v5966
    %v5975 = vadd.f32 %v5782, %v5966
    %v5976 = vadd.f32 %v5784, %v5966
    %v5977 = vadd.f32 %v5825, %v5966
    %v5978 = vadd.f32 %v5743, %v5971
    %v5979 = vadd.f32 %v5745, %v5971
    %v5980 = vadd.f32 %v5786, %v5971
    %v5981 = vadd.f32 %v5788, %v5971
    %v5982 = vadd.f32 %v5829, %v5971
    %v5983 = vtanh.pop %v5973
    %v5984 = vtanh.pop %v5974
    %v5985 = vtanh.pop %v5975
    %v5986 = vtanh.pop %v5976
    %v5987 = vtanh.pop %v5977
    %v5988 = vtanh.pop %v5978
    %v5989 = vtanh.pop %v5979
    %v5990 = vtanh.pop %v5980
    %v5991 = vtanh.pop %v5981
    %v5992 = vtanh.pop %v5982
    %v5993 = vmul.f32 %v5983, %v5983
    %v5994 = vmul.f32 %v5984, %v5984
    %v5995 = vmul.f32 %v5988, %v5988
    %v5996 = vmul.f32 %v5989, %v5989
    %v5997 = vsub.f32 1.0, %v5993
    %v5998 = vsub.f32 1.0, %v5994
    %v5999 = vsub.f32 1.0, %v5995
    %v6000 = vsub.f32 1.0, %v5996
    %v6001 = vmul.f32 %v5997, %v5827
    %v6002 = vmul.f32 %v5998, %v5868
    %v6003 = vmul.f32 %v5999, %v5831
    %v6004 = vmul.f32 %v6000, %v5872
    %v6005 = vmul.f32 %v5997, %v5870
    %v6006 = vmul.f32 %v5998, %v5911
    %v6007 = vmul.f32 %v5999, %v5874
    %v6008 = vmul.f32 %v6000, %v5915
    %v6009 = vmul.f32 %v5997, %v5913
    %v6010 = vmul.f32 %v5998, %v5954
    %v6011 = vmul.f32 %v5999, %v5917
    %v6012 = vmul.f32 %v6000, %v5957
    %v6013 = vmul.f32 %v5983, %v5827
    %v6014 = vmul.f32 %v5984, %v5868
    %v6015 = vmul.f32 %v5988, %v5831
    %v6016 = vmul.f32 %v5989, %v5872
    %v6017 = vmul.f32 %v6013, 2.0
    %v6018 = vmul.f32 %v6014, 2.0
    %v6019 = vmul.f32 %v6015, 2.0
    %v6020 = vmul.f32 %v6016, 2.0
    %v6021 = vmul.f32 %v6017, %v6001
    %v6022 = vmul.f32 %v6018, %v6002
    %v6023 = vmul.f32 %v6019, %v6003
    %v6024 = vmul.f32 %v6020, %v6004
    %v6025 = vsub.f32 %v6009, %v6021
    %v6026 = vsub.f32 %v6010, %v6022
    %v6027 = vsub.f32 %v6011, %v6023
    %v6028 = vsub.f32 %v6012, %v6024
    %v6029 = vpack.c.bf16 %v5988, %v5983
    %v6030 = vpack.c.bf16 %v5989, %v5984
    %v6031 = vpack.c.bf16 %v5990, %v5985
    %v6032 = vpack.c.bf16 %v5991, %v5986
    %v6033 = vpack.c.bf16 %v5992, %v5987
    %v6039 = vunpack.c.l.b16 %v6029
    %v6040 = vunpack.c.l.b16 %v6030
    %v6041 = vunpack.c.l.b16 %v6031
    %v6042 = vunpack.c.l.b16 %v6032
    %v6043 = vunpack.c.l.b16 %v6033
    %v6044 = vunpack.c.h.b16 %v6029
    %v6045 = vunpack.c.h.b16 %v6030
    %v6046 = vunpack.c.h.b16 %v6031
    %v6047 = vunpack.c.h.b16 %v6032
    %v6048 = vunpack.c.h.b16 %v6033
    %v6049 = vpack.c.b16 %v6040, %v6039
    %v6050 = vpack.c.b16 %v6042, %v6041
    %v6051 = vpack.c.b16 %v6043, %v6043
    %v6052 = vpack.c.b16 %v6045, %v6044
    %v6053 = vpack.c.b16 %v6047, %v6046
    %v6054 = vpack.c.b16 %v6048, %v6048
    %6061 = vst [vmem:[#allocation2] sm:$0xff] %v6049
    %6062 = vst [vmem:[#allocation2 + $0x8] sm:$0xff] %v6050
    %6063 = vst [vmem:[#allocation2 + $0x10] sm:$0xf] %v6051
    %6064 = vst [vmem:[#allocation2 + $0x2c] sm:$0xff] %v6052
    %6065 = vst [vmem:[#allocation2 + $0x34] sm:$0xff] %v6053
    %6066 = vst [vmem:[#allocation2 + $0x3c] sm:$0xf] %v6054
    %v6067 = vpack.c.bf16 %v6003, %v6001
    %v6068 = vpack.c.bf16 %v6004, %v6002
    %v6071 = vunpack.c.l.b16 %v6067
    %v6072 = vunpack.c.l.b16 %v6068
    %v6073 = vunpack.c.h.b16 %v6067
    %v6074 = vunpack.c.h.b16 %v6068
    %v6075 = vpack.c.b16 %v6072, %v6071
    %v6076 = vpack.c.b16 %v6074, %v6073
    %6079 = vst [vmem:[#allocation2 + $0x14] sm:$0xff] %v6075
    %6080 = vst [vmem:[#allocation2 + $0x40] sm:$0xff] %v6076
    %v6081 = vpack.c.bf16 %v6007, %v6005
    %v6082 = vpack.c.bf16 %v6008, %v6006
    %v6085 = vunpack.c.l.b16 %v6081
    %v6086 = vunpack.c.l.b16 %v6082
    %v6087 = vunpack.c.h.b16 %v6081
    %v6088 = vunpack.c.h.b16 %v6082
    %v6089 = vpack.c.b16 %v6086, %v6085
    %v6090 = vpack.c.b16 %v6088, %v6087
    %6093 = vst [vmem:[#allocation2 + $0x1c] sm:$0xff] %v6089
    %6094 = vst [vmem:[#allocation2 + $0x48] sm:$0xff] %v6090
    %v6095 = vpack.c.bf16 %v6027, %v6025
    %v6096 = vpack.c.bf16 %v6028, %v6026
    %v6099 = vunpack.c.l.b16 %v6095
    %v6100 = vunpack.c.l.b16 %v6096
    %v6101 = vunpack.c.h.b16 %v6095
    %v6102 = vunpack.c.h.b16 %v6096
    %v6103 = vpack.c.b16 %v6100, %v6099
    %v6104 = vpack.c.b16 %v6102, %v6101
    %6107 = vst [vmem:[#allocation2 + $0x24] sm:$0xff] %v6103
    %6108 = vst [vmem:[#allocation2 + $0x50] sm:$0xff] %v6104
    %s6109 = scalar_lea.vmem %s3, 48
    %v6110 = vld [vmem:[%s6109] sm:$0xf]
    %v6111 = vld [vmem:[%s6109 + $0x4] sm:$0xf]
    %v6112 = vld [vmem:[#allocation2] sm:$0xff]
    %v6113 = vld [vmem:[#allocation2 + $0x8] sm:$0xff]
    %v6114 = vld [vmem:[#allocation2 + $0x10] sm:$0xff]
    %v6115 = vld [vmem:[#allocation2 + $0x18] sm:$0xff]
    %v6116 = vld [vmem:[#allocation2 + $0x20] sm:$0xff]
    %v6117 = vld [vmem:[#allocation2 + $0x28] sm:$0xf]
    %v6118 = vld [vmem:[#allocation2 + $0x2c] sm:$0xff]
    %v6119 = vld [vmem:[#allocation2 + $0x34] sm:$0xff]
    %v6120 = vld [vmem:[#allocation2 + $0x3c] sm:$0xff]
    %v6121 = vld [vmem:[#allocation2 + $0x44] sm:$0xff]
    %v6122 = vld [vmem:[#allocation2 + $0x4c] sm:$0xff]
    %v6123 = vld [vmem:[#allocation2 + $0x54] sm:$0xf]
    %v6124 = vld [vmem:[#allocation2 + $0x58] sm:$0xff]
    %v6125 = vld [vmem:[#allocation2 + $0x60] sm:$0xff]
    %v6126 = vld [vmem:[#allocation2 + $0x68] sm:$0xff]
    %v6127 = vld [vmem:[#allocation2 + $0x70] sm:$0xff]
    %v6128 = vld [vmem:[#allocation2 + $0x78] sm:$0xff]
    %v6129 = vld [vmem:[#allocation2 + $0x80] sm:$0xf]
    %v6130 = vld [vmem:[#allocation2 + $0x84] sm:$0xff]
    %v6131 = vld [vmem:[#allocation2 + $0x8c] sm:$0xff]
    %v6132 = vld [vmem:[#allocation2 + $0x94] sm:$0xff]
    %v6133 = vld [vmem:[#allocation2 + $0x9c] sm:$0xff]
    %v6134 = vld [vmem:[#allocation2 + $0xa4] sm:$0xff]
    %v6135 = vld [vmem:[#allocation2 + $0xac] sm:$0xf]
    %v6136 = vld [vmem:[#allocation2 + $0xb0] sm:$0xff]
    %v6137 = vld [vmem:[#allocation2 + $0xb8] sm:$0xff]
    %v6138 = vld [vmem:[#allocation2 + $0xc0] sm:$0xff]
    %v6139 = vld [vmem:[#allocation2 + $0xc8] sm:$0xff]
    %v6140 = vld [vmem:[#allocation2 + $0xd0] sm:$0xff]
    %v6141 = vld [vmem:[#allocation2 + $0xd8] sm:$0xf]
    %v6142 = vld [vmem:[#allocation2 + $0xdc] sm:$0xff]
    %v6143 = vld [vmem:[#allocation2 + $0xe4] sm:$0xff]
    %v6144 = vld [vmem:[#allocation2 + $0xec] sm:$0xff]
    %v6145 = vld [vmem:[#allocation2 + $0xf4] sm:$0xff]
    %v6146 = vld [vmem:[#allocation2 + $0xfc] sm:$0xff]
    %v6147 = vld [vmem:[#allocation2 + $0x104] sm:$0xf]
    %v6148 = vld [vmem:[#allocation2 + $0x108] sm:$0xff]
    %v6149 = vld [vmem:[#allocation2 + $0x110] sm:$0xff]
    %v6150 = vld [vmem:[#allocation2 + $0x118] sm:$0xff]
    %v6151 = vld [vmem:[#allocation2 + $0x120] sm:$0xff]
    %v6152 = vld [vmem:[#allocation2 + $0x128] sm:$0xff]
    %v6153 = vld [vmem:[#allocation2 + $0x130] sm:$0xf]
    %v6154 = vld [vmem:[#allocation2 + $0x134] sm:$0xff]
    %v6155 = vld [vmem:[#allocation2 + $0x13c] sm:$0xff]
    %v6156 = vld [vmem:[#allocation2 + $0x144] sm:$0xff]
    %v6157 = vld [vmem:[#allocation2 + $0x14c] sm:$0xff]
    %v6158 = vld [vmem:[#allocation2 + $0x154] sm:$0xff]
    %v6159 = vld [vmem:[#allocation2 + $0x15c] sm:$0xf]
    %v6160 = vld [vmem:[#allocation2 + $0x160] sm:$0xff]
    %v6161 = vld [vmem:[#allocation2 + $0x168] sm:$0xff]
    %v6162 = vld [vmem:[#allocation2 + $0x170] sm:$0xff]
    %v6163 = vld [vmem:[#allocation2 + $0x178] sm:$0xff]
    %v6164 = vld [vmem:[#allocation2 + $0x180] sm:$0xff]
    %v6165 = vld [vmem:[#allocation2 + $0x188] sm:$0xf]
    %v6166 = vld [vmem:[#allocation2 + $0x18c] sm:$0xff]
    %v6167 = vld [vmem:[#allocation2 + $0x194] sm:$0xff]
    %v6168 = vld [vmem:[#allocation2 + $0x19c] sm:$0xff]
    %v6169 = vld [vmem:[#allocation2 + $0x1a4] sm:$0xff]
    %v6170 = vld [vmem:[#allocation2 + $0x1ac] sm:$0xff]
    %v6171 = vld [vmem:[#allocation2 + $0x1b4] sm:$0xf]
    %v6172 = vld [vmem:[#allocation2 + $0x1b8] sm:$0xff]
    %v6173 = vld [vmem:[#allocation2 + $0x1c0] sm:$0xff]
    %v6174 = vld [vmem:[#allocation2 + $0x1c8] sm:$0xff]
    %v6175 = vld [vmem:[#allocation2 + $0x1d0] sm:$0xff]
    %v6176 = vld [vmem:[#allocation2 + $0x1d8] sm:$0xff]
    %v6177 = vld [vmem:[#allocation2 + $0x1e0] sm:$0xf]
    %v6178 = vld [vmem:[#allocation2 + $0x1e4] sm:$0xff]
    %v6179 = vld [vmem:[#allocation2 + $0x1ec] sm:$0xff]
    %v6180 = vld [vmem:[#allocation2 + $0x1f4] sm:$0xff]
    %v6181 = vld [vmem:[#allocation2 + $0x1fc] sm:$0xff]
    %v6182 = vld [vmem:[#allocation2 + $0x204] sm:$0xff]
    %v6183 = vld [vmem:[#allocation2 + $0x20c] sm:$0xf]
    %v6184 = vld [vmem:[#allocation2 + $0x210] sm:$0xff]
    %v6185 = vld [vmem:[#allocation2 + $0x218] sm:$0xff]
    %v6186 = vld [vmem:[#allocation2 + $0x220] sm:$0xff]
    %v6187 = vld [vmem:[#allocation2 + $0x228] sm:$0xff]
    %v6188 = vld [vmem:[#allocation2 + $0x230] sm:$0xff]
    %v6189 = vld [vmem:[#allocation2 + $0x238] sm:$0xf]
    %v6190 = vld [vmem:[#allocation2 + $0x23c] sm:$0xff]
    %v6191 = vld [vmem:[#allocation2 + $0x244] sm:$0xff]
    %v6192 = vld [vmem:[#allocation2 + $0x24c] sm:$0xff]
    %v6193 = vld [vmem:[#allocation2 + $0x254] sm:$0xff]
    %v6194 = vld [vmem:[#allocation2 + $0x25c] sm:$0xff]
    %v6195 = vld [vmem:[#allocation2 + $0x264] sm:$0xf]
    %v6196 = vld [vmem:[#allocation2 + $0x268] sm:$0xff]
    %v6197 = vld [vmem:[#allocation2 + $0x270] sm:$0xff]
    %v6198 = vld [vmem:[#allocation2 + $0x278] sm:$0xff]
    %v6199 = vld [vmem:[#allocation2 + $0x280] sm:$0xff]
    %v6200 = vld [vmem:[#allocation2 + $0x288] sm:$0xff]
    %v6201 = vld [vmem:[#allocation2 + $0x290] sm:$0xf]
    %v6202 = vld [vmem:[#allocation2 + $0x294] sm:$0xff]
    %v6203 = vld [vmem:[#allocation2 + $0x29c] sm:$0xff]
    %v6204 = vld [vmem:[#allocation2 + $0x2a4] sm:$0xff]
    %v6205 = vld [vmem:[#allocation2 + $0x2ac] sm:$0xff]
    %v6206 = vld [vmem:[#allocation2 + $0x2b4] sm:$0xff]
    %v6207 = vld [vmem:[#allocation2 + $0x2bc] sm:$0xf]
    %v6210 = vunpack.c.l.b16 %v6110
    %v6211 = vunpack.c.l.b16 %v6111
    %v6212 = vpack.c.b16 %v6211, %v6210
    %v6310 = vunpack.c.l.b16 %v6112
    %v6311 = vunpack.c.h.b16 %v6112
    %v6312 = vunpack.c.l.b16 %v6113
    %v6313 = vunpack.c.h.b16 %v6113
    %v6314 = vunpack.c.l.b16 %v6114
    %v6315 = vunpack.c.h.b16 %v6114
    %v6316 = vunpack.c.l.b16 %v6115
    %v6317 = vunpack.c.h.b16 %v6115
    %v6318 = vunpack.c.l.b16 %v6116
    %v6319 = vunpack.c.h.b16 %v6116
    %v6320 = vunpack.c.l.b16 %v6117
    %v6321 = vunpack.c.l.b16 %v6118
    %v6322 = vunpack.c.h.b16 %v6118
    %v6323 = vunpack.c.l.b16 %v6119
    %v6324 = vunpack.c.h.b16 %v6119
    %v6325 = vunpack.c.l.b16 %v6120
    %v6326 = vunpack.c.h.b16 %v6120
    %v6327 = vunpack.c.l.b16 %v6121
    %v6328 = vunpack.c.h.b16 %v6121
    %v6329 = vunpack.c.l.b16 %v6122
    %v6330 = vunpack.c.h.b16 %v6122
    %v6331 = vunpack.c.l.b16 %v6123
    %v6332 = vunpack.c.l.b16 %v6124
    %v6333 = vunpack.c.h.b16 %v6124
    %v6334 = vunpack.c.l.b16 %v6125
    %v6335 = vunpack.c.h.b16 %v6125
    %v6336 = vunpack.c.l.b16 %v6126
    %v6337 = vunpack.c.h.b16 %v6126
    %v6338 = vunpack.c.l.b16 %v6127
    %v6339 = vunpack.c.h.b16 %v6127
    %v6340 = vunpack.c.l.b16 %v6128
    %v6341 = vunpack.c.h.b16 %v6128
    %v6342 = vunpack.c.l.b16 %v6129
    %v6343 = vunpack.c.l.b16 %v6130
    %v6344 = vunpack.c.h.b16 %v6130
    %v6345 = vunpack.c.l.b16 %v6131
    %v6346 = vunpack.c.h.b16 %v6131
    %v6347 = vunpack.c.l.b16 %v6132
    %v6348 = vunpack.c.h.b16 %v6132
    %v6349 = vunpack.c.l.b16 %v6133
    %v6350 = vunpack.c.h.b16 %v6133
    %v6351 = vunpack.c.l.b16 %v6134
    %v6352 = vunpack.c.h.b16 %v6134
    %v6353 = vunpack.c.l.b16 %v6135
    %v6354 = vunpack.c.l.b16 %v6136
    %v6355 = vunpack.c.h.b16 %v6136
    %v6356 = vunpack.c.l.b16 %v6137
    %v6357 = vunpack.c.h.b16 %v6137
    %v6358 = vunpack.c.l.b16 %v6138
    %v6359 = vunpack.c.h.b16 %v6138
    %v6360 = vunpack.c.l.b16 %v6139
    %v6361 = vunpack.c.h.b16 %v6139
    %v6362 = vunpack.c.l.b16 %v6140
    %v6363 = vunpack.c.h.b16 %v6140
    %v6364 = vunpack.c.l.b16 %v6141
    %v6365 = vunpack.c.l.b16 %v6142
    %v6366 = vunpack.c.h.b16 %v6142
    %v6367 = vunpack.c.l.b16 %v6143
    %v6368 = vunpack.c.h.b16 %v6143
    %v6369 = vunpack.c.l.b16 %v6144
    %v6370 = vunpack.c.h.b16 %v6144
    %v6371 = vunpack.c.l.b16 %v6145
    %v6372 = vunpack.c.h.b16 %v6145
    %v6373 = vunpack.c.l.b16 %v6146
    %v6374 = vunpack.c.h.b16 %v6146
    %v6375 = vunpack.c.l.b16 %v6147
    %v6376 = vunpack.c.l.b16 %v6148
    %v6377 = vunpack.c.h.b16 %v6148
    %v6378 = vunpack.c.l.b16 %v6149
    %v6379 = vunpack.c.h.b16 %v6149
    %v6380 = vunpack.c.l.b16 %v6150
    %v6381 = vunpack.c.h.b16 %v6150
    %v6382 = vunpack.c.l.b16 %v6151
    %v6383 = vunpack.c.h.b16 %v6151
    %v6384 = vunpack.c.l.b16 %v6152
    %v6385 = vunpack.c.h.b16 %v6152
    %v6386 = vunpack.c.l.b16 %v6153
    %v6387 = vunpack.c.l.b16 %v6154
    %v6388 = vunpack.c.h.b16 %v6154
    %v6389 = vunpack.c.l.b16 %v6155
    %v6390 = vunpack.c.h.b16 %v6155
    %v6391 = vunpack.c.l.b16 %v6156
    %v6392 = vunpack.c.h.b16 %v6156
    %v6393 = vunpack.c.l.b16 %v6157
    %v6394 = vunpack.c.h.b16 %v6157
    %v6395 = vunpack.c.l.b16 %v6158
    %v6396 = vunpack.c.h.b16 %v6158
    %v6397 = vunpack.c.l.b16 %v6159
    %v6398 = vunpack.c.l.b16 %v6160
    %v6399 = vunpack.c.h.b16 %v6160
    %v6400 = vunpack.c.l.b16 %v6161
    %v6401 = vunpack.c.h.b16 %v6161
    %v6402 = vunpack.c.l.b16 %v6162
    %v6403 = vunpack.c.h.b16 %v6162
    %v6404 = vunpack.c.l.b16 %v6163
    %v6405 = vunpack.c.h.b16 %v6163
    %v6406 = vunpack.c.l.b16 %v6164
    %v6407 = vunpack.c.h.b16 %v6164
    %v6408 = vunpack.c.l.b16 %v6165
    %v6409 = vunpack.c.l.b16 %v6166
    %v6410 = vunpack.c.h.b16 %v6166
    %v6411 = vunpack.c.l.b16 %v6167
    %v6412 = vunpack.c.h.b16 %v6167
    %v6413 = vunpack.c.l.b16 %v6168
    %v6414 = vunpack.c.h.b16 %v6168
    %v6415 = vunpack.c.l.b16 %v6169
    %v6416 = vunpack.c.h.b16 %v6169
    %v6417 = vunpack.c.l.b16 %v6170
    %v6418 = vunpack.c.h.b16 %v6170
    %v6419 = vunpack.c.l.b16 %v6171
    %v6420 = vunpack.c.l.b16 %v6172
    %v6421 = vunpack.c.h.b16 %v6172
    %v6422 = vunpack.c.l.b16 %v6173
    %v6423 = vunpack.c.h.b16 %v6173
    %v6424 = vunpack.c.l.b16 %v6174
    %v6425 = vunpack.c.h.b16 %v6174
    %v6426 = vunpack.c.l.b16 %v6175
    %v6427 = vunpack.c.h.b16 %v6175
    %v6428 = vunpack.c.l.b16 %v6176
    %v6429 = vunpack.c.h.b16 %v6176
    %v6430 = vunpack.c.l.b16 %v6177
    %v6431 = vunpack.c.l.b16 %v6178
    %v6432 = vunpack.c.h.b16 %v6178
    %v6433 = vunpack.c.l.b16 %v6179
    %v6434 = vunpack.c.h.b16 %v6179
    %v6435 = vunpack.c.l.b16 %v6180
    %v6436 = vunpack.c.h.b16 %v6180
    %v6437 = vunpack.c.l.b16 %v6181
    %v6438 = vunpack.c.h.b16 %v6181
    %v6439 = vunpack.c.l.b16 %v6182
    %v6440 = vunpack.c.h.b16 %v6182
    %v6441 = vunpack.c.l.b16 %v6183
    %v6442 = vunpack.c.l.b16 %v6184
    %v6443 = vunpack.c.h.b16 %v6184
    %v6444 = vunpack.c.l.b16 %v6185
    %v6445 = vunpack.c.h.b16 %v6185
    %v6446 = vunpack.c.l.b16 %v6186
    %v6447 = vunpack.c.h.b16 %v6186
    %v6448 = vunpack.c.l.b16 %v6187
    %v6449 = vunpack.c.h.b16 %v6187
    %v6450 = vunpack.c.l.b16 %v6188
    %v6451 = vunpack.c.h.b16 %v6188
    %v6452 = vunpack.c.l.b16 %v6189
    %v6453 = vunpack.c.l.b16 %v6190
    %v6454 = vunpack.c.h.b16 %v6190
    %v6455 = vunpack.c.l.b16 %v6191
    %v6456 = vunpack.c.h.b16 %v6191
    %v6457 = vunpack.c.l.b16 %v6192
    %v6458 = vunpack.c.h.b16 %v6192
    %v6459 = vunpack.c.l.b16 %v6193
    %v6460 = vunpack.c.h.b16 %v6193
    %v6461 = vunpack.c.l.b16 %v6194
    %v6462 = vunpack.c.h.b16 %v6194
    %v6463 = vunpack.c.l.b16 %v6195
    %v6464 = vunpack.c.l.b16 %v6196
    %v6465 = vunpack.c.h.b16 %v6196
    %v6466 = vunpack.c.l.b16 %v6197
    %v6467 = vunpack.c.h.b16 %v6197
    %v6468 = vunpack.c.l.b16 %v6198
    %v6469 = vunpack.c.h.b16 %v6198
    %v6470 = vunpack.c.l.b16 %v6199
    %v6471 = vunpack.c.h.b16 %v6199
    %v6472 = vunpack.c.l.b16 %v6200
    %v6473 = vunpack.c.h.b16 %v6200
    %v6474 = vunpack.c.l.b16 %v6201
    %v6475 = vunpack.c.l.b16 %v6202
    %v6476 = vunpack.c.h.b16 %v6202
    %v6477 = vunpack.c.l.b16 %v6203
    %v6478 = vunpack.c.h.b16 %v6203
    %v6479 = vunpack.c.l.b16 %v6204
    %v6480 = vunpack.c.h.b16 %v6204
    %v6481 = vunpack.c.l.b16 %v6205
    %v6482 = vunpack.c.h.b16 %v6205
    %v6483 = vunpack.c.l.b16 %v6206
    %v6484 = vunpack.c.h.b16 %v6206
    %v6485 = vunpack.c.l.b16 %v6207
    %v6486 = vpack.c.b16 %v6321, %v6310
    %v6487 = vpack.c.b16 %v6322, %v6311
    %v6488 = vpack.c.b16 %v6323, %v6312
    %v6489 = vpack.c.b16 %v6324, %v6313
    %v6490 = vpack.c.b16 %v6325, %v6314
    %v6491 = vpack.c.b16 %v6326, %v6315
    %v6492 = vpack.c.b16 %v6327, %v6316
    %v6493 = vpack.c.b16 %v6328, %v6317
    %v6494 = vpack.c.b16 %v6329, %v6318
    %v6495 = vpack.c.b16 %v6330, %v6319
    %v6496 = vpack.c.b16 %v6331, %v6320
    %v6497 = vpack.c.b16 %v6343, %v6332
    %v6498 = vpack.c.b16 %v6344, %v6333
    %v6499 = vpack.c.b16 %v6345, %v6334
    %v6500 = vpack.c.b16 %v6346, %v6335
    %v6501 = vpack.c.b16 %v6347, %v6336
    %v6502 = vpack.c.b16 %v6348, %v6337
    %v6503 = vpack.c.b16 %v6349, %v6338
    %v6504 = vpack.c.b16 %v6350, %v6339
    %v6505 = vpack.c.b16 %v6351, %v6340
    %v6506 = vpack.c.b16 %v6352, %v6341
    %v6507 = vpack.c.b16 %v6353, %v6342
    %v6508 = vpack.c.b16 %v6365, %v6354
    %v6509 = vpack.c.b16 %v6366, %v6355
    %v6510 = vpack.c.b16 %v6367, %v6356
    %v6511 = vpack.c.b16 %v6368, %v6357
    %v6512 = vpack.c.b16 %v6369, %v6358
    %v6513 = vpack.c.b16 %v6370, %v6359
    %v6514 = vpack.c.b16 %v6371, %v6360
    %v6515 = vpack.c.b16 %v6372, %v6361
    %v6516 = vpack.c.b16 %v6373, %v6362
    %v6517 = vpack.c.b16 %v6374, %v6363
    %v6518 = vpack.c.b16 %v6375, %v6364
    %v6519 = vpack.c.b16 %v6387, %v6376
    %v6520 = vpack.c.b16 %v6388, %v6377
    %v6521 = vpack.c.b16 %v6389, %v6378
    %v6522 = vpack.c.b16 %v6390, %v6379
    %v6523 = vpack.c.b16 %v6391, %v6380
    %v6524 = vpack.c.b16 %v6392, %v6381
    %v6525 = vpack.c.b16 %v6393, %v6382
    %v6526 = vpack.c.b16 %v6394, %v6383
    %v6527 = vpack.c.b16 %v6395, %v6384
    %v6528 = vpack.c.b16 %v6396, %v6385
    %v6529 = vpack.c.b16 %v6397, %v6386
    %v6530 = vpack.c.b16 %v6409, %v6398
    %v6531 = vpack.c.b16 %v6410, %v6399
    %v6532 = vpack.c.b16 %v6411, %v6400
    %v6533 = vpack.c.b16 %v6412, %v6401
    %v6534 = vpack.c.b16 %v6413, %v6402
    %v6535 = vpack.c.b16 %v6414, %v6403
    %v6536 = vpack.c.b16 %v6415, %v6404
    %v6537 = vpack.c.b16 %v6416, %v6405
    %v6538 = vpack.c.b16 %v6417, %v6406
    %v6539 = vpack.c.b16 %v6418, %v6407
    %v6540 = vpack.c.b16 %v6419, %v6408
    %v6541 = vpack.c.b16 %v6431, %v6420
    %v6542 = vpack.c.b16 %v6432, %v6421
    %v6543 = vpack.c.b16 %v6433, %v6422
    %v6544 = vpack.c.b16 %v6434, %v6423
    %v6545 = vpack.c.b16 %v6435, %v6424
    %v6546 = vpack.c.b16 %v6436, %v6425
    %v6547 = vpack.c.b16 %v6437, %v6426
    %v6548 = vpack.c.b16 %v6438, %v6427
    %v6549 = vpack.c.b16 %v6439, %v6428
    %v6550 = vpack.c.b16 %v6440, %v6429
    %v6551 = vpack.c.b16 %v6441, %v6430
    %v6552 = vpack.c.b16 %v6453, %v6442
    %v6553 = vpack.c.b16 %v6454, %v6443
    %v6554 = vpack.c.b16 %v6455, %v6444
    %v6555 = vpack.c.b16 %v6456, %v6445
    %v6556 = vpack.c.b16 %v6457, %v6446
    %v6557 = vpack.c.b16 %v6458, %v6447
    %v6558 = vpack.c.b16 %v6459, %v6448
    %v6559 = vpack.c.b16 %v6460, %v6449
    %v6560 = vpack.c.b16 %v6461, %v6450
    %v6561 = vpack.c.b16 %v6462, %v6451
    %v6562 = vpack.c.b16 %v6463, %v6452
    %v6563 = vpack.c.b16 %v6475, %v6464
    %v6564 = vpack.c.b16 %v6476, %v6465
    %v6565 = vpack.c.b16 %v6477, %v6466
    %v6566 = vpack.c.b16 %v6478, %v6467
    %v6567 = vpack.c.b16 %v6479, %v6468
    %v6568 = vpack.c.b16 %v6480, %v6469
    %v6569 = vpack.c.b16 %v6481, %v6470
    %v6570 = vpack.c.b16 %v6482, %v6471
    %v6571 = vpack.c.b16 %v6483, %v6472
    %v6572 = vpack.c.b16 %v6484, %v6473
    %v6573 = vpack.c.b16 %v6485, %v6474
    %6662 = vmatprep.subr.bf16.mxu0 %v6564
    %6663 = vmatpush1.bf16.msra.mxu0 %v6563
    %6664 = vmatprep.subr.bf16.mxu0 %v6553
    %6665 = vmatpush1.bf16.msra.mxu0 %v6552
    %6666 = vmatprep.subr.bf16.mxu0 %v6542
    %6667 = vmatpush1.bf16.msra.mxu0 %v6541
    %6668 = vmatprep.subr.bf16.mxu0 %v6531
    %6669 = vmatpush1.bf16.msra.mxu0 %v6530
    %6670 = vmatprep.subr.bf16.mxu0 %v6520
    %6671 = vmatpush1.bf16.msra.mxu0 %v6519
    %6672 = vmatprep.subr.bf16.mxu0 %v6509
    %6673 = vmatpush1.bf16.msra.mxu0 %v6508
    %6674 = vmatprep.subr.bf16.mxu0 %v6498
    %6675 = vmatpush1.bf16.msra.mxu0 %v6497
    %6676 = vmatprep.subr.bf16.mxu0 %v6487
    %6677 = vmatpush1.bf16.msra.mxu0 %v6486
    %6678 = vmatprep.subr.bf16.mxu0 0
    %6679 = vmatpush2.bf16.msra.mxu0 0
    %6680 = vmatprep.subr.bf16.mxu0 0
    %6681 = vmatpush2.bf16.msra.mxu0 0
    %6682 = vmatprep.subr.bf16.mxu0 0
    %6683 = vmatpush2.bf16.msra.mxu0 0
    %6684 = vmatprep.subr.bf16.mxu0 0
    %6685 = vmatpush2.bf16.msra.mxu0 0
    %6686 = vmatprep.subr.bf16.mxu0 0
    %6687 = vmatpush2.bf16.msra.mxu0 0
    %6688 = vmatprep.subr.bf16.mxu0 0
    %6689 = vmatpush2.bf16.msra.mxu0 0
    %6690 = vmatprep.subr.bf16.mxu0 0
    %6691 = vmatpush2.bf16.msra.mxu0 0
    %6692 = vmatprep.subr.bf16.mxu0 0
    %6693 = vmatpush2.bf16.msra.mxu0 0
    %6694 = vmatprep.mubr.bf16.mxu0 0
    %6695 = vmatmul.mubr.bf16.gmra.mxu0 %v6212
    %v6696 = vpop.f32.mrf.mxu0
    %v6697 = vadd.f32 0.0, %v6696
    %v6698 = vpop.f32.mrf.mxu0
    %v6699 = vadd.f32 0.0, %v6698
    %v6700 = vpop.f32.mrf.mxu0
    %v6701 = vadd.f32 0.0, %v6700
    %v6702 = vpop.f32.mrf.mxu0
    %v6703 = vadd.f32 0.0, %v6702
    %6704 = vdwg.mxu0
    %6705 = vmatprep.subr.bf16.mxu0 %v6566
    %6706 = vmatpush1.bf16.msra.mxu0 %v6565
    %6707 = vmatprep.subr.bf16.mxu0 %v6555
    %6708 = vmatpush1.bf16.msra.mxu0 %v6554
    %6709 = vmatprep.subr.bf16.mxu0 %v6544
    %6710 = vmatpush1.bf16.msra.mxu0 %v6543
    %6711 = vmatprep.subr.bf16.mxu0 %v6533
    %6712 = vmatpush1.bf16.msra.mxu0 %v6532
    %6713 = vmatprep.subr.bf16.mxu0 %v6522
    %6714 = vmatpush1.bf16.msra.mxu0 %v6521
    %6715 = vmatprep.subr.bf16.mxu0 %v6511
    %6716 = vmatpush1.bf16.msra.mxu0 %v6510
    %6717 = vmatprep.subr.bf16.mxu0 %v6500
    %6718 = vmatpush1.bf16.msra.mxu0 %v6499
    %6719 = vmatprep.subr.bf16.mxu0 %v6489
    %6720 = vmatpush1.bf16.msra.mxu0 %v6488
    %6721 = vmatprep.subr.bf16.mxu0 0
    %6722 = vmatpush2.bf16.msra.mxu0 0
    %6723 = vmatprep.subr.bf16.mxu0 0
    %6724 = vmatpush2.bf16.msra.mxu0 0
    %6725 = vmatprep.subr.bf16.mxu0 0
    %6726 = vmatpush2.bf16.msra.mxu0 0
    %6727 = vmatprep.subr.bf16.mxu0 0
    %6728 = vmatpush2.bf16.msra.mxu0 0
    %6729 = vmatprep.subr.bf16.mxu0 0
    %6730 = vmatpush2.bf16.msra.mxu0 0
    %6731 = vmatprep.subr.bf16.mxu0 0
    %6732 = vmatpush2.bf16.msra.mxu0 0
    %6733 = vmatprep.subr.bf16.mxu0 0
    %6734 = vmatpush2.bf16.msra.mxu0 0
    %6735 = vmatprep.subr.bf16.mxu0 0
    %6736 = vmatpush2.bf16.msra.mxu0 0
    %6737 = vmatprep.mubr.bf16.mxu0 0
    %6738 = vmatmul.mubr.bf16.gmra.mxu0 %v6212
    %v6739 = vpop.f32.mrf.mxu0
    %v6740 = vadd.f32 0.0, %v6739
    %v6741 = vpop.f32.mrf.mxu0
    %v6742 = vadd.f32 0.0, %v6741
    %v6743 = vpop.f32.mrf.mxu0
    %v6744 = vadd.f32 0.0, %v6743
    %v6745 = vpop.f32.mrf.mxu0
    %v6746 = vadd.f32 0.0, %v6745
    %6747 = vdwg.mxu0
    %6748 = vmatprep.subr.bf16.mxu0 %v6568
    %6749 = vmatpush1.bf16.msra.mxu0 %v6567
    %6750 = vmatprep.subr.bf16.mxu0 %v6557
    %6751 = vmatpush1.bf16.msra.mxu0 %v6556
    %6752 = vmatprep.subr.bf16.mxu0 %v6546
    %6753 = vmatpush1.bf16.msra.mxu0 %v6545
    %6754 = vmatprep.subr.bf16.mxu0 %v6535
    %6755 = vmatpush1.bf16.msra.mxu0 %v6534
    %6756 = vmatprep.subr.bf16.mxu0 %v6524
    %6757 = vmatpush1.bf16.msra.mxu0 %v6523
    %6758 = vmatprep.subr.bf16.mxu0 %v6513
    %6759 = vmatpush1.bf16.msra.mxu0 %v6512
    %6760 = vmatprep.subr.bf16.mxu0 %v6502
    %6761 = vmatpush1.bf16.msra.mxu0 %v6501
    %6762 = vmatprep.subr.bf16.mxu0 %v6491
    %6763 = vmatpush1.bf16.msra.mxu0 %v6490
    %6764 = vmatprep.subr.bf16.mxu0 0
    %6765 = vmatpush2.bf16.msra.mxu0 0
    %6766 = vmatprep.subr.bf16.mxu0 0
    %6767 = vmatpush2.bf16.msra.mxu0 0
    %6768 = vmatprep.subr.bf16.mxu0 0
    %6769 = vmatpush2.bf16.msra.mxu0 0
    %6770 = vmatprep.subr.bf16.mxu0 0
    %6771 = vmatpush2.bf16.msra.mxu0 0
    %6772 = vmatprep.subr.bf16.mxu0 0
    %6773 = vmatpush2.bf16.msra.mxu0 0
    %6774 = vmatprep.subr.bf16.mxu0 0
    %6775 = vmatpush2.bf16.msra.mxu0 0
    %6776 = vmatprep.subr.bf16.mxu0 0
    %6777 = vmatpush2.bf16.msra.mxu0 0
    %6778 = vmatprep.subr.bf16.mxu0 0
    %6779 = vmatpush2.bf16.msra.mxu0 0
    %6780 = vmatprep.mubr.bf16.mxu0 0
    %6781 = vmatmul.mubr.bf16.gmra.mxu0 %v6212
    %v6782 = vpop.f32.mrf.mxu0
    %v6783 = vadd.f32 0.0, %v6782
    %v6784 = vpop.f32.mrf.mxu0
    %v6785 = vadd.f32 0.0, %v6784
    %v6786 = vpop.f32.mrf.mxu0
    %v6787 = vadd.f32 0.0, %v6786
    %v6788 = vpop.f32.mrf.mxu0
    %v6789 = vadd.f32 0.0, %v6788
    %6790 = vdwg.mxu0
    %6791 = vmatprep.subr.bf16.mxu0 %v6570
    %6792 = vmatpush1.bf16.msra.mxu0 %v6569
    %6793 = vmatprep.subr.bf16.mxu0 %v6559
    %6794 = vmatpush1.bf16.msra.mxu0 %v6558
    %6795 = vmatprep.subr.bf16.mxu0 %v6548
    %6796 = vmatpush1.bf16.msra.mxu0 %v6547
    %6797 = vmatprep.subr.bf16.mxu0 %v6537
    %6798 = vmatpush1.bf16.msra.mxu0 %v6536
    %6799 = vmatprep.subr.bf16.mxu0 %v6526
    %6800 = vmatpush1.bf16.msra.mxu0 %v6525
    %6801 = vmatprep.subr.bf16.mxu0 %v6515
    %6802 = vmatpush1.bf16.msra.mxu0 %v6514
    %6803 = vmatprep.subr.bf16.mxu0 %v6504
    %6804 = vmatpush1.bf16.msra.mxu0 %v6503
    %6805 = vmatprep.subr.bf16.mxu0 %v6493
    %6806 = vmatpush1.bf16.msra.mxu0 %v6492
    %6807 = vmatprep.subr.bf16.mxu0 0
    %6808 = vmatpush2.bf16.msra.mxu0 0
    %6809 = vmatprep.subr.bf16.mxu0 0
    %6810 = vmatpush2.bf16.msra.mxu0 0
    %6811 = vmatprep.subr.bf16.mxu0 0
    %6812 = vmatpush2.bf16.msra.mxu0 0
    %6813 = vmatprep.subr.bf16.mxu0 0
    %6814 = vmatpush2.bf16.msra.mxu0 0
    %6815 = vmatprep.subr.bf16.mxu0 0
    %6816 = vmatpush2.bf16.msra.mxu0 0
    %6817 = vmatprep.subr.bf16.mxu0 0
    %6818 = vmatpush2.bf16.msra.mxu0 0
    %6819 = vmatprep.subr.bf16.mxu0 0
    %6820 = vmatpush2.bf16.msra.mxu0 0
    %6821 = vmatprep.subr.bf16.mxu0 0
    %6822 = vmatpush2.bf16.msra.mxu0 0
    %6823 = vmatprep.mubr.bf16.mxu0 0
    %6824 = vmatmul.mubr.bf16.gmra.mxu0 %v6212
    %v6825 = vpop.f32.mrf.mxu0
    %v6826 = vadd.f32 0.0, %v6825
    %v6827 = vpop.f32.mrf.mxu0
    %v6828 = vadd.f32 0.0, %v6827
    %v6829 = vpop.f32.mrf.mxu0
    %v6830 = vadd.f32 0.0, %v6829
    %v6831 = vpop.f32.mrf.mxu0
    %v6832 = vadd.f32 0.0, %v6831
    %6833 = vdwg.mxu0
    %6834 = vmatprep.subr.bf16.mxu0 %v6572
    %6835 = vmatpush1.bf16.msra.mxu0 %v6571
    %6836 = vmatprep.subr.bf16.mxu0 %v6561
    %6837 = vmatpush1.bf16.msra.mxu0 %v6560
    %6838 = vmatprep.subr.bf16.mxu0 %v6550
    %6839 = vmatpush1.bf16.msra.mxu0 %v6549
    %6840 = vmatprep.subr.bf16.mxu0 %v6539
    %6841 = vmatpush1.bf16.msra.mxu0 %v6538
    %6842 = vmatprep.subr.bf16.mxu0 %v6528
    %6843 = vmatpush1.bf16.msra.mxu0 %v6527
    %6844 = vmatprep.subr.bf16.mxu0 %v6517
    %6845 = vmatpush1.bf16.msra.mxu0 %v6516
    %6846 = vmatprep.subr.bf16.mxu0 %v6506
    %6847 = vmatpush1.bf16.msra.mxu0 %v6505
    %6848 = vmatprep.subr.bf16.mxu0 %v6495
    %6849 = vmatpush1.bf16.msra.mxu0 %v6494
    %6850 = vmatprep.subr.bf16.mxu0 0
    %6851 = vmatpush2.bf16.msra.mxu0 0
    %6852 = vmatprep.subr.bf16.mxu0 0
    %6853 = vmatpush2.bf16.msra.mxu0 0
    %6854 = vmatprep.subr.bf16.mxu0 0
    %6855 = vmatpush2.bf16.msra.mxu0 0
    %6856 = vmatprep.subr.bf16.mxu0 0
    %6857 = vmatpush2.bf16.msra.mxu0 0
    %6858 = vmatprep.subr.bf16.mxu0 0
    %6859 = vmatpush2.bf16.msra.mxu0 0
    %6860 = vmatprep.subr.bf16.mxu0 0
    %6861 = vmatpush2.bf16.msra.mxu0 0
    %6862 = vmatprep.subr.bf16.mxu0 0
    %6863 = vmatpush2.bf16.msra.mxu0 0
    %6864 = vmatprep.subr.bf16.mxu0 0
    %6865 = vmatpush2.bf16.msra.mxu0 0
    %6866 = vmatprep.mubr.bf16.mxu0 0
    %6867 = vmatmul.mubr.bf16.gmra.mxu0 %v6212
    %v6868 = vpop.f32.mrf.mxu0
    %v6869 = vadd.f32 0.0, %v6868
    %v6870 = vpop.f32.mrf.mxu0
    %v6871 = vadd.f32 0.0, %v6870
    %v6872 = vpop.f32.mrf.mxu0
    %v6873 = vadd.f32 0.0, %v6872
    %v6874 = vpop.f32.mrf.mxu0
    %v6875 = vadd.f32 0.0, %v6874
    %6876 = vdwg.mxu0
    %6877 = vmatprep.subr.bf16.mxu0 0
    %6878 = vmatpush1.bf16.msra.mxu0 %v6573
    %6879 = vmatprep.subr.bf16.mxu0 0
    %6880 = vmatpush1.bf16.msra.mxu0 %v6562
    %6881 = vmatprep.subr.bf16.mxu0 0
    %6882 = vmatpush1.bf16.msra.mxu0 %v6551
    %6883 = vmatprep.subr.bf16.mxu0 0
    %6884 = vmatpush1.bf16.msra.mxu0 %v6540
    %6885 = vmatprep.subr.bf16.mxu0 0
    %6886 = vmatpush1.bf16.msra.mxu0 %v6529
    %6887 = vmatprep.subr.bf16.mxu0 0
    %6888 = vmatpush1.bf16.msra.mxu0 %v6518
    %6889 = vmatprep.subr.bf16.mxu0 0
    %6890 = vmatpush1.bf16.msra.mxu0 %v6507
    %6891 = vmatprep.subr.bf16.mxu0 0
    %6892 = vmatpush1.bf16.msra.mxu0 %v6496
    %6893 = vmatprep.subr.bf16.mxu0 0
    %6894 = vmatpush2.bf16.msra.mxu0 0
    %6895 = vmatprep.subr.bf16.mxu0 0
    %6896 = vmatpush2.bf16.msra.mxu0 0
    %6897 = vmatprep.subr.bf16.mxu0 0
    %6898 = vmatpush2.bf16.msra.mxu0 0
    %6899 = vmatprep.subr.bf16.mxu0 0
    %6900 = vmatpush2.bf16.msra.mxu0 0
    %6901 = vmatprep.subr.bf16.mxu0 0
    %6902 = vmatpush2.bf16.msra.mxu0 0
    %6903 = vmatprep.subr.bf16.mxu0 0
    %6904 = vmatpush2.bf16.msra.mxu0 0
    %6905 = vmatprep.subr.bf16.mxu0 0
    %6906 = vmatpush2.bf16.msra.mxu0 0
    %6907 = vmatprep.subr.bf16.mxu0 0
    %6908 = vmatpush2.bf16.msra.mxu0 0
    %6909 = vmatprep.mubr.bf16.mxu0 0
    %6910 = vmatmul.mubr.bf16.gmra.mxu0 %v6212
    %v6911 = vpop.f32.mrf.mxu0
    %v6912 = vadd.f32 0.0, %v6911
    %v6913 = vpop.f32.mrf.mxu0
    %v6914 = vpop.f32.mrf.mxu0
    %v6915 = vadd.f32 0.0, %v6914
    %v6916 = vpop.f32.mrf.mxu0
    %6917 = vdwg.mxu0
    %s6918 = scalar_lea.vmem %s4, 112
    %v6919 = vld [vmem:[%s6918] sm:$0xff]
    %v6920 = vld [vmem:[%s6918 + $0x8] sm:$0xff]
    %6922 = vset.pattern.permute.xlu0 0
    %6923 = vperm.xlu0 %6922, %v6919
    %v6924 = vpop.permute.xlu0 %6923
    %6927 = vset.pattern.permute.xlu0 0
    %6928 = vperm.xlu0 %6927, %v6920
    %v6929 = vpop.permute.xlu0 %6928
    %v6931 = vadd.f32 %v6697, %v6924
    %v6932 = vadd.f32 %v6699, %v6924
    %v6933 = vadd.f32 %v6740, %v6924
    %v6934 = vadd.f32 %v6742, %v6924
    %v6935 = vadd.f32 %v6783, %v6924
    %v6936 = vadd.f32 %v6701, %v6929
    %v6937 = vadd.f32 %v6703, %v6929
    %v6938 = vadd.f32 %v6744, %v6929
    %v6939 = vadd.f32 %v6746, %v6929
    %v6940 = vadd.f32 %v6787, %v6929
    %v6941 = vtanh.pop %v6931
    %v6942 = vtanh.pop %v6932
    %v6943 = vtanh.pop %v6933
    %v6944 = vtanh.pop %v6934
    %v6945 = vtanh.pop %v6935
    %v6946 = vtanh.pop %v6936
    %v6947 = vtanh.pop %v6937
    %v6948 = vtanh.pop %v6938
    %v6949 = vtanh.pop %v6939
    %v6950 = vtanh.pop %v6940
    %v6951 = vmul.f32 %v6941, %v6941
    %v6952 = vmul.f32 %v6942, %v6942
    %v6953 = vmul.f32 %v6946, %v6946
    %v6954 = vmul.f32 %v6947, %v6947
    %v6955 = vsub.f32 1.0, %v6951
    %v6956 = vsub.f32 1.0, %v6952
    %v6957 = vsub.f32 1.0, %v6953
    %v6958 = vsub.f32 1.0, %v6954
    %v6959 = vmul.f32 %v6955, %v6785
    %v6960 = vmul.f32 %v6956, %v6826
    %v6961 = vmul.f32 %v6957, %v6789
    %v6962 = vmul.f32 %v6958, %v6830
    %v6963 = vmul.f32 %v6955, %v6828
    %v6964 = vmul.f32 %v6956, %v6869
    %v6965 = vmul.f32 %v6957, %v6832
    %v6966 = vmul.f32 %v6958, %v6873
    %v6967 = vmul.f32 %v6955, %v6871
    %v6968 = vmul.f32 %v6956, %v6912
    %v6969 = vmul.f32 %v6957, %v6875
    %v6970 = vmul.f32 %v6958, %v6915
    %v6971 = vmul.f32 %v6941, %v6785
    %v6972 = vmul.f32 %v6942, %v6826
    %v6973 = vmul.f32 %v6946, %v6789
    %v6974 = vmul.f32 %v6947, %v6830
    %v6975 = vmul.f32 %v6971, 2.0
    %v6976 = vmul.f32 %v6972, 2.0
    %v6977 = vmul.f32 %v6973, 2.0
    %v6978 = vmul.f32 %v6974, 2.0
    %v6979 = vmul.f32 %v6975, %v6959
    %v6980 = vmul.f32 %v6976, %v6960
    %v6981 = vmul.f32 %v6977, %v6961
    %v6982 = vmul.f32 %v6978, %v6962
    %v6983 = vsub.f32 %v6967, %v6979
    %v6984 = vsub.f32 %v6968, %v6980
    %v6985 = vsub.f32 %v6969, %v6981
    %v6986 = vsub.f32 %v6970, %v6982
    %v6987 = vpack.c.bf16 %v6946, %v6941
    %v6988 = vpack.c.bf16 %v6947, %v6942
    %v6989 = vpack.c.bf16 %v6948, %v6943
    %v6990 = vpack.c.bf16 %v6949, %v6944
    %v6991 = vpack.c.bf16 %v6950, %v6945
    %v6997 = vunpack.c.l.b16 %v6987
    %v6998 = vunpack.c.l.b16 %v6988
    %v6999 = vunpack.c.l.b16 %v6989
    %v7000 = vunpack.c.l.b16 %v6990
    %v7001 = vunpack.c.l.b16 %v6991
    %v7002 = vunpack.c.h.b16 %v6987
    %v7003 = vunpack.c.h.b16 %v6988
    %v7004 = vunpack.c.h.b16 %v6989
    %v7005 = vunpack.c.h.b16 %v6990
    %v7006 = vunpack.c.h.b16 %v6991
    %v7007 = vpack.c.b16 %v6998, %v6997
    %v7008 = vpack.c.b16 %v7000, %v6999
    %v7009 = vpack.c.b16 %v7001, %v7001
    %v7010 = vpack.c.b16 %v7003, %v7002
    %v7011 = vpack.c.b16 %v7005, %v7004
    %v7012 = vpack.c.b16 %v7006, %v7006
    %7019 = vst [vmem:[#allocation2] sm:$0xff] %v7007
    %7020 = vst [vmem:[#allocation2 + $0x8] sm:$0xff] %v7008
    %7021 = vst [vmem:[#allocation2 + $0x10] sm:$0xf] %v7009
    %7022 = vst [vmem:[#allocation2 + $0x2c] sm:$0xff] %v7010
    %7023 = vst [vmem:[#allocation2 + $0x34] sm:$0xff] %v7011
    %7024 = vst [vmem:[#allocation2 + $0x3c] sm:$0xf] %v7012
    %v7025 = vpack.c.bf16 %v6961, %v6959
    %v7026 = vpack.c.bf16 %v6962, %v6960
    %v7029 = vunpack.c.l.b16 %v7025
    %v7030 = vunpack.c.l.b16 %v7026
    %v7031 = vunpack.c.h.b16 %v7025
    %v7032 = vunpack.c.h.b16 %v7026
    %v7033 = vpack.c.b16 %v7030, %v7029
    %v7034 = vpack.c.b16 %v7032, %v7031
    %7037 = vst [vmem:[#allocation2 + $0x14] sm:$0xff] %v7033
    %7038 = vst [vmem:[#allocation2 + $0x40] sm:$0xff] %v7034
    %v7039 = vpack.c.bf16 %v6965, %v6963
    %v7040 = vpack.c.bf16 %v6966, %v6964
    %v7043 = vunpack.c.l.b16 %v7039
    %v7044 = vunpack.c.l.b16 %v7040
    %v7045 = vunpack.c.h.b16 %v7039
    %v7046 = vunpack.c.h.b16 %v7040
    %v7047 = vpack.c.b16 %v7044, %v7043
    %v7048 = vpack.c.b16 %v7046, %v7045
    %7051 = vst [vmem:[#allocation2 + $0x1c] sm:$0xff] %v7047
    %7052 = vst [vmem:[#allocation2 + $0x48] sm:$0xff] %v7048
    %v7053 = vpack.c.bf16 %v6985, %v6983
    %v7054 = vpack.c.bf16 %v6986, %v6984
    %v7057 = vunpack.c.l.b16 %v7053
    %v7058 = vunpack.c.l.b16 %v7054
    %v7059 = vunpack.c.h.b16 %v7053
    %v7060 = vunpack.c.h.b16 %v7054
    %v7061 = vpack.c.b16 %v7058, %v7057
    %v7062 = vpack.c.b16 %v7060, %v7059
    %7065 = vst [vmem:[#allocation2 + $0x24] sm:$0xff] %v7061
    %7066 = vst [vmem:[#allocation2 + $0x50] sm:$0xff] %v7062
    %v7067 = vld [vmem:[#allocation2] sm:$0xff]
    %v7068 = vld [vmem:[#allocation2 + $0x8] sm:$0xff]
    %v7069 = vld [vmem:[#allocation2 + $0x10] sm:$0xff]
    %v7070 = vld [vmem:[#allocation2 + $0x18] sm:$0xff]
    %v7071 = vld [vmem:[#allocation2 + $0x20] sm:$0xff]
    %v7072 = vld [vmem:[#allocation2 + $0x28] sm:$0xf]
    %v7073 = vld [vmem:[#allocation2 + $0x2c] sm:$0xff]
    %v7074 = vld [vmem:[#allocation2 + $0x34] sm:$0xff]
    %v7075 = vld [vmem:[#allocation2 + $0x3c] sm:$0xff]
    %v7076 = vld [vmem:[#allocation2 + $0x44] sm:$0xff]
    %v7077 = vld [vmem:[#allocation2 + $0x4c] sm:$0xff]
    %v7078 = vld [vmem:[#allocation2 + $0x54] sm:$0xf]
    %v7079 = vunpack.c.l.bf16 %v7067
    %v7080 = vunpack.c.h.bf16 %v7067
    %v7081 = vunpack.c.l.bf16 %v7068
    %v7082 = vunpack.c.h.bf16 %v7068
    %v7083 = vunpack.c.l.bf16 %v7069
    %v7084 = vunpack.c.h.bf16 %v7069
    %v7085 = vunpack.c.l.bf16 %v7070
    %v7086 = vunpack.c.h.bf16 %v7070
    %v7087 = vunpack.c.l.bf16 %v7071
    %v7088 = vunpack.c.h.bf16 %v7071
    %v7089 = vunpack.c.l.bf16 %v7072
    %v7090 = vunpack.c.l.bf16 %v7073
    %v7091 = vunpack.c.h.bf16 %v7073
    %v7092 = vunpack.c.l.bf16 %v7074
    %v7093 = vunpack.c.h.bf16 %v7074
    %v7094 = vunpack.c.l.bf16 %v7075
    %v7095 = vunpack.c.h.bf16 %v7075
    %v7096 = vunpack.c.l.bf16 %v7076
    %v7097 = vunpack.c.h.bf16 %v7076
    %v7098 = vunpack.c.l.bf16 %v7077
    %v7099 = vunpack.c.h.bf16 %v7077
    %v7100 = vunpack.c.l.bf16 %v7078
    %v7101 = vld [vmem:[%s5] sm:$0xff]
    %v7102 = vld [vmem:[%s5 + $0x8] sm:$0xff]
    %7104 = vset.pattern.permute.xlu0 0
    %7105 = vperm.xlu0 %7104, %v7101
    %v7106 = vpop.permute.xlu0 %7105
    %7109 = vset.pattern.permute.xlu0 0
    %7110 = vperm.xlu0 %7109, %v7102
    %v7111 = vpop.permute.xlu0 %7110
    %v7113 = vmul.f32 %v7079, %v7106
    %v7114 = vmul.f32 %v7080, %v7106
    %v7115 = vmul.f32 %v7081, %v7106
    %v7116 = vmul.f32 %v7082, %v7106
    %v7117 = vmul.f32 %v7083, %v7106
    %v7118 = vmul.f32 %v7084, %v7106
    %v7119 = vmul.f32 %v7085, %v7106
    %v7120 = vmul.f32 %v7086, %v7106
    %v7121 = vmul.f32 %v7087, %v7106
    %v7122 = vmul.f32 %v7088, %v7106
    %v7123 = vmul.f32 %v7089, %v7106
    %v7124 = vmul.f32 %v7090, %v7111
    %v7125 = vmul.f32 %v7091, %v7111
    %v7126 = vmul.f32 %v7092, %v7111
    %v7127 = vmul.f32 %v7093, %v7111
    %v7128 = vmul.f32 %v7094, %v7111
    %v7129 = vmul.f32 %v7095, %v7111
    %v7130 = vmul.f32 %v7096, %v7111
    %v7131 = vmul.f32 %v7097, %v7111
    %v7132 = vmul.f32 %v7098, %v7111
    %v7133 = vmul.f32 %v7099, %v7111
    %v7134 = vmul.f32 %v7100, %v7111
    %v7135 = vadd.f32 %v7113, %v7124
    %v7136 = vrot.slane %v7135, 4
    %v7137 = vadd.f32 %v7135, %v7136
    %v7138 = vrot.slane %v7137, 2
    %v7139 = vadd.f32 %v7137, %v7138
    %v7140 = vrot.slane %v7139, 1
    %v7141 = vadd.f32 %v7139, %v7140
    %v7142 = vadd.f32 %v7114, %v7125
    %v7143 = vrot.slane %v7142, 4
    %v7144 = vadd.f32 %v7142, %v7143
    %v7145 = vrot.slane %v7144, 2
    %v7146 = vadd.f32 %v7144, %v7145
    %v7147 = vrot.slane %v7146, 1
    %v7148 = vadd.f32 %v7146, %v7147
    %v7149 = vadd.f32 %v7115, %v7126
    %v7150 = vrot.slane %v7149, 4
    %v7151 = vadd.f32 %v7149, %v7150
    %v7152 = vrot.slane %v7151, 2
    %v7153 = vadd.f32 %v7151, %v7152
    %v7154 = vrot.slane %v7153, 1
    %v7155 = vadd.f32 %v7153, %v7154
    %v7156 = vadd.f32 %v7116, %v7127
    %v7157 = vrot.slane %v7156, 4
    %v7158 = vadd.f32 %v7156, %v7157
    %v7159 = vrot.slane %v7158, 2
    %v7160 = vadd.f32 %v7158, %v7159
    %v7161 = vrot.slane %v7160, 1
    %v7162 = vadd.f32 %v7160, %v7161
    %v7163 = vadd.f32 %v7117, %v7128
    %v7164 = vrot.slane %v7163, 4
    %v7165 = vadd.f32 %v7163, %v7164
    %v7166 = vrot.slane %v7165, 2
    %v7167 = vadd.f32 %v7165, %v7166
    %v7168 = vrot.slane %v7167, 1
    %v7169 = vadd.f32 %v7167, %v7168
    %v7170 = vadd.f32 %v7118, %v7129
    %v7171 = vrot.slane %v7170, 4
    %v7172 = vadd.f32 %v7170, %v7171
    %v7173 = vrot.slane %v7172, 2
    %v7174 = vadd.f32 %v7172, %v7173
    %v7175 = vrot.slane %v7174, 1
    %v7176 = vadd.f32 %v7174, %v7175
    %v7177 = vadd.f32 %v7119, %v7130
    %v7178 = vrot.slane %v7177, 4
    %v7179 = vadd.f32 %v7177, %v7178
    %v7180 = vrot.slane %v7179, 2
    %v7181 = vadd.f32 %v7179, %v7180
    %v7182 = vrot.slane %v7181, 1
    %v7183 = vadd.f32 %v7181, %v7182
    %v7184 = vadd.f32 %v7120, %v7131
    %v7185 = vrot.slane %v7184, 4
    %v7186 = vadd.f32 %v7184, %v7185
    %v7187 = vrot.slane %v7186, 2
    %v7188 = vadd.f32 %v7186, %v7187
    %v7189 = vrot.slane %v7188, 1
    %v7190 = vadd.f32 %v7188, %v7189
    %v7191 = vadd.f32 %v7121, %v7132
    %v7192 = vrot.slane %v7191, 4
    %v7193 = vadd.f32 %v7191, %v7192
    %v7194 = vrot.slane %v7193, 2
    %v7195 = vadd.f32 %v7193, %v7194
    %v7196 = vrot.slane %v7195, 1
    %v7197 = vadd.f32 %v7195, %v7196
    %v7198 = vadd.f32 %v7122, %v7133
    %v7199 = vrot.slane %v7198, 4
    %v7200 = vadd.f32 %v7198, %v7199
    %v7201 = vrot.slane %v7200, 2
    %v7202 = vadd.f32 %v7200, %v7201
    %v7203 = vrot.slane %v7202, 1
    %v7204 = vadd.f32 %v7202, %v7203
    %v7205 = vadd.f32 %v7123, %v7134
    %v7206 = vrot.slane %v7205, 4
    %v7207 = vadd.f32 %v7205, %v7206
    %v7208 = vrot.slane %v7207, 2
    %v7209 = vadd.f32 %v7207, %v7208
    %v7210 = vrot.slane %v7209, 1
    %v7211 = vadd.f32 %v7209, %v7210
    %v7212 = vld [vmem:[#allocation3] sm:$0x1]
    %7214 = vset.pattern.permute.xlu0 0
    %7215 = vperm.xlu0 %7214, %v7212
    %v7216 = vpop.permute.xlu0 %7215
    %v7218 = vlaneseq
    %v7219 = vshrl.u32 %v7218, 7
    %v7220 = vsub.s32 0, %v7219
    %v7221 = vrot.slane %v7216, %v7220
    %v7222 = vadd.f32 %v7141, %v7221
    %v7223 = vadd.f32 %v7148, %v7221
    %v7224 = vadd.f32 %v7155, %v7221
    %v7225 = vadd.f32 %v7162, %v7221
    %v7226 = vadd.f32 %v7169, %v7221
    %v7232 = vcombine.low %v7222, %v7223
    %v7233 = vcombine.low %v7224, %v7225
    %v7235 = vunpack.c.l.s4 1966171168
    %v7236 = vunpack.c.0.s8 %v7235
    %v7237 = vlaneseq
    %v7238 = vshrl.u32 %v7237, 7
    %v7239 = vsub.s32 %v7236, %v7238
    %v7240 = vrot.slane %v7232, %v7239
    %v7242 = vunpack.c.l.s4 1966171168
    %v7243 = vunpack.c.0.s8 %v7242
    %v7244 = vlaneseq
    %v7245 = vshrl.u32 %v7244, 7
    %v7246 = vsub.s32 %v7243, %v7245
    %v7247 = vrot.slane %v7233, %v7246
    %v7249 = vunpack.c.l.s4 1966171168
    %v7250 = vunpack.c.0.s8 %v7249
    %v7251 = vlaneseq
    %v7252 = vshrl.u32 %v7251, 7
    %v7253 = vsub.s32 %v7250, %v7252
    %v7254 = vrot.slane %v7226, %v7253
    %v7255 = vcombine.low %v7240, %v7247
    %v7257 = vunpack.c.l.s4 1966171168
    %v7258 = vunpack.c.0.s8 %v7257
    %v7259 = vlaneseq
    %v7260 = vshrl.u32 %v7259, 7
    %v7261 = vsub.s32 %v7258, %v7260
    %v7262 = vrot.slane %v7255, %v7261
    %v7264 = vunpack.c.l.s4 1966171168
    %v7265 = vunpack.c.0.s8 %v7264
    %v7266 = vlaneseq
    %v7267 = vshrl.u32 %v7266, 7
    %v7268 = vsub.s32 %v7265, %v7267
    %v7269 = vrot.slane %v7254, %v7268
    %v7270 = vcombine.low %v7262, %v7269
    %v7272 = vlaneseq
    %vm7273 = vcmp.ge.s32.totalorder %v7272, 0
    %vm7274 = vcmp.lt.s32.totalorder %v7272, 640
    %vm7275 = vmand %vm7273, %vm7274
    %7276 = vst.msk [vmem:[#allocation4] sm:$0x1f] %vm7275, %v7270
    %v7277 = vmul.f32 %v7222, %v7176
    %v7278 = vmul.f32 %v7223, %v7183
    %v7279 = vadd.f32 %v7190, %v7277
    %v7280 = vadd.f32 %v7197, %v7278
    %v7281 = vmul.f32 %v7204, 0.003183099
    %v7282 = vmul.f32 %v7211, 0.003183099
    %v7283 = vsub.f32 %v7279, %v7281
    %v7284 = vsub.f32 %v7280, %v7282
    %v7285 = vmul.f32 %v7283, %v7283
    %v7286 = vmul.f32 %v7284, %v7284
    %vm7287 = vcmask 1040384
    %v7288 = vsel %vm7287, %v7285, 0.0
    %v7289 = vsel %vm7287, %v7286, 0.0
    %v7290 = vadd.f32 %v7288, %v7289
    %7291 = vadd.xlane.f32.xlu0 %v7290
    %v7292 = vpop.xlane.xlu0 %7291
    %v7293 = vrot.slane %v7292, 4
    %v7294 = vadd.f32 %v7292, %v7293
    %v7295 = vrot.slane %v7294, 2
    %v7296 = vadd.f32 %v7294, %v7295
    %v7297 = vrot.slane %v7296, 1
    %v7298 = vadd.f32 %v7296, %v7297
    %s7299 = vtos %v7298
    %v7300 = vstv %s7299
    %v7301 = vrcp.pop 256.0
    %v7302 = vmul.f32 %v7300, %v7301
    %v7303 = vld [vmem:[%s1] sm:$0x1]
    %v7304 = vsub.f32 %v7224, %v7303
    %v7305 = vmul.f32 %v7304, %v7304
    %v7306 = vsel %vm7287, %v7305, 0.0
    %7307 = vadd.xlane.f32.xlu0 %v7306
    %v7308 = vpop.xlane.xlu0 %7307
    %v7309 = vrot.slane %v7308, 4
    %v7310 = vadd.f32 %v7308, %v7309
    %v7311 = vrot.slane %v7310, 2
    %v7312 = vadd.f32 %v7310, %v7311
    %v7313 = vrot.slane %v7312, 1
    %v7314 = vadd.f32 %v7312, %v7313
    %s7315 = vtos %v7314
    %v7316 = vstv %s7315
    %v7317 = vrcp.pop 128.0
    %v7318 = vmul.f32 %v7316, %v7317
    %v7319 = vmul.f32 %v7225, %v7225
    %v7320 = vsel %vm7287, %v7319, 0.0
    %7321 = vadd.xlane.f32.xlu0 %v7320
    %v7322 = vpop.xlane.xlu0 %7321
    %v7323 = vrot.slane %v7322, 4
    %v7324 = vadd.f32 %v7322, %v7323
    %v7325 = vrot.slane %v7324, 2
    %v7326 = vadd.f32 %v7324, %v7325
    %v7327 = vrot.slane %v7326, 1
    %v7328 = vadd.f32 %v7326, %v7327
    %s7329 = vtos %v7328
    %v7330 = vstv %s7329
    %v7331 = vmul.f32 %v7330, %v7317
    %v7332 = vmul.f32 %v7226, %v7226
    %v7333 = vsel %vm7287, %v7332, 0.0
    %7334 = vadd.xlane.f32.xlu0 %v7333
    %v7335 = vpop.xlane.xlu0 %7334
    %v7336 = vrot.slane %v7335, 4
    %v7337 = vadd.f32 %v7335, %v7336
    %v7338 = vrot.slane %v7337, 2
    %v7339 = vadd.f32 %v7337, %v7338
    %v7340 = vrot.slane %v7339, 1
    %v7341 = vadd.f32 %v7339, %v7340
    %s7342 = vtos %v7341
    %v7343 = vstv %s7342
    %v7344 = vmul.f32 %v7343, %v7317
    %v7345 = vadd.f32 %v7331, %v7344
    %v7346 = vadd.f32 %v7302, %v7318
    %v7347 = vadd.f32 %v7346, %v7345
    %vm7348 = vcmask 0
    %7349 = vst.msk [vmem:[#allocation6] sm:$0x1] %vm7348, %v7347
    // Predicated region
    $region30: #{tpu_custom_call.1} parent=1 // pred_check
      _
    $region31: #{tpu_custom_call.1} parent=1 // pred_check_branch
      %7351 = sbr.rel (0) target = $region33
    $region32: #{tpu_custom_call.1} parent=1 // pred_region
      %s7353 = ssub.s32 80, 80
      %7354 = vsyncadd [#allocation5], %s7353
      %s7356 = sshll.u32 [#allocation4], 4
      %s7357 = int_to_ptr.vmem [resolvable:$true] %s7356
      %7359 = dma.vmem_to_hbm [thread:$0]  %s7357, 80, %s7, [#allocation5]
    $region33: #{tpu_custom_call.1} parent=1 // pred_fallthru
      _
    // Predicated region
    $region34: #{tpu_custom_call.1} parent=1 // pred_check
      _
    $region35: #{tpu_custom_call.1} parent=1 // pred_check_branch
      %7361 = sbr.rel (0) target = $region37
    $region36: #{tpu_custom_call.1} parent=1 // pred_region
      %s7363 = ssub.s32 16, 16
      %7364 = vsyncadd [#allocation7], %s7363
      %s7366 = sshll.u32 [#allocation6], 4
      %s7367 = int_to_ptr.vmem [resolvable:$true] %s7366
      %7369 = dma.vmem_to_hbm [thread:$0]  %s7367, 16, %s8, [#allocation7]
    $region37: #{tpu_custom_call.1} parent=1 // pred_fallthru
      _
    // Predicated region
    $region38: #{tpu_custom_call.1} parent=1 // pred_check
      _
    $region39: #{tpu_custom_call.1} parent=1 // pred_check_branch
      %7371 = sbr.rel (0) target = $region41
    $region40: #{tpu_custom_call.1} parent=1 // pred_region
      %7372 = dma.done [#allocation5], 80
    $region41: #{tpu_custom_call.1} parent=1 // pred_fallthru
      _
    // Predicated region
    $region42: #{tpu_custom_call.1} parent=1 // pred_check
      _
    $region43: #{tpu_custom_call.1} parent=1 // pred_check_branch
      %7374 = sbr.rel (0) target = $region45
    $region44: #{tpu_custom_call.1} parent=1 // pred_region
      %7375 = dma.done [#allocation7], 16
    $region45: #{tpu_custom_call.1} parent=1 // pred_fallthru
      _
    %7376 = vsyncpa [#allocation5], 1
    %7377 = vsyncpa [#allocation7], 1

</llo_original>
